<compile_context>
chip_gen: v6e
topology: v6e:2x2x1
jax: 0.10.0
libtpu: 0.0.40
codegen_flags: <defaults>
</compile_context>

<pallas_src>
import math
import numpy as np
import jax
import jax.numpy as jnp
from jax import lax
from jax.experimental import pallas as pl
from jax.experimental.pallas import tpu as pltpu

LANES = 128          # matrices processed per grid step (matrix index lives on the 128-lane axis)
TAYLOR_DEGREE = 12   # ||B||_1 <= 1 after rescaling -> truncation error ~1.6e-10 (<< f32 eps)
_FACT = [1.0 / math.factorial(k) for k in range(TAYLOR_DEGREE + 1)]


def _cmul(ar, ai, br, bi):
    """Lane-batched complex matrix product on the VPU.

    a, b: (H, H, L) f32 planes with layout [row i, col k, matrix lane l].
    C[i,k,l] = sum_j A[i,j,l] * B[j,k,l], computed as H unrolled sublane-broadcast FMAs.
    """
    H = ar.shape[0]
    cr = None
    ci = None
    for j in range(H):                      # H is small and static: unroll
        a_r = ar[:, j:j + 1, :]             # (H, 1, L) -> broadcast along output column k
        a_i = ai[:, j:j + 1, :]
        b_r = br[j:j + 1, :, :]             # (1, H, L) -> broadcast along output row i
        b_i = bi[j:j + 1, :, :]
        pr = a_r * b_r - a_i * b_i
        pi = a_r * b_i + a_i * b_r
        cr = pr if cr is None else cr + pr
        ci = pi if ci is None else ci + pi
    return cr, ci


def _proj_expm_kernel(nsq_ref, scale_ref, w_ref, eye_ref, out_ref):
    f32 = jnp.float32
    H = out_ref.shape[1]
    L = out_ref.shape[3]
    D = w_ref.shape[0] // 2                 # w_ref: (2*D, H, H, L); [0:D]=re, [D:2D]=im
    g = pl.program_id(0)

    # ---- fused projection: A[i,k,l] = sum_d dX_scale[d,l] * M[d, l%C, i, k]  (VPU FMAs) ----
    sc = scale_ref[0]                                    # (DP, L); rows >= D are zero padding
    s0 = sc[0:1, :][None]                                # (1, 1, L)
    Are = s0 * w_ref[0]
    Aim = s0 * w_ref[D]
    for d in range(1, D):                                # D is tiny: static unroll
        sd = sc[d:d + 1, :][None]
        Are = Are + sd * w_ref[d]
        Aim = Aim + sd * w_ref[D + d]

    # ---- per-lane 1-norm and scaling & squaring prep ----------------------------------------
    mod = jnp.sqrt(Are * Are + Aim * Aim)                # (H, H, L)
    colsum = jnp.sum(mod, axis=0)                        # (H, L)   column sums
    nrm = jnp.max(colsum, axis=0, keepdims=True)         # (1, L)   1-norm per matrix lane
    n_sq = nsq_ref[g]                                    # per-group squaring bound (SMEM)
    s = jnp.where(nrm > 1.0, jnp.ceil(jnp.log2(jnp.maximum(nrm, 1.0))), 0.0)
    s = jnp.minimum(s, n_sq.astype(f32))                 # stay consistent with the loop bound
    r = jnp.exp2(-s)[None]                               # (1, 1, L)
    Br = Are * r
    Bi = Aim * r

    # ---- exp(B): degree-12 Taylor via Paterson-Stockmeyer (5 complex products) --------------
    eye = eye_ref[...]                                   # constant identity plane (H, H, L)
    c = _FACT
    B2r, B2i = _cmul(Br, Bi, Br, Bi)
    B3r, B3i = _cmul(B2r, B2i, Br, Bi)
    # Chunks consume B and B3; after this point only B2 (for B4) stays live.
    W0r = c[0] * eye + c[1] * Br + c[2] * B2r + c[3] * B3r
    W0i =              c[1] * Bi + c[2] * B2i + c[3] * B3i
    W1r = c[4] * eye + c[5] * Br + c[6] * B2r + c[7] * B3r
    W1i =              c[5] * Bi + c[6] * B2i + c[7] * B3i
    W2r = c[8] * eye + c[9] * Br + c[10] * B2r + c[11] * B3r
    W2i =              c[9] * Bi + c[10] * B2i + c[11] * B3i
    B4r, B4i = _cmul(B2r, B2i, B2r, B2i)
    W2r = W2r + c[12] * B4r
    W2i = W2i + c[12] * B4i
    M2r, M2i = _cmul(B4r, B4i, W2r, W2i)
    M1r, M1i = _cmul(B4r, B4i, W1r + M2r, W1i + M2i)
    Er = W0r + M1r
    Ei = W0i + M1i

    # ---- repeated squaring: per-group trip count, exact per-lane stop mask, value-carried ----
    def body(i, RE):
        Rr, Ri = RE
        Sr, Si = _cmul(Rr, Ri, Rr, Ri)
        keep = (i.astype(f32) < s)[None]                 # (1, 1, L): finished lanes stop updating
        return (jnp.where(keep, Sr, Rr), jnp.where(keep, Si, Ri))

    Er, Ei = lax.fori_loop(0, n_sq, body, (Er, Ei))

    out_ref[0] = Er
    out_ref[1] = Ei


def projection_forward(dX, M_re, M_im):
    """dX: (N, D) f32.  M_re/M_im: (D, C, H, H) f32 (real/imag parts of the skew-Hermitian weights).
    Returns expm(sum_d dX[n,d] * M[d,c]) as complex64 of shape (N, C, H, H)."""
    N, D = dX.shape
    Dw, C, H, H2 = M_re.shape
    assert Dw == D and H2 == H and M_im.shape == M_re.shape
    # TODO(synk): channel counts with 128 % C != 0 would need a per-group weight slab.
    assert LANES % C == 0, "channels must divide 128 for the shared per-lane weight slab"

    NM = N * C
    G = (NM + LANES - 1) // LANES
    NMP = G * LANES
    DP = max(8, -(-D // 8) * 8)             # pad the scale's sublane dim to a multiple of 8

    dtype = jnp.float32
    dX = dX.astype(dtype)
    M_re = M_re.astype(dtype)
    M_im = M_im.astype(dtype)

    # Per-lane weight slab, identical for every group since (g*128 + l) % C == l % C:
    #   W[d, i, k, l] = M[d, l % C, i, k];  re/im packed into one (2D, H, H, 128) input.
    reps = LANES // C
    W_re = jnp.tile(jnp.transpose(M_re, (0, 2, 3, 1)), (1, 1, 1, reps))
    W_im = jnp.tile(jnp.transpose(M_im, (0, 2, 3, 1)), (1, 1, 1, reps))
    W = jnp.concatenate([W_re, W_im], axis=0)                          # (2D, H, H, LANES)

    # Identity plane passed as a constant input (avoids per-step iota/compare regeneration).
    eye_in = jnp.broadcast_to(jnp.eye(H, dtype=dtype)[:, :, None], (H, H, LANES))

    # Per-lane projection scales: scale[g, d, l] = dX[(g*128 + l) // C, d], zero padded.
    dXm = jnp.repeat(dX, C, axis=0)                                    # (NM, D)
    dXm = jnp.pad(dXm, ((0, NMP - NM), (0, 0)))                        # (NMP, D)
    scale = jnp.transpose(dXm, (1, 0)).reshape(D, G, LANES)
    scale = jnp.transpose(scale, (1, 0, 2))                            # (G, D, LANES)
    scale = jnp.pad(scale, ((0, 0), (0, DP - D), (0, 0)))              # (G, DP, LANES)

    # Per-group squaring bound: ||AX[n,c]||_1 <= sum_d |dX[n,d]| * ||M[d,c]||_1 (>= exact count).
    normM = jnp.max(jnp.sum(jnp.sqrt(M_re * M_re + M_im * M_im), axis=2), axis=-1)    # (D, C)
    bound = jnp.dot(jnp.abs(dX), normM).reshape(NM)                                   # (NM,)
    bound = jnp.pad(bound, (0, NMP - NM), constant_values=1.0).reshape(G, LANES)
    nsq = jnp.ceil(jnp.log2(jnp.maximum(jnp.max(bound, axis=1), 1.0))).astype(jnp.int32)  # (G,)

    grid_spec = pltpu.PrefetchScalarGridSpec(
        num_scalar_prefetch=1,
        grid=(G,),
        in_specs=[
            pl.BlockSpec((1, DP, LANES), lambda g, nsq_ref: (g, 0, 0)),
            pl.BlockSpec((2 * D, H, H, LANES), lambda g, nsq_ref: (0, 0, 0, 0)),  # resident weights
            pl.BlockSpec((H, H, LANES), lambda g, nsq_ref: (0, 0, 0)),            # resident identity
        ],
        out_specs=pl.BlockSpec((2, H, H, LANES), lambda g, nsq_ref: (0, 0, 0, g)),
    )

    out = pl.pallas_call(
        _proj_expm_kernel,
        out_shape=jax.ShapeDtypeStruct((2, H, H, NMP), dtype),
        grid_spec=grid_spec,
        compiler_params=pltpu.CompilerParams(dimension_semantics=("parallel",)),
    )(nsq, scale, W, eye_in)

    E_re = jnp.transpose(out[0, :, :, :NM], (2, 0, 1)).reshape(N, C, H, H)
    E_im = jnp.transpose(out[1, :, :, :NM], (2, 0, 1)).reshape(N, C, H, H)
    return lax.complex(E_re, E_im)


if __name__ == "__main__":
    # Shapes implied by the module: dX (N, input_size), A (input_size, channels, hidden, hidden) cfloat.
    N, D, C, H = 8, 4, 2, 8

    key = jax.random.PRNGKey(0)
    k1, k2, k3 = jax.random.split(key, 3)
    # TODO(synk): unitary_lie_init_ source not provided; deterministic normal init + skew-Hermitian
    # projection M = A - A^H is used instead (synthetic weights, not a checkpoint).
    A_re = jax.random.normal(k1, (D, C, H, H), jnp.float32)
    A_im = jax.random.normal(k2, (D, C, H, H), jnp.float32)
    M_re = A_re - jnp.swapaxes(A_re, -1, -2)
    M_im = A_im + jnp.swapaxes(A_im, -1, -2)

    dX = jax.random.normal(k3, (N, D), jnp.float32)

    fwd = jax.jit(projection_forward)
    out = jax.block_until_ready(fwd(dX, M_re, M_im))

    # Reference: plain JAX complex expm of the same linear combination.
    M_c = (M_re + 1j * M_im).astype(jnp.complex64)
    AX_ref = jnp.einsum('nd,dcij->ncij', dX.astype(jnp.complex64), M_c)
    ref = jax.vmap(jax.scipy.linalg.expm)(AX_ref.reshape(-1, H, H)).reshape(N, C, H, H)
    ref = jax.block_until_ready(ref)

    assert out.shape == (N, C, H, H) and out.dtype == jnp.complex64
    assert np.allclose(np.asarray(out), np.asarray(ref), atol=5e-3, rtol=5e-3)

    print("KERNEL_OK")
</pallas_src>

<mosaic_0001>
module attributes {stable_mosaic.version = 11 : i64} {
  func.func @_proj_expm_kernel(%arg0: i32, %arg1: memref<1xi32, #tpu.memory_space<smem>>, %arg2: memref<1x8x128xf32, #tpu.memory_space<vmem>>, %arg3: memref<8x8x8x128xf32, #tpu.memory_space<vmem>>, %arg4: memref<8x8x128xf32, #tpu.memory_space<vmem>>, %arg5: memref<2x8x8x128xf32, #tpu.memory_space<vmem>>) attributes {dimension_semantics = [#tpu.dimension_semantics<parallel>], iteration_bounds = array<i64: 1>, scalar_prefetch = 1 : i64, scratch_operands = 0 : i64, tpu.core_type = #tpu.core_type<tc>, window_params = [{transform_indices = @transform_0, window_bounds = array<i64: 1, 8, 128>}, {pipeline_mode = #tpu.pipeline_mode<synchronous>, transform_indices = @transform_1, window_bounds = array<i64: 8, 8, 8, 128>}, {pipeline_mode = #tpu.pipeline_mode<synchronous>, transform_indices = @transform_2, window_bounds = array<i64: 8, 8, 128>}, {transform_indices = @transform_3, window_bounds = array<i64: 2, 8, 8, 128>}]} {
    %c0 = arith.constant 0 : index
    %c0_0 = arith.constant 0 : index
    %c0_1 = arith.constant 0 : index
    %0 = vector.load %arg2[%c0, %c0_0, %c0_1] : memref<1x8x128xf32, #tpu.memory_space<vmem>>, vector<1x8x128xf32>
    %1 = vector.shape_cast %0 : vector<1x8x128xf32> to vector<8x128xf32>
    %2 = vector.extract_strided_slice %1 {offsets = [0, 0], sizes = [1, 128], strides = [1, 1]} : vector<8x128xf32> to vector<1x128xf32>
    %3 = vector.shape_cast %2 : vector<1x128xf32> to vector<1x1x128xf32>
    %c0_2 = arith.constant 0 : index
    %c0_3 = arith.constant 0 : index
    %c0_4 = arith.constant 0 : index
    %c0_5 = arith.constant 0 : index
    %4 = vector.load %arg3[%c0_2, %c0_3, %c0_4, %c0_5] : memref<8x8x8x128xf32, #tpu.memory_space<vmem>>, vector<1x8x8x128xf32>
    %5 = vector.shape_cast %4 : vector<1x8x8x128xf32> to vector<8x8x128xf32>
    %6 = vector.broadcast %3 : vector<1x1x128xf32> to vector<8x8x128xf32>
    %7 = arith.mulf %6, %5 : vector<8x8x128xf32>
    %c4 = arith.constant 4 : index
    %c0_6 = arith.constant 0 : index
    %c0_7 = arith.constant 0 : index
    %c0_8 = arith.constant 0 : index
    %8 = vector.load %arg3[%c4, %c0_6, %c0_7, %c0_8] : memref<8x8x8x128xf32, #tpu.memory_space<vmem>>, vector<1x8x8x128xf32>
    %9 = vector.shape_cast %8 : vector<1x8x8x128xf32> to vector<8x8x128xf32>
    %10 = vector.broadcast %3 : vector<1x1x128xf32> to vector<8x8x128xf32>
    %11 = arith.mulf %10, %9 : vector<8x8x128xf32>
    %12 = vector.extract_strided_slice %1 {offsets = [1, 0], sizes = [1, 128], strides = [1, 1]} : vector<8x128xf32> to vector<1x128xf32>
    %13 = vector.shape_cast %12 : vector<1x128xf32> to vector<1x1x128xf32>
    %c1 = arith.constant 1 : index
    %c0_9 = arith.constant 0 : index
    %c0_10 = arith.constant 0 : index
    %c0_11 = arith.constant 0 : index
    %14 = vector.load %arg3[%c1, %c0_9, %c0_10, %c0_11] : memref<8x8x8x128xf32, #tpu.memory_space<vmem>>, vector<1x8x8x128xf32>
    %15 = vector.shape_cast %14 : vector<1x8x8x128xf32> to vector<8x8x128xf32>
    %16 = vector.broadcast %13 : vector<1x1x128xf32> to vector<8x8x128xf32>
    %17 = arith.mulf %16, %15 : vector<8x8x128xf32>
    %18 = arith.addf %7, %17 : vector<8x8x128xf32>
    %c5 = arith.constant 5 : index
    %c0_12 = arith.constant 0 : index
    %c0_13 = arith.constant 0 : index
    %c0_14 = arith.constant 0 : index
    %19 = vector.load %arg3[%c5, %c0_12, %c0_13, %c0_14] : memref<8x8x8x128xf32, #tpu.memory_space<vmem>>, vector<1x8x8x128xf32>
    %20 = vector.shape_cast %19 : vector<1x8x8x128xf32> to vector<8x8x128xf32>
    %21 = vector.broadcast %13 : vector<1x1x128xf32> to vector<8x8x128xf32>
    %22 = arith.mulf %21, %20 : vector<8x8x128xf32>
    %23 = arith.addf %11, %22 : vector<8x8x128xf32>
    %24 = vector.extract_strided_slice %1 {offsets = [2, 0], sizes = [1, 128], strides = [1, 1]} : vector<8x128xf32> to vector<1x128xf32>
    %25 = vector.shape_cast %24 : vector<1x128xf32> to vector<1x1x128xf32>
    %c2 = arith.constant 2 : index
    %c0_15 = arith.constant 0 : index
    %c0_16 = arith.constant 0 : index
    %c0_17 = arith.constant 0 : index
    %26 = vector.load %arg3[%c2, %c0_15, %c0_16, %c0_17] : memref<8x8x8x128xf32, #tpu.memory_space<vmem>>, vector<1x8x8x128xf32>
    %27 = vector.shape_cast %26 : vector<1x8x8x128xf32> to vector<8x8x128xf32>
    %28 = vector.broadcast %25 : vector<1x1x128xf32> to vector<8x8x128xf32>
    %29 = arith.mulf %28, %27 : vector<8x8x128xf32>
    %30 = arith.addf %18, %29 : vector<8x8x128xf32>
    %c6 = arith.constant 6 : index
    %c0_18 = arith.constant 0 : index
    %c0_19 = arith.constant 0 : index
    %c0_20 = arith.constant 0 : index
    %31 = vector.load %arg3[%c6, %c0_18, %c0_19, %c0_20] : memref<8x8x8x128xf32, #tpu.memory_space<vmem>>, vector<1x8x8x128xf32>
    %32 = vector.shape_cast %31 : vector<1x8x8x128xf32> to vector<8x8x128xf32>
    %33 = vector.broadcast %25 : vector<1x1x128xf32> to vector<8x8x128xf32>
    %34 = arith.mulf %33, %32 : vector<8x8x128xf32>
    %35 = arith.addf %23, %34 : vector<8x8x128xf32>
    %36 = vector.extract_strided_slice %1 {offsets = [3, 0], sizes = [1, 128], strides = [1, 1]} : vector<8x128xf32> to vector<1x128xf32>
    %37 = vector.shape_cast %36 : vector<1x128xf32> to vector<1x1x128xf32>
    %c3 = arith.constant 3 : index
    %c0_21 = arith.constant 0 : index
    %c0_22 = arith.constant 0 : index
    %c0_23 = arith.constant 0 : index
    %38 = vector.load %arg3[%c3, %c0_21, %c0_22, %c0_23] : memref<8x8x8x128xf32, #tpu.memory_space<vmem>>, vector<1x8x8x128xf32>
    %39 = vector.shape_cast %38 : vector<1x8x8x128xf32> to vector<8x8x128xf32>
    %40 = vector.broadcast %37 : vector<1x1x128xf32> to vector<8x8x128xf32>
    %41 = arith.mulf %40, %39 : vector<8x8x128xf32>
    %42 = arith.addf %30, %41 : vector<8x8x128xf32>
    %c7 = arith.constant 7 : index
    %c0_24 = arith.constant 0 : index
    %c0_25 = arith.constant 0 : index
    %c0_26 = arith.constant 0 : index
    %43 = vector.load %arg3[%c7, %c0_24, %c0_25, %c0_26] : memref<8x8x8x128xf32, #tpu.memory_space<vmem>>, vector<1x8x8x128xf32>
    %44 = vector.shape_cast %43 : vector<1x8x8x128xf32> to vector<8x8x128xf32>
    %45 = vector.broadcast %37 : vector<1x1x128xf32> to vector<8x8x128xf32>
    %46 = arith.mulf %45, %44 : vector<8x8x128xf32>
    %47 = arith.addf %35, %46 : vector<8x8x128xf32>
    %48 = arith.mulf %42, %42 : vector<8x8x128xf32>
    %49 = arith.mulf %47, %47 : vector<8x8x128xf32>
    %50 = arith.addf %48, %49 : vector<8x8x128xf32>
    %51 = math.sqrt %50 : vector<8x8x128xf32>
    %cst = arith.constant dense<0.000000e+00> : vector<8x128xf32>
    %52 = vector.multi_reduction <add>, %51, %cst [0] : vector<8x8x128xf32> to vector<8x128xf32>
    %cst_27 = arith.constant dense<0xFF800000> : vector<128xf32>
    %53 = vector.multi_reduction <maximumf>, %52, %cst_27 [0] : vector<8x128xf32> to vector<128xf32>
    %54 = vector.shape_cast %53 : vector<128xf32> to vector<1x128xf32>
    %55 = arith.index_cast %arg0 : i32 to index
    %56 = memref.load %arg1[%55] : memref<1xi32, #tpu.memory_space<smem>>
    %cst_28 = arith.constant 1.000000e+00 : f32
    %57 = vector.broadcast %cst_28 : f32 to vector<1x128xf32>
    %58 = arith.cmpf ogt, %54, %57 : vector<1x128xf32>
    %cst_29 = arith.constant 1.000000e+00 : f32
    %59 = vector.broadcast %cst_29 : f32 to vector<1x128xf32>
    %60 = arith.maximumf %54, %59 : vector<1x128xf32>
    %61 = math.log %60 : vector<1x128xf32>
    %cst_30 = arith.constant 2.000000e+00 : f32
    %62 = math.log %cst_30 : f32
    %63 = vector.broadcast %62 : f32 to vector<1x128xf32>
    %64 = arith.divf %61, %63 : vector<1x128xf32>
    %65 = math.ceil %64 : vector<1x128xf32>
    %cst_31 = arith.constant 0.000000e+00 : f32
    %66 = vector.broadcast %cst_31 : f32 to vector<1x128xf32>
    %67 = arith.select %58, %65, %66 : vector<1x128xi1>, vector<1x128xf32>
    %68 = arith.sitofp %56 : i32 to f32
    %69 = vector.broadcast %68 : f32 to vector<1x128xf32>
    %70 = arith.minimumf %67, %69 : vector<1x128xf32>
    %cst_32 = arith.constant 0.000000e+00 : f32
    %71 = vector.broadcast %cst_32 : f32 to vector<1x128xf32>
    %72 = arith.subf %71, %70 : vector<1x128xf32>
    %73 = math.exp2 %72 : vector<1x128xf32>
    %74 = vector.shape_cast %73 : vector<1x128xf32> to vector<1x1x128xf32>
    %75 = vector.broadcast %74 : vector<1x1x128xf32> to vector<8x8x128xf32>
    %76 = arith.mulf %42, %75 : vector<8x8x128xf32>
    %77 = vector.broadcast %74 : vector<1x1x128xf32> to vector<8x8x128xf32>
    %78 = arith.mulf %47, %77 : vector<8x8x128xf32>
    %c0_33 = arith.constant 0 : index
    %c0_34 = arith.constant 0 : index
    %c0_35 = arith.constant 0 : index
    %79 = vector.load %arg4[%c0_33, %c0_34, %c0_35] : memref<8x8x128xf32, #tpu.memory_space<vmem>>, vector<8x8x128xf32>
    %80 = vector.extract_strided_slice %76 {offsets = [0, 0, 0], sizes = [8, 1, 128], strides = [1, 1, 1]} : vector<8x8x128xf32> to vector<8x1x128xf32>
    %81 = vector.extract_strided_slice %78 {offsets = [0, 0, 0], sizes = [8, 1, 128], strides = [1, 1, 1]} : vector<8x8x128xf32> to vector<8x1x128xf32>
    %82 = vector.extract_strided_slice %76 {offsets = [0, 0, 0], sizes = [1, 8, 128], strides = [1, 1, 1]} : vector<8x8x128xf32> to vector<1x8x128xf32>
    %83 = vector.extract_strided_slice %78 {offsets = [0, 0, 0], sizes = [1, 8, 128], strides = [1, 1, 1]} : vector<8x8x128xf32> to vector<1x8x128xf32>
    %84 = vector.broadcast %80 : vector<8x1x128xf32> to vector<8x8x128xf32>
    %85 = vector.broadcast %82 : vector<1x8x128xf32> to vector<8x8x128xf32>
    %86 = arith.mulf %84, %85 : vector<8x8x128xf32>
    %87 = vector.broadcast %81 : vector<8x1x128xf32> to vector<8x8x128xf32>
    %88 = vector.broadcast %83 : vector<1x8x128xf32> to vector<8x8x128xf32>
    %89 = arith.mulf %87, %88 : vector<8x8x128xf32>
    %90 = arith.subf %86, %89 : vector<8x8x128xf32>
    %91 = vector.broadcast %80 : vector<8x1x128xf32> to vector<8x8x128xf32>
    %92 = vector.broadcast %83 : vector<1x8x128xf32> to vector<8x8x128xf32>
    %93 = arith.mulf %91, %92 : vector<8x8x128xf32>
    %94 = vector.broadcast %81 : vector<8x1x128xf32> to vector<8x8x128xf32>
    %95 = vector.broadcast %82 : vector<1x8x128xf32> to vector<8x8x128xf32>
    %96 = arith.mulf %94, %95 : vector<8x8x128xf32>
    %97 = arith.addf %93, %96 : vector<8x8x128xf32>
    %98 = vector.extract_strided_slice %76 {offsets = [0, 1, 0], sizes = [8, 1, 128], strides = [1, 1, 1]} : vector<8x8x128xf32> to vector<8x1x128xf32>
    %99 = vector.extract_strided_slice %78 {offsets = [0, 1, 0], sizes = [8, 1, 128], strides = [1, 1, 1]} : vector<8x8x128xf32> to vector<8x1x128xf32>
    %100 = vector.extract_strided_slice %76 {offsets = [1, 0, 0], sizes = [1, 8, 128], strides = [1, 1, 1]} : vector<8x8x128xf32> to vector<1x8x128xf32>
    %101 = vector.extract_strided_slice %78 {offsets = [1, 0, 0], sizes = [1, 8, 128], strides = [1, 1, 1]} : vector<8x8x128xf32> to vector<1x8x128xf32>
    %102 = vector.broadcast %98 : vector<8x1x128xf32> to vector<8x8x128xf32>
    %103 = vector.broadcast %100 : vector<1x8x128xf32> to vector<8x8x128xf32>
    %104 = arith.mulf %102, %103 : vector<8x8x128xf32>
    %105 = vector.broadcast %99 : vector<8x1x128xf32> to vector<8x8x128xf32>
    %106 = vector.broadcast %101 : vector<1x8x128xf32> to vector<8x8x128xf32>
    %107 = arith.mulf %105, %106 : vector<8x8x128xf32>
    %108 = arith.subf %104, %107 : vector<8x8x128xf32>
    %109 = vector.broadcast %98 : vector<8x1x128xf32> to vector<8x8x128xf32>
    %110 = vector.broadcast %101 : vector<1x8x128xf32> to vector<8x8x128xf32>
    %111 = arith.mulf %109, %110 : vector<8x8x128xf32>
    %112 = vector.broadcast %99 : vector<8x1x128xf32> to vector<8x8x128xf32>
    %113 = vector.broadcast %100 : vector<1x8x128xf32> to vector<8x8x128xf32>
    %114 = arith.mulf %112, %113 : vector<8x8x128xf32>
    %115 = arith.addf %111, %114 : vector<8x8x128xf32>
    %116 = arith.addf %90, %108 : vector<8x8x128xf32>
    %117 = arith.addf %97, %115 : vector<8x8x128xf32>
    %118 = vector.extract_strided_slice %76 {offsets = [0, 2, 0], sizes = [8, 1, 128], strides = [1, 1, 1]} : vector<8x8x128xf32> to vector<8x1x128xf32>
    %119 = vector.extract_strided_slice %78 {offsets = [0, 2, 0], sizes = [8, 1, 128], strides = [1, 1, 1]} : vector<8x8x128xf32> to vector<8x1x128xf32>
    %120 = vector.extract_strided_slice %76 {offsets = [2, 0, 0], sizes = [1, 8, 128], strides = [1, 1, 1]} : vector<8x8x128xf32> to vector<1x8x128xf32>
    %121 = vector.extract_strided_slice %78 {offsets = [2, 0, 0], sizes = [1, 8, 128], strides = [1, 1, 1]} : vector<8x8x128xf32> to vector<1x8x128xf32>
    %122 = vector.broadcast %118 : vector<8x1x128xf32> to vector<8x8x128xf32>
    %123 = vector.broadcast %120 : vector<1x8x128xf32> to vector<8x8x128xf32>
    %124 = arith.mulf %122, %123 : vector<8x8x128xf32>
    %125 = vector.broadcast %119 : vector<8x1x128xf32> to vector<8x8x128xf32>
    %126 = vector.broadcast %121 : vector<1x8x128xf32> to vector<8x8x128xf32>
    %127 = arith.mulf %125, %126 : vector<8x8x128xf32>
    %128 = arith.subf %124, %127 : vector<8x8x128xf32>
    %129 = vector.broadcast %118 : vector<8x1x128xf32> to vector<8x8x128xf32>
    %130 = vector.broadcast %121 : vector<1x8x128xf32> to vector<8x8x128xf32>
    %131 = arith.mulf %129, %130 : vector<8x8x128xf32>
    %132 = vector.broadcast %119 : vector<8x1x128xf32> to vector<8x8x128xf32>
    %133 = vector.broadcast %120 : vector<1x8x128xf32> to vector<8x8x128xf32>
    %134 = arith.mulf %132, %133 : vector<8x8x128xf32>
    %135 = arith.addf %131, %134 : vector<8x8x128xf32>
    %136 = arith.addf %116, %128 : vector<8x8x128xf32>
    %137 = arith.addf %117, %135 : vector<8x8x128xf32>
    %138 = vector.extract_strided_slice %76 {offsets = [0, 3, 0], sizes = [8, 1, 128], strides = [1, 1, 1]} : vector<8x8x128xf32> to vector<8x1x128xf32>
    %139 = vector.extract_strided_slice %78 {offsets = [0, 3, 0], sizes = [8, 1, 128], strides = [1, 1, 1]} : vector<8x8x128xf32> to vector<8x1x128xf32>
    %140 = vector.extract_strided_slice %76 {offsets = [3, 0, 0], sizes = [1, 8, 128], strides = [1, 1, 1]} : vector<8x8x128xf32> to vector<1x8x128xf32>
    %141 = vector.extract_strided_slice %78 {offsets = [3, 0, 0], sizes = [1, 8, 128], strides = [1, 1, 1]} : vector<8x8x128xf32> to vector<1x8x128xf32>
    %142 = vector.broadcast %138 : vector<8x1x128xf32> to vector<8x8x128xf32>
    %143 = vector.broadcast %140 : vector<1x8x128xf32> to vector<8x8x128xf32>
    %144 = arith.mulf %142, %143 : vector<8x8x128xf32>
    %145 = vector.broadcast %139 : vector<8x1x128xf32> to vector<8x8x128xf32>
    %146 = vector.broadcast %141 : vector<1x8x128xf32> to vector<8x8x128xf32>
    %147 = arith.mulf %145, %146 : vector<8x8x128xf32>
    %148 = arith.subf %144, %147 : vector<8x8x128xf32>
    %149 = vector.broadcast %138 : vector<8x1x128xf32> to vector<8x8x128xf32>
    %150 = vector.broadcast %141 : vector<1x8x128xf32> to vector<8x8x128xf32>
    %151 = arith.mulf %149, %150 : vector<8x8x128xf32>
    %152 = vector.broadcast %139 : vector<8x1x128xf32> to vector<8x8x128xf32>
    %153 = vector.broadcast %140 : vector<1x8x128xf32> to vector<8x8x128xf32>
    %154 = arith.mulf %152, %153 : vector<8x8x128xf32>
    %155 = arith.addf %151, %154 : vector<8x8x128xf32>
    %156 = arith.addf %136, %148 : vector<8x8x128xf32>
    %157 = arith.addf %137, %155 : vector<8x8x128xf32>
    %158 = vector.extract_strided_slice %76 {offsets = [0, 4, 0], sizes = [8, 1, 128], strides = [1, 1, 1]} : vector<8x8x128xf32> to vector<8x1x128xf32>
    %159 = vector.extract_strided_slice %78 {offsets = [0, 4, 0], sizes = [8, 1, 128], strides = [1, 1, 1]} : vector<8x8x128xf32> to vector<8x1x128xf32>
    %160 = vector.extract_strided_slice %76 {offsets = [4, 0, 0], sizes = [1, 8, 128], strides = [1, 1, 1]} : vector<8x8x128xf32> to vector<1x8x128xf32>
    %161 = vector.extract_strided_slice %78 {offsets = [4, 0, 0], sizes = [1, 8, 128], strides = [1, 1, 1]} : vector<8x8x128xf32> to vector<1x8x128xf32>
    %162 = vector.broadcast %158 : vector<8x1x128xf32> to vector<8x8x128xf32>
    %163 = vector.broadcast %160 : vector<1x8x128xf32> to vector<8x8x128xf32>
    %164 = arith.mulf %162, %163 : vector<8x8x128xf32>
    %165 = vector.broadcast %159 : vector<8x1x128xf32> to vector<8x8x128xf32>
    %166 = vector.broadcast %161 : vector<1x8x128xf32> to vector<8x8x128xf32>
    %167 = arith.mulf %165, %166 : vector<8x8x128xf32>
    %168 = arith.subf %164, %167 : vector<8x8x128xf32>
    %169 = vector.broadcast %158 : vector<8x1x128xf32> to vector<8x8x128xf32>
    %170 = vector.broadcast %161 : vector<1x8x128xf32> to vector<8x8x128xf32>
    %171 = arith.mulf %169, %170 : vector<8x8x128xf32>
    %172 = vector.broadcast %159 : vector<8x1x128xf32> to vector<8x8x128xf32>
    %173 = vector.broadcast %160 : vector<1x8x128xf32> to vector<8x8x128xf32>
    %174 = arith.mulf %172, %173 : vector<8x8x128xf32>
    %175 = arith.addf %171, %174 : vector<8x8x128xf32>
    %176 = arith.addf %156, %168 : vector<8x8x128xf32>
    %177 = arith.addf %157, %175 : vector<8x8x128xf32>
    %178 = vector.extract_strided_slice %76 {offsets = [0, 5, 0], sizes = [8, 1, 128], strides = [1, 1, 1]} : vector<8x8x128xf32> to vector<8x1x128xf32>
    %179 = vector.extract_strided_slice %78 {offsets = [0, 5, 0], sizes = [8, 1, 128], strides = [1, 1, 1]} : vector<8x8x128xf32> to vector<8x1x128xf32>
    %180 = vector.extract_strided_slice %76 {offsets = [5, 0, 0], sizes = [1, 8, 128], strides = [1, 1, 1]} : vector<8x8x128xf32> to vector<1x8x128xf32>
    %181 = vector.extract_strided_slice %78 {offsets = [5, 0, 0], sizes = [1, 8, 128], strides = [1, 1, 1]} : vector<8x8x128xf32> to vector<1x8x128xf32>
    %182 = vector.broadcast %178 : vector<8x1x128xf32> to vector<8x8x128xf32>
    %183 = vector.broadcast %180 : vector<1x8x128xf32> to vector<8x8x128xf32>
    %184 = arith.mulf %182, %183 : vector<8x8x128xf32>
    %185 = vector.broadcast %179 : vector<8x1x128xf32> to vector<8x8x128xf32>
    %186 = vector.broadcast %181 : vector<1x8x128xf32> to vector<8x8x128xf32>
    %187 = arith.mulf %185, %186 : vector<8x8x128xf32>
    %188 = arith.subf %184, %187 : vector<8x8x128xf32>
    %189 = vector.broadcast %178 : vector<8x1x128xf32> to vector<8x8x128xf32>
    %190 = vector.broadcast %181 : vector<1x8x128xf32> to vector<8x8x128xf32>
    %191 = arith.mulf %189, %190 : vector<8x8x128xf32>
    %192 = vector.broadcast %179 : vector<8x1x128xf32> to vector<8x8x128xf32>
    %193 = vector.broadcast %180 : vector<1x8x128xf32> to vector<8x8x128xf32>
    %194 = arith.mulf %192, %193 : vector<8x8x128xf32>
    %195 = arith.addf %191, %194 : vector<8x8x128xf32>
    %196 = arith.addf %176, %188 : vector<8x8x128xf32>
    %197 = arith.addf %177, %195 : vector<8x8x128xf32>
    %198 = vector.extract_strided_slice %76 {offsets = [0, 6, 0], sizes = [8, 1, 128], strides = [1, 1, 1]} : vector<8x8x128xf32> to vector<8x1x128xf32>
    %199 = vector.extract_strided_slice %78 {offsets = [0, 6, 0], sizes = [8, 1, 128], strides = [1, 1, 1]} : vector<8x8x128xf32> to vector<8x1x128xf32>
    %200 = vector.extract_strided_slice %76 {offsets = [6, 0, 0], sizes = [1, 8, 128], strides = [1, 1, 1]} : vector<8x8x128xf32> to vector<1x8x128xf32>
    %201 = vector.extract_strided_slice %78 {offsets = [6, 0, 0], sizes = [1, 8, 128], strides = [1, 1, 1]} : vector<8x8x128xf32> to vector<1x8x128xf32>
    %202 = vector.broadcast %198 : vector<8x1x128xf32> to vector<8x8x128xf32>
    %203 = vector.broadcast %200 : vector<1x8x128xf32> to vector<8x8x128xf32>
    %204 = arith.mulf %202, %203 : vector<8x8x128xf32>
    %205 = vector.broadcast %199 : vector<8x1x128xf32> to vector<8x8x128xf32>
    %206 = vector.broadcast %201 : vector<1x8x128xf32> to vector<8x8x128xf32>
    %207 = arith.mulf %205, %206 : vector<8x8x128xf32>
    %208 = arith.subf %204, %207 : vector<8x8x128xf32>
    %209 = vector.broadcast %198 : vector<8x1x128xf32> to vector<8x8x128xf32>
    %210 = vector.broadcast %201 : vector<1x8x128xf32> to vector<8x8x128xf32>
    %211 = arith.mulf %209, %210 : vector<8x8x128xf32>
    %212 = vector.broadcast %199 : vector<8x1x128xf32> to vector<8x8x128xf32>
    %213 = vector.broadcast %200 : vector<1x8x128xf32> to vector<8x8x128xf32>
    %214 = arith.mulf %212, %213 : vector<8x8x128xf32>
    %215 = arith.addf %211, %214 : vector<8x8x128xf32>
    %216 = arith.addf %196, %208 : vector<8x8x128xf32>
    %217 = arith.addf %197, %215 : vector<8x8x128xf32>
    %218 = vector.extract_strided_slice %76 {offsets = [0, 7, 0], sizes = [8, 1, 128], strides = [1, 1, 1]} : vector<8x8x128xf32> to vector<8x1x128xf32>
    %219 = vector.extract_strided_slice %78 {offsets = [0, 7, 0], sizes = [8, 1, 128], strides = [1, 1, 1]} : vector<8x8x128xf32> to vector<8x1x128xf32>
    %220 = vector.extract_strided_slice %76 {offsets = [7, 0, 0], sizes = [1, 8, 128], strides = [1, 1, 1]} : vector<8x8x128xf32> to vector<1x8x128xf32>
    %221 = vector.extract_strided_slice %78 {offsets = [7, 0, 0], sizes = [1, 8, 128], strides = [1, 1, 1]} : vector<8x8x128xf32> to vector<1x8x128xf32>
    %222 = vector.broadcast %218 : vector<8x1x128xf32> to vector<8x8x128xf32>
    %223 = vector.broadcast %220 : vector<1x8x128xf32> to vector<8x8x128xf32>
    %224 = arith.mulf %222, %223 : vector<8x8x128xf32>
    %225 = vector.broadcast %219 : vector<8x1x128xf32> to vector<8x8x128xf32>
    %226 = vector.broadcast %221 : vector<1x8x128xf32> to vector<8x8x128xf32>
    %227 = arith.mulf %225, %226 : vector<8x8x128xf32>
    %228 = arith.subf %224, %227 : vector<8x8x128xf32>
    %229 = vector.broadcast %218 : vector<8x1x128xf32> to vector<8x8x128xf32>
    %230 = vector.broadcast %221 : vector<1x8x128xf32> to vector<8x8x128xf32>
    %231 = arith.mulf %229, %230 : vector<8x8x128xf32>
    %232 = vector.broadcast %219 : vector<8x1x128xf32> to vector<8x8x128xf32>
    %233 = vector.broadcast %220 : vector<1x8x128xf32> to vector<8x8x128xf32>
    %234 = arith.mulf %232, %233 : vector<8x8x128xf32>
    %235 = arith.addf %231, %234 : vector<8x8x128xf32>
    %236 = arith.addf %216, %228 : vector<8x8x128xf32>
    %237 = arith.addf %217, %235 : vector<8x8x128xf32>
    %238 = vector.extract_strided_slice %236 {offsets = [0, 0, 0], sizes = [8, 1, 128], strides = [1, 1, 1]} : vector<8x8x128xf32> to vector<8x1x128xf32>
    %239 = vector.extract_strided_slice %237 {offsets = [0, 0, 0], sizes = [8, 1, 128], strides = [1, 1, 1]} : vector<8x8x128xf32> to vector<8x1x128xf32>
    %240 = vector.extract_strided_slice %76 {offsets = [0, 0, 0], sizes = [1, 8, 128], strides = [1, 1, 1]} : vector<8x8x128xf32> to vector<1x8x128xf32>
    %241 = vector.extract_strided_slice %78 {offsets = [0, 0, 0], sizes = [1, 8, 128], strides = [1, 1, 1]} : vector<8x8x128xf32> to vector<1x8x128xf32>
    %242 = vector.broadcast %238 : vector<8x1x128xf32> to vector<8x8x128xf32>
    %243 = vector.broadcast %240 : vector<1x8x128xf32> to vector<8x8x128xf32>
    %244 = arith.mulf %242, %243 : vector<8x8x128xf32>
    %245 = vector.broadcast %239 : vector<8x1x128xf32> to vector<8x8x128xf32>
    %246 = vector.broadcast %241 : vector<1x8x128xf32> to vector<8x8x128xf32>
    %247 = arith.mulf %245, %246 : vector<8x8x128xf32>
    %248 = arith.subf %244, %247 : vector<8x8x128xf32>
    %249 = vector.broadcast %238 : vector<8x1x128xf32> to vector<8x8x128xf32>
    %250 = vector.broadcast %241 : vector<1x8x128xf32> to vector<8x8x128xf32>
    %251 = arith.mulf %249, %250 : vector<8x8x128xf32>
    %252 = vector.broadcast %239 : vector<8x1x128xf32> to vector<8x8x128xf32>
    %253 = vector.broadcast %240 : vector<1x8x128xf32> to vector<8x8x128xf32>
    %254 = arith.mulf %252, %253 : vector<8x8x128xf32>
    %255 = arith.addf %251, %254 : vector<8x8x128xf32>
    %256 = vector.extract_strided_slice %236 {offsets = [0, 1, 0], sizes = [8, 1, 128], strides = [1, 1, 1]} : vector<8x8x128xf32> to vector<8x1x128xf32>
    %257 = vector.extract_strided_slice %237 {offsets = [0, 1, 0], sizes = [8, 1, 128], strides = [1, 1, 1]} : vector<8x8x128xf32> to vector<8x1x128xf32>
    %258 = vector.extract_strided_slice %76 {offsets = [1, 0, 0], sizes = [1, 8, 128], strides = [1, 1, 1]} : vector<8x8x128xf32> to vector<1x8x128xf32>
    %259 = vector.extract_strided_slice %78 {offsets = [1, 0, 0], sizes = [1, 8, 128], strides = [1, 1, 1]} : vector<8x8x128xf32> to vector<1x8x128xf32>
    %260 = vector.broadcast %256 : vector<8x1x128xf32> to vector<8x8x128xf32>
    %261 = vector.broadcast %258 : vector<1x8x128xf32> to vector<8x8x128xf32>
    %262 = arith.mulf %260, %261 : vector<8x8x128xf32>
    %263 = vector.broadcast %257 : vector<8x1x128xf32> to vector<8x8x128xf32>
    %264 = vector.broadcast %259 : vector<1x8x128xf32> to vector<8x8x128xf32>
    %265 = arith.mulf %263, %264 : vector<8x8x128xf32>
    %266 = arith.subf %262, %265 : vector<8x8x128xf32>
    %267 = vector.broadcast %256 : vector<8x1x128xf32> to vector<8x8x128xf32>
    %268 = vector.broadcast %259 : vector<1x8x128xf32> to vector<8x8x128xf32>
    %269 = arith.mulf %267, %268 : vector<8x8x128xf32>
    %270 = vector.broadcast %257 : vector<8x1x128xf32> to vector<8x8x128xf32>
    %271 = vector.broadcast %258 : vector<1x8x128xf32> to vector<8x8x128xf32>
    %272 = arith.mulf %270, %271 : vector<8x8x128xf32>
    %273 = arith.addf %269, %272 : vector<8x8x128xf32>
    %274 = arith.addf %248, %266 : vector<8x8x128xf32>
    %275 = arith.addf %255, %273 : vector<8x8x128xf32>
    %276 = vector.extract_strided_slice %236 {offsets = [0, 2, 0], sizes = [8, 1, 128], strides = [1, 1, 1]} : vector<8x8x128xf32> to vector<8x1x128xf32>
    %277 = vector.extract_strided_slice %237 {offsets = [0, 2, 0], sizes = [8, 1, 128], strides = [1, 1, 1]} : vector<8x8x128xf32> to vector<8x1x128xf32>
    %278 = vector.extract_strided_slice %76 {offsets = [2, 0, 0], sizes = [1, 8, 128], strides = [1, 1, 1]} : vector<8x8x128xf32> to vector<1x8x128xf32>
    %279 = vector.extract_strided_slice %78 {offsets = [2, 0, 0], sizes = [1, 8, 128], strides = [1, 1, 1]} : vector<8x8x128xf32> to vector<1x8x128xf32>
    %280 = vector.broadcast %276 : vector<8x1x128xf32> to vector<8x8x128xf32>
    %281 = vector.broadcast %278 : vector<1x8x128xf32> to vector<8x8x128xf32>
    %282 = arith.mulf %280, %281 : vector<8x8x128xf32>
    %283 = vector.broadcast %277 : vector<8x1x128xf32> to vector<8x8x128xf32>
    %284 = vector.broadcast %279 : vector<1x8x128xf32> to vector<8x8x128xf32>
    %285 = arith.mulf %283, %284 : vector<8x8x128xf32>
    %286 = arith.subf %282, %285 : vector<8x8x128xf32>
    %287 = vector.broadcast %276 : vector<8x1x128xf32> to vector<8x8x128xf32>
    %288 = vector.broadcast %279 : vector<1x8x128xf32> to vector<8x8x128xf32>
    %289 = arith.mulf %287, %288 : vector<8x8x128xf32>
    %290 = vector.broadcast %277 : vector<8x1x128xf32> to vector<8x8x128xf32>
    %291 = vector.broadcast %278 : vector<1x8x128xf32> to vector<8x8x128xf32>
    %292 = arith.mulf %290, %291 : vector<8x8x128xf32>
    %293 = arith.addf %289, %292 : vector<8x8x128xf32>
    %294 = arith.addf %274, %286 : vector<8x8x128xf32>
    %295 = arith.addf %275, %293 : vector<8x8x128xf32>
    %296 = vector.extract_strided_slice %236 {offsets = [0, 3, 0], sizes = [8, 1, 128], strides = [1, 1, 1]} : vector<8x8x128xf32> to vector<8x1x128xf32>
    %297 = vector.extract_strided_slice %237 {offsets = [0, 3, 0], sizes = [8, 1, 128], strides = [1, 1, 1]} : vector<8x8x128xf32> to vector<8x1x128xf32>
    %298 = vector.extract_strided_slice %76 {offsets = [3, 0, 0], sizes = [1, 8, 128], strides = [1, 1, 1]} : vector<8x8x128xf32> to vector<1x8x128xf32>
    %299 = vector.extract_strided_slice %78 {offsets = [3, 0, 0], sizes = [1, 8, 128], strides = [1, 1, 1]} : vector<8x8x128xf32> to vector<1x8x128xf32>
    %300 = vector.broadcast %296 : vector<8x1x128xf32> to vector<8x8x128xf32>
    %301 = vector.broadcast %298 : vector<1x8x128xf32> to vector<8x8x128xf32>
    %302 = arith.mulf %300, %301 : vector<8x8x128xf32>
    %303 = vector.broadcast %297 : vector<8x1x128xf32> to vector<8x8x128xf32>
    %304 = vector.broadcast %299 : vector<1x8x128xf32> to vector<8x8x128xf32>
    %305 = arith.mulf %303, %304 : vector<8x8x128xf32>
    %306 = arith.subf %302, %305 : vector<8x8x128xf32>
    %307 = vector.broadcast %296 : vector<8x1x128xf32> to vector<8x8x128xf32>
    %308 = vector.broadcast %299 : vector<1x8x128xf32> to vector<8x8x128xf32>
    %309 = arith.mulf %307, %308 : vector<8x8x128xf32>
    %310 = vector.broadcast %297 : vector<8x1x128xf32> to vector<8x8x128xf32>
    %311 = vector.broadcast %298 : vector<1x8x128xf32> to vector<8x8x128xf32>
    %312 = arith.mulf %310, %311 : vector<8x8x128xf32>
    %313 = arith.addf %309, %312 : vector<8x8x128xf32>
    %314 = arith.addf %294, %306 : vector<8x8x128xf32>
    %315 = arith.addf %295, %313 : vector<8x8x128xf32>
    %316 = vector.extract_strided_slice %236 {offsets = [0, 4, 0], sizes = [8, 1, 128], strides = [1, 1, 1]} : vector<8x8x128xf32> to vector<8x1x128xf32>
    %317 = vector.extract_strided_slice %237 {offsets = [0, 4, 0], sizes = [8, 1, 128], strides = [1, 1, 1]} : vector<8x8x128xf32> to vector<8x1x128xf32>
    %318 = vector.extract_strided_slice %76 {offsets = [4, 0, 0], sizes = [1, 8, 128], strides = [1, 1, 1]} : vector<8x8x128xf32> to vector<1x8x128xf32>
    %319 = vector.extract_strided_slice %78 {offsets = [4, 0, 0], sizes = [1, 8, 128], strides = [1, 1, 1]} : vector<8x8x128xf32> to vector<1x8x128xf32>
    %320 = vector.broadcast %316 : vector<8x1x128xf32> to vector<8x8x128xf32>
    %321 = vector.broadcast %318 : vector<1x8x128xf32> to vector<8x8x128xf32>
    %322 = arith.mulf %320, %321 : vector<8x8x128xf32>
    %323 = vector.broadcast %317 : vector<8x1x128xf32> to vector<8x8x128xf32>
    %324 = vector.broadcast %319 : vector<1x8x128xf32> to vector<8x8x128xf32>
    %325 = arith.mulf %323, %324 : vector<8x8x128xf32>
    %326 = arith.subf %322, %325 : vector<8x8x128xf32>
    %327 = vector.broadcast %316 : vector<8x1x128xf32> to vector<8x8x128xf32>
    %328 = vector.broadcast %319 : vector<1x8x128xf32> to vector<8x8x128xf32>
    %329 = arith.mulf %327, %328 : vector<8x8x128xf32>
    %330 = vector.broadcast %317 : vector<8x1x128xf32> to vector<8x8x128xf32>
    %331 = vector.broadcast %318 : vector<1x8x128xf32> to vector<8x8x128xf32>
    %332 = arith.mulf %330, %331 : vector<8x8x128xf32>
    %333 = arith.addf %329, %332 : vector<8x8x128xf32>
    %334 = arith.addf %314, %326 : vector<8x8x128xf32>
    %335 = arith.addf %315, %333 : vector<8x8x128xf32>
    %336 = vector.extract_strided_slice %236 {offsets = [0, 5, 0], sizes = [8, 1, 128], strides = [1, 1, 1]} : vector<8x8x128xf32> to vector<8x1x128xf32>
    %337 = vector.extract_strided_slice %237 {offsets = [0, 5, 0], sizes = [8, 1, 128], strides = [1, 1, 1]} : vector<8x8x128xf32> to vector<8x1x128xf32>
    %338 = vector.extract_strided_slice %76 {offsets = [5, 0, 0], sizes = [1, 8, 128], strides = [1, 1, 1]} : vector<8x8x128xf32> to vector<1x8x128xf32>
    %339 = vector.extract_strided_slice %78 {offsets = [5, 0, 0], sizes = [1, 8, 128], strides = [1, 1, 1]} : vector<8x8x128xf32> to vector<1x8x128xf32>
    %340 = vector.broadcast %336 : vector<8x1x128xf32> to vector<8x8x128xf32>
    %341 = vector.broadcast %338 : vector<1x8x128xf32> to vector<8x8x128xf32>
    %342 = arith.mulf %340, %341 : vector<8x8x128xf32>
    %343 = vector.broadcast %337 : vector<8x1x128xf32> to vector<8x8x128xf32>
    %344 = vector.broadcast %339 : vector<1x8x128xf32> to vector<8x8x128xf32>
    %345 = arith.mulf %343, %344 : vector<8x8x128xf32>
    %346 = arith.subf %342, %345 : vector<8x8x128xf32>
    %347 = vector.broadcast %336 : vector<8x1x128xf32> to vector<8x8x128xf32>
    %348 = vector.broadcast %339 : vector<1x8x128xf32> to vector<8x8x128xf32>
    %349 = arith.mulf %347, %348 : vector<8x8x128xf32>
    %350 = vector.broadcast %337 : vector<8x1x128xf32> to vector<8x8x128xf32>
    %351 = vector.broadcast %338 : vector<1x8x128xf32> to vector<8x8x128xf32>
    %352 = arith.mulf %350, %351 : vector<8x8x128xf32>
    %353 = arith.addf %349, %352 : vector<8x8x128xf32>
    %354 = arith.addf %334, %346 : vector<8x8x128xf32>
    %355 = arith.addf %335, %353 : vector<8x8x128xf32>
    %356 = vector.extract_strided_slice %236 {offsets = [0, 6, 0], sizes = [8, 1, 128], strides = [1, 1, 1]} : vector<8x8x128xf32> to vector<8x1x128xf32>
    %357 = vector.extract_strided_slice %237 {offsets = [0, 6, 0], sizes = [8, 1, 128], strides = [1, 1, 1]} : vector<8x8x128xf32> to vector<8x1x128xf32>
    %358 = vector.extract_strided_slice %76 {offsets = [6, 0, 0], sizes = [1, 8, 128], strides = [1, 1, 1]} : vector<8x8x128xf32> to vector<1x8x128xf32>
    %359 = vector.extract_strided_slice %78 {offsets = [6, 0, 0], sizes = [1, 8, 128], strides = [1, 1, 1]} : vector<8x8x128xf32> to vector<1x8x128xf32>
    %360 = vector.broadcast %356 : vector<8x1x128xf32> to vector<8x8x128xf32>
    %361 = vector.broadcast %358 : vector<1x8x128xf32> to vector<8x8x128xf32>
    %362 = arith.mulf %360, %361 : vector<8x8x128xf32>
    %363 = vector.broadcast %357 : vector<8x1x128xf32> to vector<8x8x128xf32>
    %364 = vector.broadcast %359 : vector<1x8x128xf32> to vector<8x8x128xf32>
    %365 = arith.mulf %363, %364 : vector<8x8x128xf32>
    %366 = arith.subf %362, %365 : vector<8x8x128xf32>
    %367 = vector.broadcast %356 : vector<8x1x128xf32> to vector<8x8x128xf32>
    %368 = vector.broadcast %359 : vector<1x8x128xf32> to vector<8x8x128xf32>
    %369 = arith.mulf %367, %368 : vector<8x8x128xf32>
    %370 = vector.broadcast %357 : vector<8x1x128xf32> to vector<8x8x128xf32>
    %371 = vector.broadcast %358 : vector<1x8x128xf32> to vector<8x8x128xf32>
    %372 = arith.mulf %370, %371 : vector<8x8x128xf32>
    %373 = arith.addf %369, %372 : vector<8x8x128xf32>
    %374 = arith.addf %354, %366 : vector<8x8x128xf32>
    %375 = arith.addf %355, %373 : vector<8x8x128xf32>
    %376 = vector.extract_strided_slice %236 {offsets = [0, 7, 0], sizes = [8, 1, 128], strides = [1, 1, 1]} : vector<8x8x128xf32> to vector<8x1x128xf32>
    %377 = vector.extract_strided_slice %237 {offsets = [0, 7, 0], sizes = [8, 1, 128], strides = [1, 1, 1]} : vector<8x8x128xf32> to vector<8x1x128xf32>
    %378 = vector.extract_strided_slice %76 {offsets = [7, 0, 0], sizes = [1, 8, 128], strides = [1, 1, 1]} : vector<8x8x128xf32> to vector<1x8x128xf32>
    %379 = vector.extract_strided_slice %78 {offsets = [7, 0, 0], sizes = [1, 8, 128], strides = [1, 1, 1]} : vector<8x8x128xf32> to vector<1x8x128xf32>
    %380 = vector.broadcast %376 : vector<8x1x128xf32> to vector<8x8x128xf32>
    %381 = vector.broadcast %378 : vector<1x8x128xf32> to vector<8x8x128xf32>
    %382 = arith.mulf %380, %381 : vector<8x8x128xf32>
    %383 = vector.broadcast %377 : vector<8x1x128xf32> to vector<8x8x128xf32>
    %384 = vector.broadcast %379 : vector<1x8x128xf32> to vector<8x8x128xf32>
    %385 = arith.mulf %383, %384 : vector<8x8x128xf32>
    %386 = arith.subf %382, %385 : vector<8x8x128xf32>
    %387 = vector.broadcast %376 : vector<8x1x128xf32> to vector<8x8x128xf32>
    %388 = vector.broadcast %379 : vector<1x8x128xf32> to vector<8x8x128xf32>
    %389 = arith.mulf %387, %388 : vector<8x8x128xf32>
    %390 = vector.broadcast %377 : vector<8x1x128xf32> to vector<8x8x128xf32>
    %391 = vector.broadcast %378 : vector<1x8x128xf32> to vector<8x8x128xf32>
    %392 = arith.mulf %390, %391 : vector<8x8x128xf32>
    %393 = arith.addf %389, %392 : vector<8x8x128xf32>
    %394 = arith.addf %374, %386 : vector<8x8x128xf32>
    %395 = arith.addf %375, %393 : vector<8x8x128xf32>
    %cst_36 = arith.constant 1.000000e+00 : f32
    %396 = vector.broadcast %cst_36 : f32 to vector<8x8x128xf32>
    %397 = arith.mulf %396, %79 : vector<8x8x128xf32>
    %cst_37 = arith.constant 1.000000e+00 : f32
    %398 = vector.broadcast %cst_37 : f32 to vector<8x8x128xf32>
    %399 = arith.mulf %398, %76 : vector<8x8x128xf32>
    %400 = arith.addf %397, %399 : vector<8x8x128xf32>
    %cst_38 = arith.constant 5.000000e-01 : f32
    %401 = vector.broadcast %cst_38 : f32 to vector<8x8x128xf32>
    %402 = arith.mulf %401, %236 : vector<8x8x128xf32>
    %403 = arith.addf %400, %402 : vector<8x8x128xf32>
    %cst_39 = arith.constant 0.166666672 : f32
    %404 = vector.broadcast %cst_39 : f32 to vector<8x8x128xf32>
    %405 = arith.mulf %404, %394 : vector<8x8x128xf32>
    %406 = arith.addf %403, %405 : vector<8x8x128xf32>
    %cst_40 = arith.constant 1.000000e+00 : f32
    %407 = vector.broadcast %cst_40 : f32 to vector<8x8x128xf32>
    %408 = arith.mulf %407, %78 : vector<8x8x128xf32>
    %cst_41 = arith.constant 5.000000e-01 : f32
    %409 = vector.broadcast %cst_41 : f32 to vector<8x8x128xf32>
    %410 = arith.mulf %409, %237 : vector<8x8x128xf32>
    %411 = arith.addf %408, %410 : vector<8x8x128xf32>
    %cst_42 = arith.constant 0.166666672 : f32
    %412 = vector.broadcast %cst_42 : f32 to vector<8x8x128xf32>
    %413 = arith.mulf %412, %395 : vector<8x8x128xf32>
    %414 = arith.addf %411, %413 : vector<8x8x128xf32>
    %cst_43 = arith.constant 0.0416666679 : f32
    %415 = vector.broadcast %cst_43 : f32 to vector<8x8x128xf32>
    %416 = arith.mulf %415, %79 : vector<8x8x128xf32>
    %cst_44 = arith.constant 0.00833333377 : f32
    %417 = vector.broadcast %cst_44 : f32 to vector<8x8x128xf32>
    %418 = arith.mulf %417, %76 : vector<8x8x128xf32>
    %419 = arith.addf %416, %418 : vector<8x8x128xf32>
    %cst_45 = arith.constant 0.00138888892 : f32
    %420 = vector.broadcast %cst_45 : f32 to vector<8x8x128xf32>
    %421 = arith.mulf %420, %236 : vector<8x8x128xf32>
    %422 = arith.addf %419, %421 : vector<8x8x128xf32>
    %cst_46 = arith.constant 1.98412701E-4 : f32
    %423 = vector.broadcast %cst_46 : f32 to vector<8x8x128xf32>
    %424 = arith.mulf %423, %394 : vector<8x8x128xf32>
    %425 = arith.addf %422, %424 : vector<8x8x128xf32>
    %cst_47 = arith.constant 0.00833333377 : f32
    %426 = vector.broadcast %cst_47 : f32 to vector<8x8x128xf32>
    %427 = arith.mulf %426, %78 : vector<8x8x128xf32>
    %cst_48 = arith.constant 0.00138888892 : f32
    %428 = vector.broadcast %cst_48 : f32 to vector<8x8x128xf32>
    %429 = arith.mulf %428, %237 : vector<8x8x128xf32>
    %430 = arith.addf %427, %429 : vector<8x8x128xf32>
    %cst_49 = arith.constant 1.98412701E-4 : f32
    %431 = vector.broadcast %cst_49 : f32 to vector<8x8x128xf32>
    %432 = arith.mulf %431, %395 : vector<8x8x128xf32>
    %433 = arith.addf %430, %432 : vector<8x8x128xf32>
    %cst_50 = arith.constant 2.48015876E-5 : f32
    %434 = vector.broadcast %cst_50 : f32 to vector<8x8x128xf32>
    %435 = arith.mulf %434, %79 : vector<8x8x128xf32>
    %cst_51 = arith.constant 2.75573188E-6 : f32
    %436 = vector.broadcast %cst_51 : f32 to vector<8x8x128xf32>
    %437 = arith.mulf %436, %76 : vector<8x8x128xf32>
    %438 = arith.addf %435, %437 : vector<8x8x128xf32>
    %cst_52 = arith.constant 2.755732E-7 : f32
    %439 = vector.broadcast %cst_52 : f32 to vector<8x8x128xf32>
    %440 = arith.mulf %439, %236 : vector<8x8x128xf32>
    %441 = arith.addf %438, %440 : vector<8x8x128xf32>
    %cst_53 = arith.constant 2.50521079E-8 : f32
    %442 = vector.broadcast %cst_53 : f32 to vector<8x8x128xf32>
    %443 = arith.mulf %442, %394 : vector<8x8x128xf32>
    %444 = arith.addf %441, %443 : vector<8x8x128xf32>
    %cst_54 = arith.constant 2.75573188E-6 : f32
    %445 = vector.broadcast %cst_54 : f32 to vector<8x8x128xf32>
    %446 = arith.mulf %445, %78 : vector<8x8x128xf32>
    %cst_55 = arith.constant 2.755732E-7 : f32
    %447 = vector.broadcast %cst_55 : f32 to vector<8x8x128xf32>
    %448 = arith.mulf %447, %237 : vector<8x8x128xf32>
    %449 = arith.addf %446, %448 : vector<8x8x128xf32>
    %cst_56 = arith.constant 2.50521079E-8 : f32
    %450 = vector.broadcast %cst_56 : f32 to vector<8x8x128xf32>
    %451 = arith.mulf %450, %395 : vector<8x8x128xf32>
    %452 = arith.addf %449, %451 : vector<8x8x128xf32>
    %453 = vector.extract_strided_slice %236 {offsets = [0, 0, 0], sizes = [8, 1, 128], strides = [1, 1, 1]} : vector<8x8x128xf32> to vector<8x1x128xf32>
    %454 = vector.extract_strided_slice %237 {offsets = [0, 0, 0], sizes = [8, 1, 128], strides = [1, 1, 1]} : vector<8x8x128xf32> to vector<8x1x128xf32>
    %455 = vector.extract_strided_slice %236 {offsets = [0, 0, 0], sizes = [1, 8, 128], strides = [1, 1, 1]} : vector<8x8x128xf32> to vector<1x8x128xf32>
    %456 = vector.extract_strided_slice %237 {offsets = [0, 0, 0], sizes = [1, 8, 128], strides = [1, 1, 1]} : vector<8x8x128xf32> to vector<1x8x128xf32>
    %457 = vector.broadcast %453 : vector<8x1x128xf32> to vector<8x8x128xf32>
    %458 = vector.broadcast %455 : vector<1x8x128xf32> to vector<8x8x128xf32>
    %459 = arith.mulf %457, %458 : vector<8x8x128xf32>
    %460 = vector.broadcast %454 : vector<8x1x128xf32> to vector<8x8x128xf32>
    %461 = vector.broadcast %456 : vector<1x8x128xf32> to vector<8x8x128xf32>
    %462 = arith.mulf %460, %461 : vector<8x8x128xf32>
    %463 = arith.subf %459, %462 : vector<8x8x128xf32>
    %464 = vector.broadcast %453 : vector<8x1x128xf32> to vector<8x8x128xf32>
    %465 = vector.broadcast %456 : vector<1x8x128xf32> to vector<8x8x128xf32>
    %466 = arith.mulf %464, %465 : vector<8x8x128xf32>
    %467 = vector.broadcast %454 : vector<8x1x128xf32> to vector<8x8x128xf32>
    %468 = vector.broadcast %455 : vector<1x8x128xf32> to vector<8x8x128xf32>
    %469 = arith.mulf %467, %468 : vector<8x8x128xf32>
    %470 = arith.addf %466, %469 : vector<8x8x128xf32>
    %471 = vector.extract_strided_slice %236 {offsets = [0, 1, 0], sizes = [8, 1, 128], strides = [1, 1, 1]} : vector<8x8x128xf32> to vector<8x1x128xf32>
    %472 = vector.extract_strided_slice %237 {offsets = [0, 1, 0], sizes = [8, 1, 128], strides = [1, 1, 1]} : vector<8x8x128xf32> to vector<8x1x128xf32>
    %473 = vector.extract_strided_slice %236 {offsets = [1, 0, 0], sizes = [1, 8, 128], strides = [1, 1, 1]} : vector<8x8x128xf32> to vector<1x8x128xf32>
    %474 = vector.extract_strided_slice %237 {offsets = [1, 0, 0], sizes = [1, 8, 128], strides = [1, 1, 1]} : vector<8x8x128xf32> to vector<1x8x128xf32>
    %475 = vector.broadcast %471 : vector<8x1x128xf32> to vector<8x8x128xf32>
    %476 = vector.broadcast %473 : vector<1x8x128xf32> to vector<8x8x128xf32>
    %477 = arith.mulf %475, %476 : vector<8x8x128xf32>
    %478 = vector.broadcast %472 : vector<8x1x128xf32> to vector<8x8x128xf32>
    %479 = vector.broadcast %474 : vector<1x8x128xf32> to vector<8x8x128xf32>
    %480 = arith.mulf %478, %479 : vector<8x8x128xf32>
    %481 = arith.subf %477, %480 : vector<8x8x128xf32>
    %482 = vector.broadcast %471 : vector<8x1x128xf32> to vector<8x8x128xf32>
    %483 = vector.broadcast %474 : vector<1x8x128xf32> to vector<8x8x128xf32>
    %484 = arith.mulf %482, %483 : vector<8x8x128xf32>
    %485 = vector.broadcast %472 : vector<8x1x128xf32> to vector<8x8x128xf32>
    %486 = vector.broadcast %473 : vector<1x8x128xf32> to vector<8x8x128xf32>
    %487 = arith.mulf %485, %486 : vector<8x8x128xf32>
    %488 = arith.addf %484, %487 : vector<8x8x128xf32>
    %489 = arith.addf %463, %481 : vector<8x8x128xf32>
    %490 = arith.addf %470, %488 : vector<8x8x128xf32>
    %491 = vector.extract_strided_slice %236 {offsets = [0, 2, 0], sizes = [8, 1, 128], strides = [1, 1, 1]} : vector<8x8x128xf32> to vector<8x1x128xf32>
    %492 = vector.extract_strided_slice %237 {offsets = [0, 2, 0], sizes = [8, 1, 128], strides = [1, 1, 1]} : vector<8x8x128xf32> to vector<8x1x128xf32>
    %493 = vector.extract_strided_slice %236 {offsets = [2, 0, 0], sizes = [1, 8, 128], strides = [1, 1, 1]} : vector<8x8x128xf32> to vector<1x8x128xf32>
    %494 = vector.extract_strided_slice %237 {offsets = [2, 0, 0], sizes = [1, 8, 128], strides = [1, 1, 1]} : vector<8x8x128xf32> to vector<1x8x128xf32>
    %495 = vector.broadcast %491 : vector<8x1x128xf32> to vector<8x8x128xf32>
    %496 = vector.broadcast %493 : vector<1x8x128xf32> to vector<8x8x128xf32>
    %497 = arith.mulf %495, %496 : vector<8x8x128xf32>
    %498 = vector.broadcast %492 : vector<8x1x128xf32> to vector<8x8x128xf32>
    %499 = vector.broadcast %494 : vector<1x8x128xf32> to vector<8x8x128xf32>
    %500 = arith.mulf %498, %499 : vector<8x8x128xf32>
    %501 = arith.subf %497, %500 : vector<8x8x128xf32>
    %502 = vector.broadcast %491 : vector<8x1x128xf32> to vector<8x8x128xf32>
    %503 = vector.broadcast %494 : vector<1x8x128xf32> to vector<8x8x128xf32>
    %504 = arith.mulf %502, %503 : vector<8x8x128xf32>
    %505 = vector.broadcast %492 : vector<8x1x128xf32> to vector<8x8x128xf32>
    %506 = vector.broadcast %493 : vector<1x8x128xf32> to vector<8x8x128xf32>
    %507 = arith.mulf %505, %506 : vector<8x8x128xf32>
    %508 = arith.addf %504, %507 : vector<8x8x128xf32>
    %509 = arith.addf %489, %501 : vector<8x8x128xf32>
    %510 = arith.addf %490, %508 : vector<8x8x128xf32>
    %511 = vector.extract_strided_slice %236 {offsets = [0, 3, 0], sizes = [8, 1, 128], strides = [1, 1, 1]} : vector<8x8x128xf32> to vector<8x1x128xf32>
    %512 = vector.extract_strided_slice %237 {offsets = [0, 3, 0], sizes = [8, 1, 128], strides = [1, 1, 1]} : vector<8x8x128xf32> to vector<8x1x128xf32>
    %513 = vector.extract_strided_slice %236 {offsets = [3, 0, 0], sizes = [1, 8, 128], strides = [1, 1, 1]} : vector<8x8x128xf32> to vector<1x8x128xf32>
    %514 = vector.extract_strided_slice %237 {offsets = [3, 0, 0], sizes = [1, 8, 128], strides = [1, 1, 1]} : vector<8x8x128xf32> to vector<1x8x128xf32>
    %515 = vector.broadcast %511 : vector<8x1x128xf32> to vector<8x8x128xf32>
    %516 = vector.broadcast %513 : vector<1x8x128xf32> to vector<8x8x128xf32>
    %517 = arith.mulf %515, %516 : vector<8x8x128xf32>
    %518 = vector.broadcast %512 : vector<8x1x128xf32> to vector<8x8x128xf32>
    %519 = vector.broadcast %514 : vector<1x8x128xf32> to vector<8x8x128xf32>
    %520 = arith.mulf %518, %519 : vector<8x8x128xf32>
    %521 = arith.subf %517, %520 : vector<8x8x128xf32>
    %522 = vector.broadcast %511 : vector<8x1x128xf32> to vector<8x8x128xf32>
    %523 = vector.broadcast %514 : vector<1x8x128xf32> to vector<8x8x128xf32>
    %524 = arith.mulf %522, %523 : vector<8x8x128xf32>
    %525 = vector.broadcast %512 : vector<8x1x128xf32> to vector<8x8x128xf32>
    %526 = vector.broadcast %513 : vector<1x8x128xf32> to vector<8x8x128xf32>
    %527 = arith.mulf %525, %526 : vector<8x8x128xf32>
    %528 = arith.addf %524, %527 : vector<8x8x128xf32>
    %529 = arith.addf %509, %521 : vector<8x8x128xf32>
    %530 = arith.addf %510, %528 : vector<8x8x128xf32>
    %531 = vector.extract_strided_slice %236 {offsets = [0, 4, 0], sizes = [8, 1, 128], strides = [1, 1, 1]} : vector<8x8x128xf32> to vector<8x1x128xf32>
    %532 = vector.extract_strided_slice %237 {offsets = [0, 4, 0], sizes = [8, 1, 128], strides = [1, 1, 1]} : vector<8x8x128xf32> to vector<8x1x128xf32>
    %533 = vector.extract_strided_slice %236 {offsets = [4, 0, 0], sizes = [1, 8, 128], strides = [1, 1, 1]} : vector<8x8x128xf32> to vector<1x8x128xf32>
    %534 = vector.extract_strided_slice %237 {offsets = [4, 0, 0], sizes = [1, 8, 128], strides = [1, 1, 1]} : vector<8x8x128xf32> to vector<1x8x128xf32>
    %535 = vector.broadcast %531 : vector<8x1x128xf32> to vector<8x8x128xf32>
    %536 = vector.broadcast %533 : vector<1x8x128xf32> to vector<8x8x128xf32>
    %537 = arith.mulf %535, %536 : vector<8x8x128xf32>
    %538 = vector.broadcast %532 : vector<8x1x128xf32> to vector<8x8x128xf32>
    %539 = vector.broadcast %534 : vector<1x8x128xf32> to vector<8x8x128xf32>
    %540 = arith.mulf %538, %539 : vector<8x8x128xf32>
    %541 = arith.subf %537, %540 : vector<8x8x128xf32>
    %542 = vector.broadcast %531 : vector<8x1x128xf32> to vector<8x8x128xf32>
    %543 = vector.broadcast %534 : vector<1x8x128xf32> to vector<8x8x128xf32>
    %544 = arith.mulf %542, %543 : vector<8x8x128xf32>
    %545 = vector.broadcast %532 : vector<8x1x128xf32> to vector<8x8x128xf32>
    %546 = vector.broadcast %533 : vector<1x8x128xf32> to vector<8x8x128xf32>
    %547 = arith.mulf %545, %546 : vector<8x8x128xf32>
    %548 = arith.addf %544, %547 : vector<8x8x128xf32>
    %549 = arith.addf %529, %541 : vector<8x8x128xf32>
    %550 = arith.addf %530, %548 : vector<8x8x128xf32>
    %551 = vector.extract_strided_slice %236 {offsets = [0, 5, 0], sizes = [8, 1, 128], strides = [1, 1, 1]} : vector<8x8x128xf32> to vector<8x1x128xf32>
    %552 = vector.extract_strided_slice %237 {offsets = [0, 5, 0], sizes = [8, 1, 128], strides = [1, 1, 1]} : vector<8x8x128xf32> to vector<8x1x128xf32>
    %553 = vector.extract_strided_slice %236 {offsets = [5, 0, 0], sizes = [1, 8, 128], strides = [1, 1, 1]} : vector<8x8x128xf32> to vector<1x8x128xf32>
    %554 = vector.extract_strided_slice %237 {offsets = [5, 0, 0], sizes = [1, 8, 128], strides = [1, 1, 1]} : vector<8x8x128xf32> to vector<1x8x128xf32>
    %555 = vector.broadcast %551 : vector<8x1x128xf32> to vector<8x8x128xf32>
    %556 = vector.broadcast %553 : vector<1x8x128xf32> to vector<8x8x128xf32>
    %557 = arith.mulf %555, %556 : vector<8x8x128xf32>
    %558 = vector.broadcast %552 : vector<8x1x128xf32> to vector<8x8x128xf32>
    %559 = vector.broadcast %554 : vector<1x8x128xf32> to vector<8x8x128xf32>
    %560 = arith.mulf %558, %559 : vector<8x8x128xf32>
    %561 = arith.subf %557, %560 : vector<8x8x128xf32>
    %562 = vector.broadcast %551 : vector<8x1x128xf32> to vector<8x8x128xf32>
    %563 = vector.broadcast %554 : vector<1x8x128xf32> to vector<8x8x128xf32>
    %564 = arith.mulf %562, %563 : vector<8x8x128xf32>
    %565 = vector.broadcast %552 : vector<8x1x128xf32> to vector<8x8x128xf32>
    %566 = vector.broadcast %553 : vector<1x8x128xf32> to vector<8x8x128xf32>
    %567 = arith.mulf %565, %566 : vector<8x8x128xf32>
    %568 = arith.addf %564, %567 : vector<8x8x128xf32>
    %569 = arith.addf %549, %561 : vector<8x8x128xf32>
    %570 = arith.addf %550, %568 : vector<8x8x128xf32>
    %571 = vector.extract_strided_slice %236 {offsets = [0, 6, 0], sizes = [8, 1, 128], strides = [1, 1, 1]} : vector<8x8x128xf32> to vector<8x1x128xf32>
    %572 = vector.extract_strided_slice %237 {offsets = [0, 6, 0], sizes = [8, 1, 128], strides = [1, 1, 1]} : vector<8x8x128xf32> to vector<8x1x128xf32>
    %573 = vector.extract_strided_slice %236 {offsets = [6, 0, 0], sizes = [1, 8, 128], strides = [1, 1, 1]} : vector<8x8x128xf32> to vector<1x8x128xf32>
    %574 = vector.extract_strided_slice %237 {offsets = [6, 0, 0], sizes = [1, 8, 128], strides = [1, 1, 1]} : vector<8x8x128xf32> to vector<1x8x128xf32>
    %575 = vector.broadcast %571 : vector<8x1x128xf32> to vector<8x8x128xf32>
    %576 = vector.broadcast %573 : vector<1x8x128xf32> to vector<8x8x128xf32>
    %577 = arith.mulf %575, %576 : vector<8x8x128xf32>
    %578 = vector.broadcast %572 : vector<8x1x128xf32> to vector<8x8x128xf32>
    %579 = vector.broadcast %574 : vector<1x8x128xf32> to vector<8x8x128xf32>
    %580 = arith.mulf %578, %579 : vector<8x8x128xf32>
    %581 = arith.subf %577, %580 : vector<8x8x128xf32>
    %582 = vector.broadcast %571 : vector<8x1x128xf32> to vector<8x8x128xf32>
    %583 = vector.broadcast %574 : vector<1x8x128xf32> to vector<8x8x128xf32>
    %584 = arith.mulf %582, %583 : vector<8x8x128xf32>
    %585 = vector.broadcast %572 : vector<8x1x128xf32> to vector<8x8x128xf32>
    %586 = vector.broadcast %573 : vector<1x8x128xf32> to vector<8x8x128xf32>
    %587 = arith.mulf %585, %586 : vector<8x8x128xf32>
    %588 = arith.addf %584, %587 : vector<8x8x128xf32>
    %589 = arith.addf %569, %581 : vector<8x8x128xf32>
    %590 = arith.addf %570, %588 : vector<8x8x128xf32>
    %591 = vector.extract_strided_slice %236 {offsets = [0, 7, 0], sizes = [8, 1, 128], strides = [1, 1, 1]} : vector<8x8x128xf32> to vector<8x1x128xf32>
    %592 = vector.extract_strided_slice %237 {offsets = [0, 7, 0], sizes = [8, 1, 128], strides = [1, 1, 1]} : vector<8x8x128xf32> to vector<8x1x128xf32>
    %593 = vector.extract_strided_slice %236 {offsets = [7, 0, 0], sizes = [1, 8, 128], strides = [1, 1, 1]} : vector<8x8x128xf32> to vector<1x8x128xf32>
    %594 = vector.extract_strided_slice %237 {offsets = [7, 0, 0], sizes = [1, 8, 128], strides = [1, 1, 1]} : vector<8x8x128xf32> to vector<1x8x128xf32>
    %595 = vector.broadcast %591 : vector<8x1x128xf32> to vector<8x8x128xf32>
    %596 = vector.broadcast %593 : vector<1x8x128xf32> to vector<8x8x128xf32>
    %597 = arith.mulf %595, %596 : vector<8x8x128xf32>
    %598 = vector.broadcast %592 : vector<8x1x128xf32> to vector<8x8x128xf32>
    %599 = vector.broadcast %594 : vector<1x8x128xf32> to vector<8x8x128xf32>
    %600 = arith.mulf %598, %599 : vector<8x8x128xf32>
    %601 = arith.subf %597, %600 : vector<8x8x128xf32>
    %602 = vector.broadcast %591 : vector<8x1x128xf32> to vector<8x8x128xf32>
    %603 = vector.broadcast %594 : vector<1x8x128xf32> to vector<8x8x128xf32>
    %604 = arith.mulf %602, %603 : vector<8x8x128xf32>
    %605 = vector.broadcast %592 : vector<8x1x128xf32> to vector<8x8x128xf32>
    %606 = vector.broadcast %593 : vector<1x8x128xf32> to vector<8x8x128xf32>
    %607 = arith.mulf %605, %606 : vector<8x8x128xf32>
    %608 = arith.addf %604, %607 : vector<8x8x128xf32>
    %609 = arith.addf %589, %601 : vector<8x8x128xf32>
    %610 = arith.addf %590, %608 : vector<8x8x128xf32>
    %cst_57 = arith.constant 2.08767559E-9 : f32
    %611 = vector.broadcast %cst_57 : f32 to vector<8x8x128xf32>
    %612 = arith.mulf %611, %609 : vector<8x8x128xf32>
    %613 = arith.addf %444, %612 : vector<8x8x128xf32>
    %cst_58 = arith.constant 2.08767559E-9 : f32
    %614 = vector.broadcast %cst_58 : f32 to vector<8x8x128xf32>
    %615 = arith.mulf %614, %610 : vector<8x8x128xf32>
    %616 = arith.addf %452, %615 : vector<8x8x128xf32>
    %617 = vector.extract_strided_slice %609 {offsets = [0, 0, 0], sizes = [8, 1, 128], strides = [1, 1, 1]} : vector<8x8x128xf32> to vector<8x1x128xf32>
    %618 = vector.extract_strided_slice %610 {offsets = [0, 0, 0], sizes = [8, 1, 128], strides = [1, 1, 1]} : vector<8x8x128xf32> to vector<8x1x128xf32>
    %619 = vector.extract_strided_slice %613 {offsets = [0, 0, 0], sizes = [1, 8, 128], strides = [1, 1, 1]} : vector<8x8x128xf32> to vector<1x8x128xf32>
    %620 = vector.extract_strided_slice %616 {offsets = [0, 0, 0], sizes = [1, 8, 128], strides = [1, 1, 1]} : vector<8x8x128xf32> to vector<1x8x128xf32>
    %621 = vector.broadcast %617 : vector<8x1x128xf32> to vector<8x8x128xf32>
    %622 = vector.broadcast %619 : vector<1x8x128xf32> to vector<8x8x128xf32>
    %623 = arith.mulf %621, %622 : vector<8x8x128xf32>
    %624 = vector.broadcast %618 : vector<8x1x128xf32> to vector<8x8x128xf32>
    %625 = vector.broadcast %620 : vector<1x8x128xf32> to vector<8x8x128xf32>
    %626 = arith.mulf %624, %625 : vector<8x8x128xf32>
    %627 = arith.subf %623, %626 : vector<8x8x128xf32>
    %628 = vector.broadcast %617 : vector<8x1x128xf32> to vector<8x8x128xf32>
    %629 = vector.broadcast %620 : vector<1x8x128xf32> to vector<8x8x128xf32>
    %630 = arith.mulf %628, %629 : vector<8x8x128xf32>
    %631 = vector.broadcast %618 : vector<8x1x128xf32> to vector<8x8x128xf32>
    %632 = vector.broadcast %619 : vector<1x8x128xf32> to vector<8x8x128xf32>
    %633 = arith.mulf %631, %632 : vector<8x8x128xf32>
    %634 = arith.addf %630, %633 : vector<8x8x128xf32>
    %635 = vector.extract_strided_slice %609 {offsets = [0, 1, 0], sizes = [8, 1, 128], strides = [1, 1, 1]} : vector<8x8x128xf32> to vector<8x1x128xf32>
    %636 = vector.extract_strided_slice %610 {offsets = [0, 1, 0], sizes = [8, 1, 128], strides = [1, 1, 1]} : vector<8x8x128xf32> to vector<8x1x128xf32>
    %637 = vector.extract_strided_slice %613 {offsets = [1, 0, 0], sizes = [1, 8, 128], strides = [1, 1, 1]} : vector<8x8x128xf32> to vector<1x8x128xf32>
    %638 = vector.extract_strided_slice %616 {offsets = [1, 0, 0], sizes = [1, 8, 128], strides = [1, 1, 1]} : vector<8x8x128xf32> to vector<1x8x128xf32>
    %639 = vector.broadcast %635 : vector<8x1x128xf32> to vector<8x8x128xf32>
    %640 = vector.broadcast %637 : vector<1x8x128xf32> to vector<8x8x128xf32>
    %641 = arith.mulf %639, %640 : vector<8x8x128xf32>
    %642 = vector.broadcast %636 : vector<8x1x128xf32> to vector<8x8x128xf32>
    %643 = vector.broadcast %638 : vector<1x8x128xf32> to vector<8x8x128xf32>
    %644 = arith.mulf %642, %643 : vector<8x8x128xf32>
    %645 = arith.subf %641, %644 : vector<8x8x128xf32>
    %646 = vector.broadcast %635 : vector<8x1x128xf32> to vector<8x8x128xf32>
    %647 = vector.broadcast %638 : vector<1x8x128xf32> to vector<8x8x128xf32>
    %648 = arith.mulf %646, %647 : vector<8x8x128xf32>
    %649 = vector.broadcast %636 : vector<8x1x128xf32> to vector<8x8x128xf32>
    %650 = vector.broadcast %637 : vector<1x8x128xf32> to vector<8x8x128xf32>
    %651 = arith.mulf %649, %650 : vector<8x8x128xf32>
    %652 = arith.addf %648, %651 : vector<8x8x128xf32>
    %653 = arith.addf %627, %645 : vector<8x8x128xf32>
    %654 = arith.addf %634, %652 : vector<8x8x128xf32>
    %655 = vector.extract_strided_slice %609 {offsets = [0, 2, 0], sizes = [8, 1, 128], strides = [1, 1, 1]} : vector<8x8x128xf32> to vector<8x1x128xf32>
    %656 = vector.extract_strided_slice %610 {offsets = [0, 2, 0], sizes = [8, 1, 128], strides = [1, 1, 1]} : vector<8x8x128xf32> to vector<8x1x128xf32>
    %657 = vector.extract_strided_slice %613 {offsets = [2, 0, 0], sizes = [1, 8, 128], strides = [1, 1, 1]} : vector<8x8x128xf32> to vector<1x8x128xf32>
    %658 = vector.extract_strided_slice %616 {offsets = [2, 0, 0], sizes = [1, 8, 128], strides = [1, 1, 1]} : vector<8x8x128xf32> to vector<1x8x128xf32>
    %659 = vector.broadcast %655 : vector<8x1x128xf32> to vector<8x8x128xf32>
    %660 = vector.broadcast %657 : vector<1x8x128xf32> to vector<8x8x128xf32>
    %661 = arith.mulf %659, %660 : vector<8x8x128xf32>
    %662 = vector.broadcast %656 : vector<8x1x128xf32> to vector<8x8x128xf32>
    %663 = vector.broadcast %658 : vector<1x8x128xf32> to vector<8x8x128xf32>
    %664 = arith.mulf %662, %663 : vector<8x8x128xf32>
    %665 = arith.subf %661, %664 : vector<8x8x128xf32>
    %666 = vector.broadcast %655 : vector<8x1x128xf32> to vector<8x8x128xf32>
    %667 = vector.broadcast %658 : vector<1x8x128xf32> to vector<8x8x128xf32>
    %668 = arith.mulf %666, %667 : vector<8x8x128xf32>
    %669 = vector.broadcast %656 : vector<8x1x128xf32> to vector<8x8x128xf32>
    %670 = vector.broadcast %657 : vector<1x8x128xf32> to vector<8x8x128xf32>
    %671 = arith.mulf %669, %670 : vector<8x8x128xf32>
    %672 = arith.addf %668, %671 : vector<8x8x128xf32>
    %673 = arith.addf %653, %665 : vector<8x8x128xf32>
    %674 = arith.addf %654, %672 : vector<8x8x128xf32>
    %675 = vector.extract_strided_slice %609 {offsets = [0, 3, 0], sizes = [8, 1, 128], strides = [1, 1, 1]} : vector<8x8x128xf32> to vector<8x1x128xf32>
    %676 = vector.extract_strided_slice %610 {offsets = [0, 3, 0], sizes = [8, 1, 128], strides = [1, 1, 1]} : vector<8x8x128xf32> to vector<8x1x128xf32>
    %677 = vector.extract_strided_slice %613 {offsets = [3, 0, 0], sizes = [1, 8, 128], strides = [1, 1, 1]} : vector<8x8x128xf32> to vector<1x8x128xf32>
    %678 = vector.extract_strided_slice %616 {offsets = [3, 0, 0], sizes = [1, 8, 128], strides = [1, 1, 1]} : vector<8x8x128xf32> to vector<1x8x128xf32>
    %679 = vector.broadcast %675 : vector<8x1x128xf32> to vector<8x8x128xf32>
    %680 = vector.broadcast %677 : vector<1x8x128xf32> to vector<8x8x128xf32>
    %681 = arith.mulf %679, %680 : vector<8x8x128xf32>
    %682 = vector.broadcast %676 : vector<8x1x128xf32> to vector<8x8x128xf32>
    %683 = vector.broadcast %678 : vector<1x8x128xf32> to vector<8x8x128xf32>
    %684 = arith.mulf %682, %683 : vector<8x8x128xf32>
    %685 = arith.subf %681, %684 : vector<8x8x128xf32>
    %686 = vector.broadcast %675 : vector<8x1x128xf32> to vector<8x8x128xf32>
    %687 = vector.broadcast %678 : vector<1x8x128xf32> to vector<8x8x128xf32>
    %688 = arith.mulf %686, %687 : vector<8x8x128xf32>
    %689 = vector.broadcast %676 : vector<8x1x128xf32> to vector<8x8x128xf32>
    %690 = vector.broadcast %677 : vector<1x8x128xf32> to vector<8x8x128xf32>
    %691 = arith.mulf %689, %690 : vector<8x8x128xf32>
    %692 = arith.addf %688, %691 : vector<8x8x128xf32>
    %693 = arith.addf %673, %685 : vector<8x8x128xf32>
    %694 = arith.addf %674, %692 : vector<8x8x128xf32>
    %695 = vector.extract_strided_slice %609 {offsets = [0, 4, 0], sizes = [8, 1, 128], strides = [1, 1, 1]} : vector<8x8x128xf32> to vector<8x1x128xf32>
    %696 = vector.extract_strided_slice %610 {offsets = [0, 4, 0], sizes = [8, 1, 128], strides = [1, 1, 1]} : vector<8x8x128xf32> to vector<8x1x128xf32>
    %697 = vector.extract_strided_slice %613 {offsets = [4, 0, 0], sizes = [1, 8, 128], strides = [1, 1, 1]} : vector<8x8x128xf32> to vector<1x8x128xf32>
    %698 = vector.extract_strided_slice %616 {offsets = [4, 0, 0], sizes = [1, 8, 128], strides = [1, 1, 1]} : vector<8x8x128xf32> to vector<1x8x128xf32>
    %699 = vector.broadcast %695 : vector<8x1x128xf32> to vector<8x8x128xf32>
    %700 = vector.broadcast %697 : vector<1x8x128xf32> to vector<8x8x128xf32>
    %701 = arith.mulf %699, %700 : vector<8x8x128xf32>
    %702 = vector.broadcast %696 : vector<8x1x128xf32> to vector<8x8x128xf32>
    %703 = vector.broadcast %698 : vector<1x8x128xf32> to vector<8x8x128xf32>
    %704 = arith.mulf %702, %703 : vector<8x8x128xf32>
    %705 = arith.subf %701, %704 : vector<8x8x128xf32>
    %706 = vector.broadcast %695 : vector<8x1x128xf32> to vector<8x8x128xf32>
    %707 = vector.broadcast %698 : vector<1x8x128xf32> to vector<8x8x128xf32>
    %708 = arith.mulf %706, %707 : vector<8x8x128xf32>
    %709 = vector.broadcast %696 : vector<8x1x128xf32> to vector<8x8x128xf32>
    %710 = vector.broadcast %697 : vector<1x8x128xf32> to vector<8x8x128xf32>
    %711 = arith.mulf %709, %710 : vector<8x8x128xf32>
    %712 = arith.addf %708, %711 : vector<8x8x128xf32>
    %713 = arith.addf %693, %705 : vector<8x8x128xf32>
    %714 = arith.addf %694, %712 : vector<8x8x128xf32>
    %715 = vector.extract_strided_slice %609 {offsets = [0, 5, 0], sizes = [8, 1, 128], strides = [1, 1, 1]} : vector<8x8x128xf32> to vector<8x1x128xf32>
    %716 = vector.extract_strided_slice %610 {offsets = [0, 5, 0], sizes = [8, 1, 128], strides = [1, 1, 1]} : vector<8x8x128xf32> to vector<8x1x128xf32>
    %717 = vector.extract_strided_slice %613 {offsets = [5, 0, 0], sizes = [1, 8, 128], strides = [1, 1, 1]} : vector<8x8x128xf32> to vector<1x8x128xf32>
    %718 = vector.extract_strided_slice %616 {offsets = [5, 0, 0], sizes = [1, 8, 128], strides = [1, 1, 1]} : vector<8x8x128xf32> to vector<1x8x128xf32>
    %719 = vector.broadcast %715 : vector<8x1x128xf32> to vector<8x8x128xf32>
    %720 = vector.broadcast %717 : vector<1x8x128xf32> to vector<8x8x128xf32>
    %721 = arith.mulf %719, %720 : vector<8x8x128xf32>
    %722 = vector.broadcast %716 : vector<8x1x128xf32> to vector<8x8x128xf32>
    %723 = vector.broadcast %718 : vector<1x8x128xf32> to vector<8x8x128xf32>
    %724 = arith.mulf %722, %723 : vector<8x8x128xf32>
    %725 = arith.subf %721, %724 : vector<8x8x128xf32>
    %726 = vector.broadcast %715 : vector<8x1x128xf32> to vector<8x8x128xf32>
    %727 = vector.broadcast %718 : vector<1x8x128xf32> to vector<8x8x128xf32>
    %728 = arith.mulf %726, %727 : vector<8x8x128xf32>
    %729 = vector.broadcast %716 : vector<8x1x128xf32> to vector<8x8x128xf32>
    %730 = vector.broadcast %717 : vector<1x8x128xf32> to vector<8x8x128xf32>
    %731 = arith.mulf %729, %730 : vector<8x8x128xf32>
    %732 = arith.addf %728, %731 : vector<8x8x128xf32>
    %733 = arith.addf %713, %725 : vector<8x8x128xf32>
    %734 = arith.addf %714, %732 : vector<8x8x128xf32>
    %735 = vector.extract_strided_slice %609 {offsets = [0, 6, 0], sizes = [8, 1, 128], strides = [1, 1, 1]} : vector<8x8x128xf32> to vector<8x1x128xf32>
    %736 = vector.extract_strided_slice %610 {offsets = [0, 6, 0], sizes = [8, 1, 128], strides = [1, 1, 1]} : vector<8x8x128xf32> to vector<8x1x128xf32>
    %737 = vector.extract_strided_slice %613 {offsets = [6, 0, 0], sizes = [1, 8, 128], strides = [1, 1, 1]} : vector<8x8x128xf32> to vector<1x8x128xf32>
    %738 = vector.extract_strided_slice %616 {offsets = [6, 0, 0], sizes = [1, 8, 128], strides = [1, 1, 1]} : vector<8x8x128xf32> to vector<1x8x128xf32>
    %739 = vector.broadcast %735 : vector<8x1x128xf32> to vector<8x8x128xf32>
    %740 = vector.broadcast %737 : vector<1x8x128xf32> to vector<8x8x128xf32>
    %741 = arith.mulf %739, %740 : vector<8x8x128xf32>
    %742 = vector.broadcast %736 : vector<8x1x128xf32> to vector<8x8x128xf32>
    %743 = vector.broadcast %738 : vector<1x8x128xf32> to vector<8x8x128xf32>
    %744 = arith.mulf %742, %743 : vector<8x8x128xf32>
    %745 = arith.subf %741, %744 : vector<8x8x128xf32>
    %746 = vector.broadcast %735 : vector<8x1x128xf32> to vector<8x8x128xf32>
    %747 = vector.broadcast %738 : vector<1x8x128xf32> to vector<8x8x128xf32>
    %748 = arith.mulf %746, %747 : vector<8x8x128xf32>
    %749 = vector.broadcast %736 : vector<8x1x128xf32> to vector<8x8x128xf32>
    %750 = vector.broadcast %737 : vector<1x8x128xf32> to vector<8x8x128xf32>
    %751 = arith.mulf %749, %750 : vector<8x8x128xf32>
    %752 = arith.addf %748, %751 : vector<8x8x128xf32>
    %753 = arith.addf %733, %745 : vector<8x8x128xf32>
    %754 = arith.addf %734, %752 : vector<8x8x128xf32>
    %755 = vector.extract_strided_slice %609 {offsets = [0, 7, 0], sizes = [8, 1, 128], strides = [1, 1, 1]} : vector<8x8x128xf32> to vector<8x1x128xf32>
    %756 = vector.extract_strided_slice %610 {offsets = [0, 7, 0], sizes = [8, 1, 128], strides = [1, 1, 1]} : vector<8x8x128xf32> to vector<8x1x128xf32>
    %757 = vector.extract_strided_slice %613 {offsets = [7, 0, 0], sizes = [1, 8, 128], strides = [1, 1, 1]} : vector<8x8x128xf32> to vector<1x8x128xf32>
    %758 = vector.extract_strided_slice %616 {offsets = [7, 0, 0], sizes = [1, 8, 128], strides = [1, 1, 1]} : vector<8x8x128xf32> to vector<1x8x128xf32>
    %759 = vector.broadcast %755 : vector<8x1x128xf32> to vector<8x8x128xf32>
    %760 = vector.broadcast %757 : vector<1x8x128xf32> to vector<8x8x128xf32>
    %761 = arith.mulf %759, %760 : vector<8x8x128xf32>
    %762 = vector.broadcast %756 : vector<8x1x128xf32> to vector<8x8x128xf32>
    %763 = vector.broadcast %758 : vector<1x8x128xf32> to vector<8x8x128xf32>
    %764 = arith.mulf %762, %763 : vector<8x8x128xf32>
    %765 = arith.subf %761, %764 : vector<8x8x128xf32>
    %766 = vector.broadcast %755 : vector<8x1x128xf32> to vector<8x8x128xf32>
    %767 = vector.broadcast %758 : vector<1x8x128xf32> to vector<8x8x128xf32>
    %768 = arith.mulf %766, %767 : vector<8x8x128xf32>
    %769 = vector.broadcast %756 : vector<8x1x128xf32> to vector<8x8x128xf32>
    %770 = vector.broadcast %757 : vector<1x8x128xf32> to vector<8x8x128xf32>
    %771 = arith.mulf %769, %770 : vector<8x8x128xf32>
    %772 = arith.addf %768, %771 : vector<8x8x128xf32>
    %773 = arith.addf %753, %765 : vector<8x8x128xf32>
    %774 = arith.addf %754, %772 : vector<8x8x128xf32>
    %775 = arith.addf %425, %773 : vector<8x8x128xf32>
    %776 = arith.addf %433, %774 : vector<8x8x128xf32>
    %777 = vector.extract_strided_slice %609 {offsets = [0, 0, 0], sizes = [8, 1, 128], strides = [1, 1, 1]} : vector<8x8x128xf32> to vector<8x1x128xf32>
    %778 = vector.extract_strided_slice %610 {offsets = [0, 0, 0], sizes = [8, 1, 128], strides = [1, 1, 1]} : vector<8x8x128xf32> to vector<8x1x128xf32>
    %779 = vector.extract_strided_slice %775 {offsets = [0, 0, 0], sizes = [1, 8, 128], strides = [1, 1, 1]} : vector<8x8x128xf32> to vector<1x8x128xf32>
    %780 = vector.extract_strided_slice %776 {offsets = [0, 0, 0], sizes = [1, 8, 128], strides = [1, 1, 1]} : vector<8x8x128xf32> to vector<1x8x128xf32>
    %781 = vector.broadcast %777 : vector<8x1x128xf32> to vector<8x8x128xf32>
    %782 = vector.broadcast %779 : vector<1x8x128xf32> to vector<8x8x128xf32>
    %783 = arith.mulf %781, %782 : vector<8x8x128xf32>
    %784 = vector.broadcast %778 : vector<8x1x128xf32> to vector<8x8x128xf32>
    %785 = vector.broadcast %780 : vector<1x8x128xf32> to vector<8x8x128xf32>
    %786 = arith.mulf %784, %785 : vector<8x8x128xf32>
    %787 = arith.subf %783, %786 : vector<8x8x128xf32>
    %788 = vector.broadcast %777 : vector<8x1x128xf32> to vector<8x8x128xf32>
    %789 = vector.broadcast %780 : vector<1x8x128xf32> to vector<8x8x128xf32>
    %790 = arith.mulf %788, %789 : vector<8x8x128xf32>
    %791 = vector.broadcast %778 : vector<8x1x128xf32> to vector<8x8x128xf32>
    %792 = vector.broadcast %779 : vector<1x8x128xf32> to vector<8x8x128xf32>
    %793 = arith.mulf %791, %792 : vector<8x8x128xf32>
    %794 = arith.addf %790, %793 : vector<8x8x128xf32>
    %795 = vector.extract_strided_slice %609 {offsets = [0, 1, 0], sizes = [8, 1, 128], strides = [1, 1, 1]} : vector<8x8x128xf32> to vector<8x1x128xf32>
    %796 = vector.extract_strided_slice %610 {offsets = [0, 1, 0], sizes = [8, 1, 128], strides = [1, 1, 1]} : vector<8x8x128xf32> to vector<8x1x128xf32>
    %797 = vector.extract_strided_slice %775 {offsets = [1, 0, 0], sizes = [1, 8, 128], strides = [1, 1, 1]} : vector<8x8x128xf32> to vector<1x8x128xf32>
    %798 = vector.extract_strided_slice %776 {offsets = [1, 0, 0], sizes = [1, 8, 128], strides = [1, 1, 1]} : vector<8x8x128xf32> to vector<1x8x128xf32>
    %799 = vector.broadcast %795 : vector<8x1x128xf32> to vector<8x8x128xf32>
    %800 = vector.broadcast %797 : vector<1x8x128xf32> to vector<8x8x128xf32>
    %801 = arith.mulf %799, %800 : vector<8x8x128xf32>
    %802 = vector.broadcast %796 : vector<8x1x128xf32> to vector<8x8x128xf32>
    %803 = vector.broadcast %798 : vector<1x8x128xf32> to vector<8x8x128xf32>
    %804 = arith.mulf %802, %803 : vector<8x8x128xf32>
    %805 = arith.subf %801, %804 : vector<8x8x128xf32>
    %806 = vector.broadcast %795 : vector<8x1x128xf32> to vector<8x8x128xf32>
    %807 = vector.broadcast %798 : vector<1x8x128xf32> to vector<8x8x128xf32>
    %808 = arith.mulf %806, %807 : vector<8x8x128xf32>
    %809 = vector.broadcast %796 : vector<8x1x128xf32> to vector<8x8x128xf32>
    %810 = vector.broadcast %797 : vector<1x8x128xf32> to vector<8x8x128xf32>
    %811 = arith.mulf %809, %810 : vector<8x8x128xf32>
    %812 = arith.addf %808, %811 : vector<8x8x128xf32>
    %813 = arith.addf %787, %805 : vector<8x8x128xf32>
    %814 = arith.addf %794, %812 : vector<8x8x128xf32>
    %815 = vector.extract_strided_slice %609 {offsets = [0, 2, 0], sizes = [8, 1, 128], strides = [1, 1, 1]} : vector<8x8x128xf32> to vector<8x1x128xf32>
    %816 = vector.extract_strided_slice %610 {offsets = [0, 2, 0], sizes = [8, 1, 128], strides = [1, 1, 1]} : vector<8x8x128xf32> to vector<8x1x128xf32>
    %817 = vector.extract_strided_slice %775 {offsets = [2, 0, 0], sizes = [1, 8, 128], strides = [1, 1, 1]} : vector<8x8x128xf32> to vector<1x8x128xf32>
    %818 = vector.extract_strided_slice %776 {offsets = [2, 0, 0], sizes = [1, 8, 128], strides = [1, 1, 1]} : vector<8x8x128xf32> to vector<1x8x128xf32>
    %819 = vector.broadcast %815 : vector<8x1x128xf32> to vector<8x8x128xf32>
    %820 = vector.broadcast %817 : vector<1x8x128xf32> to vector<8x8x128xf32>
    %821 = arith.mulf %819, %820 : vector<8x8x128xf32>
    %822 = vector.broadcast %816 : vector<8x1x128xf32> to vector<8x8x128xf32>
    %823 = vector.broadcast %818 : vector<1x8x128xf32> to vector<8x8x128xf32>
    %824 = arith.mulf %822, %823 : vector<8x8x128xf32>
    %825 = arith.subf %821, %824 : vector<8x8x128xf32>
    %826 = vector.broadcast %815 : vector<8x1x128xf32> to vector<8x8x128xf32>
    %827 = vector.broadcast %818 : vector<1x8x128xf32> to vector<8x8x128xf32>
    %828 = arith.mulf %826, %827 : vector<8x8x128xf32>
    %829 = vector.broadcast %816 : vector<8x1x128xf32> to vector<8x8x128xf32>
    %830 = vector.broadcast %817 : vector<1x8x128xf32> to vector<8x8x128xf32>
    %831 = arith.mulf %829, %830 : vector<8x8x128xf32>
    %832 = arith.addf %828, %831 : vector<8x8x128xf32>
    %833 = arith.addf %813, %825 : vector<8x8x128xf32>
    %834 = arith.addf %814, %832 : vector<8x8x128xf32>
    %835 = vector.extract_strided_slice %609 {offsets = [0, 3, 0], sizes = [8, 1, 128], strides = [1, 1, 1]} : vector<8x8x128xf32> to vector<8x1x128xf32>
    %836 = vector.extract_strided_slice %610 {offsets = [0, 3, 0], sizes = [8, 1, 128], strides = [1, 1, 1]} : vector<8x8x128xf32> to vector<8x1x128xf32>
    %837 = vector.extract_strided_slice %775 {offsets = [3, 0, 0], sizes = [1, 8, 128], strides = [1, 1, 1]} : vector<8x8x128xf32> to vector<1x8x128xf32>
    %838 = vector.extract_strided_slice %776 {offsets = [3, 0, 0], sizes = [1, 8, 128], strides = [1, 1, 1]} : vector<8x8x128xf32> to vector<1x8x128xf32>
    %839 = vector.broadcast %835 : vector<8x1x128xf32> to vector<8x8x128xf32>
    %840 = vector.broadcast %837 : vector<1x8x128xf32> to vector<8x8x128xf32>
    %841 = arith.mulf %839, %840 : vector<8x8x128xf32>
    %842 = vector.broadcast %836 : vector<8x1x128xf32> to vector<8x8x128xf32>
    %843 = vector.broadcast %838 : vector<1x8x128xf32> to vector<8x8x128xf32>
    %844 = arith.mulf %842, %843 : vector<8x8x128xf32>
    %845 = arith.subf %841, %844 : vector<8x8x128xf32>
    %846 = vector.broadcast %835 : vector<8x1x128xf32> to vector<8x8x128xf32>
    %847 = vector.broadcast %838 : vector<1x8x128xf32> to vector<8x8x128xf32>
    %848 = arith.mulf %846, %847 : vector<8x8x128xf32>
    %849 = vector.broadcast %836 : vector<8x1x128xf32> to vector<8x8x128xf32>
    %850 = vector.broadcast %837 : vector<1x8x128xf32> to vector<8x8x128xf32>
    %851 = arith.mulf %849, %850 : vector<8x8x128xf32>
    %852 = arith.addf %848, %851 : vector<8x8x128xf32>
    %853 = arith.addf %833, %845 : vector<8x8x128xf32>
    %854 = arith.addf %834, %852 : vector<8x8x128xf32>
    %855 = vector.extract_strided_slice %609 {offsets = [0, 4, 0], sizes = [8, 1, 128], strides = [1, 1, 1]} : vector<8x8x128xf32> to vector<8x1x128xf32>
    %856 = vector.extract_strided_slice %610 {offsets = [0, 4, 0], sizes = [8, 1, 128], strides = [1, 1, 1]} : vector<8x8x128xf32> to vector<8x1x128xf32>
    %857 = vector.extract_strided_slice %775 {offsets = [4, 0, 0], sizes = [1, 8, 128], strides = [1, 1, 1]} : vector<8x8x128xf32> to vector<1x8x128xf32>
    %858 = vector.extract_strided_slice %776 {offsets = [4, 0, 0], sizes = [1, 8, 128], strides = [1, 1, 1]} : vector<8x8x128xf32> to vector<1x8x128xf32>
    %859 = vector.broadcast %855 : vector<8x1x128xf32> to vector<8x8x128xf32>
    %860 = vector.broadcast %857 : vector<1x8x128xf32> to vector<8x8x128xf32>
    %861 = arith.mulf %859, %860 : vector<8x8x128xf32>
    %862 = vector.broadcast %856 : vector<8x1x128xf32> to vector<8x8x128xf32>
    %863 = vector.broadcast %858 : vector<1x8x128xf32> to vector<8x8x128xf32>
    %864 = arith.mulf %862, %863 : vector<8x8x128xf32>
    %865 = arith.subf %861, %864 : vector<8x8x128xf32>
    %866 = vector.broadcast %855 : vector<8x1x128xf32> to vector<8x8x128xf32>
    %867 = vector.broadcast %858 : vector<1x8x128xf32> to vector<8x8x128xf32>
    %868 = arith.mulf %866, %867 : vector<8x8x128xf32>
    %869 = vector.broadcast %856 : vector<8x1x128xf32> to vector<8x8x128xf32>
    %870 = vector.broadcast %857 : vector<1x8x128xf32> to vector<8x8x128xf32>
    %871 = arith.mulf %869, %870 : vector<8x8x128xf32>
    %872 = arith.addf %868, %871 : vector<8x8x128xf32>
    %873 = arith.addf %853, %865 : vector<8x8x128xf32>
    %874 = arith.addf %854, %872 : vector<8x8x128xf32>
    %875 = vector.extract_strided_slice %609 {offsets = [0, 5, 0], sizes = [8, 1, 128], strides = [1, 1, 1]} : vector<8x8x128xf32> to vector<8x1x128xf32>
    %876 = vector.extract_strided_slice %610 {offsets = [0, 5, 0], sizes = [8, 1, 128], strides = [1, 1, 1]} : vector<8x8x128xf32> to vector<8x1x128xf32>
    %877 = vector.extract_strided_slice %775 {offsets = [5, 0, 0], sizes = [1, 8, 128], strides = [1, 1, 1]} : vector<8x8x128xf32> to vector<1x8x128xf32>
    %878 = vector.extract_strided_slice %776 {offsets = [5, 0, 0], sizes = [1, 8, 128], strides = [1, 1, 1]} : vector<8x8x128xf32> to vector<1x8x128xf32>
    %879 = vector.broadcast %875 : vector<8x1x128xf32> to vector<8x8x128xf32>
    %880 = vector.broadcast %877 : vector<1x8x128xf32> to vector<8x8x128xf32>
    %881 = arith.mulf %879, %880 : vector<8x8x128xf32>
    %882 = vector.broadcast %876 : vector<8x1x128xf32> to vector<8x8x128xf32>
    %883 = vector.broadcast %878 : vector<1x8x128xf32> to vector<8x8x128xf32>
    %884 = arith.mulf %882, %883 : vector<8x8x128xf32>
    %885 = arith.subf %881, %884 : vector<8x8x128xf32>
    %886 = vector.broadcast %875 : vector<8x1x128xf32> to vector<8x8x128xf32>
    %887 = vector.broadcast %878 : vector<1x8x128xf32> to vector<8x8x128xf32>
    %888 = arith.mulf %886, %887 : vector<8x8x128xf32>
    %889 = vector.broadcast %876 : vector<8x1x128xf32> to vector<8x8x128xf32>
    %890 = vector.broadcast %877 : vector<1x8x128xf32> to vector<8x8x128xf32>
    %891 = arith.mulf %889, %890 : vector<8x8x128xf32>
    %892 = arith.addf %888, %891 : vector<8x8x128xf32>
    %893 = arith.addf %873, %885 : vector<8x8x128xf32>
    %894 = arith.addf %874, %892 : vector<8x8x128xf32>
    %895 = vector.extract_strided_slice %609 {offsets = [0, 6, 0], sizes = [8, 1, 128], strides = [1, 1, 1]} : vector<8x8x128xf32> to vector<8x1x128xf32>
    %896 = vector.extract_strided_slice %610 {offsets = [0, 6, 0], sizes = [8, 1, 128], strides = [1, 1, 1]} : vector<8x8x128xf32> to vector<8x1x128xf32>
    %897 = vector.extract_strided_slice %775 {offsets = [6, 0, 0], sizes = [1, 8, 128], strides = [1, 1, 1]} : vector<8x8x128xf32> to vector<1x8x128xf32>
    %898 = vector.extract_strided_slice %776 {offsets = [6, 0, 0], sizes = [1, 8, 128], strides = [1, 1, 1]} : vector<8x8x128xf32> to vector<1x8x128xf32>
    %899 = vector.broadcast %895 : vector<8x1x128xf32> to vector<8x8x128xf32>
    %900 = vector.broadcast %897 : vector<1x8x128xf32> to vector<8x8x128xf32>
    %901 = arith.mulf %899, %900 : vector<8x8x128xf32>
    %902 = vector.broadcast %896 : vector<8x1x128xf32> to vector<8x8x128xf32>
    %903 = vector.broadcast %898 : vector<1x8x128xf32> to vector<8x8x128xf32>
    %904 = arith.mulf %902, %903 : vector<8x8x128xf32>
    %905 = arith.subf %901, %904 : vector<8x8x128xf32>
    %906 = vector.broadcast %895 : vector<8x1x128xf32> to vector<8x8x128xf32>
    %907 = vector.broadcast %898 : vector<1x8x128xf32> to vector<8x8x128xf32>
    %908 = arith.mulf %906, %907 : vector<8x8x128xf32>
    %909 = vector.broadcast %896 : vector<8x1x128xf32> to vector<8x8x128xf32>
    %910 = vector.broadcast %897 : vector<1x8x128xf32> to vector<8x8x128xf32>
    %911 = arith.mulf %909, %910 : vector<8x8x128xf32>
    %912 = arith.addf %908, %911 : vector<8x8x128xf32>
    %913 = arith.addf %893, %905 : vector<8x8x128xf32>
    %914 = arith.addf %894, %912 : vector<8x8x128xf32>
    %915 = vector.extract_strided_slice %609 {offsets = [0, 7, 0], sizes = [8, 1, 128], strides = [1, 1, 1]} : vector<8x8x128xf32> to vector<8x1x128xf32>
    %916 = vector.extract_strided_slice %610 {offsets = [0, 7, 0], sizes = [8, 1, 128], strides = [1, 1, 1]} : vector<8x8x128xf32> to vector<8x1x128xf32>
    %917 = vector.extract_strided_slice %775 {offsets = [7, 0, 0], sizes = [1, 8, 128], strides = [1, 1, 1]} : vector<8x8x128xf32> to vector<1x8x128xf32>
    %918 = vector.extract_strided_slice %776 {offsets = [7, 0, 0], sizes = [1, 8, 128], strides = [1, 1, 1]} : vector<8x8x128xf32> to vector<1x8x128xf32>
    %919 = vector.broadcast %915 : vector<8x1x128xf32> to vector<8x8x128xf32>
    %920 = vector.broadcast %917 : vector<1x8x128xf32> to vector<8x8x128xf32>
    %921 = arith.mulf %919, %920 : vector<8x8x128xf32>
    %922 = vector.broadcast %916 : vector<8x1x128xf32> to vector<8x8x128xf32>
    %923 = vector.broadcast %918 : vector<1x8x128xf32> to vector<8x8x128xf32>
    %924 = arith.mulf %922, %923 : vector<8x8x128xf32>
    %925 = arith.subf %921, %924 : vector<8x8x128xf32>
    %926 = vector.broadcast %915 : vector<8x1x128xf32> to vector<8x8x128xf32>
    %927 = vector.broadcast %918 : vector<1x8x128xf32> to vector<8x8x128xf32>
    %928 = arith.mulf %926, %927 : vector<8x8x128xf32>
    %929 = vector.broadcast %916 : vector<8x1x128xf32> to vector<8x8x128xf32>
    %930 = vector.broadcast %917 : vector<1x8x128xf32> to vector<8x8x128xf32>
    %931 = arith.mulf %929, %930 : vector<8x8x128xf32>
    %932 = arith.addf %928, %931 : vector<8x8x128xf32>
    %933 = arith.addf %913, %925 : vector<8x8x128xf32>
    %934 = arith.addf %914, %932 : vector<8x8x128xf32>
    %935 = arith.addf %406, %933 : vector<8x8x128xf32>
    %936 = arith.addf %414, %934 : vector<8x8x128xf32>
    %c0_i32 = arith.constant 0 : i32
    %937 = arith.subi %56, %c0_i32 : i32
    %938 = arith.addi %c0_i32, %937 : i32
    %c1_i32 = arith.constant 1 : i32
    %939:2 = scf.for %arg6 = %c0_i32 to %938 step %c1_i32 iter_args(%arg7 = %935, %arg8 = %936) -> (vector<8x8x128xf32>, vector<8x8x128xf32>)  : i32 {
      %946 = vector.extract_strided_slice %arg7 {offsets = [0, 0, 0], sizes = [8, 1, 128], strides = [1, 1, 1]} : vector<8x8x128xf32> to vector<8x1x128xf32>
      %947 = vector.extract_strided_slice %arg8 {offsets = [0, 0, 0], sizes = [8, 1, 128], strides = [1, 1, 1]} : vector<8x8x128xf32> to vector<8x1x128xf32>
      %948 = vector.extract_strided_slice %arg7 {offsets = [0, 0, 0], sizes = [1, 8, 128], strides = [1, 1, 1]} : vector<8x8x128xf32> to vector<1x8x128xf32>
      %949 = vector.extract_strided_slice %arg8 {offsets = [0, 0, 0], sizes = [1, 8, 128], strides = [1, 1, 1]} : vector<8x8x128xf32> to vector<1x8x128xf32>
      %950 = vector.broadcast %946 : vector<8x1x128xf32> to vector<8x8x128xf32>
      %951 = vector.broadcast %948 : vector<1x8x128xf32> to vector<8x8x128xf32>
      %952 = arith.mulf %950, %951 : vector<8x8x128xf32>
      %953 = vector.broadcast %947 : vector<8x1x128xf32> to vector<8x8x128xf32>
      %954 = vector.broadcast %949 : vector<1x8x128xf32> to vector<8x8x128xf32>
      %955 = arith.mulf %953, %954 : vector<8x8x128xf32>
      %956 = arith.subf %952, %955 : vector<8x8x128xf32>
      %957 = vector.broadcast %946 : vector<8x1x128xf32> to vector<8x8x128xf32>
      %958 = vector.broadcast %949 : vector<1x8x128xf32> to vector<8x8x128xf32>
      %959 = arith.mulf %957, %958 : vector<8x8x128xf32>
      %960 = vector.broadcast %947 : vector<8x1x128xf32> to vector<8x8x128xf32>
      %961 = vector.broadcast %948 : vector<1x8x128xf32> to vector<8x8x128xf32>
      %962 = arith.mulf %960, %961 : vector<8x8x128xf32>
      %963 = arith.addf %959, %962 : vector<8x8x128xf32>
      %964 = vector.extract_strided_slice %arg7 {offsets = [0, 1, 0], sizes = [8, 1, 128], strides = [1, 1, 1]} : vector<8x8x128xf32> to vector<8x1x128xf32>
      %965 = vector.extract_strided_slice %arg8 {offsets = [0, 1, 0], sizes = [8, 1, 128], strides = [1, 1, 1]} : vector<8x8x128xf32> to vector<8x1x128xf32>
      %966 = vector.extract_strided_slice %arg7 {offsets = [1, 0, 0], sizes = [1, 8, 128], strides = [1, 1, 1]} : vector<8x8x128xf32> to vector<1x8x128xf32>
      %967 = vector.extract_strided_slice %arg8 {offsets = [1, 0, 0], sizes = [1, 8, 128], strides = [1, 1, 1]} : vector<8x8x128xf32> to vector<1x8x128xf32>
      %968 = vector.broadcast %964 : vector<8x1x128xf32> to vector<8x8x128xf32>
      %969 = vector.broadcast %966 : vector<1x8x128xf32> to vector<8x8x128xf32>
      %970 = arith.mulf %968, %969 : vector<8x8x128xf32>
      %971 = vector.broadcast %965 : vector<8x1x128xf32> to vector<8x8x128xf32>
      %972 = vector.broadcast %967 : vector<1x8x128xf32> to vector<8x8x128xf32>
      %973 = arith.mulf %971, %972 : vector<8x8x128xf32>
      %974 = arith.subf %970, %973 : vector<8x8x128xf32>
      %975 = vector.broadcast %964 : vector<8x1x128xf32> to vector<8x8x128xf32>
      %976 = vector.broadcast %967 : vector<1x8x128xf32> to vector<8x8x128xf32>
      %977 = arith.mulf %975, %976 : vector<8x8x128xf32>
      %978 = vector.broadcast %965 : vector<8x1x128xf32> to vector<8x8x128xf32>
      %979 = vector.broadcast %966 : vector<1x8x128xf32> to vector<8x8x128xf32>
      %980 = arith.mulf %978, %979 : vector<8x8x128xf32>
      %981 = arith.addf %977, %980 : vector<8x8x128xf32>
      %982 = arith.addf %956, %974 : vector<8x8x128xf32>
      %983 = arith.addf %963, %981 : vector<8x8x128xf32>
      %984 = vector.extract_strided_slice %arg7 {offsets = [0, 2, 0], sizes = [8, 1, 128], strides = [1, 1, 1]} : vector<8x8x128xf32> to vector<8x1x128xf32>
      %985 = vector.extract_strided_slice %arg8 {offsets = [0, 2, 0], sizes = [8, 1, 128], strides = [1, 1, 1]} : vector<8x8x128xf32> to vector<8x1x128xf32>
      %986 = vector.extract_strided_slice %arg7 {offsets = [2, 0, 0], sizes = [1, 8, 128], strides = [1, 1, 1]} : vector<8x8x128xf32> to vector<1x8x128xf32>
      %987 = vector.extract_strided_slice %arg8 {offsets = [2, 0, 0], sizes = [1, 8, 128], strides = [1, 1, 1]} : vector<8x8x128xf32> to vector<1x8x128xf32>
      %988 = vector.broadcast %984 : vector<8x1x128xf32> to vector<8x8x128xf32>
      %989 = vector.broadcast %986 : vector<1x8x128xf32> to vector<8x8x128xf32>
      %990 = arith.mulf %988, %989 : vector<8x8x128xf32>
      %991 = vector.broadcast %985 : vector<8x1x128xf32> to vector<8x8x128xf32>
      %992 = vector.broadcast %987 : vector<1x8x128xf32> to vector<8x8x128xf32>
      %993 = arith.mulf %991, %992 : vector<8x8x128xf32>
      %994 = arith.subf %990, %993 : vector<8x8x128xf32>
      %995 = vector.broadcast %984 : vector<8x1x128xf32> to vector<8x8x128xf32>
      %996 = vector.broadcast %987 : vector<1x8x128xf32> to vector<8x8x128xf32>
      %997 = arith.mulf %995, %996 : vector<8x8x128xf32>
      %998 = vector.broadcast %985 : vector<8x1x128xf32> to vector<8x8x128xf32>
      %999 = vector.broadcast %986 : vector<1x8x128xf32> to vector<8x8x128xf32>
      %1000 = arith.mulf %998, %999 : vector<8x8x128xf32>
      %1001 = arith.addf %997, %1000 : vector<8x8x128xf32>
      %1002 = arith.addf %982, %994 : vector<8x8x128xf32>
      %1003 = arith.addf %983, %1001 : vector<8x8x128xf32>
      %1004 = vector.extract_strided_slice %arg7 {offsets = [0, 3, 0], sizes = [8, 1, 128], strides = [1, 1, 1]} : vector<8x8x128xf32> to vector<8x1x128xf32>
      %1005 = vector.extract_strided_slice %arg8 {offsets = [0, 3, 0], sizes = [8, 1, 128], strides = [1, 1, 1]} : vector<8x8x128xf32> to vector<8x1x128xf32>
      %1006 = vector.extract_strided_slice %arg7 {offsets = [3, 0, 0], sizes = [1, 8, 128], strides = [1, 1, 1]} : vector<8x8x128xf32> to vector<1x8x128xf32>
      %1007 = vector.extract_strided_slice %arg8 {offsets = [3, 0, 0], sizes = [1, 8, 128], strides = [1, 1, 1]} : vector<8x8x128xf32> to vector<1x8x128xf32>
      %1008 = vector.broadcast %1004 : vector<8x1x128xf32> to vector<8x8x128xf32>
      %1009 = vector.broadcast %1006 : vector<1x8x128xf32> to vector<8x8x128xf32>
      %1010 = arith.mulf %1008, %1009 : vector<8x8x128xf32>
      %1011 = vector.broadcast %1005 : vector<8x1x128xf32> to vector<8x8x128xf32>
      %1012 = vector.broadcast %1007 : vector<1x8x128xf32> to vector<8x8x128xf32>
      %1013 = arith.mulf %1011, %1012 : vector<8x8x128xf32>
      %1014 = arith.subf %1010, %1013 : vector<8x8x128xf32>
      %1015 = vector.broadcast %1004 : vector<8x1x128xf32> to vector<8x8x128xf32>
      %1016 = vector.broadcast %1007 : vector<1x8x128xf32> to vector<8x8x128xf32>
      %1017 = arith.mulf %1015, %1016 : vector<8x8x128xf32>
      %1018 = vector.broadcast %1005 : vector<8x1x128xf32> to vector<8x8x128xf32>
      %1019 = vector.broadcast %1006 : vector<1x8x128xf32> to vector<8x8x128xf32>
      %1020 = arith.mulf %1018, %1019 : vector<8x8x128xf32>
      %1021 = arith.addf %1017, %1020 : vector<8x8x128xf32>
      %1022 = arith.addf %1002, %1014 : vector<8x8x128xf32>
      %1023 = arith.addf %1003, %1021 : vector<8x8x128xf32>
      %1024 = vector.extract_strided_slice %arg7 {offsets = [0, 4, 0], sizes = [8, 1, 128], strides = [1, 1, 1]} : vector<8x8x128xf32> to vector<8x1x128xf32>
      %1025 = vector.extract_strided_slice %arg8 {offsets = [0, 4, 0], sizes = [8, 1, 128], strides = [1, 1, 1]} : vector<8x8x128xf32> to vector<8x1x128xf32>
      %1026 = vector.extract_strided_slice %arg7 {offsets = [4, 0, 0], sizes = [1, 8, 128], strides = [1, 1, 1]} : vector<8x8x128xf32> to vector<1x8x128xf32>
      %1027 = vector.extract_strided_slice %arg8 {offsets = [4, 0, 0], sizes = [1, 8, 128], strides = [1, 1, 1]} : vector<8x8x128xf32> to vector<1x8x128xf32>
      %1028 = vector.broadcast %1024 : vector<8x1x128xf32> to vector<8x8x128xf32>
      %1029 = vector.broadcast %1026 : vector<1x8x128xf32> to vector<8x8x128xf32>
      %1030 = arith.mulf %1028, %1029 : vector<8x8x128xf32>
      %1031 = vector.broadcast %1025 : vector<8x1x128xf32> to vector<8x8x128xf32>
      %1032 = vector.broadcast %1027 : vector<1x8x128xf32> to vector<8x8x128xf32>
      %1033 = arith.mulf %1031, %1032 : vector<8x8x128xf32>
      %1034 = arith.subf %1030, %1033 : vector<8x8x128xf32>
      %1035 = vector.broadcast %1024 : vector<8x1x128xf32> to vector<8x8x128xf32>
      %1036 = vector.broadcast %1027 : vector<1x8x128xf32> to vector<8x8x128xf32>
      %1037 = arith.mulf %1035, %1036 : vector<8x8x128xf32>
      %1038 = vector.broadcast %1025 : vector<8x1x128xf32> to vector<8x8x128xf32>
      %1039 = vector.broadcast %1026 : vector<1x8x128xf32> to vector<8x8x128xf32>
      %1040 = arith.mulf %1038, %1039 : vector<8x8x128xf32>
      %1041 = arith.addf %1037, %1040 : vector<8x8x128xf32>
      %1042 = arith.addf %1022, %1034 : vector<8x8x128xf32>
      %1043 = arith.addf %1023, %1041 : vector<8x8x128xf32>
      %1044 = vector.extract_strided_slice %arg7 {offsets = [0, 5, 0], sizes = [8, 1, 128], strides = [1, 1, 1]} : vector<8x8x128xf32> to vector<8x1x128xf32>
      %1045 = vector.extract_strided_slice %arg8 {offsets = [0, 5, 0], sizes = [8, 1, 128], strides = [1, 1, 1]} : vector<8x8x128xf32> to vector<8x1x128xf32>
      %1046 = vector.extract_strided_slice %arg7 {offsets = [5, 0, 0], sizes = [1, 8, 128], strides = [1, 1, 1]} : vector<8x8x128xf32> to vector<1x8x128xf32>
      %1047 = vector.extract_strided_slice %arg8 {offsets = [5, 0, 0], sizes = [1, 8, 128], strides = [1, 1, 1]} : vector<8x8x128xf32> to vector<1x8x128xf32>
      %1048 = vector.broadcast %1044 : vector<8x1x128xf32> to vector<8x8x128xf32>
      %1049 = vector.broadcast %1046 : vector<1x8x128xf32> to vector<8x8x128xf32>
      %1050 = arith.mulf %1048, %1049 : vector<8x8x128xf32>
      %1051 = vector.broadcast %1045 : vector<8x1x128xf32> to vector<8x8x128xf32>
      %1052 = vector.broadcast %1047 : vector<1x8x128xf32> to vector<8x8x128xf32>
      %1053 = arith.mulf %1051, %1052 : vector<8x8x128xf32>
      %1054 = arith.subf %1050, %1053 : vector<8x8x128xf32>
      %1055 = vector.broadcast %1044 : vector<8x1x128xf32> to vector<8x8x128xf32>
      %1056 = vector.broadcast %1047 : vector<1x8x128xf32> to vector<8x8x128xf32>
      %1057 = arith.mulf %1055, %1056 : vector<8x8x128xf32>
      %1058 = vector.broadcast %1045 : vector<8x1x128xf32> to vector<8x8x128xf32>
      %1059 = vector.broadcast %1046 : vector<1x8x128xf32> to vector<8x8x128xf32>
      %1060 = arith.mulf %1058, %1059 : vector<8x8x128xf32>
      %1061 = arith.addf %1057, %1060 : vector<8x8x128xf32>
      %1062 = arith.addf %1042, %1054 : vector<8x8x128xf32>
      %1063 = arith.addf %1043, %1061 : vector<8x8x128xf32>
      %1064 = vector.extract_strided_slice %arg7 {offsets = [0, 6, 0], sizes = [8, 1, 128], strides = [1, 1, 1]} : vector<8x8x128xf32> to vector<8x1x128xf32>
      %1065 = vector.extract_strided_slice %arg8 {offsets = [0, 6, 0], sizes = [8, 1, 128], strides = [1, 1, 1]} : vector<8x8x128xf32> to vector<8x1x128xf32>
      %1066 = vector.extract_strided_slice %arg7 {offsets = [6, 0, 0], sizes = [1, 8, 128], strides = [1, 1, 1]} : vector<8x8x128xf32> to vector<1x8x128xf32>
      %1067 = vector.extract_strided_slice %arg8 {offsets = [6, 0, 0], sizes = [1, 8, 128], strides = [1, 1, 1]} : vector<8x8x128xf32> to vector<1x8x128xf32>
      %1068 = vector.broadcast %1064 : vector<8x1x128xf32> to vector<8x8x128xf32>
      %1069 = vector.broadcast %1066 : vector<1x8x128xf32> to vector<8x8x128xf32>
      %1070 = arith.mulf %1068, %1069 : vector<8x8x128xf32>
      %1071 = vector.broadcast %1065 : vector<8x1x128xf32> to vector<8x8x128xf32>
      %1072 = vector.broadcast %1067 : vector<1x8x128xf32> to vector<8x8x128xf32>
      %1073 = arith.mulf %1071, %1072 : vector<8x8x128xf32>
      %1074 = arith.subf %1070, %1073 : vector<8x8x128xf32>
      %1075 = vector.broadcast %1064 : vector<8x1x128xf32> to vector<8x8x128xf32>
      %1076 = vector.broadcast %1067 : vector<1x8x128xf32> to vector<8x8x128xf32>
      %1077 = arith.mulf %1075, %1076 : vector<8x8x128xf32>
      %1078 = vector.broadcast %1065 : vector<8x1x128xf32> to vector<8x8x128xf32>
      %1079 = vector.broadcast %1066 : vector<1x8x128xf32> to vector<8x8x128xf32>
      %1080 = arith.mulf %1078, %1079 : vector<8x8x128xf32>
      %1081 = arith.addf %1077, %1080 : vector<8x8x128xf32>
      %1082 = arith.addf %1062, %1074 : vector<8x8x128xf32>
      %1083 = arith.addf %1063, %1081 : vector<8x8x128xf32>
      %1084 = vector.extract_strided_slice %arg7 {offsets = [0, 7, 0], sizes = [8, 1, 128], strides = [1, 1, 1]} : vector<8x8x128xf32> to vector<8x1x128xf32>
      %1085 = vector.extract_strided_slice %arg8 {offsets = [0, 7, 0], sizes = [8, 1, 128], strides = [1, 1, 1]} : vector<8x8x128xf32> to vector<8x1x128xf32>
      %1086 = vector.extract_strided_slice %arg7 {offsets = [7, 0, 0], sizes = [1, 8, 128], strides = [1, 1, 1]} : vector<8x8x128xf32> to vector<1x8x128xf32>
      %1087 = vector.extract_strided_slice %arg8 {offsets = [7, 0, 0], sizes = [1, 8, 128], strides = [1, 1, 1]} : vector<8x8x128xf32> to vector<1x8x128xf32>
      %1088 = vector.broadcast %1084 : vector<8x1x128xf32> to vector<8x8x128xf32>
      %1089 = vector.broadcast %1086 : vector<1x8x128xf32> to vector<8x8x128xf32>
      %1090 = arith.mulf %1088, %1089 : vector<8x8x128xf32>
      %1091 = vector.broadcast %1085 : vector<8x1x128xf32> to vector<8x8x128xf32>
      %1092 = vector.broadcast %1087 : vector<1x8x128xf32> to vector<8x8x128xf32>
      %1093 = arith.mulf %1091, %1092 : vector<8x8x128xf32>
      %1094 = arith.subf %1090, %1093 : vector<8x8x128xf32>
      %1095 = vector.broadcast %1084 : vector<8x1x128xf32> to vector<8x8x128xf32>
      %1096 = vector.broadcast %1087 : vector<1x8x128xf32> to vector<8x8x128xf32>
      %1097 = arith.mulf %1095, %1096 : vector<8x8x128xf32>
      %1098 = vector.broadcast %1085 : vector<8x1x128xf32> to vector<8x8x128xf32>
      %1099 = vector.broadcast %1086 : vector<1x8x128xf32> to vector<8x8x128xf32>
      %1100 = arith.mulf %1098, %1099 : vector<8x8x128xf32>
      %1101 = arith.addf %1097, %1100 : vector<8x8x128xf32>
      %1102 = arith.addf %1082, %1094 : vector<8x8x128xf32>
      %1103 = arith.addf %1083, %1101 : vector<8x8x128xf32>
      %1104 = arith.sitofp %arg6 : i32 to f32
      %1105 = vector.broadcast %1104 : f32 to vector<1x128xf32>
      %1106 = arith.cmpf olt, %1105, %70 : vector<1x128xf32>
      %1107 = vector.shape_cast %1106 : vector<1x128xi1> to vector<1x1x128xi1>
      %1108 = vector.shape_cast %1107 : vector<1x1x128xi1> to vector<1x1x128xi1>
      %1109 = vector.broadcast %1108 : vector<1x1x128xi1> to vector<8x8x128xi1>
      %1110 = arith.select %1109, %1102, %arg7 : vector<8x8x128xi1>, vector<8x8x128xf32>
      %1111 = vector.shape_cast %1107 : vector<1x1x128xi1> to vector<1x1x128xi1>
      %1112 = vector.broadcast %1111 : vector<1x1x128xi1> to vector<8x8x128xi1>
      %1113 = arith.select %1112, %1103, %arg8 : vector<8x8x128xi1>, vector<8x8x128xf32>
      scf.yield %1110, %1113 : vector<8x8x128xf32>, vector<8x8x128xf32>
    }
    %c0_59 = arith.constant 0 : index
    %c0_60 = arith.constant 0 : index
    %c0_61 = arith.constant 0 : index
    %c0_62 = arith.constant 0 : index
    %940 = vector.load %arg5[%c0_59, %c0_60, %c0_61, %c0_62] : memref<2x8x8x128xf32, #tpu.memory_space<vmem>>, vector<1x8x8x128xf32>
    %941 = vector.shape_cast %940 : vector<1x8x8x128xf32> to vector<8x8x128xf32>
    %942 = vector.shape_cast %939#0 : vector<8x8x128xf32> to vector<1x8x8x128xf32>
    tpu.vector_store %arg5[%c0_59, %c0_60, %c0_61, %c0_62], %942 {strides = array<i32>} : memref<2x8x8x128xf32, #tpu.memory_space<vmem>>, vector<1x8x8x128xf32>,
    %c1_63 = arith.constant 1 : index
    %c0_64 = arith.constant 0 : index
    %c0_65 = arith.constant 0 : index
    %c0_66 = arith.constant 0 : index
    %943 = vector.load %arg5[%c1_63, %c0_64, %c0_65, %c0_66] : memref<2x8x8x128xf32, #tpu.memory_space<vmem>>, vector<1x8x8x128xf32>
    %944 = vector.shape_cast %943 : vector<1x8x8x128xf32> to vector<8x8x128xf32>
    %945 = vector.shape_cast %939#1 : vector<8x8x128xf32> to vector<1x8x8x128xf32>
    tpu.vector_store %arg5[%c1_63, %c0_64, %c0_65, %c0_66], %945 {strides = array<i32>} : memref<2x8x8x128xf32, #tpu.memory_space<vmem>>, vector<1x8x8x128xf32>,
    return
  }
  func.func @transform_0(%arg0: i32, %arg1: memref<1xi32, #tpu.memory_space<smem>>) -> (i32, i32, i32) {
    %c0_i32 = arith.constant 0 : i32
    %c0_i32_0 = arith.constant 0 : i32
    %c0_i32_1 = arith.constant 0 : i32
    return %arg0, %c0_i32, %c0_i32_0 : i32, i32, i32
  }
  func.func @transform_1(%arg0: i32, %arg1: memref<1xi32, #tpu.memory_space<smem>>) -> (i32, i32, i32, i32) {
    %c0_i32 = arith.constant 0 : i32
    %c0_i32_0 = arith.constant 0 : i32
    %c0_i32_1 = arith.constant 0 : i32
    %c0_i32_2 = arith.constant 0 : i32
    %c0_i32_3 = arith.constant 0 : i32
    return %c0_i32, %c0_i32_0, %c0_i32_1, %c0_i32_2 : i32, i32, i32, i32
  }
  func.func @transform_2(%arg0: i32, %arg1: memref<1xi32, #tpu.memory_space<smem>>) -> (i32, i32, i32) {
    %c0_i32 = arith.constant 0 : i32
    %c0_i32_0 = arith.constant 0 : i32
    %c0_i32_1 = arith.constant 0 : i32
    %c0_i32_2 = arith.constant 0 : i32
    return %c0_i32, %c0_i32_0, %c0_i32_1 : i32, i32, i32
  }
  func.func @transform_3(%arg0: i32, %arg1: memref<1xi32, #tpu.memory_space<smem>>) -> (i32, i32, i32, i32) {
    %c0_i32 = arith.constant 0 : i32
    %c0_i32_0 = arith.constant 0 : i32
    %c0_i32_1 = arith.constant 0 : i32
    %c0_i32_2 = arith.constant 0 : i32
    return %c0_i32, %c0_i32_0, %c0_i32_1, %arg0 : i32, i32, i32, i32
  }
}

</mosaic_0001>

<llo_original>
// kernel: custom-call
$region0: #{custom-call}
  %s0 = inlined_call_operand.vmem [shape: f32[8,2,8,8], index: 0, kind: input, shape index: {}]
  %s1 = inlined_call_operand.vmem [shape: f32[8,2,8,8], index: 1, kind: input, shape index: {}]
  %s2 = inlined_call_operand.hbm [shape: c64[8,2,8,8], index: 2, kind: output, shape index: {}]
  %s3 = scalar_lea.hbm %s2, 2048
  $region1: #{custom-call} parent=0
    #allocation0 [shape = 's32[1]{0}', space=sflag, size = 0x4, scoped, tag = 'scoped memory for custom-call']
    %4 = vsyncpa [#allocation0], 0
    %s5 = sshll.u32 %s0, 4
    %s6 = int_to_ptr.vmem [resolvable:$true] %s5
    %8 = dma.vmem_to_hbm [thread:$0]  %s6, 2048, %s2, [#allocation0]
    %9 = dma.done [#allocation0], 2048
    %10 = vsyncpa [#allocation0], 1
  $region2: #{custom-call} parent=0
    #allocation1 [shape = 's32[1]{0}', space=sflag, size = 0x4, scoped, tag = 'scoped memory for custom-call']
    %11 = vsyncpa [#allocation1], 0
    %s12 = sshll.u32 %s1, 4
    %s13 = int_to_ptr.vmem [resolvable:$true] %s12
    %15 = dma.vmem_to_hbm [thread:$0]  %s13, 2048, %s3, [#allocation1]
    %16 = dma.done [#allocation1], 2048
    %17 = vsyncpa [#allocation1], 1

// kernel: projection_forward.1
$region0: #{projection_forward.1}
  #allocation0 [shape = 'u32[]', space=smem, size = 0x4, offset = 0x4, fixed_abs, tag = 'smem constant byte address 0x4 - core index']
  #allocation1 [shape = 'u32[144,128]{1,0:T(1,128)}', space=vmem, size = 0x12000, scoped, tag = 'internal scratch']
  #allocation2 [shape = 's32[1]{0}', space=sflag, size = 0x4, scoped, tag = 'scoped memory for projection_forward.1']
  #allocation3 [shape = 's32[1]{0:T(128)S(6)}', space=smem, size = 0x200, scoped, tag = 'prefetched SMEM operand 0']
  %s0 = inlined_call_operand.<no memory space> [shape: s32[1], index: 0, kind: input, shape index: {}]
  %s1 = inlined_call_operand.vmem [shape: f32[1,8,128], index: 1, kind: input, shape index: {}]
  %s2 = inlined_call_operand.vmem [shape: f32[8,8,8,128], index: 2, kind: input, shape index: {}]
  %s3 = inlined_call_operand.vmem [shape: f32[8,8,128], index: 3, kind: input, shape index: {}]
  %s4 = inlined_call_operand.vmem [shape: f32[2,8,8,128], index: 4, kind: output, shape index: {}]
  %s5 = sld [smem:[#allocation0]]
  $region29: #{projection_forward.1} parent=0
    _
  %s7 = ssub.s32 1, %s5
  %s8 = scalar_select 0, %s7, %s5
  %9 = sst [smem:[#allocation3]] %s0
  // Predicated region
  $region2: #{projection_forward.1} parent=0 // pred_check
    _
  $region3: #{projection_forward.1} parent=0 // pred_check_branch
    %11 = sbr.rel (0) target = $region5
  $region4: #{projection_forward.1} parent=0 // pred_region
    _
  $region5: #{projection_forward.1} parent=0 // pred_fallthru
    _
  // Predicated region
  $region6: #{projection_forward.1} parent=0 // pred_check
    _
  $region7: #{projection_forward.1} parent=0 // pred_check_branch
    %13 = sbr.rel (0) target = $region9
  $region8: #{projection_forward.1} parent=0 // pred_region
    _
  $region9: #{projection_forward.1} parent=0 // pred_fallthru
    _
  // Predicated region
  $region10: #{projection_forward.1} parent=0 // pred_check
    _
  $region11: #{projection_forward.1} parent=0 // pred_check_branch
    %15 = sbr.rel (0) target = $region13
  $region12: #{projection_forward.1} parent=0 // pred_region
    _
  $region13: #{projection_forward.1} parent=0 // pred_fallthru
    _
  %v16 = vld [vmem:[%s1] sm:$0xff]
  %v17 = vld [vmem:[%s2] sm:$0xff]
  %v18 = vld [vmem:[%s2 + $0x8] sm:$0xff]
  %v19 = vld [vmem:[%s2 + $0x10] sm:$0xff]
  %v20 = vld [vmem:[%s2 + $0x18] sm:$0xff]
  %v21 = vld [vmem:[%s2 + $0x20] sm:$0xff]
  %v22 = vld [vmem:[%s2 + $0x28] sm:$0xff]
  %v23 = vld [vmem:[%s2 + $0x30] sm:$0xff]
  %v24 = vld [vmem:[%s2 + $0x38] sm:$0xff]
  %v25 = vlaneseq
  %v26 = vshrl.u32 %v25, 7
  %v27 = vsub.s32 0, %v26
  %v28 = vrot.slane %v16, %v27
  %v29 = vmul.f32 %v28, %v17
  %v30 = vmul.f32 %v28, %v18
  %v31 = vmul.f32 %v28, %v19
  %v32 = vmul.f32 %v28, %v20
  %v33 = vmul.f32 %v28, %v21
  %v34 = vmul.f32 %v28, %v22
  %v35 = vmul.f32 %v28, %v23
  %v36 = vmul.f32 %v28, %v24
  %s37 = scalar_lea.vmem %s2, 256
  %v38 = vld [vmem:[%s37] sm:$0xff]
  %v39 = vld [vmem:[%s37 + $0x8] sm:$0xff]
  %v40 = vld [vmem:[%s37 + $0x10] sm:$0xff]
  %v41 = vld [vmem:[%s37 + $0x18] sm:$0xff]
  %v42 = vld [vmem:[%s37 + $0x20] sm:$0xff]
  %v43 = vld [vmem:[%s37 + $0x28] sm:$0xff]
  %v44 = vld [vmem:[%s37 + $0x30] sm:$0xff]
  %v45 = vld [vmem:[%s37 + $0x38] sm:$0xff]
  %v46 = vmul.f32 %v28, %v38
  %v47 = vmul.f32 %v28, %v39
  %v48 = vmul.f32 %v28, %v40
  %v49 = vmul.f32 %v28, %v41
  %v50 = vmul.f32 %v28, %v42
  %v51 = vmul.f32 %v28, %v43
  %v52 = vmul.f32 %v28, %v44
  %v53 = vmul.f32 %v28, %v45
  %s54 = scalar_lea.vmem %s2, 64
  %v55 = vld [vmem:[%s54] sm:$0xff]
  %v56 = vld [vmem:[%s54 + $0x8] sm:$0xff]
  %v57 = vld [vmem:[%s54 + $0x10] sm:$0xff]
  %v58 = vld [vmem:[%s54 + $0x18] sm:$0xff]
  %v59 = vld [vmem:[%s54 + $0x20] sm:$0xff]
  %v60 = vld [vmem:[%s54 + $0x28] sm:$0xff]
  %v61 = vld [vmem:[%s54 + $0x30] sm:$0xff]
  %v62 = vld [vmem:[%s54 + $0x38] sm:$0xff]
  %v63 = vlaneseq
  %v64 = vshrl.u32 %v63, 7
  %v65 = vsub.s32 1, %v64
  %v66 = vrot.slane %v16, %v65
  %v67 = vmul.f32 %v66, %v55
  %v68 = vmul.f32 %v66, %v56
  %v69 = vmul.f32 %v66, %v57
  %v70 = vmul.f32 %v66, %v58
  %v71 = vmul.f32 %v66, %v59
  %v72 = vmul.f32 %v66, %v60
  %v73 = vmul.f32 %v66, %v61
  %v74 = vmul.f32 %v66, %v62
  %v75 = vadd.f32 %v29, %v67
  %v76 = vadd.f32 %v30, %v68
  %v77 = vadd.f32 %v31, %v69
  %v78 = vadd.f32 %v32, %v70
  %v79 = vadd.f32 %v33, %v71
  %v80 = vadd.f32 %v34, %v72
  %v81 = vadd.f32 %v35, %v73
  %v82 = vadd.f32 %v36, %v74
  %s83 = scalar_lea.vmem %s2, 320
  %v84 = vld [vmem:[%s83] sm:$0xff]
  %v85 = vld [vmem:[%s83 + $0x8] sm:$0xff]
  %v86 = vld [vmem:[%s83 + $0x10] sm:$0xff]
  %v87 = vld [vmem:[%s83 + $0x18] sm:$0xff]
  %v88 = vld [vmem:[%s83 + $0x20] sm:$0xff]
  %v89 = vld [vmem:[%s83 + $0x28] sm:$0xff]
  %v90 = vld [vmem:[%s83 + $0x30] sm:$0xff]
  %v91 = vld [vmem:[%s83 + $0x38] sm:$0xff]
  %v92 = vmul.f32 %v66, %v84
  %v93 = vmul.f32 %v66, %v85
  %v94 = vmul.f32 %v66, %v86
  %v95 = vmul.f32 %v66, %v87
  %v96 = vmul.f32 %v66, %v88
  %v97 = vmul.f32 %v66, %v89
  %v98 = vmul.f32 %v66, %v90
  %v99 = vmul.f32 %v66, %v91
  %v100 = vadd.f32 %v46, %v92
  %v101 = vadd.f32 %v47, %v93
  %v102 = vadd.f32 %v48, %v94
  %v103 = vadd.f32 %v49, %v95
  %v104 = vadd.f32 %v50, %v96
  %v105 = vadd.f32 %v51, %v97
  %v106 = vadd.f32 %v52, %v98
  %v107 = vadd.f32 %v53, %v99
  %s108 = scalar_lea.vmem %s2, 128
  %v109 = vld [vmem:[%s108] sm:$0xff]
  %v110 = vld [vmem:[%s108 + $0x8] sm:$0xff]
  %v111 = vld [vmem:[%s108 + $0x10] sm:$0xff]
  %v112 = vld [vmem:[%s108 + $0x18] sm:$0xff]
  %v113 = vld [vmem:[%s108 + $0x20] sm:$0xff]
  %v114 = vld [vmem:[%s108 + $0x28] sm:$0xff]
  %v115 = vld [vmem:[%s108 + $0x30] sm:$0xff]
  %v116 = vld [vmem:[%s108 + $0x38] sm:$0xff]
  %v117 = vlaneseq
  %v118 = vshrl.u32 %v117, 7
  %v119 = vsub.s32 2, %v118
  %v120 = vrot.slane %v16, %v119
  %v121 = vmul.f32 %v120, %v109
  %v122 = vmul.f32 %v120, %v110
  %v123 = vmul.f32 %v120, %v111
  %v124 = vmul.f32 %v120, %v112
  %v125 = vmul.f32 %v120, %v113
  %v126 = vmul.f32 %v120, %v114
  %v127 = vmul.f32 %v120, %v115
  %v128 = vmul.f32 %v120, %v116
  %v129 = vadd.f32 %v75, %v121
  %v130 = vadd.f32 %v76, %v122
  %v131 = vadd.f32 %v77, %v123
  %v132 = vadd.f32 %v78, %v124
  %v133 = vadd.f32 %v79, %v125
  %v134 = vadd.f32 %v80, %v126
  %v135 = vadd.f32 %v81, %v127
  %v136 = vadd.f32 %v82, %v128
  %s137 = scalar_lea.vmem %s2, 384
  %v138 = vld [vmem:[%s137] sm:$0xff]
  %v139 = vld [vmem:[%s137 + $0x8] sm:$0xff]
  %v140 = vld [vmem:[%s137 + $0x10] sm:$0xff]
  %v141 = vld [vmem:[%s137 + $0x18] sm:$0xff]
  %v142 = vld [vmem:[%s137 + $0x20] sm:$0xff]
  %v143 = vld [vmem:[%s137 + $0x28] sm:$0xff]
  %v144 = vld [vmem:[%s137 + $0x30] sm:$0xff]
  %v145 = vld [vmem:[%s137 + $0x38] sm:$0xff]
  %v146 = vmul.f32 %v120, %v138
  %v147 = vmul.f32 %v120, %v139
  %v148 = vmul.f32 %v120, %v140
  %v149 = vmul.f32 %v120, %v141
  %v150 = vmul.f32 %v120, %v142
  %v151 = vmul.f32 %v120, %v143
  %v152 = vmul.f32 %v120, %v144
  %v153 = vmul.f32 %v120, %v145
  %v154 = vadd.f32 %v100, %v146
  %v155 = vadd.f32 %v101, %v147
  %v156 = vadd.f32 %v102, %v148
  %v157 = vadd.f32 %v103, %v149
  %v158 = vadd.f32 %v104, %v150
  %v159 = vadd.f32 %v105, %v151
  %v160 = vadd.f32 %v106, %v152
  %v161 = vadd.f32 %v107, %v153
  %s162 = scalar_lea.vmem %s2, 192
  %v163 = vld [vmem:[%s162] sm:$0xff]
  %v164 = vld [vmem:[%s162 + $0x8] sm:$0xff]
  %v165 = vld [vmem:[%s162 + $0x10] sm:$0xff]
  %v166 = vld [vmem:[%s162 + $0x18] sm:$0xff]
  %v167 = vld [vmem:[%s162 + $0x20] sm:$0xff]
  %v168 = vld [vmem:[%s162 + $0x28] sm:$0xff]
  %v169 = vld [vmem:[%s162 + $0x30] sm:$0xff]
  %v170 = vld [vmem:[%s162 + $0x38] sm:$0xff]
  %v171 = vlaneseq
  %v172 = vshrl.u32 %v171, 7
  %v173 = vsub.s32 3, %v172
  %v174 = vrot.slane %v16, %v173
  %v175 = vmul.f32 %v174, %v163
  %v176 = vmul.f32 %v174, %v164
  %v177 = vmul.f32 %v174, %v165
  %v178 = vmul.f32 %v174, %v166
  %v179 = vmul.f32 %v174, %v167
  %v180 = vmul.f32 %v174, %v168
  %v181 = vmul.f32 %v174, %v169
  %v182 = vmul.f32 %v174, %v170
  %v183 = vadd.f32 %v129, %v175
  %v184 = vadd.f32 %v130, %v176
  %v185 = vadd.f32 %v131, %v177
  %v186 = vadd.f32 %v132, %v178
  %v187 = vadd.f32 %v133, %v179
  %v188 = vadd.f32 %v134, %v180
  %v189 = vadd.f32 %v135, %v181
  %v190 = vadd.f32 %v136, %v182
  %s191 = scalar_lea.vmem %s2, 448
  %v192 = vld [vmem:[%s191] sm:$0xff]
  %v193 = vld [vmem:[%s191 + $0x8] sm:$0xff]
  %v194 = vld [vmem:[%s191 + $0x10] sm:$0xff]
  %v195 = vld [vmem:[%s191 + $0x18] sm:$0xff]
  %v196 = vld [vmem:[%s191 + $0x20] sm:$0xff]
  %v197 = vld [vmem:[%s191 + $0x28] sm:$0xff]
  %v198 = vld [vmem:[%s191 + $0x30] sm:$0xff]
  %v199 = vld [vmem:[%s191 + $0x38] sm:$0xff]
  %v200 = vmul.f32 %v174, %v192
  %v201 = vmul.f32 %v174, %v193
  %v202 = vmul.f32 %v174, %v194
  %v203 = vmul.f32 %v174, %v195
  %v204 = vmul.f32 %v174, %v196
  %v205 = vmul.f32 %v174, %v197
  %v206 = vmul.f32 %v174, %v198
  %v207 = vmul.f32 %v174, %v199
  %v208 = vadd.f32 %v154, %v200
  %v209 = vadd.f32 %v155, %v201
  %v210 = vadd.f32 %v156, %v202
  %v211 = vadd.f32 %v157, %v203
  %v212 = vadd.f32 %v158, %v204
  %v213 = vadd.f32 %v159, %v205
  %v214 = vadd.f32 %v160, %v206
  %v215 = vadd.f32 %v161, %v207
  %v216 = vmul.f32 %v183, %v183
  %v217 = vmul.f32 %v184, %v184
  %v218 = vmul.f32 %v185, %v185
  %v219 = vmul.f32 %v186, %v186
  %v220 = vmul.f32 %v187, %v187
  %v221 = vmul.f32 %v188, %v188
  %v222 = vmul.f32 %v189, %v189
  %v223 = vmul.f32 %v190, %v190
  %v224 = vmul.f32 %v208, %v208
  %v225 = vmul.f32 %v209, %v209
  %v226 = vmul.f32 %v210, %v210
  %v227 = vmul.f32 %v211, %v211
  %v228 = vmul.f32 %v212, %v212
  %v229 = vmul.f32 %v213, %v213
  %v230 = vmul.f32 %v214, %v214
  %v231 = vmul.f32 %v215, %v215
  %v232 = vadd.f32 %v216, %v224
  %v233 = vadd.f32 %v217, %v225
  %v234 = vadd.f32 %v218, %v226
  %v235 = vadd.f32 %v219, %v227
  %v236 = vadd.f32 %v220, %v228
  %v237 = vadd.f32 %v221, %v229
  %v238 = vadd.f32 %v222, %v230
  %v239 = vadd.f32 %v223, %v231
  %v240 = vrsqrt.pop %v232
  %v241 = vmul.f32 %v232, %v240
  %vm242 = vcmp.eq.f32.partialorder %v232, inf
  %v243 = vsel %vm242, %v232, %v241
  %vm244 = vcmp.eq.f32.partialorder %v232, 0.0
  %v245 = vand.u32 %v232, 2147483648
  %v246 = vsel %vm244, %v245, %v243
  %v247 = vrsqrt.pop %v233
  %v248 = vmul.f32 %v233, %v247
  %vm249 = vcmp.eq.f32.partialorder %v233, inf
  %v250 = vsel %vm249, %v233, %v248
  %vm251 = vcmp.eq.f32.partialorder %v233, 0.0
  %v252 = vand.u32 %v233, 2147483648
  %v253 = vsel %vm251, %v252, %v250
  %v254 = vrsqrt.pop %v234
  %v255 = vmul.f32 %v234, %v254
  %vm256 = vcmp.eq.f32.partialorder %v234, inf
  %v257 = vsel %vm256, %v234, %v255
  %vm258 = vcmp.eq.f32.partialorder %v234, 0.0
  %v259 = vand.u32 %v234, 2147483648
  %v260 = vsel %vm258, %v259, %v257
  %v261 = vrsqrt.pop %v235
  %v262 = vmul.f32 %v235, %v261
  %vm263 = vcmp.eq.f32.partialorder %v235, inf
  %v264 = vsel %vm263, %v235, %v262
  %vm265 = vcmp.eq.f32.partialorder %v235, 0.0
  %v266 = vand.u32 %v235, 2147483648
  %v267 = vsel %vm265, %v266, %v264
  %v268 = vrsqrt.pop %v236
  %v269 = vmul.f32 %v236, %v268
  %vm270 = vcmp.eq.f32.partialorder %v236, inf
  %v271 = vsel %vm270, %v236, %v269
  %vm272 = vcmp.eq.f32.partialorder %v236, 0.0
  %v273 = vand.u32 %v236, 2147483648
  %v274 = vsel %vm272, %v273, %v271
  %v275 = vrsqrt.pop %v237
  %v276 = vmul.f32 %v237, %v275
  %vm277 = vcmp.eq.f32.partialorder %v237, inf
  %v278 = vsel %vm277, %v237, %v276
  %vm279 = vcmp.eq.f32.partialorder %v237, 0.0
  %v280 = vand.u32 %v237, 2147483648
  %v281 = vsel %vm279, %v280, %v278
  %v282 = vrsqrt.pop %v238
  %v283 = vmul.f32 %v238, %v282
  %vm284 = vcmp.eq.f32.partialorder %v238, inf
  %v285 = vsel %vm284, %v238, %v283
  %vm286 = vcmp.eq.f32.partialorder %v238, 0.0
  %v287 = vand.u32 %v238, 2147483648
  %v288 = vsel %vm286, %v287, %v285
  %v289 = vrsqrt.pop %v239
  %v290 = vmul.f32 %v239, %v289
  %vm291 = vcmp.eq.f32.partialorder %v239, inf
  %v292 = vsel %vm291, %v239, %v290
  %vm293 = vcmp.eq.f32.partialorder %v239, 0.0
  %v294 = vand.u32 %v239, 2147483648
  %v295 = vsel %vm293, %v294, %v292
  %v296 = vadd.f32 %v246, %v253
  %v297 = vadd.f32 %v296, %v260
  %v298 = vadd.f32 %v297, %v267
  %v299 = vadd.f32 %v298, %v274
  %v300 = vadd.f32 %v299, %v281
  %v301 = vadd.f32 %v300, %v288
  %v302 = vadd.f32 %v301, %v295
  %v303 = vrot.slane %v302, 4
  %v304 = vmax.f32 %v302, %v303
  %v305 = vrot.slane %v304, 2
  %v306 = vmax.f32 %v304, %v305
  %v307 = vrot.slane %v306, 1
  %v308 = vmax.f32 %v306, %v307
  %s309 = sld [smem:[#allocation3]]
  %vm310 = vcmp.gt.f32.partialorder %v308, 1.0
  %v311 = vmax.f32 %v308, 1.0
  %v312 = vlog2.pop %v311
  %v313 = vmul.f32 %v312, 0.6931472
  %v314 = vrcp.pop 0.6931472
  %v315 = vmul.f32 %v313, %v314
  %v316 = vceil.f32 %v315
  %v317 = vsel %vm310, %v316, 0.0
  %s318 = scvt.s32.f32 %s309
  %v319 = vstv %s318
  %v320 = vmin.f32 %v317, %v319
  %v321 = vsub.f32 0.0, %v320
  %v322 = vpow.pop %v321
  %v323 = vmul.f32 %v183, %v322
  %v324 = vmul.f32 %v184, %v322
  %v325 = vmul.f32 %v185, %v322
  %v326 = vmul.f32 %v186, %v322
  %v327 = vmul.f32 %v187, %v322
  %v328 = vmul.f32 %v188, %v322
  %v329 = vmul.f32 %v189, %v322
  %v330 = vmul.f32 %v190, %v322
  %v331 = vmul.f32 %v208, %v322
  %v332 = vmul.f32 %v209, %v322
  %v333 = vmul.f32 %v210, %v322
  %v334 = vmul.f32 %v211, %v322
  %v335 = vmul.f32 %v212, %v322
  %v336 = vmul.f32 %v213, %v322
  %v337 = vmul.f32 %v214, %v322
  %v338 = vmul.f32 %v215, %v322
  %v339 = vld [vmem:[%s3] sm:$0xff]
  %v340 = vld [vmem:[%s3 + $0x8] sm:$0xff]
  %v341 = vld [vmem:[%s3 + $0x10] sm:$0xff]
  %v342 = vld [vmem:[%s3 + $0x18] sm:$0xff]
  %v343 = vld [vmem:[%s3 + $0x20] sm:$0xff]
  %v344 = vld [vmem:[%s3 + $0x28] sm:$0xff]
  %v345 = vld [vmem:[%s3 + $0x30] sm:$0xff]
  %v346 = vld [vmem:[%s3 + $0x38] sm:$0xff]
  %v347 = vlaneseq
  %v348 = vshrl.u32 %v347, 7
  %v349 = vsub.s32 0, %v348
  %v350 = vrot.slane %v323, %v349
  %v351 = vlaneseq
  %v352 = vshrl.u32 %v351, 7
  %v353 = vsub.s32 0, %v352
  %v354 = vrot.slane %v324, %v353
  %v355 = vlaneseq
  %v356 = vshrl.u32 %v355, 7
  %v357 = vsub.s32 0, %v356
  %v358 = vrot.slane %v325, %v357
  %v359 = vlaneseq
  %v360 = vshrl.u32 %v359, 7
  %v361 = vsub.s32 0, %v360
  %v362 = vrot.slane %v326, %v361
  %v363 = vlaneseq
  %v364 = vshrl.u32 %v363, 7
  %v365 = vsub.s32 0, %v364
  %v366 = vrot.slane %v327, %v365
  %v367 = vlaneseq
  %v368 = vshrl.u32 %v367, 7
  %v369 = vsub.s32 0, %v368
  %v370 = vrot.slane %v328, %v369
  %v371 = vlaneseq
  %v372 = vshrl.u32 %v371, 7
  %v373 = vsub.s32 0, %v372
  %v374 = vrot.slane %v329, %v373
  %v375 = vlaneseq
  %v376 = vshrl.u32 %v375, 7
  %v377 = vsub.s32 0, %v376
  %v378 = vrot.slane %v330, %v377
  %v379 = vmul.f32 %v350, %v323
  %v380 = vmul.f32 %v354, %v323
  %v381 = vmul.f32 %v358, %v323
  %v382 = vmul.f32 %v362, %v323
  %v383 = vmul.f32 %v366, %v323
  %v384 = vmul.f32 %v370, %v323
  %v385 = vmul.f32 %v374, %v323
  %v386 = vmul.f32 %v378, %v323
  %v387 = vlaneseq
  %v388 = vshrl.u32 %v387, 7
  %v389 = vsub.s32 0, %v388
  %v390 = vrot.slane %v331, %v389
  %v391 = vlaneseq
  %v392 = vshrl.u32 %v391, 7
  %v393 = vsub.s32 0, %v392
  %v394 = vrot.slane %v332, %v393
  %v395 = vlaneseq
  %v396 = vshrl.u32 %v395, 7
  %v397 = vsub.s32 0, %v396
  %v398 = vrot.slane %v333, %v397
  %v399 = vlaneseq
  %v400 = vshrl.u32 %v399, 7
  %v401 = vsub.s32 0, %v400
  %v402 = vrot.slane %v334, %v401
  %v403 = vlaneseq
  %v404 = vshrl.u32 %v403, 7
  %v405 = vsub.s32 0, %v404
  %v406 = vrot.slane %v335, %v405
  %v407 = vlaneseq
  %v408 = vshrl.u32 %v407, 7
  %v409 = vsub.s32 0, %v408
  %v410 = vrot.slane %v336, %v409
  %v411 = vlaneseq
  %v412 = vshrl.u32 %v411, 7
  %v413 = vsub.s32 0, %v412
  %v414 = vrot.slane %v337, %v413
  %v415 = vlaneseq
  %v416 = vshrl.u32 %v415, 7
  %v417 = vsub.s32 0, %v416
  %v418 = vrot.slane %v338, %v417
  %v419 = vmul.f32 %v390, %v331
  %v420 = vmul.f32 %v394, %v331
  %v421 = vmul.f32 %v398, %v331
  %v422 = vmul.f32 %v402, %v331
  %v423 = vmul.f32 %v406, %v331
  %v424 = vmul.f32 %v410, %v331
  %v425 = vmul.f32 %v414, %v331
  %v426 = vmul.f32 %v418, %v331
  %v427 = vsub.f32 %v379, %v419
  %v428 = vsub.f32 %v380, %v420
  %v429 = vsub.f32 %v381, %v421
  %v430 = vsub.f32 %v382, %v422
  %v431 = vsub.f32 %v383, %v423
  %v432 = vsub.f32 %v384, %v424
  %v433 = vsub.f32 %v385, %v425
  %v434 = vsub.f32 %v386, %v426
  %v435 = vmul.f32 %v350, %v331
  %v436 = vmul.f32 %v354, %v331
  %v437 = vmul.f32 %v358, %v331
  %v438 = vmul.f32 %v362, %v331
  %v439 = vmul.f32 %v366, %v331
  %v440 = vmul.f32 %v370, %v331
  %v441 = vmul.f32 %v374, %v331
  %v442 = vmul.f32 %v378, %v331
  %v443 = vmul.f32 %v390, %v323
  %v444 = vmul.f32 %v394, %v323
  %v445 = vmul.f32 %v398, %v323
  %v446 = vmul.f32 %v402, %v323
  %v447 = vmul.f32 %v406, %v323
  %v448 = vmul.f32 %v410, %v323
  %v449 = vmul.f32 %v414, %v323
  %v450 = vmul.f32 %v418, %v323
  %v451 = vadd.f32 %v435, %v443
  %v452 = vadd.f32 %v436, %v444
  %v453 = vadd.f32 %v437, %v445
  %v454 = vadd.f32 %v438, %v446
  %v455 = vadd.f32 %v439, %v447
  %v456 = vadd.f32 %v440, %v448
  %v457 = vadd.f32 %v441, %v449
  %v458 = vadd.f32 %v442, %v450
  %v459 = vlaneseq
  %v460 = vshrl.u32 %v459, 7
  %v461 = vsub.s32 1, %v460
  %v462 = vrot.slane %v323, %v461
  %v463 = vlaneseq
  %v464 = vshrl.u32 %v463, 7
  %v465 = vsub.s32 1, %v464
  %v466 = vrot.slane %v324, %v465
  %v467 = vlaneseq
  %v468 = vshrl.u32 %v467, 7
  %v469 = vsub.s32 1, %v468
  %v470 = vrot.slane %v325, %v469
  %v471 = vlaneseq
  %v472 = vshrl.u32 %v471, 7
  %v473 = vsub.s32 1, %v472
  %v474 = vrot.slane %v326, %v473
  %v475 = vlaneseq
  %v476 = vshrl.u32 %v475, 7
  %v477 = vsub.s32 1, %v476
  %v478 = vrot.slane %v327, %v477
  %v479 = vlaneseq
  %v480 = vshrl.u32 %v479, 7
  %v481 = vsub.s32 1, %v480
  %v482 = vrot.slane %v328, %v481
  %v483 = vlaneseq
  %v484 = vshrl.u32 %v483, 7
  %v485 = vsub.s32 1, %v484
  %v486 = vrot.slane %v329, %v485
  %v487 = vlaneseq
  %v488 = vshrl.u32 %v487, 7
  %v489 = vsub.s32 1, %v488
  %v490 = vrot.slane %v330, %v489
  %v491 = vmul.f32 %v462, %v324
  %v492 = vmul.f32 %v466, %v324
  %v493 = vmul.f32 %v470, %v324
  %v494 = vmul.f32 %v474, %v324
  %v495 = vmul.f32 %v478, %v324
  %v496 = vmul.f32 %v482, %v324
  %v497 = vmul.f32 %v486, %v324
  %v498 = vmul.f32 %v490, %v324
  %v499 = vlaneseq
  %v500 = vshrl.u32 %v499, 7
  %v501 = vsub.s32 1, %v500
  %v502 = vrot.slane %v331, %v501
  %v503 = vlaneseq
  %v504 = vshrl.u32 %v503, 7
  %v505 = vsub.s32 1, %v504
  %v506 = vrot.slane %v332, %v505
  %v507 = vlaneseq
  %v508 = vshrl.u32 %v507, 7
  %v509 = vsub.s32 1, %v508
  %v510 = vrot.slane %v333, %v509
  %v511 = vlaneseq
  %v512 = vshrl.u32 %v511, 7
  %v513 = vsub.s32 1, %v512
  %v514 = vrot.slane %v334, %v513
  %v515 = vlaneseq
  %v516 = vshrl.u32 %v515, 7
  %v517 = vsub.s32 1, %v516
  %v518 = vrot.slane %v335, %v517
  %v519 = vlaneseq
  %v520 = vshrl.u32 %v519, 7
  %v521 = vsub.s32 1, %v520
  %v522 = vrot.slane %v336, %v521
  %v523 = vlaneseq
  %v524 = vshrl.u32 %v523, 7
  %v525 = vsub.s32 1, %v524
  %v526 = vrot.slane %v337, %v525
  %v527 = vlaneseq
  %v528 = vshrl.u32 %v527, 7
  %v529 = vsub.s32 1, %v528
  %v530 = vrot.slane %v338, %v529
  %v531 = vmul.f32 %v502, %v332
  %v532 = vmul.f32 %v506, %v332
  %v533 = vmul.f32 %v510, %v332
  %v534 = vmul.f32 %v514, %v332
  %v535 = vmul.f32 %v518, %v332
  %v536 = vmul.f32 %v522, %v332
  %v537 = vmul.f32 %v526, %v332
  %v538 = vmul.f32 %v530, %v332
  %v539 = vsub.f32 %v491, %v531
  %v540 = vsub.f32 %v492, %v532
  %v541 = vsub.f32 %v493, %v533
  %v542 = vsub.f32 %v494, %v534
  %v543 = vsub.f32 %v495, %v535
  %v544 = vsub.f32 %v496, %v536
  %v545 = vsub.f32 %v497, %v537
  %v546 = vsub.f32 %v498, %v538
  %v547 = vmul.f32 %v462, %v332
  %v548 = vmul.f32 %v466, %v332
  %v549 = vmul.f32 %v470, %v332
  %v550 = vmul.f32 %v474, %v332
  %v551 = vmul.f32 %v478, %v332
  %v552 = vmul.f32 %v482, %v332
  %v553 = vmul.f32 %v486, %v332
  %v554 = vmul.f32 %v490, %v332
  %v555 = vmul.f32 %v502, %v324
  %v556 = vmul.f32 %v506, %v324
  %v557 = vmul.f32 %v510, %v324
  %v558 = vmul.f32 %v514, %v324
  %v559 = vmul.f32 %v518, %v324
  %v560 = vmul.f32 %v522, %v324
  %v561 = vmul.f32 %v526, %v324
  %v562 = vmul.f32 %v530, %v324
  %v563 = vadd.f32 %v547, %v555
  %v564 = vadd.f32 %v548, %v556
  %v565 = vadd.f32 %v549, %v557
  %v566 = vadd.f32 %v550, %v558
  %v567 = vadd.f32 %v551, %v559
  %v568 = vadd.f32 %v552, %v560
  %v569 = vadd.f32 %v553, %v561
  %v570 = vadd.f32 %v554, %v562
  %v571 = vadd.f32 %v427, %v539
  %v572 = vadd.f32 %v428, %v540
  %v573 = vadd.f32 %v429, %v541
  %v574 = vadd.f32 %v430, %v542
  %v575 = vadd.f32 %v431, %v543
  %v576 = vadd.f32 %v432, %v544
  %v577 = vadd.f32 %v433, %v545
  %v578 = vadd.f32 %v434, %v546
  %v579 = vadd.f32 %v451, %v563
  %v580 = vadd.f32 %v452, %v564
  %v581 = vadd.f32 %v453, %v565
  %v582 = vadd.f32 %v454, %v566
  %v583 = vadd.f32 %v455, %v567
  %v584 = vadd.f32 %v456, %v568
  %v585 = vadd.f32 %v457, %v569
  %v586 = vadd.f32 %v458, %v570
  %v587 = vlaneseq
  %v588 = vshrl.u32 %v587, 7
  %v589 = vsub.s32 2, %v588
  %v590 = vrot.slane %v323, %v589
  %v591 = vlaneseq
  %v592 = vshrl.u32 %v591, 7
  %v593 = vsub.s32 2, %v592
  %v594 = vrot.slane %v324, %v593
  %v595 = vlaneseq
  %v596 = vshrl.u32 %v595, 7
  %v597 = vsub.s32 2, %v596
  %v598 = vrot.slane %v325, %v597
  %v599 = vlaneseq
  %v600 = vshrl.u32 %v599, 7
  %v601 = vsub.s32 2, %v600
  %v602 = vrot.slane %v326, %v601
  %v603 = vlaneseq
  %v604 = vshrl.u32 %v603, 7
  %v605 = vsub.s32 2, %v604
  %v606 = vrot.slane %v327, %v605
  %v607 = vlaneseq
  %v608 = vshrl.u32 %v607, 7
  %v609 = vsub.s32 2, %v608
  %v610 = vrot.slane %v328, %v609
  %v611 = vlaneseq
  %v612 = vshrl.u32 %v611, 7
  %v613 = vsub.s32 2, %v612
  %v614 = vrot.slane %v329, %v613
  %v615 = vlaneseq
  %v616 = vshrl.u32 %v615, 7
  %v617 = vsub.s32 2, %v616
  %v618 = vrot.slane %v330, %v617
  %v619 = vmul.f32 %v590, %v325
  %v620 = vmul.f32 %v594, %v325
  %v621 = vmul.f32 %v598, %v325
  %v622 = vmul.f32 %v602, %v325
  %v623 = vmul.f32 %v606, %v325
  %v624 = vmul.f32 %v610, %v325
  %v625 = vmul.f32 %v614, %v325
  %v626 = vmul.f32 %v618, %v325
  %v627 = vlaneseq
  %v628 = vshrl.u32 %v627, 7
  %v629 = vsub.s32 2, %v628
  %v630 = vrot.slane %v331, %v629
  %v631 = vlaneseq
  %v632 = vshrl.u32 %v631, 7
  %v633 = vsub.s32 2, %v632
  %v634 = vrot.slane %v332, %v633
  %v635 = vlaneseq
  %v636 = vshrl.u32 %v635, 7
  %v637 = vsub.s32 2, %v636
  %v638 = vrot.slane %v333, %v637
  %v639 = vlaneseq
  %v640 = vshrl.u32 %v639, 7
  %v641 = vsub.s32 2, %v640
  %v642 = vrot.slane %v334, %v641
  %v643 = vlaneseq
  %v644 = vshrl.u32 %v643, 7
  %v645 = vsub.s32 2, %v644
  %v646 = vrot.slane %v335, %v645
  %v647 = vlaneseq
  %v648 = vshrl.u32 %v647, 7
  %v649 = vsub.s32 2, %v648
  %v650 = vrot.slane %v336, %v649
  %v651 = vlaneseq
  %v652 = vshrl.u32 %v651, 7
  %v653 = vsub.s32 2, %v652
  %v654 = vrot.slane %v337, %v653
  %v655 = vlaneseq
  %v656 = vshrl.u32 %v655, 7
  %v657 = vsub.s32 2, %v656
  %v658 = vrot.slane %v338, %v657
  %v659 = vmul.f32 %v630, %v333
  %v660 = vmul.f32 %v634, %v333
  %v661 = vmul.f32 %v638, %v333
  %v662 = vmul.f32 %v642, %v333
  %v663 = vmul.f32 %v646, %v333
  %v664 = vmul.f32 %v650, %v333
  %v665 = vmul.f32 %v654, %v333
  %v666 = vmul.f32 %v658, %v333
  %v667 = vsub.f32 %v619, %v659
  %v668 = vsub.f32 %v620, %v660
  %v669 = vsub.f32 %v621, %v661
  %v670 = vsub.f32 %v622, %v662
  %v671 = vsub.f32 %v623, %v663
  %v672 = vsub.f32 %v624, %v664
  %v673 = vsub.f32 %v625, %v665
  %v674 = vsub.f32 %v626, %v666
  %v675 = vmul.f32 %v590, %v333
  %v676 = vmul.f32 %v594, %v333
  %v677 = vmul.f32 %v598, %v333
  %v678 = vmul.f32 %v602, %v333
  %v679 = vmul.f32 %v606, %v333
  %v680 = vmul.f32 %v610, %v333
  %v681 = vmul.f32 %v614, %v333
  %v682 = vmul.f32 %v618, %v333
  %v683 = vmul.f32 %v630, %v325
  %v684 = vmul.f32 %v634, %v325
  %v685 = vmul.f32 %v638, %v325
  %v686 = vmul.f32 %v642, %v325
  %v687 = vmul.f32 %v646, %v325
  %v688 = vmul.f32 %v650, %v325
  %v689 = vmul.f32 %v654, %v325
  %v690 = vmul.f32 %v658, %v325
  %v691 = vadd.f32 %v675, %v683
  %v692 = vadd.f32 %v676, %v684
  %v693 = vadd.f32 %v677, %v685
  %v694 = vadd.f32 %v678, %v686
  %v695 = vadd.f32 %v679, %v687
  %v696 = vadd.f32 %v680, %v688
  %v697 = vadd.f32 %v681, %v689
  %v698 = vadd.f32 %v682, %v690
  %v699 = vadd.f32 %v571, %v667
  %v700 = vadd.f32 %v572, %v668
  %v701 = vadd.f32 %v573, %v669
  %v702 = vadd.f32 %v574, %v670
  %v703 = vadd.f32 %v575, %v671
  %v704 = vadd.f32 %v576, %v672
  %v705 = vadd.f32 %v577, %v673
  %v706 = vadd.f32 %v578, %v674
  %v707 = vadd.f32 %v579, %v691
  %v708 = vadd.f32 %v580, %v692
  %v709 = vadd.f32 %v581, %v693
  %v710 = vadd.f32 %v582, %v694
  %v711 = vadd.f32 %v583, %v695
  %v712 = vadd.f32 %v584, %v696
  %v713 = vadd.f32 %v585, %v697
  %v714 = vadd.f32 %v586, %v698
  %v715 = vlaneseq
  %v716 = vshrl.u32 %v715, 7
  %v717 = vsub.s32 3, %v716
  %v718 = vrot.slane %v323, %v717
  %v719 = vlaneseq
  %v720 = vshrl.u32 %v719, 7
  %v721 = vsub.s32 3, %v720
  %v722 = vrot.slane %v324, %v721
  %v723 = vlaneseq
  %v724 = vshrl.u32 %v723, 7
  %v725 = vsub.s32 3, %v724
  %v726 = vrot.slane %v325, %v725
  %v727 = vlaneseq
  %v728 = vshrl.u32 %v727, 7
  %v729 = vsub.s32 3, %v728
  %v730 = vrot.slane %v326, %v729
  %v731 = vlaneseq
  %v732 = vshrl.u32 %v731, 7
  %v733 = vsub.s32 3, %v732
  %v734 = vrot.slane %v327, %v733
  %v735 = vlaneseq
  %v736 = vshrl.u32 %v735, 7
  %v737 = vsub.s32 3, %v736
  %v738 = vrot.slane %v328, %v737
  %v739 = vlaneseq
  %v740 = vshrl.u32 %v739, 7
  %v741 = vsub.s32 3, %v740
  %v742 = vrot.slane %v329, %v741
  %v743 = vlaneseq
  %v744 = vshrl.u32 %v743, 7
  %v745 = vsub.s32 3, %v744
  %v746 = vrot.slane %v330, %v745
  %v747 = vmul.f32 %v718, %v326
  %v748 = vmul.f32 %v722, %v326
  %v749 = vmul.f32 %v726, %v326
  %v750 = vmul.f32 %v730, %v326
  %v751 = vmul.f32 %v734, %v326
  %v752 = vmul.f32 %v738, %v326
  %v753 = vmul.f32 %v742, %v326
  %v754 = vmul.f32 %v746, %v326
  %v755 = vlaneseq
  %v756 = vshrl.u32 %v755, 7
  %v757 = vsub.s32 3, %v756
  %v758 = vrot.slane %v331, %v757
  %v759 = vlaneseq
  %v760 = vshrl.u32 %v759, 7
  %v761 = vsub.s32 3, %v760
  %v762 = vrot.slane %v332, %v761
  %v763 = vlaneseq
  %v764 = vshrl.u32 %v763, 7
  %v765 = vsub.s32 3, %v764
  %v766 = vrot.slane %v333, %v765
  %v767 = vlaneseq
  %v768 = vshrl.u32 %v767, 7
  %v769 = vsub.s32 3, %v768
  %v770 = vrot.slane %v334, %v769
  %v771 = vlaneseq
  %v772 = vshrl.u32 %v771, 7
  %v773 = vsub.s32 3, %v772
  %v774 = vrot.slane %v335, %v773
  %v775 = vlaneseq
  %v776 = vshrl.u32 %v775, 7
  %v777 = vsub.s32 3, %v776
  %v778 = vrot.slane %v336, %v777
  %v779 = vlaneseq
  %v780 = vshrl.u32 %v779, 7
  %v781 = vsub.s32 3, %v780
  %v782 = vrot.slane %v337, %v781
  %v783 = vlaneseq
  %v784 = vshrl.u32 %v783, 7
  %v785 = vsub.s32 3, %v784
  %v786 = vrot.slane %v338, %v785
  %v787 = vmul.f32 %v758, %v334
  %v788 = vmul.f32 %v762, %v334
  %v789 = vmul.f32 %v766, %v334
  %v790 = vmul.f32 %v770, %v334
  %v791 = vmul.f32 %v774, %v334
  %v792 = vmul.f32 %v778, %v334
  %v793 = vmul.f32 %v782, %v334
  %v794 = vmul.f32 %v786, %v334
  %v795 = vsub.f32 %v747, %v787
  %v796 = vsub.f32 %v748, %v788
  %v797 = vsub.f32 %v749, %v789
  %v798 = vsub.f32 %v750, %v790
  %v799 = vsub.f32 %v751, %v791
  %v800 = vsub.f32 %v752, %v792
  %v801 = vsub.f32 %v753, %v793
  %v802 = vsub.f32 %v754, %v794
  %v803 = vmul.f32 %v718, %v334
  %v804 = vmul.f32 %v722, %v334
  %v805 = vmul.f32 %v726, %v334
  %v806 = vmul.f32 %v730, %v334
  %v807 = vmul.f32 %v734, %v334
  %v808 = vmul.f32 %v738, %v334
  %v809 = vmul.f32 %v742, %v334
  %v810 = vmul.f32 %v746, %v334
  %v811 = vmul.f32 %v758, %v326
  %v812 = vmul.f32 %v762, %v326
  %v813 = vmul.f32 %v766, %v326
  %v814 = vmul.f32 %v770, %v326
  %v815 = vmul.f32 %v774, %v326
  %v816 = vmul.f32 %v778, %v326
  %v817 = vmul.f32 %v782, %v326
  %v818 = vmul.f32 %v786, %v326
  %v819 = vadd.f32 %v803, %v811
  %v820 = vadd.f32 %v804, %v812
  %v821 = vadd.f32 %v805, %v813
  %v822 = vadd.f32 %v806, %v814
  %v823 = vadd.f32 %v807, %v815
  %v824 = vadd.f32 %v808, %v816
  %v825 = vadd.f32 %v809, %v817
  %v826 = vadd.f32 %v810, %v818
  %v827 = vadd.f32 %v699, %v795
  %v828 = vadd.f32 %v700, %v796
  %v829 = vadd.f32 %v701, %v797
  %v830 = vadd.f32 %v702, %v798
  %v831 = vadd.f32 %v703, %v799
  %v832 = vadd.f32 %v704, %v800
  %v833 = vadd.f32 %v705, %v801
  %v834 = vadd.f32 %v706, %v802
  %v835 = vadd.f32 %v707, %v819
  %v836 = vadd.f32 %v708, %v820
  %v837 = vadd.f32 %v709, %v821
  %v838 = vadd.f32 %v710, %v822
  %v839 = vadd.f32 %v711, %v823
  %v840 = vadd.f32 %v712, %v824
  %v841 = vadd.f32 %v713, %v825
  %v842 = vadd.f32 %v714, %v826
  %v843 = vlaneseq
  %v844 = vshrl.u32 %v843, 7
  %v845 = vsub.s32 4, %v844
  %v846 = vrot.slane %v323, %v845
  %v847 = vlaneseq
  %v848 = vshrl.u32 %v847, 7
  %v849 = vsub.s32 4, %v848
  %v850 = vrot.slane %v324, %v849
  %v851 = vlaneseq
  %v852 = vshrl.u32 %v851, 7
  %v853 = vsub.s32 4, %v852
  %v854 = vrot.slane %v325, %v853
  %v855 = vlaneseq
  %v856 = vshrl.u32 %v855, 7
  %v857 = vsub.s32 4, %v856
  %v858 = vrot.slane %v326, %v857
  %v859 = vlaneseq
  %v860 = vshrl.u32 %v859, 7
  %v861 = vsub.s32 4, %v860
  %v862 = vrot.slane %v327, %v861
  %v863 = vlaneseq
  %v864 = vshrl.u32 %v863, 7
  %v865 = vsub.s32 4, %v864
  %v866 = vrot.slane %v328, %v865
  %v867 = vlaneseq
  %v868 = vshrl.u32 %v867, 7
  %v869 = vsub.s32 4, %v868
  %v870 = vrot.slane %v329, %v869
  %v871 = vlaneseq
  %v872 = vshrl.u32 %v871, 7
  %v873 = vsub.s32 4, %v872
  %v874 = vrot.slane %v330, %v873
  %v875 = vmul.f32 %v846, %v327
  %v876 = vmul.f32 %v850, %v327
  %v877 = vmul.f32 %v854, %v327
  %v878 = vmul.f32 %v858, %v327
  %v879 = vmul.f32 %v862, %v327
  %v880 = vmul.f32 %v866, %v327
  %v881 = vmul.f32 %v870, %v327
  %v882 = vmul.f32 %v874, %v327
  %v883 = vlaneseq
  %v884 = vshrl.u32 %v883, 7
  %v885 = vsub.s32 4, %v884
  %v886 = vrot.slane %v331, %v885
  %v887 = vlaneseq
  %v888 = vshrl.u32 %v887, 7
  %v889 = vsub.s32 4, %v888
  %v890 = vrot.slane %v332, %v889
  %v891 = vlaneseq
  %v892 = vshrl.u32 %v891, 7
  %v893 = vsub.s32 4, %v892
  %v894 = vrot.slane %v333, %v893
  %v895 = vlaneseq
  %v896 = vshrl.u32 %v895, 7
  %v897 = vsub.s32 4, %v896
  %v898 = vrot.slane %v334, %v897
  %v899 = vlaneseq
  %v900 = vshrl.u32 %v899, 7
  %v901 = vsub.s32 4, %v900
  %v902 = vrot.slane %v335, %v901
  %v903 = vlaneseq
  %v904 = vshrl.u32 %v903, 7
  %v905 = vsub.s32 4, %v904
  %v906 = vrot.slane %v336, %v905
  %v907 = vlaneseq
  %v908 = vshrl.u32 %v907, 7
  %v909 = vsub.s32 4, %v908
  %v910 = vrot.slane %v337, %v909
  %v911 = vlaneseq
  %v912 = vshrl.u32 %v911, 7
  %v913 = vsub.s32 4, %v912
  %v914 = vrot.slane %v338, %v913
  %v915 = vmul.f32 %v886, %v335
  %v916 = vmul.f32 %v890, %v335
  %v917 = vmul.f32 %v894, %v335
  %v918 = vmul.f32 %v898, %v335
  %v919 = vmul.f32 %v902, %v335
  %v920 = vmul.f32 %v906, %v335
  %v921 = vmul.f32 %v910, %v335
  %v922 = vmul.f32 %v914, %v335
  %v923 = vsub.f32 %v875, %v915
  %v924 = vsub.f32 %v876, %v916
  %v925 = vsub.f32 %v877, %v917
  %v926 = vsub.f32 %v878, %v918
  %v927 = vsub.f32 %v879, %v919
  %v928 = vsub.f32 %v880, %v920
  %v929 = vsub.f32 %v881, %v921
  %v930 = vsub.f32 %v882, %v922
  %v931 = vmul.f32 %v846, %v335
  %v932 = vmul.f32 %v850, %v335
  %v933 = vmul.f32 %v854, %v335
  %v934 = vmul.f32 %v858, %v335
  %v935 = vmul.f32 %v862, %v335
  %v936 = vmul.f32 %v866, %v335
  %v937 = vmul.f32 %v870, %v335
  %v938 = vmul.f32 %v874, %v335
  %v939 = vmul.f32 %v886, %v327
  %v940 = vmul.f32 %v890, %v327
  %v941 = vmul.f32 %v894, %v327
  %v942 = vmul.f32 %v898, %v327
  %v943 = vmul.f32 %v902, %v327
  %v944 = vmul.f32 %v906, %v327
  %v945 = vmul.f32 %v910, %v327
  %v946 = vmul.f32 %v914, %v327
  %v947 = vadd.f32 %v931, %v939
  %v948 = vadd.f32 %v932, %v940
  %v949 = vadd.f32 %v933, %v941
  %v950 = vadd.f32 %v934, %v942
  %v951 = vadd.f32 %v935, %v943
  %v952 = vadd.f32 %v936, %v944
  %v953 = vadd.f32 %v937, %v945
  %v954 = vadd.f32 %v938, %v946
  %v955 = vadd.f32 %v827, %v923
  %v956 = vadd.f32 %v828, %v924
  %v957 = vadd.f32 %v829, %v925
  %v958 = vadd.f32 %v830, %v926
  %v959 = vadd.f32 %v831, %v927
  %v960 = vadd.f32 %v832, %v928
  %v961 = vadd.f32 %v833, %v929
  %v962 = vadd.f32 %v834, %v930
  %v963 = vadd.f32 %v835, %v947
  %v964 = vadd.f32 %v836, %v948
  %v965 = vadd.f32 %v837, %v949
  %v966 = vadd.f32 %v838, %v950
  %v967 = vadd.f32 %v839, %v951
  %v968 = vadd.f32 %v840, %v952
  %v969 = vadd.f32 %v841, %v953
  %v970 = vadd.f32 %v842, %v954
  %v971 = vlaneseq
  %v972 = vshrl.u32 %v971, 7
  %v973 = vsub.s32 5, %v972
  %v974 = vrot.slane %v323, %v973
  %v975 = vlaneseq
  %v976 = vshrl.u32 %v975, 7
  %v977 = vsub.s32 5, %v976
  %v978 = vrot.slane %v324, %v977
  %v979 = vlaneseq
  %v980 = vshrl.u32 %v979, 7
  %v981 = vsub.s32 5, %v980
  %v982 = vrot.slane %v325, %v981
  %v983 = vlaneseq
  %v984 = vshrl.u32 %v983, 7
  %v985 = vsub.s32 5, %v984
  %v986 = vrot.slane %v326, %v985
  %v987 = vlaneseq
  %v988 = vshrl.u32 %v987, 7
  %v989 = vsub.s32 5, %v988
  %v990 = vrot.slane %v327, %v989
  %v991 = vlaneseq
  %v992 = vshrl.u32 %v991, 7
  %v993 = vsub.s32 5, %v992
  %v994 = vrot.slane %v328, %v993
  %v995 = vlaneseq
  %v996 = vshrl.u32 %v995, 7
  %v997 = vsub.s32 5, %v996
  %v998 = vrot.slane %v329, %v997
  %v999 = vlaneseq
  %v1000 = vshrl.u32 %v999, 7
  %v1001 = vsub.s32 5, %v1000
  %v1002 = vrot.slane %v330, %v1001
  %v1003 = vmul.f32 %v974, %v328
  %v1004 = vmul.f32 %v978, %v328
  %v1005 = vmul.f32 %v982, %v328
  %v1006 = vmul.f32 %v986, %v328
  %v1007 = vmul.f32 %v990, %v328
  %v1008 = vmul.f32 %v994, %v328
  %v1009 = vmul.f32 %v998, %v328
  %v1010 = vmul.f32 %v1002, %v328
  %v1011 = vlaneseq
  %v1012 = vshrl.u32 %v1011, 7
  %v1013 = vsub.s32 5, %v1012
  %v1014 = vrot.slane %v331, %v1013
  %v1015 = vlaneseq
  %v1016 = vshrl.u32 %v1015, 7
  %v1017 = vsub.s32 5, %v1016
  %v1018 = vrot.slane %v332, %v1017
  %v1019 = vlaneseq
  %v1020 = vshrl.u32 %v1019, 7
  %v1021 = vsub.s32 5, %v1020
  %v1022 = vrot.slane %v333, %v1021
  %v1023 = vlaneseq
  %v1024 = vshrl.u32 %v1023, 7
  %v1025 = vsub.s32 5, %v1024
  %v1026 = vrot.slane %v334, %v1025
  %v1027 = vlaneseq
  %v1028 = vshrl.u32 %v1027, 7
  %v1029 = vsub.s32 5, %v1028
  %v1030 = vrot.slane %v335, %v1029
  %v1031 = vlaneseq
  %v1032 = vshrl.u32 %v1031, 7
  %v1033 = vsub.s32 5, %v1032
  %v1034 = vrot.slane %v336, %v1033
  %v1035 = vlaneseq
  %v1036 = vshrl.u32 %v1035, 7
  %v1037 = vsub.s32 5, %v1036
  %v1038 = vrot.slane %v337, %v1037
  %v1039 = vlaneseq
  %v1040 = vshrl.u32 %v1039, 7
  %v1041 = vsub.s32 5, %v1040
  %v1042 = vrot.slane %v338, %v1041
  %v1043 = vmul.f32 %v1014, %v336
  %v1044 = vmul.f32 %v1018, %v336
  %v1045 = vmul.f32 %v1022, %v336
  %v1046 = vmul.f32 %v1026, %v336
  %v1047 = vmul.f32 %v1030, %v336
  %v1048 = vmul.f32 %v1034, %v336
  %v1049 = vmul.f32 %v1038, %v336
  %v1050 = vmul.f32 %v1042, %v336
  %v1051 = vsub.f32 %v1003, %v1043
  %v1052 = vsub.f32 %v1004, %v1044
  %v1053 = vsub.f32 %v1005, %v1045
  %v1054 = vsub.f32 %v1006, %v1046
  %v1055 = vsub.f32 %v1007, %v1047
  %v1056 = vsub.f32 %v1008, %v1048
  %v1057 = vsub.f32 %v1009, %v1049
  %v1058 = vsub.f32 %v1010, %v1050
  %v1059 = vmul.f32 %v974, %v336
  %v1060 = vmul.f32 %v978, %v336
  %v1061 = vmul.f32 %v982, %v336
  %v1062 = vmul.f32 %v986, %v336
  %v1063 = vmul.f32 %v990, %v336
  %v1064 = vmul.f32 %v994, %v336
  %v1065 = vmul.f32 %v998, %v336
  %v1066 = vmul.f32 %v1002, %v336
  %v1067 = vmul.f32 %v1014, %v328
  %v1068 = vmul.f32 %v1018, %v328
  %v1069 = vmul.f32 %v1022, %v328
  %v1070 = vmul.f32 %v1026, %v328
  %v1071 = vmul.f32 %v1030, %v328
  %v1072 = vmul.f32 %v1034, %v328
  %v1073 = vmul.f32 %v1038, %v328
  %v1074 = vmul.f32 %v1042, %v328
  %v1075 = vadd.f32 %v1059, %v1067
  %v1076 = vadd.f32 %v1060, %v1068
  %v1077 = vadd.f32 %v1061, %v1069
  %v1078 = vadd.f32 %v1062, %v1070
  %v1079 = vadd.f32 %v1063, %v1071
  %v1080 = vadd.f32 %v1064, %v1072
  %v1081 = vadd.f32 %v1065, %v1073
  %v1082 = vadd.f32 %v1066, %v1074
  %v1083 = vadd.f32 %v955, %v1051
  %v1084 = vadd.f32 %v956, %v1052
  %v1085 = vadd.f32 %v957, %v1053
  %v1086 = vadd.f32 %v958, %v1054
  %v1087 = vadd.f32 %v959, %v1055
  %v1088 = vadd.f32 %v960, %v1056
  %v1089 = vadd.f32 %v961, %v1057
  %v1090 = vadd.f32 %v962, %v1058
  %v1091 = vadd.f32 %v963, %v1075
  %v1092 = vadd.f32 %v964, %v1076
  %v1093 = vadd.f32 %v965, %v1077
  %v1094 = vadd.f32 %v966, %v1078
  %v1095 = vadd.f32 %v967, %v1079
  %v1096 = vadd.f32 %v968, %v1080
  %v1097 = vadd.f32 %v969, %v1081
  %v1098 = vadd.f32 %v970, %v1082
  %v1099 = vlaneseq
  %v1100 = vshrl.u32 %v1099, 7
  %v1101 = vsub.s32 6, %v1100
  %v1102 = vrot.slane %v323, %v1101
  %v1103 = vlaneseq
  %v1104 = vshrl.u32 %v1103, 7
  %v1105 = vsub.s32 6, %v1104
  %v1106 = vrot.slane %v324, %v1105
  %v1107 = vlaneseq
  %v1108 = vshrl.u32 %v1107, 7
  %v1109 = vsub.s32 6, %v1108
  %v1110 = vrot.slane %v325, %v1109
  %v1111 = vlaneseq
  %v1112 = vshrl.u32 %v1111, 7
  %v1113 = vsub.s32 6, %v1112
  %v1114 = vrot.slane %v326, %v1113
  %v1115 = vlaneseq
  %v1116 = vshrl.u32 %v1115, 7
  %v1117 = vsub.s32 6, %v1116
  %v1118 = vrot.slane %v327, %v1117
  %v1119 = vlaneseq
  %v1120 = vshrl.u32 %v1119, 7
  %v1121 = vsub.s32 6, %v1120
  %v1122 = vrot.slane %v328, %v1121
  %v1123 = vlaneseq
  %v1124 = vshrl.u32 %v1123, 7
  %v1125 = vsub.s32 6, %v1124
  %v1126 = vrot.slane %v329, %v1125
  %v1127 = vlaneseq
  %v1128 = vshrl.u32 %v1127, 7
  %v1129 = vsub.s32 6, %v1128
  %v1130 = vrot.slane %v330, %v1129
  %v1131 = vmul.f32 %v1102, %v329
  %v1132 = vmul.f32 %v1106, %v329
  %v1133 = vmul.f32 %v1110, %v329
  %v1134 = vmul.f32 %v1114, %v329
  %v1135 = vmul.f32 %v1118, %v329
  %v1136 = vmul.f32 %v1122, %v329
  %v1137 = vmul.f32 %v1126, %v329
  %v1138 = vmul.f32 %v1130, %v329
  %v1139 = vlaneseq
  %v1140 = vshrl.u32 %v1139, 7
  %v1141 = vsub.s32 6, %v1140
  %v1142 = vrot.slane %v331, %v1141
  %v1143 = vlaneseq
  %v1144 = vshrl.u32 %v1143, 7
  %v1145 = vsub.s32 6, %v1144
  %v1146 = vrot.slane %v332, %v1145
  %v1147 = vlaneseq
  %v1148 = vshrl.u32 %v1147, 7
  %v1149 = vsub.s32 6, %v1148
  %v1150 = vrot.slane %v333, %v1149
  %v1151 = vlaneseq
  %v1152 = vshrl.u32 %v1151, 7
  %v1153 = vsub.s32 6, %v1152
  %v1154 = vrot.slane %v334, %v1153
  %v1155 = vlaneseq
  %v1156 = vshrl.u32 %v1155, 7
  %v1157 = vsub.s32 6, %v1156
  %v1158 = vrot.slane %v335, %v1157
  %v1159 = vlaneseq
  %v1160 = vshrl.u32 %v1159, 7
  %v1161 = vsub.s32 6, %v1160
  %v1162 = vrot.slane %v336, %v1161
  %v1163 = vlaneseq
  %v1164 = vshrl.u32 %v1163, 7
  %v1165 = vsub.s32 6, %v1164
  %v1166 = vrot.slane %v337, %v1165
  %v1167 = vlaneseq
  %v1168 = vshrl.u32 %v1167, 7
  %v1169 = vsub.s32 6, %v1168
  %v1170 = vrot.slane %v338, %v1169
  %v1171 = vmul.f32 %v1142, %v337
  %v1172 = vmul.f32 %v1146, %v337
  %v1173 = vmul.f32 %v1150, %v337
  %v1174 = vmul.f32 %v1154, %v337
  %v1175 = vmul.f32 %v1158, %v337
  %v1176 = vmul.f32 %v1162, %v337
  %v1177 = vmul.f32 %v1166, %v337
  %v1178 = vmul.f32 %v1170, %v337
  %v1179 = vsub.f32 %v1131, %v1171
  %v1180 = vsub.f32 %v1132, %v1172
  %v1181 = vsub.f32 %v1133, %v1173
  %v1182 = vsub.f32 %v1134, %v1174
  %v1183 = vsub.f32 %v1135, %v1175
  %v1184 = vsub.f32 %v1136, %v1176
  %v1185 = vsub.f32 %v1137, %v1177
  %v1186 = vsub.f32 %v1138, %v1178
  %v1187 = vmul.f32 %v1102, %v337
  %v1188 = vmul.f32 %v1106, %v337
  %v1189 = vmul.f32 %v1110, %v337
  %v1190 = vmul.f32 %v1114, %v337
  %v1191 = vmul.f32 %v1118, %v337
  %v1192 = vmul.f32 %v1122, %v337
  %v1193 = vmul.f32 %v1126, %v337
  %v1194 = vmul.f32 %v1130, %v337
  %v1195 = vmul.f32 %v1142, %v329
  %v1196 = vmul.f32 %v1146, %v329
  %v1197 = vmul.f32 %v1150, %v329
  %v1198 = vmul.f32 %v1154, %v329
  %v1199 = vmul.f32 %v1158, %v329
  %v1200 = vmul.f32 %v1162, %v329
  %v1201 = vmul.f32 %v1166, %v329
  %v1202 = vmul.f32 %v1170, %v329
  %v1203 = vadd.f32 %v1187, %v1195
  %v1204 = vadd.f32 %v1188, %v1196
  %v1205 = vadd.f32 %v1189, %v1197
  %v1206 = vadd.f32 %v1190, %v1198
  %v1207 = vadd.f32 %v1191, %v1199
  %v1208 = vadd.f32 %v1192, %v1200
  %v1209 = vadd.f32 %v1193, %v1201
  %v1210 = vadd.f32 %v1194, %v1202
  %v1211 = vadd.f32 %v1083, %v1179
  %v1212 = vadd.f32 %v1084, %v1180
  %v1213 = vadd.f32 %v1085, %v1181
  %v1214 = vadd.f32 %v1086, %v1182
  %v1215 = vadd.f32 %v1087, %v1183
  %v1216 = vadd.f32 %v1088, %v1184
  %v1217 = vadd.f32 %v1089, %v1185
  %v1218 = vadd.f32 %v1090, %v1186
  %v1219 = vadd.f32 %v1091, %v1203
  %v1220 = vadd.f32 %v1092, %v1204
  %v1221 = vadd.f32 %v1093, %v1205
  %v1222 = vadd.f32 %v1094, %v1206
  %v1223 = vadd.f32 %v1095, %v1207
  %v1224 = vadd.f32 %v1096, %v1208
  %v1225 = vadd.f32 %v1097, %v1209
  %v1226 = vadd.f32 %v1098, %v1210
  %v1227 = vlaneseq
  %v1228 = vshrl.u32 %v1227, 7
  %v1229 = vsub.s32 7, %v1228
  %v1230 = vrot.slane %v323, %v1229
  %v1231 = vlaneseq
  %v1232 = vshrl.u32 %v1231, 7
  %v1233 = vsub.s32 7, %v1232
  %v1234 = vrot.slane %v324, %v1233
  %v1235 = vlaneseq
  %v1236 = vshrl.u32 %v1235, 7
  %v1237 = vsub.s32 7, %v1236
  %v1238 = vrot.slane %v325, %v1237
  %v1239 = vlaneseq
  %v1240 = vshrl.u32 %v1239, 7
  %v1241 = vsub.s32 7, %v1240
  %v1242 = vrot.slane %v326, %v1241
  %v1243 = vlaneseq
  %v1244 = vshrl.u32 %v1243, 7
  %v1245 = vsub.s32 7, %v1244
  %v1246 = vrot.slane %v327, %v1245
  %v1247 = vlaneseq
  %v1248 = vshrl.u32 %v1247, 7
  %v1249 = vsub.s32 7, %v1248
  %v1250 = vrot.slane %v328, %v1249
  %v1251 = vlaneseq
  %v1252 = vshrl.u32 %v1251, 7
  %v1253 = vsub.s32 7, %v1252
  %v1254 = vrot.slane %v329, %v1253
  %v1255 = vlaneseq
  %v1256 = vshrl.u32 %v1255, 7
  %v1257 = vsub.s32 7, %v1256
  %v1258 = vrot.slane %v330, %v1257
  %v1259 = vmul.f32 %v1230, %v330
  %v1260 = vmul.f32 %v1234, %v330
  %v1261 = vmul.f32 %v1238, %v330
  %v1262 = vmul.f32 %v1242, %v330
  %v1263 = vmul.f32 %v1246, %v330
  %v1264 = vmul.f32 %v1250, %v330
  %v1265 = vmul.f32 %v1254, %v330
  %v1266 = vmul.f32 %v1258, %v330
  %v1267 = vlaneseq
  %v1268 = vshrl.u32 %v1267, 7
  %v1269 = vsub.s32 7, %v1268
  %v1270 = vrot.slane %v331, %v1269
  %v1271 = vlaneseq
  %v1272 = vshrl.u32 %v1271, 7
  %v1273 = vsub.s32 7, %v1272
  %v1274 = vrot.slane %v332, %v1273
  %v1275 = vlaneseq
  %v1276 = vshrl.u32 %v1275, 7
  %v1277 = vsub.s32 7, %v1276
  %v1278 = vrot.slane %v333, %v1277
  %v1279 = vlaneseq
  %v1280 = vshrl.u32 %v1279, 7
  %v1281 = vsub.s32 7, %v1280
  %v1282 = vrot.slane %v334, %v1281
  %v1283 = vlaneseq
  %v1284 = vshrl.u32 %v1283, 7
  %v1285 = vsub.s32 7, %v1284
  %v1286 = vrot.slane %v335, %v1285
  %v1287 = vlaneseq
  %v1288 = vshrl.u32 %v1287, 7
  %v1289 = vsub.s32 7, %v1288
  %v1290 = vrot.slane %v336, %v1289
  %v1291 = vlaneseq
  %v1292 = vshrl.u32 %v1291, 7
  %v1293 = vsub.s32 7, %v1292
  %v1294 = vrot.slane %v337, %v1293
  %v1295 = vlaneseq
  %v1296 = vshrl.u32 %v1295, 7
  %v1297 = vsub.s32 7, %v1296
  %v1298 = vrot.slane %v338, %v1297
  %v1299 = vmul.f32 %v1270, %v338
  %v1300 = vmul.f32 %v1274, %v338
  %v1301 = vmul.f32 %v1278, %v338
  %v1302 = vmul.f32 %v1282, %v338
  %v1303 = vmul.f32 %v1286, %v338
  %v1304 = vmul.f32 %v1290, %v338
  %v1305 = vmul.f32 %v1294, %v338
  %v1306 = vmul.f32 %v1298, %v338
  %v1307 = vsub.f32 %v1259, %v1299
  %v1308 = vsub.f32 %v1260, %v1300
  %v1309 = vsub.f32 %v1261, %v1301
  %v1310 = vsub.f32 %v1262, %v1302
  %v1311 = vsub.f32 %v1263, %v1303
  %v1312 = vsub.f32 %v1264, %v1304
  %v1313 = vsub.f32 %v1265, %v1305
  %v1314 = vsub.f32 %v1266, %v1306
  %v1315 = vmul.f32 %v1230, %v338
  %v1316 = vmul.f32 %v1234, %v338
  %v1317 = vmul.f32 %v1238, %v338
  %v1318 = vmul.f32 %v1242, %v338
  %v1319 = vmul.f32 %v1246, %v338
  %v1320 = vmul.f32 %v1250, %v338
  %v1321 = vmul.f32 %v1254, %v338
  %v1322 = vmul.f32 %v1258, %v338
  %v1323 = vmul.f32 %v1270, %v330
  %v1324 = vmul.f32 %v1274, %v330
  %v1325 = vmul.f32 %v1278, %v330
  %v1326 = vmul.f32 %v1282, %v330
  %v1327 = vmul.f32 %v1286, %v330
  %v1328 = vmul.f32 %v1290, %v330
  %v1329 = vmul.f32 %v1294, %v330
  %v1330 = vmul.f32 %v1298, %v330
  %v1331 = vadd.f32 %v1315, %v1323
  %v1332 = vadd.f32 %v1316, %v1324
  %v1333 = vadd.f32 %v1317, %v1325
  %v1334 = vadd.f32 %v1318, %v1326
  %v1335 = vadd.f32 %v1319, %v1327
  %v1336 = vadd.f32 %v1320, %v1328
  %v1337 = vadd.f32 %v1321, %v1329
  %v1338 = vadd.f32 %v1322, %v1330
  %v1339 = vadd.f32 %v1211, %v1307
  %v1340 = vadd.f32 %v1212, %v1308
  %v1341 = vadd.f32 %v1213, %v1309
  %v1342 = vadd.f32 %v1214, %v1310
  %v1343 = vadd.f32 %v1215, %v1311
  %v1344 = vadd.f32 %v1216, %v1312
  %v1345 = vadd.f32 %v1217, %v1313
  %v1346 = vadd.f32 %v1218, %v1314
  %v1347 = vadd.f32 %v1219, %v1331
  %v1348 = vadd.f32 %v1220, %v1332
  %v1349 = vadd.f32 %v1221, %v1333
  %v1350 = vadd.f32 %v1222, %v1334
  %v1351 = vadd.f32 %v1223, %v1335
  %v1352 = vadd.f32 %v1224, %v1336
  %v1353 = vadd.f32 %v1225, %v1337
  %v1354 = vadd.f32 %v1226, %v1338
  %v1355 = vlaneseq
  %v1356 = vshrl.u32 %v1355, 7
  %v1357 = vsub.s32 0, %v1356
  %v1358 = vrot.slane %v1339, %v1357
  %v1359 = vlaneseq
  %v1360 = vshrl.u32 %v1359, 7
  %v1361 = vsub.s32 0, %v1360
  %v1362 = vrot.slane %v1340, %v1361
  %v1363 = vlaneseq
  %v1364 = vshrl.u32 %v1363, 7
  %v1365 = vsub.s32 0, %v1364
  %v1366 = vrot.slane %v1341, %v1365
  %v1367 = vlaneseq
  %v1368 = vshrl.u32 %v1367, 7
  %v1369 = vsub.s32 0, %v1368
  %v1370 = vrot.slane %v1342, %v1369
  %v1371 = vlaneseq
  %v1372 = vshrl.u32 %v1371, 7
  %v1373 = vsub.s32 0, %v1372
  %v1374 = vrot.slane %v1343, %v1373
  %v1375 = vlaneseq
  %v1376 = vshrl.u32 %v1375, 7
  %v1377 = vsub.s32 0, %v1376
  %v1378 = vrot.slane %v1344, %v1377
  %v1379 = vlaneseq
  %v1380 = vshrl.u32 %v1379, 7
  %v1381 = vsub.s32 0, %v1380
  %v1382 = vrot.slane %v1345, %v1381
  %v1383 = vlaneseq
  %v1384 = vshrl.u32 %v1383, 7
  %v1385 = vsub.s32 0, %v1384
  %v1386 = vrot.slane %v1346, %v1385
  %v1387 = vmul.f32 %v1358, %v323
  %v1388 = vmul.f32 %v1362, %v323
  %v1389 = vmul.f32 %v1366, %v323
  %v1390 = vmul.f32 %v1370, %v323
  %v1391 = vmul.f32 %v1374, %v323
  %v1392 = vmul.f32 %v1378, %v323
  %v1393 = vmul.f32 %v1382, %v323
  %v1394 = vmul.f32 %v1386, %v323
  %v1395 = vlaneseq
  %v1396 = vshrl.u32 %v1395, 7
  %v1397 = vsub.s32 0, %v1396
  %v1398 = vrot.slane %v1347, %v1397
  %v1399 = vlaneseq
  %v1400 = vshrl.u32 %v1399, 7
  %v1401 = vsub.s32 0, %v1400
  %v1402 = vrot.slane %v1348, %v1401
  %v1403 = vlaneseq
  %v1404 = vshrl.u32 %v1403, 7
  %v1405 = vsub.s32 0, %v1404
  %v1406 = vrot.slane %v1349, %v1405
  %v1407 = vlaneseq
  %v1408 = vshrl.u32 %v1407, 7
  %v1409 = vsub.s32 0, %v1408
  %v1410 = vrot.slane %v1350, %v1409
  %v1411 = vlaneseq
  %v1412 = vshrl.u32 %v1411, 7
  %v1413 = vsub.s32 0, %v1412
  %v1414 = vrot.slane %v1351, %v1413
  %v1415 = vlaneseq
  %v1416 = vshrl.u32 %v1415, 7
  %v1417 = vsub.s32 0, %v1416
  %v1418 = vrot.slane %v1352, %v1417
  %v1419 = vlaneseq
  %v1420 = vshrl.u32 %v1419, 7
  %v1421 = vsub.s32 0, %v1420
  %v1422 = vrot.slane %v1353, %v1421
  %v1423 = vlaneseq
  %v1424 = vshrl.u32 %v1423, 7
  %v1425 = vsub.s32 0, %v1424
  %v1426 = vrot.slane %v1354, %v1425
  %v1427 = vmul.f32 %v1398, %v331
  %v1428 = vmul.f32 %v1402, %v331
  %v1429 = vmul.f32 %v1406, %v331
  %v1430 = vmul.f32 %v1410, %v331
  %v1431 = vmul.f32 %v1414, %v331
  %v1432 = vmul.f32 %v1418, %v331
  %v1433 = vmul.f32 %v1422, %v331
  %v1434 = vmul.f32 %v1426, %v331
  %v1435 = vsub.f32 %v1387, %v1427
  %v1436 = vsub.f32 %v1388, %v1428
  %v1437 = vsub.f32 %v1389, %v1429
  %v1438 = vsub.f32 %v1390, %v1430
  %v1439 = vsub.f32 %v1391, %v1431
  %v1440 = vsub.f32 %v1392, %v1432
  %v1441 = vsub.f32 %v1393, %v1433
  %v1442 = vsub.f32 %v1394, %v1434
  %v1443 = vmul.f32 %v1358, %v331
  %v1444 = vmul.f32 %v1362, %v331
  %v1445 = vmul.f32 %v1366, %v331
  %v1446 = vmul.f32 %v1370, %v331
  %v1447 = vmul.f32 %v1374, %v331
  %v1448 = vmul.f32 %v1378, %v331
  %v1449 = vmul.f32 %v1382, %v331
  %v1450 = vmul.f32 %v1386, %v331
  %v1451 = vmul.f32 %v1398, %v323
  %v1452 = vmul.f32 %v1402, %v323
  %v1453 = vmul.f32 %v1406, %v323
  %v1454 = vmul.f32 %v1410, %v323
  %v1455 = vmul.f32 %v1414, %v323
  %v1456 = vmul.f32 %v1418, %v323
  %v1457 = vmul.f32 %v1422, %v323
  %v1458 = vmul.f32 %v1426, %v323
  %v1459 = vadd.f32 %v1443, %v1451
  %v1460 = vadd.f32 %v1444, %v1452
  %v1461 = vadd.f32 %v1445, %v1453
  %v1462 = vadd.f32 %v1446, %v1454
  %v1463 = vadd.f32 %v1447, %v1455
  %v1464 = vadd.f32 %v1448, %v1456
  %v1465 = vadd.f32 %v1449, %v1457
  %v1466 = vadd.f32 %v1450, %v1458
  %v1467 = vlaneseq
  %v1468 = vshrl.u32 %v1467, 7
  %v1469 = vsub.s32 1, %v1468
  %v1470 = vrot.slane %v1339, %v1469
  %v1471 = vlaneseq
  %v1472 = vshrl.u32 %v1471, 7
  %v1473 = vsub.s32 1, %v1472
  %v1474 = vrot.slane %v1340, %v1473
  %v1475 = vlaneseq
  %v1476 = vshrl.u32 %v1475, 7
  %v1477 = vsub.s32 1, %v1476
  %v1478 = vrot.slane %v1341, %v1477
  %v1479 = vlaneseq
  %v1480 = vshrl.u32 %v1479, 7
  %v1481 = vsub.s32 1, %v1480
  %v1482 = vrot.slane %v1342, %v1481
  %v1483 = vlaneseq
  %v1484 = vshrl.u32 %v1483, 7
  %v1485 = vsub.s32 1, %v1484
  %v1486 = vrot.slane %v1343, %v1485
  %v1487 = vlaneseq
  %v1488 = vshrl.u32 %v1487, 7
  %v1489 = vsub.s32 1, %v1488
  %v1490 = vrot.slane %v1344, %v1489
  %v1491 = vlaneseq
  %v1492 = vshrl.u32 %v1491, 7
  %v1493 = vsub.s32 1, %v1492
  %v1494 = vrot.slane %v1345, %v1493
  %v1495 = vlaneseq
  %v1496 = vshrl.u32 %v1495, 7
  %v1497 = vsub.s32 1, %v1496
  %v1498 = vrot.slane %v1346, %v1497
  %v1499 = vmul.f32 %v1470, %v324
  %v1500 = vmul.f32 %v1474, %v324
  %v1501 = vmul.f32 %v1478, %v324
  %v1502 = vmul.f32 %v1482, %v324
  %v1503 = vmul.f32 %v1486, %v324
  %v1504 = vmul.f32 %v1490, %v324
  %v1505 = vmul.f32 %v1494, %v324
  %v1506 = vmul.f32 %v1498, %v324
  %v1507 = vlaneseq
  %v1508 = vshrl.u32 %v1507, 7
  %v1509 = vsub.s32 1, %v1508
  %v1510 = vrot.slane %v1347, %v1509
  %v1511 = vlaneseq
  %v1512 = vshrl.u32 %v1511, 7
  %v1513 = vsub.s32 1, %v1512
  %v1514 = vrot.slane %v1348, %v1513
  %v1515 = vlaneseq
  %v1516 = vshrl.u32 %v1515, 7
  %v1517 = vsub.s32 1, %v1516
  %v1518 = vrot.slane %v1349, %v1517
  %v1519 = vlaneseq
  %v1520 = vshrl.u32 %v1519, 7
  %v1521 = vsub.s32 1, %v1520
  %v1522 = vrot.slane %v1350, %v1521
  %v1523 = vlaneseq
  %v1524 = vshrl.u32 %v1523, 7
  %v1525 = vsub.s32 1, %v1524
  %v1526 = vrot.slane %v1351, %v1525
  %v1527 = vlaneseq
  %v1528 = vshrl.u32 %v1527, 7
  %v1529 = vsub.s32 1, %v1528
  %v1530 = vrot.slane %v1352, %v1529
  %v1531 = vlaneseq
  %v1532 = vshrl.u32 %v1531, 7
  %v1533 = vsub.s32 1, %v1532
  %v1534 = vrot.slane %v1353, %v1533
  %v1535 = vlaneseq
  %v1536 = vshrl.u32 %v1535, 7
  %v1537 = vsub.s32 1, %v1536
  %v1538 = vrot.slane %v1354, %v1537
  %v1539 = vmul.f32 %v1510, %v332
  %v1540 = vmul.f32 %v1514, %v332
  %v1541 = vmul.f32 %v1518, %v332
  %v1542 = vmul.f32 %v1522, %v332
  %v1543 = vmul.f32 %v1526, %v332
  %v1544 = vmul.f32 %v1530, %v332
  %v1545 = vmul.f32 %v1534, %v332
  %v1546 = vmul.f32 %v1538, %v332
  %v1547 = vsub.f32 %v1499, %v1539
  %v1548 = vsub.f32 %v1500, %v1540
  %v1549 = vsub.f32 %v1501, %v1541
  %v1550 = vsub.f32 %v1502, %v1542
  %v1551 = vsub.f32 %v1503, %v1543
  %v1552 = vsub.f32 %v1504, %v1544
  %v1553 = vsub.f32 %v1505, %v1545
  %v1554 = vsub.f32 %v1506, %v1546
  %v1555 = vmul.f32 %v1470, %v332
  %v1556 = vmul.f32 %v1474, %v332
  %v1557 = vmul.f32 %v1478, %v332
  %v1558 = vmul.f32 %v1482, %v332
  %v1559 = vmul.f32 %v1486, %v332
  %v1560 = vmul.f32 %v1490, %v332
  %v1561 = vmul.f32 %v1494, %v332
  %v1562 = vmul.f32 %v1498, %v332
  %v1563 = vmul.f32 %v1510, %v324
  %v1564 = vmul.f32 %v1514, %v324
  %v1565 = vmul.f32 %v1518, %v324
  %v1566 = vmul.f32 %v1522, %v324
  %v1567 = vmul.f32 %v1526, %v324
  %v1568 = vmul.f32 %v1530, %v324
  %v1569 = vmul.f32 %v1534, %v324
  %v1570 = vmul.f32 %v1538, %v324
  %v1571 = vadd.f32 %v1555, %v1563
  %v1572 = vadd.f32 %v1556, %v1564
  %v1573 = vadd.f32 %v1557, %v1565
  %v1574 = vadd.f32 %v1558, %v1566
  %v1575 = vadd.f32 %v1559, %v1567
  %v1576 = vadd.f32 %v1560, %v1568
  %v1577 = vadd.f32 %v1561, %v1569
  %v1578 = vadd.f32 %v1562, %v1570
  %v1579 = vadd.f32 %v1435, %v1547
  %v1580 = vadd.f32 %v1436, %v1548
  %v1581 = vadd.f32 %v1437, %v1549
  %v1582 = vadd.f32 %v1438, %v1550
  %v1583 = vadd.f32 %v1439, %v1551
  %v1584 = vadd.f32 %v1440, %v1552
  %v1585 = vadd.f32 %v1441, %v1553
  %v1586 = vadd.f32 %v1442, %v1554
  %v1587 = vadd.f32 %v1459, %v1571
  %v1588 = vadd.f32 %v1460, %v1572
  %v1589 = vadd.f32 %v1461, %v1573
  %v1590 = vadd.f32 %v1462, %v1574
  %v1591 = vadd.f32 %v1463, %v1575
  %v1592 = vadd.f32 %v1464, %v1576
  %v1593 = vadd.f32 %v1465, %v1577
  %v1594 = vadd.f32 %v1466, %v1578
  %v1595 = vlaneseq
  %v1596 = vshrl.u32 %v1595, 7
  %v1597 = vsub.s32 2, %v1596
  %v1598 = vrot.slane %v1339, %v1597
  %v1599 = vlaneseq
  %v1600 = vshrl.u32 %v1599, 7
  %v1601 = vsub.s32 2, %v1600
  %v1602 = vrot.slane %v1340, %v1601
  %v1603 = vlaneseq
  %v1604 = vshrl.u32 %v1603, 7
  %v1605 = vsub.s32 2, %v1604
  %v1606 = vrot.slane %v1341, %v1605
  %v1607 = vlaneseq
  %v1608 = vshrl.u32 %v1607, 7
  %v1609 = vsub.s32 2, %v1608
  %v1610 = vrot.slane %v1342, %v1609
  %v1611 = vlaneseq
  %v1612 = vshrl.u32 %v1611, 7
  %v1613 = vsub.s32 2, %v1612
  %v1614 = vrot.slane %v1343, %v1613
  %v1615 = vlaneseq
  %v1616 = vshrl.u32 %v1615, 7
  %v1617 = vsub.s32 2, %v1616
  %v1618 = vrot.slane %v1344, %v1617
  %v1619 = vlaneseq
  %v1620 = vshrl.u32 %v1619, 7
  %v1621 = vsub.s32 2, %v1620
  %v1622 = vrot.slane %v1345, %v1621
  %v1623 = vlaneseq
  %v1624 = vshrl.u32 %v1623, 7
  %v1625 = vsub.s32 2, %v1624
  %v1626 = vrot.slane %v1346, %v1625
  %v1627 = vmul.f32 %v1598, %v325
  %v1628 = vmul.f32 %v1602, %v325
  %v1629 = vmul.f32 %v1606, %v325
  %v1630 = vmul.f32 %v1610, %v325
  %v1631 = vmul.f32 %v1614, %v325
  %v1632 = vmul.f32 %v1618, %v325
  %v1633 = vmul.f32 %v1622, %v325
  %v1634 = vmul.f32 %v1626, %v325
  %v1635 = vlaneseq
  %v1636 = vshrl.u32 %v1635, 7
  %v1637 = vsub.s32 2, %v1636
  %v1638 = vrot.slane %v1347, %v1637
  %v1639 = vlaneseq
  %v1640 = vshrl.u32 %v1639, 7
  %v1641 = vsub.s32 2, %v1640
  %v1642 = vrot.slane %v1348, %v1641
  %v1643 = vlaneseq
  %v1644 = vshrl.u32 %v1643, 7
  %v1645 = vsub.s32 2, %v1644
  %v1646 = vrot.slane %v1349, %v1645
  %v1647 = vlaneseq
  %v1648 = vshrl.u32 %v1647, 7
  %v1649 = vsub.s32 2, %v1648
  %v1650 = vrot.slane %v1350, %v1649
  %v1651 = vlaneseq
  %v1652 = vshrl.u32 %v1651, 7
  %v1653 = vsub.s32 2, %v1652
  %v1654 = vrot.slane %v1351, %v1653
  %v1655 = vlaneseq
  %v1656 = vshrl.u32 %v1655, 7
  %v1657 = vsub.s32 2, %v1656
  %v1658 = vrot.slane %v1352, %v1657
  %v1659 = vlaneseq
  %v1660 = vshrl.u32 %v1659, 7
  %v1661 = vsub.s32 2, %v1660
  %v1662 = vrot.slane %v1353, %v1661
  %v1663 = vlaneseq
  %v1664 = vshrl.u32 %v1663, 7
  %v1665 = vsub.s32 2, %v1664
  %v1666 = vrot.slane %v1354, %v1665
  %v1667 = vmul.f32 %v1638, %v333
  %v1668 = vmul.f32 %v1642, %v333
  %v1669 = vmul.f32 %v1646, %v333
  %v1670 = vmul.f32 %v1650, %v333
  %v1671 = vmul.f32 %v1654, %v333
  %v1672 = vmul.f32 %v1658, %v333
  %v1673 = vmul.f32 %v1662, %v333
  %v1674 = vmul.f32 %v1666, %v333
  %v1675 = vsub.f32 %v1627, %v1667
  %v1676 = vsub.f32 %v1628, %v1668
  %v1677 = vsub.f32 %v1629, %v1669
  %v1678 = vsub.f32 %v1630, %v1670
  %v1679 = vsub.f32 %v1631, %v1671
  %v1680 = vsub.f32 %v1632, %v1672
  %v1681 = vsub.f32 %v1633, %v1673
  %v1682 = vsub.f32 %v1634, %v1674
  %v1683 = vmul.f32 %v1598, %v333
  %v1684 = vmul.f32 %v1602, %v333
  %v1685 = vmul.f32 %v1606, %v333
  %v1686 = vmul.f32 %v1610, %v333
  %v1687 = vmul.f32 %v1614, %v333
  %v1688 = vmul.f32 %v1618, %v333
  %v1689 = vmul.f32 %v1622, %v333
  %v1690 = vmul.f32 %v1626, %v333
  %v1691 = vmul.f32 %v1638, %v325
  %v1692 = vmul.f32 %v1642, %v325
  %v1693 = vmul.f32 %v1646, %v325
  %v1694 = vmul.f32 %v1650, %v325
  %v1695 = vmul.f32 %v1654, %v325
  %v1696 = vmul.f32 %v1658, %v325
  %v1697 = vmul.f32 %v1662, %v325
  %v1698 = vmul.f32 %v1666, %v325
  %v1699 = vadd.f32 %v1683, %v1691
  %v1700 = vadd.f32 %v1684, %v1692
  %v1701 = vadd.f32 %v1685, %v1693
  %v1702 = vadd.f32 %v1686, %v1694
  %v1703 = vadd.f32 %v1687, %v1695
  %v1704 = vadd.f32 %v1688, %v1696
  %v1705 = vadd.f32 %v1689, %v1697
  %v1706 = vadd.f32 %v1690, %v1698
  %v1707 = vadd.f32 %v1579, %v1675
  %v1708 = vadd.f32 %v1580, %v1676
  %v1709 = vadd.f32 %v1581, %v1677
  %v1710 = vadd.f32 %v1582, %v1678
  %v1711 = vadd.f32 %v1583, %v1679
  %v1712 = vadd.f32 %v1584, %v1680
  %v1713 = vadd.f32 %v1585, %v1681
  %v1714 = vadd.f32 %v1586, %v1682
  %v1715 = vadd.f32 %v1587, %v1699
  %v1716 = vadd.f32 %v1588, %v1700
  %v1717 = vadd.f32 %v1589, %v1701
  %v1718 = vadd.f32 %v1590, %v1702
  %v1719 = vadd.f32 %v1591, %v1703
  %v1720 = vadd.f32 %v1592, %v1704
  %v1721 = vadd.f32 %v1593, %v1705
  %v1722 = vadd.f32 %v1594, %v1706
  %v1723 = vlaneseq
  %v1724 = vshrl.u32 %v1723, 7
  %v1725 = vsub.s32 3, %v1724
  %v1726 = vrot.slane %v1339, %v1725
  %v1727 = vlaneseq
  %v1728 = vshrl.u32 %v1727, 7
  %v1729 = vsub.s32 3, %v1728
  %v1730 = vrot.slane %v1340, %v1729
  %v1731 = vlaneseq
  %v1732 = vshrl.u32 %v1731, 7
  %v1733 = vsub.s32 3, %v1732
  %v1734 = vrot.slane %v1341, %v1733
  %v1735 = vlaneseq
  %v1736 = vshrl.u32 %v1735, 7
  %v1737 = vsub.s32 3, %v1736
  %v1738 = vrot.slane %v1342, %v1737
  %v1739 = vlaneseq
  %v1740 = vshrl.u32 %v1739, 7
  %v1741 = vsub.s32 3, %v1740
  %v1742 = vrot.slane %v1343, %v1741
  %v1743 = vlaneseq
  %v1744 = vshrl.u32 %v1743, 7
  %v1745 = vsub.s32 3, %v1744
  %v1746 = vrot.slane %v1344, %v1745
  %v1747 = vlaneseq
  %v1748 = vshrl.u32 %v1747, 7
  %v1749 = vsub.s32 3, %v1748
  %v1750 = vrot.slane %v1345, %v1749
  %v1751 = vlaneseq
  %v1752 = vshrl.u32 %v1751, 7
  %v1753 = vsub.s32 3, %v1752
  %v1754 = vrot.slane %v1346, %v1753
  %v1755 = vmul.f32 %v1726, %v326
  %v1756 = vmul.f32 %v1730, %v326
  %v1757 = vmul.f32 %v1734, %v326
  %v1758 = vmul.f32 %v1738, %v326
  %v1759 = vmul.f32 %v1742, %v326
  %v1760 = vmul.f32 %v1746, %v326
  %v1761 = vmul.f32 %v1750, %v326
  %v1762 = vmul.f32 %v1754, %v326
  %v1763 = vlaneseq
  %v1764 = vshrl.u32 %v1763, 7
  %v1765 = vsub.s32 3, %v1764
  %v1766 = vrot.slane %v1347, %v1765
  %v1767 = vlaneseq
  %v1768 = vshrl.u32 %v1767, 7
  %v1769 = vsub.s32 3, %v1768
  %v1770 = vrot.slane %v1348, %v1769
  %v1771 = vlaneseq
  %v1772 = vshrl.u32 %v1771, 7
  %v1773 = vsub.s32 3, %v1772
  %v1774 = vrot.slane %v1349, %v1773
  %v1775 = vlaneseq
  %v1776 = vshrl.u32 %v1775, 7
  %v1777 = vsub.s32 3, %v1776
  %v1778 = vrot.slane %v1350, %v1777
  %v1779 = vlaneseq
  %v1780 = vshrl.u32 %v1779, 7
  %v1781 = vsub.s32 3, %v1780
  %v1782 = vrot.slane %v1351, %v1781
  %v1783 = vlaneseq
  %v1784 = vshrl.u32 %v1783, 7
  %v1785 = vsub.s32 3, %v1784
  %v1786 = vrot.slane %v1352, %v1785
  %v1787 = vlaneseq
  %v1788 = vshrl.u32 %v1787, 7
  %v1789 = vsub.s32 3, %v1788
  %v1790 = vrot.slane %v1353, %v1789
  %v1791 = vlaneseq
  %v1792 = vshrl.u32 %v1791, 7
  %v1793 = vsub.s32 3, %v1792
  %v1794 = vrot.slane %v1354, %v1793
  %v1795 = vmul.f32 %v1766, %v334
  %v1796 = vmul.f32 %v1770, %v334
  %v1797 = vmul.f32 %v1774, %v334
  %v1798 = vmul.f32 %v1778, %v334
  %v1799 = vmul.f32 %v1782, %v334
  %v1800 = vmul.f32 %v1786, %v334
  %v1801 = vmul.f32 %v1790, %v334
  %v1802 = vmul.f32 %v1794, %v334
  %v1803 = vsub.f32 %v1755, %v1795
  %v1804 = vsub.f32 %v1756, %v1796
  %v1805 = vsub.f32 %v1757, %v1797
  %v1806 = vsub.f32 %v1758, %v1798
  %v1807 = vsub.f32 %v1759, %v1799
  %v1808 = vsub.f32 %v1760, %v1800
  %v1809 = vsub.f32 %v1761, %v1801
  %v1810 = vsub.f32 %v1762, %v1802
  %v1811 = vmul.f32 %v1726, %v334
  %v1812 = vmul.f32 %v1730, %v334
  %v1813 = vmul.f32 %v1734, %v334
  %v1814 = vmul.f32 %v1738, %v334
  %v1815 = vmul.f32 %v1742, %v334
  %v1816 = vmul.f32 %v1746, %v334
  %v1817 = vmul.f32 %v1750, %v334
  %v1818 = vmul.f32 %v1754, %v334
  %v1819 = vmul.f32 %v1766, %v326
  %v1820 = vmul.f32 %v1770, %v326
  %v1821 = vmul.f32 %v1774, %v326
  %v1822 = vmul.f32 %v1778, %v326
  %v1823 = vmul.f32 %v1782, %v326
  %v1824 = vmul.f32 %v1786, %v326
  %v1825 = vmul.f32 %v1790, %v326
  %v1826 = vmul.f32 %v1794, %v326
  %v1827 = vadd.f32 %v1811, %v1819
  %v1828 = vadd.f32 %v1812, %v1820
  %v1829 = vadd.f32 %v1813, %v1821
  %v1830 = vadd.f32 %v1814, %v1822
  %v1831 = vadd.f32 %v1815, %v1823
  %v1832 = vadd.f32 %v1816, %v1824
  %v1833 = vadd.f32 %v1817, %v1825
  %v1834 = vadd.f32 %v1818, %v1826
  %v1835 = vadd.f32 %v1707, %v1803
  %v1836 = vadd.f32 %v1708, %v1804
  %v1837 = vadd.f32 %v1709, %v1805
  %v1838 = vadd.f32 %v1710, %v1806
  %v1839 = vadd.f32 %v1711, %v1807
  %v1840 = vadd.f32 %v1712, %v1808
  %v1841 = vadd.f32 %v1713, %v1809
  %v1842 = vadd.f32 %v1714, %v1810
  %v1843 = vadd.f32 %v1715, %v1827
  %v1844 = vadd.f32 %v1716, %v1828
  %v1845 = vadd.f32 %v1717, %v1829
  %v1846 = vadd.f32 %v1718, %v1830
  %v1847 = vadd.f32 %v1719, %v1831
  %v1848 = vadd.f32 %v1720, %v1832
  %v1849 = vadd.f32 %v1721, %v1833
  %v1850 = vadd.f32 %v1722, %v1834
  %v1851 = vlaneseq
  %v1852 = vshrl.u32 %v1851, 7
  %v1853 = vsub.s32 4, %v1852
  %v1854 = vrot.slane %v1339, %v1853
  %v1855 = vlaneseq
  %v1856 = vshrl.u32 %v1855, 7
  %v1857 = vsub.s32 4, %v1856
  %v1858 = vrot.slane %v1340, %v1857
  %v1859 = vlaneseq
  %v1860 = vshrl.u32 %v1859, 7
  %v1861 = vsub.s32 4, %v1860
  %v1862 = vrot.slane %v1341, %v1861
  %v1863 = vlaneseq
  %v1864 = vshrl.u32 %v1863, 7
  %v1865 = vsub.s32 4, %v1864
  %v1866 = vrot.slane %v1342, %v1865
  %v1867 = vlaneseq
  %v1868 = vshrl.u32 %v1867, 7
  %v1869 = vsub.s32 4, %v1868
  %v1870 = vrot.slane %v1343, %v1869
  %v1871 = vlaneseq
  %v1872 = vshrl.u32 %v1871, 7
  %v1873 = vsub.s32 4, %v1872
  %v1874 = vrot.slane %v1344, %v1873
  %v1875 = vlaneseq
  %v1876 = vshrl.u32 %v1875, 7
  %v1877 = vsub.s32 4, %v1876
  %v1878 = vrot.slane %v1345, %v1877
  %v1879 = vlaneseq
  %v1880 = vshrl.u32 %v1879, 7
  %v1881 = vsub.s32 4, %v1880
  %v1882 = vrot.slane %v1346, %v1881
  %v1883 = vmul.f32 %v1854, %v327
  %v1884 = vmul.f32 %v1858, %v327
  %v1885 = vmul.f32 %v1862, %v327
  %v1886 = vmul.f32 %v1866, %v327
  %v1887 = vmul.f32 %v1870, %v327
  %v1888 = vmul.f32 %v1874, %v327
  %v1889 = vmul.f32 %v1878, %v327
  %v1890 = vmul.f32 %v1882, %v327
  %v1891 = vlaneseq
  %v1892 = vshrl.u32 %v1891, 7
  %v1893 = vsub.s32 4, %v1892
  %v1894 = vrot.slane %v1347, %v1893
  %v1895 = vlaneseq
  %v1896 = vshrl.u32 %v1895, 7
  %v1897 = vsub.s32 4, %v1896
  %v1898 = vrot.slane %v1348, %v1897
  %v1899 = vlaneseq
  %v1900 = vshrl.u32 %v1899, 7
  %v1901 = vsub.s32 4, %v1900
  %v1902 = vrot.slane %v1349, %v1901
  %v1903 = vlaneseq
  %v1904 = vshrl.u32 %v1903, 7
  %v1905 = vsub.s32 4, %v1904
  %v1906 = vrot.slane %v1350, %v1905
  %v1907 = vlaneseq
  %v1908 = vshrl.u32 %v1907, 7
  %v1909 = vsub.s32 4, %v1908
  %v1910 = vrot.slane %v1351, %v1909
  %v1911 = vlaneseq
  %v1912 = vshrl.u32 %v1911, 7
  %v1913 = vsub.s32 4, %v1912
  %v1914 = vrot.slane %v1352, %v1913
  %v1915 = vlaneseq
  %v1916 = vshrl.u32 %v1915, 7
  %v1917 = vsub.s32 4, %v1916
  %v1918 = vrot.slane %v1353, %v1917
  %v1919 = vlaneseq
  %v1920 = vshrl.u32 %v1919, 7
  %v1921 = vsub.s32 4, %v1920
  %v1922 = vrot.slane %v1354, %v1921
  %v1923 = vmul.f32 %v1894, %v335
  %v1924 = vmul.f32 %v1898, %v335
  %v1925 = vmul.f32 %v1902, %v335
  %v1926 = vmul.f32 %v1906, %v335
  %v1927 = vmul.f32 %v1910, %v335
  %v1928 = vmul.f32 %v1914, %v335
  %v1929 = vmul.f32 %v1918, %v335
  %v1930 = vmul.f32 %v1922, %v335
  %v1931 = vsub.f32 %v1883, %v1923
  %v1932 = vsub.f32 %v1884, %v1924
  %v1933 = vsub.f32 %v1885, %v1925
  %v1934 = vsub.f32 %v1886, %v1926
  %v1935 = vsub.f32 %v1887, %v1927
  %v1936 = vsub.f32 %v1888, %v1928
  %v1937 = vsub.f32 %v1889, %v1929
  %v1938 = vsub.f32 %v1890, %v1930
  %v1939 = vmul.f32 %v1854, %v335
  %v1940 = vmul.f32 %v1858, %v335
  %v1941 = vmul.f32 %v1862, %v335
  %v1942 = vmul.f32 %v1866, %v335
  %v1943 = vmul.f32 %v1870, %v335
  %v1944 = vmul.f32 %v1874, %v335
  %v1945 = vmul.f32 %v1878, %v335
  %v1946 = vmul.f32 %v1882, %v335
  %v1947 = vmul.f32 %v1894, %v327
  %v1948 = vmul.f32 %v1898, %v327
  %v1949 = vmul.f32 %v1902, %v327
  %v1950 = vmul.f32 %v1906, %v327
  %v1951 = vmul.f32 %v1910, %v327
  %v1952 = vmul.f32 %v1914, %v327
  %v1953 = vmul.f32 %v1918, %v327
  %v1954 = vmul.f32 %v1922, %v327
  %v1955 = vadd.f32 %v1939, %v1947
  %v1956 = vadd.f32 %v1940, %v1948
  %v1957 = vadd.f32 %v1941, %v1949
  %v1958 = vadd.f32 %v1942, %v1950
  %v1959 = vadd.f32 %v1943, %v1951
  %v1960 = vadd.f32 %v1944, %v1952
  %v1961 = vadd.f32 %v1945, %v1953
  %v1962 = vadd.f32 %v1946, %v1954
  %v1963 = vadd.f32 %v1835, %v1931
  %v1964 = vadd.f32 %v1836, %v1932
  %v1965 = vadd.f32 %v1837, %v1933
  %v1966 = vadd.f32 %v1838, %v1934
  %v1967 = vadd.f32 %v1839, %v1935
  %v1968 = vadd.f32 %v1840, %v1936
  %v1969 = vadd.f32 %v1841, %v1937
  %v1970 = vadd.f32 %v1842, %v1938
  %v1971 = vadd.f32 %v1843, %v1955
  %v1972 = vadd.f32 %v1844, %v1956
  %v1973 = vadd.f32 %v1845, %v1957
  %v1974 = vadd.f32 %v1846, %v1958
  %v1975 = vadd.f32 %v1847, %v1959
  %v1976 = vadd.f32 %v1848, %v1960
  %v1977 = vadd.f32 %v1849, %v1961
  %v1978 = vadd.f32 %v1850, %v1962
  %v1979 = vlaneseq
  %v1980 = vshrl.u32 %v1979, 7
  %v1981 = vsub.s32 5, %v1980
  %v1982 = vrot.slane %v1339, %v1981
  %v1983 = vlaneseq
  %v1984 = vshrl.u32 %v1983, 7
  %v1985 = vsub.s32 5, %v1984
  %v1986 = vrot.slane %v1340, %v1985
  %v1987 = vlaneseq
  %v1988 = vshrl.u32 %v1987, 7
  %v1989 = vsub.s32 5, %v1988
  %v1990 = vrot.slane %v1341, %v1989
  %v1991 = vlaneseq
  %v1992 = vshrl.u32 %v1991, 7
  %v1993 = vsub.s32 5, %v1992
  %v1994 = vrot.slane %v1342, %v1993
  %v1995 = vlaneseq
  %v1996 = vshrl.u32 %v1995, 7
  %v1997 = vsub.s32 5, %v1996
  %v1998 = vrot.slane %v1343, %v1997
  %v1999 = vlaneseq
  %v2000 = vshrl.u32 %v1999, 7
  %v2001 = vsub.s32 5, %v2000
  %v2002 = vrot.slane %v1344, %v2001
  %v2003 = vlaneseq
  %v2004 = vshrl.u32 %v2003, 7
  %v2005 = vsub.s32 5, %v2004
  %v2006 = vrot.slane %v1345, %v2005
  %v2007 = vlaneseq
  %v2008 = vshrl.u32 %v2007, 7
  %v2009 = vsub.s32 5, %v2008
  %v2010 = vrot.slane %v1346, %v2009
  %v2011 = vmul.f32 %v1982, %v328
  %v2012 = vmul.f32 %v1986, %v328
  %v2013 = vmul.f32 %v1990, %v328
  %v2014 = vmul.f32 %v1994, %v328
  %v2015 = vmul.f32 %v1998, %v328
  %v2016 = vmul.f32 %v2002, %v328
  %v2017 = vmul.f32 %v2006, %v328
  %v2018 = vmul.f32 %v2010, %v328
  %v2019 = vlaneseq
  %v2020 = vshrl.u32 %v2019, 7
  %v2021 = vsub.s32 5, %v2020
  %v2022 = vrot.slane %v1347, %v2021
  %v2023 = vlaneseq
  %v2024 = vshrl.u32 %v2023, 7
  %v2025 = vsub.s32 5, %v2024
  %v2026 = vrot.slane %v1348, %v2025
  %v2027 = vlaneseq
  %v2028 = vshrl.u32 %v2027, 7
  %v2029 = vsub.s32 5, %v2028
  %v2030 = vrot.slane %v1349, %v2029
  %v2031 = vlaneseq
  %v2032 = vshrl.u32 %v2031, 7
  %v2033 = vsub.s32 5, %v2032
  %v2034 = vrot.slane %v1350, %v2033
  %v2035 = vlaneseq
  %v2036 = vshrl.u32 %v2035, 7
  %v2037 = vsub.s32 5, %v2036
  %v2038 = vrot.slane %v1351, %v2037
  %v2039 = vlaneseq
  %v2040 = vshrl.u32 %v2039, 7
  %v2041 = vsub.s32 5, %v2040
  %v2042 = vrot.slane %v1352, %v2041
  %v2043 = vlaneseq
  %v2044 = vshrl.u32 %v2043, 7
  %v2045 = vsub.s32 5, %v2044
  %v2046 = vrot.slane %v1353, %v2045
  %v2047 = vlaneseq
  %v2048 = vshrl.u32 %v2047, 7
  %v2049 = vsub.s32 5, %v2048
  %v2050 = vrot.slane %v1354, %v2049
  %v2051 = vmul.f32 %v2022, %v336
  %v2052 = vmul.f32 %v2026, %v336
  %v2053 = vmul.f32 %v2030, %v336
  %v2054 = vmul.f32 %v2034, %v336
  %v2055 = vmul.f32 %v2038, %v336
  %v2056 = vmul.f32 %v2042, %v336
  %v2057 = vmul.f32 %v2046, %v336
  %v2058 = vmul.f32 %v2050, %v336
  %v2059 = vsub.f32 %v2011, %v2051
  %v2060 = vsub.f32 %v2012, %v2052
  %v2061 = vsub.f32 %v2013, %v2053
  %v2062 = vsub.f32 %v2014, %v2054
  %v2063 = vsub.f32 %v2015, %v2055
  %v2064 = vsub.f32 %v2016, %v2056
  %v2065 = vsub.f32 %v2017, %v2057
  %v2066 = vsub.f32 %v2018, %v2058
  %v2067 = vmul.f32 %v1982, %v336
  %v2068 = vmul.f32 %v1986, %v336
  %v2069 = vmul.f32 %v1990, %v336
  %v2070 = vmul.f32 %v1994, %v336
  %v2071 = vmul.f32 %v1998, %v336
  %v2072 = vmul.f32 %v2002, %v336
  %v2073 = vmul.f32 %v2006, %v336
  %v2074 = vmul.f32 %v2010, %v336
  %v2075 = vmul.f32 %v2022, %v328
  %v2076 = vmul.f32 %v2026, %v328
  %v2077 = vmul.f32 %v2030, %v328
  %v2078 = vmul.f32 %v2034, %v328
  %v2079 = vmul.f32 %v2038, %v328
  %v2080 = vmul.f32 %v2042, %v328
  %v2081 = vmul.f32 %v2046, %v328
  %v2082 = vmul.f32 %v2050, %v328
  %v2083 = vadd.f32 %v2067, %v2075
  %v2084 = vadd.f32 %v2068, %v2076
  %v2085 = vadd.f32 %v2069, %v2077
  %v2086 = vadd.f32 %v2070, %v2078
  %v2087 = vadd.f32 %v2071, %v2079
  %v2088 = vadd.f32 %v2072, %v2080
  %v2089 = vadd.f32 %v2073, %v2081
  %v2090 = vadd.f32 %v2074, %v2082
  %v2091 = vadd.f32 %v1963, %v2059
  %v2092 = vadd.f32 %v1964, %v2060
  %v2093 = vadd.f32 %v1965, %v2061
  %v2094 = vadd.f32 %v1966, %v2062
  %v2095 = vadd.f32 %v1967, %v2063
  %v2096 = vadd.f32 %v1968, %v2064
  %v2097 = vadd.f32 %v1969, %v2065
  %v2098 = vadd.f32 %v1970, %v2066
  %v2099 = vadd.f32 %v1971, %v2083
  %v2100 = vadd.f32 %v1972, %v2084
  %v2101 = vadd.f32 %v1973, %v2085
  %v2102 = vadd.f32 %v1974, %v2086
  %v2103 = vadd.f32 %v1975, %v2087
  %v2104 = vadd.f32 %v1976, %v2088
  %v2105 = vadd.f32 %v1977, %v2089
  %v2106 = vadd.f32 %v1978, %v2090
  %v2107 = vlaneseq
  %v2108 = vshrl.u32 %v2107, 7
  %v2109 = vsub.s32 6, %v2108
  %v2110 = vrot.slane %v1339, %v2109
  %v2111 = vlaneseq
  %v2112 = vshrl.u32 %v2111, 7
  %v2113 = vsub.s32 6, %v2112
  %v2114 = vrot.slane %v1340, %v2113
  %v2115 = vlaneseq
  %v2116 = vshrl.u32 %v2115, 7
  %v2117 = vsub.s32 6, %v2116
  %v2118 = vrot.slane %v1341, %v2117
  %v2119 = vlaneseq
  %v2120 = vshrl.u32 %v2119, 7
  %v2121 = vsub.s32 6, %v2120
  %v2122 = vrot.slane %v1342, %v2121
  %v2123 = vlaneseq
  %v2124 = vshrl.u32 %v2123, 7
  %v2125 = vsub.s32 6, %v2124
  %v2126 = vrot.slane %v1343, %v2125
  %v2127 = vlaneseq
  %v2128 = vshrl.u32 %v2127, 7
  %v2129 = vsub.s32 6, %v2128
  %v2130 = vrot.slane %v1344, %v2129
  %v2131 = vlaneseq
  %v2132 = vshrl.u32 %v2131, 7
  %v2133 = vsub.s32 6, %v2132
  %v2134 = vrot.slane %v1345, %v2133
  %v2135 = vlaneseq
  %v2136 = vshrl.u32 %v2135, 7
  %v2137 = vsub.s32 6, %v2136
  %v2138 = vrot.slane %v1346, %v2137
  %v2139 = vmul.f32 %v2110, %v329
  %v2140 = vmul.f32 %v2114, %v329
  %v2141 = vmul.f32 %v2118, %v329
  %v2142 = vmul.f32 %v2122, %v329
  %v2143 = vmul.f32 %v2126, %v329
  %v2144 = vmul.f32 %v2130, %v329
  %v2145 = vmul.f32 %v2134, %v329
  %v2146 = vmul.f32 %v2138, %v329
  %v2147 = vlaneseq
  %v2148 = vshrl.u32 %v2147, 7
  %v2149 = vsub.s32 6, %v2148
  %v2150 = vrot.slane %v1347, %v2149
  %v2151 = vlaneseq
  %v2152 = vshrl.u32 %v2151, 7
  %v2153 = vsub.s32 6, %v2152
  %v2154 = vrot.slane %v1348, %v2153
  %v2155 = vlaneseq
  %v2156 = vshrl.u32 %v2155, 7
  %v2157 = vsub.s32 6, %v2156
  %v2158 = vrot.slane %v1349, %v2157
  %v2159 = vlaneseq
  %v2160 = vshrl.u32 %v2159, 7
  %v2161 = vsub.s32 6, %v2160
  %v2162 = vrot.slane %v1350, %v2161
  %v2163 = vlaneseq
  %v2164 = vshrl.u32 %v2163, 7
  %v2165 = vsub.s32 6, %v2164
  %v2166 = vrot.slane %v1351, %v2165
  %v2167 = vlaneseq
  %v2168 = vshrl.u32 %v2167, 7
  %v2169 = vsub.s32 6, %v2168
  %v2170 = vrot.slane %v1352, %v2169
  %v2171 = vlaneseq
  %v2172 = vshrl.u32 %v2171, 7
  %v2173 = vsub.s32 6, %v2172
  %v2174 = vrot.slane %v1353, %v2173
  %v2175 = vlaneseq
  %v2176 = vshrl.u32 %v2175, 7
  %v2177 = vsub.s32 6, %v2176
  %v2178 = vrot.slane %v1354, %v2177
  %v2179 = vmul.f32 %v2150, %v337
  %v2180 = vmul.f32 %v2154, %v337
  %v2181 = vmul.f32 %v2158, %v337
  %v2182 = vmul.f32 %v2162, %v337
  %v2183 = vmul.f32 %v2166, %v337
  %v2184 = vmul.f32 %v2170, %v337
  %v2185 = vmul.f32 %v2174, %v337
  %v2186 = vmul.f32 %v2178, %v337
  %v2187 = vsub.f32 %v2139, %v2179
  %v2188 = vsub.f32 %v2140, %v2180
  %v2189 = vsub.f32 %v2141, %v2181
  %v2190 = vsub.f32 %v2142, %v2182
  %v2191 = vsub.f32 %v2143, %v2183
  %v2192 = vsub.f32 %v2144, %v2184
  %v2193 = vsub.f32 %v2145, %v2185
  %v2194 = vsub.f32 %v2146, %v2186
  %v2195 = vmul.f32 %v2110, %v337
  %v2196 = vmul.f32 %v2114, %v337
  %v2197 = vmul.f32 %v2118, %v337
  %v2198 = vmul.f32 %v2122, %v337
  %v2199 = vmul.f32 %v2126, %v337
  %v2200 = vmul.f32 %v2130, %v337
  %v2201 = vmul.f32 %v2134, %v337
  %v2202 = vmul.f32 %v2138, %v337
  %v2203 = vmul.f32 %v2150, %v329
  %v2204 = vmul.f32 %v2154, %v329
  %v2205 = vmul.f32 %v2158, %v329
  %v2206 = vmul.f32 %v2162, %v329
  %v2207 = vmul.f32 %v2166, %v329
  %v2208 = vmul.f32 %v2170, %v329
  %v2209 = vmul.f32 %v2174, %v329
  %v2210 = vmul.f32 %v2178, %v329
  %v2211 = vadd.f32 %v2195, %v2203
  %v2212 = vadd.f32 %v2196, %v2204
  %v2213 = vadd.f32 %v2197, %v2205
  %v2214 = vadd.f32 %v2198, %v2206
  %v2215 = vadd.f32 %v2199, %v2207
  %v2216 = vadd.f32 %v2200, %v2208
  %v2217 = vadd.f32 %v2201, %v2209
  %v2218 = vadd.f32 %v2202, %v2210
  %v2219 = vadd.f32 %v2091, %v2187
  %v2220 = vadd.f32 %v2092, %v2188
  %v2221 = vadd.f32 %v2093, %v2189
  %v2222 = vadd.f32 %v2094, %v2190
  %v2223 = vadd.f32 %v2095, %v2191
  %v2224 = vadd.f32 %v2096, %v2192
  %v2225 = vadd.f32 %v2097, %v2193
  %v2226 = vadd.f32 %v2098, %v2194
  %v2227 = vadd.f32 %v2099, %v2211
  %v2228 = vadd.f32 %v2100, %v2212
  %v2229 = vadd.f32 %v2101, %v2213
  %v2230 = vadd.f32 %v2102, %v2214
  %v2231 = vadd.f32 %v2103, %v2215
  %v2232 = vadd.f32 %v2104, %v2216
  %v2233 = vadd.f32 %v2105, %v2217
  %v2234 = vadd.f32 %v2106, %v2218
  %v2235 = vlaneseq
  %v2236 = vshrl.u32 %v2235, 7
  %v2237 = vsub.s32 7, %v2236
  %v2238 = vrot.slane %v1339, %v2237
  %v2239 = vlaneseq
  %v2240 = vshrl.u32 %v2239, 7
  %v2241 = vsub.s32 7, %v2240
  %v2242 = vrot.slane %v1340, %v2241
  %v2243 = vlaneseq
  %v2244 = vshrl.u32 %v2243, 7
  %v2245 = vsub.s32 7, %v2244
  %v2246 = vrot.slane %v1341, %v2245
  %v2247 = vlaneseq
  %v2248 = vshrl.u32 %v2247, 7
  %v2249 = vsub.s32 7, %v2248
  %v2250 = vrot.slane %v1342, %v2249
  %v2251 = vlaneseq
  %v2252 = vshrl.u32 %v2251, 7
  %v2253 = vsub.s32 7, %v2252
  %v2254 = vrot.slane %v1343, %v2253
  %v2255 = vlaneseq
  %v2256 = vshrl.u32 %v2255, 7
  %v2257 = vsub.s32 7, %v2256
  %v2258 = vrot.slane %v1344, %v2257
  %v2259 = vlaneseq
  %v2260 = vshrl.u32 %v2259, 7
  %v2261 = vsub.s32 7, %v2260
  %v2262 = vrot.slane %v1345, %v2261
  %v2263 = vlaneseq
  %v2264 = vshrl.u32 %v2263, 7
  %v2265 = vsub.s32 7, %v2264
  %v2266 = vrot.slane %v1346, %v2265
  %v2267 = vmul.f32 %v2238, %v330
  %v2268 = vmul.f32 %v2242, %v330
  %v2269 = vmul.f32 %v2246, %v330
  %v2270 = vmul.f32 %v2250, %v330
  %v2271 = vmul.f32 %v2254, %v330
  %v2272 = vmul.f32 %v2258, %v330
  %v2273 = vmul.f32 %v2262, %v330
  %v2274 = vmul.f32 %v2266, %v330
  %v2275 = vlaneseq
  %v2276 = vshrl.u32 %v2275, 7
  %v2277 = vsub.s32 7, %v2276
  %v2278 = vrot.slane %v1347, %v2277
  %v2279 = vlaneseq
  %v2280 = vshrl.u32 %v2279, 7
  %v2281 = vsub.s32 7, %v2280
  %v2282 = vrot.slane %v1348, %v2281
  %v2283 = vlaneseq
  %v2284 = vshrl.u32 %v2283, 7
  %v2285 = vsub.s32 7, %v2284
  %v2286 = vrot.slane %v1349, %v2285
  %v2287 = vlaneseq
  %v2288 = vshrl.u32 %v2287, 7
  %v2289 = vsub.s32 7, %v2288
  %v2290 = vrot.slane %v1350, %v2289
  %v2291 = vlaneseq
  %v2292 = vshrl.u32 %v2291, 7
  %v2293 = vsub.s32 7, %v2292
  %v2294 = vrot.slane %v1351, %v2293
  %v2295 = vlaneseq
  %v2296 = vshrl.u32 %v2295, 7
  %v2297 = vsub.s32 7, %v2296
  %v2298 = vrot.slane %v1352, %v2297
  %v2299 = vlaneseq
  %v2300 = vshrl.u32 %v2299, 7
  %v2301 = vsub.s32 7, %v2300
  %v2302 = vrot.slane %v1353, %v2301
  %v2303 = vlaneseq
  %v2304 = vshrl.u32 %v2303, 7
  %v2305 = vsub.s32 7, %v2304
  %v2306 = vrot.slane %v1354, %v2305
  %v2307 = vmul.f32 %v2278, %v338
  %v2308 = vmul.f32 %v2282, %v338
  %v2309 = vmul.f32 %v2286, %v338
  %v2310 = vmul.f32 %v2290, %v338
  %v2311 = vmul.f32 %v2294, %v338
  %v2312 = vmul.f32 %v2298, %v338
  %v2313 = vmul.f32 %v2302, %v338
  %v2314 = vmul.f32 %v2306, %v338
  %v2315 = vsub.f32 %v2267, %v2307
  %v2316 = vsub.f32 %v2268, %v2308
  %v2317 = vsub.f32 %v2269, %v2309
  %v2318 = vsub.f32 %v2270, %v2310
  %v2319 = vsub.f32 %v2271, %v2311
  %v2320 = vsub.f32 %v2272, %v2312
  %v2321 = vsub.f32 %v2273, %v2313
  %v2322 = vsub.f32 %v2274, %v2314
  %v2323 = vmul.f32 %v2238, %v338
  %v2324 = vmul.f32 %v2242, %v338
  %v2325 = vmul.f32 %v2246, %v338
  %v2326 = vmul.f32 %v2250, %v338
  %v2327 = vmul.f32 %v2254, %v338
  %v2328 = vmul.f32 %v2258, %v338
  %v2329 = vmul.f32 %v2262, %v338
  %v2330 = vmul.f32 %v2266, %v338
  %v2331 = vmul.f32 %v2278, %v330
  %v2332 = vmul.f32 %v2282, %v330
  %v2333 = vmul.f32 %v2286, %v330
  %v2334 = vmul.f32 %v2290, %v330
  %v2335 = vmul.f32 %v2294, %v330
  %v2336 = vmul.f32 %v2298, %v330
  %v2337 = vmul.f32 %v2302, %v330
  %v2338 = vmul.f32 %v2306, %v330
  %v2339 = vadd.f32 %v2323, %v2331
  %v2340 = vadd.f32 %v2324, %v2332
  %v2341 = vadd.f32 %v2325, %v2333
  %v2342 = vadd.f32 %v2326, %v2334
  %v2343 = vadd.f32 %v2327, %v2335
  %v2344 = vadd.f32 %v2328, %v2336
  %v2345 = vadd.f32 %v2329, %v2337
  %v2346 = vadd.f32 %v2330, %v2338
  %v2347 = vadd.f32 %v2219, %v2315
  %v2348 = vadd.f32 %v2220, %v2316
  %v2349 = vadd.f32 %v2221, %v2317
  %v2350 = vadd.f32 %v2222, %v2318
  %v2351 = vadd.f32 %v2223, %v2319
  %v2352 = vadd.f32 %v2224, %v2320
  %v2353 = vadd.f32 %v2225, %v2321
  %v2354 = vadd.f32 %v2226, %v2322
  %v2355 = vadd.f32 %v2227, %v2339
  %v2356 = vadd.f32 %v2228, %v2340
  %v2357 = vadd.f32 %v2229, %v2341
  %v2358 = vadd.f32 %v2230, %v2342
  %v2359 = vadd.f32 %v2231, %v2343
  %v2360 = vadd.f32 %v2232, %v2344
  %v2361 = vadd.f32 %v2233, %v2345
  %v2362 = vadd.f32 %v2234, %v2346
  %v2363 = vadd.f32 %v339, %v323
  %v2364 = vadd.f32 %v340, %v324
  %v2365 = vadd.f32 %v341, %v325
  %v2366 = vadd.f32 %v342, %v326
  %v2367 = vadd.f32 %v343, %v327
  %v2368 = vadd.f32 %v344, %v328
  %v2369 = vadd.f32 %v345, %v329
  %v2370 = vadd.f32 %v346, %v330
  %v2371 = vmul.f32 %v1339, 0.5
  %v2372 = vmul.f32 %v1340, 0.5
  %v2373 = vmul.f32 %v1341, 0.5
  %v2374 = vmul.f32 %v1342, 0.5
  %v2375 = vmul.f32 %v1343, 0.5
  %v2376 = vmul.f32 %v1344, 0.5
  %v2377 = vmul.f32 %v1345, 0.5
  %v2378 = vmul.f32 %v1346, 0.5
  %v2379 = vadd.f32 %v2363, %v2371
  %v2380 = vadd.f32 %v2364, %v2372
  %v2381 = vadd.f32 %v2365, %v2373
  %v2382 = vadd.f32 %v2366, %v2374
  %v2383 = vadd.f32 %v2367, %v2375
  %v2384 = vadd.f32 %v2368, %v2376
  %v2385 = vadd.f32 %v2369, %v2377
  %v2386 = vadd.f32 %v2370, %v2378
  %v2387 = vmul.f32 %v2347, 0.16666667
  %v2388 = vmul.f32 %v2348, 0.16666667
  %v2389 = vmul.f32 %v2349, 0.16666667
  %v2390 = vmul.f32 %v2350, 0.16666667
  %v2391 = vmul.f32 %v2351, 0.16666667
  %v2392 = vmul.f32 %v2352, 0.16666667
  %v2393 = vmul.f32 %v2353, 0.16666667
  %v2394 = vmul.f32 %v2354, 0.16666667
  %v2395 = vadd.f32 %v2379, %v2387
  %v2396 = vadd.f32 %v2380, %v2388
  %v2397 = vadd.f32 %v2381, %v2389
  %v2398 = vadd.f32 %v2382, %v2390
  %v2399 = vadd.f32 %v2383, %v2391
  %v2400 = vadd.f32 %v2384, %v2392
  %v2401 = vadd.f32 %v2385, %v2393
  %v2402 = vadd.f32 %v2386, %v2394
  %v2403 = vmul.f32 %v1347, 0.5
  %v2404 = vmul.f32 %v1348, 0.5
  %v2405 = vmul.f32 %v1349, 0.5
  %v2406 = vmul.f32 %v1350, 0.5
  %v2407 = vmul.f32 %v1351, 0.5
  %v2408 = vmul.f32 %v1352, 0.5
  %v2409 = vmul.f32 %v1353, 0.5
  %v2410 = vmul.f32 %v1354, 0.5
  %v2411 = vadd.f32 %v331, %v2403
  %v2412 = vadd.f32 %v332, %v2404
  %v2413 = vadd.f32 %v333, %v2405
  %v2414 = vadd.f32 %v334, %v2406
  %v2415 = vadd.f32 %v335, %v2407
  %v2416 = vadd.f32 %v336, %v2408
  %v2417 = vadd.f32 %v337, %v2409
  %v2418 = vadd.f32 %v338, %v2410
  %v2419 = vmul.f32 %v2355, 0.16666667
  %v2420 = vmul.f32 %v2356, 0.16666667
  %v2421 = vmul.f32 %v2357, 0.16666667
  %v2422 = vmul.f32 %v2358, 0.16666667
  %v2423 = vmul.f32 %v2359, 0.16666667
  %v2424 = vmul.f32 %v2360, 0.16666667
  %v2425 = vmul.f32 %v2361, 0.16666667
  %v2426 = vmul.f32 %v2362, 0.16666667
  %v2427 = vadd.f32 %v2411, %v2419
  %v2428 = vadd.f32 %v2412, %v2420
  %v2429 = vadd.f32 %v2413, %v2421
  %v2430 = vadd.f32 %v2414, %v2422
  %v2431 = vadd.f32 %v2415, %v2423
  %v2432 = vadd.f32 %v2416, %v2424
  %v2433 = vadd.f32 %v2417, %v2425
  %v2434 = vadd.f32 %v2418, %v2426
  %v2435 = vmul.f32 %v339, 0.041666668
  %v2436 = vmul.f32 %v340, 0.041666668
  %v2437 = vmul.f32 %v341, 0.041666668
  %v2438 = vmul.f32 %v342, 0.041666668
  %v2439 = vmul.f32 %v343, 0.041666668
  %v2440 = vmul.f32 %v344, 0.041666668
  %v2441 = vmul.f32 %v345, 0.041666668
  %v2442 = vmul.f32 %v346, 0.041666668
  %v2443 = vmul.f32 %v323, 0.008333334
  %v2444 = vmul.f32 %v324, 0.008333334
  %v2445 = vmul.f32 %v325, 0.008333334
  %v2446 = vmul.f32 %v326, 0.008333334
  %v2447 = vmul.f32 %v327, 0.008333334
  %v2448 = vmul.f32 %v328, 0.008333334
  %v2449 = vmul.f32 %v329, 0.008333334
  %v2450 = vmul.f32 %v330, 0.008333334
  %v2451 = vadd.f32 %v2435, %v2443
  %v2452 = vadd.f32 %v2436, %v2444
  %v2453 = vadd.f32 %v2437, %v2445
  %v2454 = vadd.f32 %v2438, %v2446
  %v2455 = vadd.f32 %v2439, %v2447
  %v2456 = vadd.f32 %v2440, %v2448
  %v2457 = vadd.f32 %v2441, %v2449
  %v2458 = vadd.f32 %v2442, %v2450
  %v2459 = vmul.f32 %v1339, 0.0013888889
  %v2460 = vmul.f32 %v1340, 0.0013888889
  %v2461 = vmul.f32 %v1341, 0.0013888889
  %v2462 = vmul.f32 %v1342, 0.0013888889
  %v2463 = vmul.f32 %v1343, 0.0013888889
  %v2464 = vmul.f32 %v1344, 0.0013888889
  %v2465 = vmul.f32 %v1345, 0.0013888889
  %v2466 = vmul.f32 %v1346, 0.0013888889
  %v2467 = vadd.f32 %v2451, %v2459
  %v2468 = vadd.f32 %v2452, %v2460
  %v2469 = vadd.f32 %v2453, %v2461
  %v2470 = vadd.f32 %v2454, %v2462
  %v2471 = vadd.f32 %v2455, %v2463
  %v2472 = vadd.f32 %v2456, %v2464
  %v2473 = vadd.f32 %v2457, %v2465
  %v2474 = vadd.f32 %v2458, %v2466
  %v2475 = vmul.f32 %v2347, 0.0001984127
  %v2476 = vmul.f32 %v2348, 0.0001984127
  %v2477 = vmul.f32 %v2349, 0.0001984127
  %v2478 = vmul.f32 %v2350, 0.0001984127
  %v2479 = vmul.f32 %v2351, 0.0001984127
  %v2480 = vmul.f32 %v2352, 0.0001984127
  %v2481 = vmul.f32 %v2353, 0.0001984127
  %v2482 = vmul.f32 %v2354, 0.0001984127
  %v2483 = vadd.f32 %v2467, %v2475
  %v2484 = vadd.f32 %v2468, %v2476
  %v2485 = vadd.f32 %v2469, %v2477
  %v2486 = vadd.f32 %v2470, %v2478
  %v2487 = vadd.f32 %v2471, %v2479
  %v2488 = vadd.f32 %v2472, %v2480
  %v2489 = vadd.f32 %v2473, %v2481
  %v2490 = vadd.f32 %v2474, %v2482
  %v2491 = vmul.f32 %v331, 0.008333334
  %v2492 = vmul.f32 %v332, 0.008333334
  %v2493 = vmul.f32 %v333, 0.008333334
  %v2494 = vmul.f32 %v334, 0.008333334
  %v2495 = vmul.f32 %v335, 0.008333334
  %v2496 = vmul.f32 %v336, 0.008333334
  %v2497 = vmul.f32 %v337, 0.008333334
  %v2498 = vmul.f32 %v338, 0.008333334
  %v2499 = vmul.f32 %v1347, 0.0013888889
  %v2500 = vmul.f32 %v1348, 0.0013888889
  %v2501 = vmul.f32 %v1349, 0.0013888889
  %v2502 = vmul.f32 %v1350, 0.0013888889
  %v2503 = vmul.f32 %v1351, 0.0013888889
  %v2504 = vmul.f32 %v1352, 0.0013888889
  %v2505 = vmul.f32 %v1353, 0.0013888889
  %v2506 = vmul.f32 %v1354, 0.0013888889
  %v2507 = vadd.f32 %v2491, %v2499
  %v2508 = vadd.f32 %v2492, %v2500
  %v2509 = vadd.f32 %v2493, %v2501
  %v2510 = vadd.f32 %v2494, %v2502
  %v2511 = vadd.f32 %v2495, %v2503
  %v2512 = vadd.f32 %v2496, %v2504
  %v2513 = vadd.f32 %v2497, %v2505
  %v2514 = vadd.f32 %v2498, %v2506
  %v2515 = vmul.f32 %v2355, 0.0001984127
  %v2516 = vmul.f32 %v2356, 0.0001984127
  %v2517 = vmul.f32 %v2357, 0.0001984127
  %v2518 = vmul.f32 %v2358, 0.0001984127
  %v2519 = vmul.f32 %v2359, 0.0001984127
  %v2520 = vmul.f32 %v2360, 0.0001984127
  %v2521 = vmul.f32 %v2361, 0.0001984127
  %v2522 = vmul.f32 %v2362, 0.0001984127
  %v2523 = vadd.f32 %v2507, %v2515
  %v2524 = vadd.f32 %v2508, %v2516
  %v2525 = vadd.f32 %v2509, %v2517
  %v2526 = vadd.f32 %v2510, %v2518
  %v2527 = vadd.f32 %v2511, %v2519
  %v2528 = vadd.f32 %v2512, %v2520
  %v2529 = vadd.f32 %v2513, %v2521
  %v2530 = vadd.f32 %v2514, %v2522
  %v2531 = vmul.f32 %v339, 2.4801588e-05
  %v2532 = vmul.f32 %v340, 2.4801588e-05
  %v2533 = vmul.f32 %v341, 2.4801588e-05
  %v2534 = vmul.f32 %v342, 2.4801588e-05
  %v2535 = vmul.f32 %v343, 2.4801588e-05
  %v2536 = vmul.f32 %v344, 2.4801588e-05
  %v2537 = vmul.f32 %v345, 2.4801588e-05
  %v2538 = vmul.f32 %v346, 2.4801588e-05
  %v2539 = vmul.f32 %v323, 2.7557319e-06
  %v2540 = vmul.f32 %v324, 2.7557319e-06
  %v2541 = vmul.f32 %v325, 2.7557319e-06
  %v2542 = vmul.f32 %v326, 2.7557319e-06
  %v2543 = vmul.f32 %v327, 2.7557319e-06
  %v2544 = vmul.f32 %v328, 2.7557319e-06
  %v2545 = vmul.f32 %v329, 2.7557319e-06
  %v2546 = vmul.f32 %v330, 2.7557319e-06
  %v2547 = vadd.f32 %v2531, %v2539
  %v2548 = vadd.f32 %v2532, %v2540
  %v2549 = vadd.f32 %v2533, %v2541
  %v2550 = vadd.f32 %v2534, %v2542
  %v2551 = vadd.f32 %v2535, %v2543
  %v2552 = vadd.f32 %v2536, %v2544
  %v2553 = vadd.f32 %v2537, %v2545
  %v2554 = vadd.f32 %v2538, %v2546
  %v2555 = vmul.f32 %v1339, 2.755732e-07
  %v2556 = vmul.f32 %v1340, 2.755732e-07
  %v2557 = vmul.f32 %v1341, 2.755732e-07
  %v2558 = vmul.f32 %v1342, 2.755732e-07
  %v2559 = vmul.f32 %v1343, 2.755732e-07
  %v2560 = vmul.f32 %v1344, 2.755732e-07
  %v2561 = vmul.f32 %v1345, 2.755732e-07
  %v2562 = vmul.f32 %v1346, 2.755732e-07
  %v2563 = vadd.f32 %v2547, %v2555
  %v2564 = vadd.f32 %v2548, %v2556
  %v2565 = vadd.f32 %v2549, %v2557
  %v2566 = vadd.f32 %v2550, %v2558
  %v2567 = vadd.f32 %v2551, %v2559
  %v2568 = vadd.f32 %v2552, %v2560
  %v2569 = vadd.f32 %v2553, %v2561
  %v2570 = vadd.f32 %v2554, %v2562
  %v2571 = vmul.f32 %v2347, 2.5052108e-08
  %v2572 = vmul.f32 %v2348, 2.5052108e-08
  %v2573 = vmul.f32 %v2349, 2.5052108e-08
  %v2574 = vmul.f32 %v2350, 2.5052108e-08
  %v2575 = vmul.f32 %v2351, 2.5052108e-08
  %v2576 = vmul.f32 %v2352, 2.5052108e-08
  %v2577 = vmul.f32 %v2353, 2.5052108e-08
  %v2578 = vmul.f32 %v2354, 2.5052108e-08
  %v2579 = vadd.f32 %v2563, %v2571
  %v2580 = vadd.f32 %v2564, %v2572
  %v2581 = vadd.f32 %v2565, %v2573
  %v2582 = vadd.f32 %v2566, %v2574
  %v2583 = vadd.f32 %v2567, %v2575
  %v2584 = vadd.f32 %v2568, %v2576
  %v2585 = vadd.f32 %v2569, %v2577
  %v2586 = vadd.f32 %v2570, %v2578
  %v2587 = vmul.f32 %v331, 2.7557319e-06
  %v2588 = vmul.f32 %v332, 2.7557319e-06
  %v2589 = vmul.f32 %v333, 2.7557319e-06
  %v2590 = vmul.f32 %v334, 2.7557319e-06
  %v2591 = vmul.f32 %v335, 2.7557319e-06
  %v2592 = vmul.f32 %v336, 2.7557319e-06
  %v2593 = vmul.f32 %v337, 2.7557319e-06
  %v2594 = vmul.f32 %v338, 2.7557319e-06
  %v2595 = vmul.f32 %v1347, 2.755732e-07
  %v2596 = vmul.f32 %v1348, 2.755732e-07
  %v2597 = vmul.f32 %v1349, 2.755732e-07
  %v2598 = vmul.f32 %v1350, 2.755732e-07
  %v2599 = vmul.f32 %v1351, 2.755732e-07
  %v2600 = vmul.f32 %v1352, 2.755732e-07
  %v2601 = vmul.f32 %v1353, 2.755732e-07
  %v2602 = vmul.f32 %v1354, 2.755732e-07
  %v2603 = vadd.f32 %v2587, %v2595
  %v2604 = vadd.f32 %v2588, %v2596
  %v2605 = vadd.f32 %v2589, %v2597
  %v2606 = vadd.f32 %v2590, %v2598
  %v2607 = vadd.f32 %v2591, %v2599
  %v2608 = vadd.f32 %v2592, %v2600
  %v2609 = vadd.f32 %v2593, %v2601
  %v2610 = vadd.f32 %v2594, %v2602
  %v2611 = vmul.f32 %v2355, 2.5052108e-08
  %v2612 = vmul.f32 %v2356, 2.5052108e-08
  %v2613 = vmul.f32 %v2357, 2.5052108e-08
  %v2614 = vmul.f32 %v2358, 2.5052108e-08
  %v2615 = vmul.f32 %v2359, 2.5052108e-08
  %v2616 = vmul.f32 %v2360, 2.5052108e-08
  %v2617 = vmul.f32 %v2361, 2.5052108e-08
  %v2618 = vmul.f32 %v2362, 2.5052108e-08
  %v2619 = vadd.f32 %v2603, %v2611
  %v2620 = vadd.f32 %v2604, %v2612
  %v2621 = vadd.f32 %v2605, %v2613
  %v2622 = vadd.f32 %v2606, %v2614
  %v2623 = vadd.f32 %v2607, %v2615
  %v2624 = vadd.f32 %v2608, %v2616
  %v2625 = vadd.f32 %v2609, %v2617
  %v2626 = vadd.f32 %v2610, %v2618
  %v2627 = vmul.f32 %v1358, %v1339
  %v2628 = vmul.f32 %v1362, %v1339
  %v2629 = vmul.f32 %v1366, %v1339
  %v2630 = vmul.f32 %v1370, %v1339
  %v2631 = vmul.f32 %v1374, %v1339
  %v2632 = vmul.f32 %v1378, %v1339
  %v2633 = vmul.f32 %v1382, %v1339
  %v2634 = vmul.f32 %v1386, %v1339
  %v2635 = vmul.f32 %v1398, %v1347
  %v2636 = vmul.f32 %v1402, %v1347
  %v2637 = vmul.f32 %v1406, %v1347
  %v2638 = vmul.f32 %v1410, %v1347
  %v2639 = vmul.f32 %v1414, %v1347
  %v2640 = vmul.f32 %v1418, %v1347
  %v2641 = vmul.f32 %v1422, %v1347
  %v2642 = vmul.f32 %v1426, %v1347
  %v2643 = vsub.f32 %v2627, %v2635
  %v2644 = vsub.f32 %v2628, %v2636
  %v2645 = vsub.f32 %v2629, %v2637
  %v2646 = vsub.f32 %v2630, %v2638
  %v2647 = vsub.f32 %v2631, %v2639
  %v2648 = vsub.f32 %v2632, %v2640
  %v2649 = vsub.f32 %v2633, %v2641
  %v2650 = vsub.f32 %v2634, %v2642
  %v2651 = vmul.f32 %v1358, %v1347
  %v2652 = vmul.f32 %v1362, %v1347
  %v2653 = vmul.f32 %v1366, %v1347
  %v2654 = vmul.f32 %v1370, %v1347
  %v2655 = vmul.f32 %v1374, %v1347
  %v2656 = vmul.f32 %v1378, %v1347
  %v2657 = vmul.f32 %v1382, %v1347
  %v2658 = vmul.f32 %v1386, %v1347
  %v2659 = vmul.f32 %v1398, %v1339
  %v2660 = vmul.f32 %v1402, %v1339
  %v2661 = vmul.f32 %v1406, %v1339
  %v2662 = vmul.f32 %v1410, %v1339
  %v2663 = vmul.f32 %v1414, %v1339
  %v2664 = vmul.f32 %v1418, %v1339
  %v2665 = vmul.f32 %v1422, %v1339
  %v2666 = vmul.f32 %v1426, %v1339
  %v2667 = vadd.f32 %v2651, %v2659
  %v2668 = vadd.f32 %v2652, %v2660
  %v2669 = vadd.f32 %v2653, %v2661
  %v2670 = vadd.f32 %v2654, %v2662
  %v2671 = vadd.f32 %v2655, %v2663
  %v2672 = vadd.f32 %v2656, %v2664
  %v2673 = vadd.f32 %v2657, %v2665
  %v2674 = vadd.f32 %v2658, %v2666
  %v2675 = vmul.f32 %v1470, %v1340
  %v2676 = vmul.f32 %v1474, %v1340
  %v2677 = vmul.f32 %v1478, %v1340
  %v2678 = vmul.f32 %v1482, %v1340
  %v2679 = vmul.f32 %v1486, %v1340
  %v2680 = vmul.f32 %v1490, %v1340
  %v2681 = vmul.f32 %v1494, %v1340
  %v2682 = vmul.f32 %v1498, %v1340
  %v2683 = vmul.f32 %v1510, %v1348
  %v2684 = vmul.f32 %v1514, %v1348
  %v2685 = vmul.f32 %v1518, %v1348
  %v2686 = vmul.f32 %v1522, %v1348
  %v2687 = vmul.f32 %v1526, %v1348
  %v2688 = vmul.f32 %v1530, %v1348
  %v2689 = vmul.f32 %v1534, %v1348
  %v2690 = vmul.f32 %v1538, %v1348
  %v2691 = vsub.f32 %v2675, %v2683
  %v2692 = vsub.f32 %v2676, %v2684
  %v2693 = vsub.f32 %v2677, %v2685
  %v2694 = vsub.f32 %v2678, %v2686
  %v2695 = vsub.f32 %v2679, %v2687
  %v2696 = vsub.f32 %v2680, %v2688
  %v2697 = vsub.f32 %v2681, %v2689
  %v2698 = vsub.f32 %v2682, %v2690
  %v2699 = vmul.f32 %v1470, %v1348
  %v2700 = vmul.f32 %v1474, %v1348
  %v2701 = vmul.f32 %v1478, %v1348
  %v2702 = vmul.f32 %v1482, %v1348
  %v2703 = vmul.f32 %v1486, %v1348
  %v2704 = vmul.f32 %v1490, %v1348
  %v2705 = vmul.f32 %v1494, %v1348
  %v2706 = vmul.f32 %v1498, %v1348
  %v2707 = vmul.f32 %v1510, %v1340
  %v2708 = vmul.f32 %v1514, %v1340
  %v2709 = vmul.f32 %v1518, %v1340
  %v2710 = vmul.f32 %v1522, %v1340
  %v2711 = vmul.f32 %v1526, %v1340
  %v2712 = vmul.f32 %v1530, %v1340
  %v2713 = vmul.f32 %v1534, %v1340
  %v2714 = vmul.f32 %v1538, %v1340
  %v2715 = vadd.f32 %v2699, %v2707
  %v2716 = vadd.f32 %v2700, %v2708
  %v2717 = vadd.f32 %v2701, %v2709
  %v2718 = vadd.f32 %v2702, %v2710
  %v2719 = vadd.f32 %v2703, %v2711
  %v2720 = vadd.f32 %v2704, %v2712
  %v2721 = vadd.f32 %v2705, %v2713
  %v2722 = vadd.f32 %v2706, %v2714
  %v2723 = vadd.f32 %v2643, %v2691
  %v2724 = vadd.f32 %v2644, %v2692
  %v2725 = vadd.f32 %v2645, %v2693
  %v2726 = vadd.f32 %v2646, %v2694
  %v2727 = vadd.f32 %v2647, %v2695
  %v2728 = vadd.f32 %v2648, %v2696
  %v2729 = vadd.f32 %v2649, %v2697
  %v2730 = vadd.f32 %v2650, %v2698
  %v2731 = vadd.f32 %v2667, %v2715
  %v2732 = vadd.f32 %v2668, %v2716
  %v2733 = vadd.f32 %v2669, %v2717
  %v2734 = vadd.f32 %v2670, %v2718
  %v2735 = vadd.f32 %v2671, %v2719
  %v2736 = vadd.f32 %v2672, %v2720
  %v2737 = vadd.f32 %v2673, %v2721
  %v2738 = vadd.f32 %v2674, %v2722
  %v2739 = vmul.f32 %v1598, %v1341
  %v2740 = vmul.f32 %v1602, %v1341
  %v2741 = vmul.f32 %v1606, %v1341
  %v2742 = vmul.f32 %v1610, %v1341
  %v2743 = vmul.f32 %v1614, %v1341
  %v2744 = vmul.f32 %v1618, %v1341
  %v2745 = vmul.f32 %v1622, %v1341
  %v2746 = vmul.f32 %v1626, %v1341
  %v2747 = vmul.f32 %v1638, %v1349
  %v2748 = vmul.f32 %v1642, %v1349
  %v2749 = vmul.f32 %v1646, %v1349
  %v2750 = vmul.f32 %v1650, %v1349
  %v2751 = vmul.f32 %v1654, %v1349
  %v2752 = vmul.f32 %v1658, %v1349
  %v2753 = vmul.f32 %v1662, %v1349
  %v2754 = vmul.f32 %v1666, %v1349
  %v2755 = vsub.f32 %v2739, %v2747
  %v2756 = vsub.f32 %v2740, %v2748
  %v2757 = vsub.f32 %v2741, %v2749
  %v2758 = vsub.f32 %v2742, %v2750
  %v2759 = vsub.f32 %v2743, %v2751
  %v2760 = vsub.f32 %v2744, %v2752
  %v2761 = vsub.f32 %v2745, %v2753
  %v2762 = vsub.f32 %v2746, %v2754
  %v2763 = vmul.f32 %v1598, %v1349
  %v2764 = vmul.f32 %v1602, %v1349
  %v2765 = vmul.f32 %v1606, %v1349
  %v2766 = vmul.f32 %v1610, %v1349
  %v2767 = vmul.f32 %v1614, %v1349
  %v2768 = vmul.f32 %v1618, %v1349
  %v2769 = vmul.f32 %v1622, %v1349
  %v2770 = vmul.f32 %v1626, %v1349
  %v2771 = vmul.f32 %v1638, %v1341
  %v2772 = vmul.f32 %v1642, %v1341
  %v2773 = vmul.f32 %v1646, %v1341
  %v2774 = vmul.f32 %v1650, %v1341
  %v2775 = vmul.f32 %v1654, %v1341
  %v2776 = vmul.f32 %v1658, %v1341
  %v2777 = vmul.f32 %v1662, %v1341
  %v2778 = vmul.f32 %v1666, %v1341
  %v2779 = vadd.f32 %v2763, %v2771
  %v2780 = vadd.f32 %v2764, %v2772
  %v2781 = vadd.f32 %v2765, %v2773
  %v2782 = vadd.f32 %v2766, %v2774
  %v2783 = vadd.f32 %v2767, %v2775
  %v2784 = vadd.f32 %v2768, %v2776
  %v2785 = vadd.f32 %v2769, %v2777
  %v2786 = vadd.f32 %v2770, %v2778
  %v2787 = vadd.f32 %v2723, %v2755
  %v2788 = vadd.f32 %v2724, %v2756
  %v2789 = vadd.f32 %v2725, %v2757
  %v2790 = vadd.f32 %v2726, %v2758
  %v2791 = vadd.f32 %v2727, %v2759
  %v2792 = vadd.f32 %v2728, %v2760
  %v2793 = vadd.f32 %v2729, %v2761
  %v2794 = vadd.f32 %v2730, %v2762
  %v2795 = vadd.f32 %v2731, %v2779
  %v2796 = vadd.f32 %v2732, %v2780
  %v2797 = vadd.f32 %v2733, %v2781
  %v2798 = vadd.f32 %v2734, %v2782
  %v2799 = vadd.f32 %v2735, %v2783
  %v2800 = vadd.f32 %v2736, %v2784
  %v2801 = vadd.f32 %v2737, %v2785
  %v2802 = vadd.f32 %v2738, %v2786
  %v2803 = vmul.f32 %v1726, %v1342
  %v2804 = vmul.f32 %v1730, %v1342
  %v2805 = vmul.f32 %v1734, %v1342
  %v2806 = vmul.f32 %v1738, %v1342
  %v2807 = vmul.f32 %v1742, %v1342
  %v2808 = vmul.f32 %v1746, %v1342
  %v2809 = vmul.f32 %v1750, %v1342
  %v2810 = vmul.f32 %v1754, %v1342
  %v2811 = vmul.f32 %v1766, %v1350
  %v2812 = vmul.f32 %v1770, %v1350
  %v2813 = vmul.f32 %v1774, %v1350
  %v2814 = vmul.f32 %v1778, %v1350
  %v2815 = vmul.f32 %v1782, %v1350
  %v2816 = vmul.f32 %v1786, %v1350
  %v2817 = vmul.f32 %v1790, %v1350
  %v2818 = vmul.f32 %v1794, %v1350
  %v2819 = vsub.f32 %v2803, %v2811
  %v2820 = vsub.f32 %v2804, %v2812
  %v2821 = vsub.f32 %v2805, %v2813
  %v2822 = vsub.f32 %v2806, %v2814
  %v2823 = vsub.f32 %v2807, %v2815
  %v2824 = vsub.f32 %v2808, %v2816
  %v2825 = vsub.f32 %v2809, %v2817
  %v2826 = vsub.f32 %v2810, %v2818
  %v2827 = vmul.f32 %v1726, %v1350
  %v2828 = vmul.f32 %v1730, %v1350
  %v2829 = vmul.f32 %v1734, %v1350
  %v2830 = vmul.f32 %v1738, %v1350
  %v2831 = vmul.f32 %v1742, %v1350
  %v2832 = vmul.f32 %v1746, %v1350
  %v2833 = vmul.f32 %v1750, %v1350
  %v2834 = vmul.f32 %v1754, %v1350
  %v2835 = vmul.f32 %v1766, %v1342
  %v2836 = vmul.f32 %v1770, %v1342
  %v2837 = vmul.f32 %v1774, %v1342
  %v2838 = vmul.f32 %v1778, %v1342
  %v2839 = vmul.f32 %v1782, %v1342
  %v2840 = vmul.f32 %v1786, %v1342
  %v2841 = vmul.f32 %v1790, %v1342
  %v2842 = vmul.f32 %v1794, %v1342
  %v2843 = vadd.f32 %v2827, %v2835
  %v2844 = vadd.f32 %v2828, %v2836
  %v2845 = vadd.f32 %v2829, %v2837
  %v2846 = vadd.f32 %v2830, %v2838
  %v2847 = vadd.f32 %v2831, %v2839
  %v2848 = vadd.f32 %v2832, %v2840
  %v2849 = vadd.f32 %v2833, %v2841
  %v2850 = vadd.f32 %v2834, %v2842
  %v2851 = vadd.f32 %v2787, %v2819
  %v2852 = vadd.f32 %v2788, %v2820
  %v2853 = vadd.f32 %v2789, %v2821
  %v2854 = vadd.f32 %v2790, %v2822
  %v2855 = vadd.f32 %v2791, %v2823
  %v2856 = vadd.f32 %v2792, %v2824
  %v2857 = vadd.f32 %v2793, %v2825
  %v2858 = vadd.f32 %v2794, %v2826
  %v2859 = vadd.f32 %v2795, %v2843
  %v2860 = vadd.f32 %v2796, %v2844
  %v2861 = vadd.f32 %v2797, %v2845
  %v2862 = vadd.f32 %v2798, %v2846
  %v2863 = vadd.f32 %v2799, %v2847
  %v2864 = vadd.f32 %v2800, %v2848
  %v2865 = vadd.f32 %v2801, %v2849
  %v2866 = vadd.f32 %v2802, %v2850
  %v2867 = vmul.f32 %v1854, %v1343
  %v2868 = vmul.f32 %v1858, %v1343
  %v2869 = vmul.f32 %v1862, %v1343
  %v2870 = vmul.f32 %v1866, %v1343
  %v2871 = vmul.f32 %v1870, %v1343
  %v2872 = vmul.f32 %v1874, %v1343
  %v2873 = vmul.f32 %v1878, %v1343
  %v2874 = vmul.f32 %v1882, %v1343
  %v2875 = vmul.f32 %v1894, %v1351
  %v2876 = vmul.f32 %v1898, %v1351
  %v2877 = vmul.f32 %v1902, %v1351
  %v2878 = vmul.f32 %v1906, %v1351
  %v2879 = vmul.f32 %v1910, %v1351
  %v2880 = vmul.f32 %v1914, %v1351
  %v2881 = vmul.f32 %v1918, %v1351
  %v2882 = vmul.f32 %v1922, %v1351
  %v2883 = vsub.f32 %v2867, %v2875
  %v2884 = vsub.f32 %v2868, %v2876
  %v2885 = vsub.f32 %v2869, %v2877
  %v2886 = vsub.f32 %v2870, %v2878
  %v2887 = vsub.f32 %v2871, %v2879
  %v2888 = vsub.f32 %v2872, %v2880
  %v2889 = vsub.f32 %v2873, %v2881
  %v2890 = vsub.f32 %v2874, %v2882
  %v2891 = vmul.f32 %v1854, %v1351
  %v2892 = vmul.f32 %v1858, %v1351
  %v2893 = vmul.f32 %v1862, %v1351
  %v2894 = vmul.f32 %v1866, %v1351
  %v2895 = vmul.f32 %v1870, %v1351
  %v2896 = vmul.f32 %v1874, %v1351
  %v2897 = vmul.f32 %v1878, %v1351
  %v2898 = vmul.f32 %v1882, %v1351
  %v2899 = vmul.f32 %v1894, %v1343
  %v2900 = vmul.f32 %v1898, %v1343
  %v2901 = vmul.f32 %v1902, %v1343
  %v2902 = vmul.f32 %v1906, %v1343
  %v2903 = vmul.f32 %v1910, %v1343
  %v2904 = vmul.f32 %v1914, %v1343
  %v2905 = vmul.f32 %v1918, %v1343
  %v2906 = vmul.f32 %v1922, %v1343
  %v2907 = vadd.f32 %v2891, %v2899
  %v2908 = vadd.f32 %v2892, %v2900
  %v2909 = vadd.f32 %v2893, %v2901
  %v2910 = vadd.f32 %v2894, %v2902
  %v2911 = vadd.f32 %v2895, %v2903
  %v2912 = vadd.f32 %v2896, %v2904
  %v2913 = vadd.f32 %v2897, %v2905
  %v2914 = vadd.f32 %v2898, %v2906
  %v2915 = vadd.f32 %v2851, %v2883
  %v2916 = vadd.f32 %v2852, %v2884
  %v2917 = vadd.f32 %v2853, %v2885
  %v2918 = vadd.f32 %v2854, %v2886
  %v2919 = vadd.f32 %v2855, %v2887
  %v2920 = vadd.f32 %v2856, %v2888
  %v2921 = vadd.f32 %v2857, %v2889
  %v2922 = vadd.f32 %v2858, %v2890
  %v2923 = vadd.f32 %v2859, %v2907
  %v2924 = vadd.f32 %v2860, %v2908
  %v2925 = vadd.f32 %v2861, %v2909
  %v2926 = vadd.f32 %v2862, %v2910
  %v2927 = vadd.f32 %v2863, %v2911
  %v2928 = vadd.f32 %v2864, %v2912
  %v2929 = vadd.f32 %v2865, %v2913
  %v2930 = vadd.f32 %v2866, %v2914
  %v2931 = vmul.f32 %v1982, %v1344
  %v2932 = vmul.f32 %v1986, %v1344
  %v2933 = vmul.f32 %v1990, %v1344
  %v2934 = vmul.f32 %v1994, %v1344
  %v2935 = vmul.f32 %v1998, %v1344
  %v2936 = vmul.f32 %v2002, %v1344
  %v2937 = vmul.f32 %v2006, %v1344
  %v2938 = vmul.f32 %v2010, %v1344
  %v2939 = vmul.f32 %v2022, %v1352
  %v2940 = vmul.f32 %v2026, %v1352
  %v2941 = vmul.f32 %v2030, %v1352
  %v2942 = vmul.f32 %v2034, %v1352
  %v2943 = vmul.f32 %v2038, %v1352
  %v2944 = vmul.f32 %v2042, %v1352
  %v2945 = vmul.f32 %v2046, %v1352
  %v2946 = vmul.f32 %v2050, %v1352
  %v2947 = vsub.f32 %v2931, %v2939
  %v2948 = vsub.f32 %v2932, %v2940
  %v2949 = vsub.f32 %v2933, %v2941
  %v2950 = vsub.f32 %v2934, %v2942
  %v2951 = vsub.f32 %v2935, %v2943
  %v2952 = vsub.f32 %v2936, %v2944
  %v2953 = vsub.f32 %v2937, %v2945
  %v2954 = vsub.f32 %v2938, %v2946
  %v2955 = vmul.f32 %v1982, %v1352
  %v2956 = vmul.f32 %v1986, %v1352
  %v2957 = vmul.f32 %v1990, %v1352
  %v2958 = vmul.f32 %v1994, %v1352
  %v2959 = vmul.f32 %v1998, %v1352
  %v2960 = vmul.f32 %v2002, %v1352
  %v2961 = vmul.f32 %v2006, %v1352
  %v2962 = vmul.f32 %v2010, %v1352
  %v2963 = vmul.f32 %v2022, %v1344
  %v2964 = vmul.f32 %v2026, %v1344
  %v2965 = vmul.f32 %v2030, %v1344
  %v2966 = vmul.f32 %v2034, %v1344
  %v2967 = vmul.f32 %v2038, %v1344
  %v2968 = vmul.f32 %v2042, %v1344
  %v2969 = vmul.f32 %v2046, %v1344
  %v2970 = vmul.f32 %v2050, %v1344
  %v2971 = vadd.f32 %v2955, %v2963
  %v2972 = vadd.f32 %v2956, %v2964
  %v2973 = vadd.f32 %v2957, %v2965
  %v2974 = vadd.f32 %v2958, %v2966
  %v2975 = vadd.f32 %v2959, %v2967
  %v2976 = vadd.f32 %v2960, %v2968
  %v2977 = vadd.f32 %v2961, %v2969
  %v2978 = vadd.f32 %v2962, %v2970
  %v2979 = vadd.f32 %v2915, %v2947
  %v2980 = vadd.f32 %v2916, %v2948
  %v2981 = vadd.f32 %v2917, %v2949
  %v2982 = vadd.f32 %v2918, %v2950
  %v2983 = vadd.f32 %v2919, %v2951
  %v2984 = vadd.f32 %v2920, %v2952
  %v2985 = vadd.f32 %v2921, %v2953
  %v2986 = vadd.f32 %v2922, %v2954
  %v2987 = vadd.f32 %v2923, %v2971
  %v2988 = vadd.f32 %v2924, %v2972
  %v2989 = vadd.f32 %v2925, %v2973
  %v2990 = vadd.f32 %v2926, %v2974
  %v2991 = vadd.f32 %v2927, %v2975
  %v2992 = vadd.f32 %v2928, %v2976
  %v2993 = vadd.f32 %v2929, %v2977
  %v2994 = vadd.f32 %v2930, %v2978
  %v2995 = vmul.f32 %v2110, %v1345
  %v2996 = vmul.f32 %v2114, %v1345
  %v2997 = vmul.f32 %v2118, %v1345
  %v2998 = vmul.f32 %v2122, %v1345
  %v2999 = vmul.f32 %v2126, %v1345
  %v3000 = vmul.f32 %v2130, %v1345
  %v3001 = vmul.f32 %v2134, %v1345
  %v3002 = vmul.f32 %v2138, %v1345
  %v3003 = vmul.f32 %v2150, %v1353
  %v3004 = vmul.f32 %v2154, %v1353
  %v3005 = vmul.f32 %v2158, %v1353
  %v3006 = vmul.f32 %v2162, %v1353
  %v3007 = vmul.f32 %v2166, %v1353
  %v3008 = vmul.f32 %v2170, %v1353
  %v3009 = vmul.f32 %v2174, %v1353
  %v3010 = vmul.f32 %v2178, %v1353
  %v3011 = vsub.f32 %v2995, %v3003
  %v3012 = vsub.f32 %v2996, %v3004
  %v3013 = vsub.f32 %v2997, %v3005
  %v3014 = vsub.f32 %v2998, %v3006
  %v3015 = vsub.f32 %v2999, %v3007
  %v3016 = vsub.f32 %v3000, %v3008
  %v3017 = vsub.f32 %v3001, %v3009
  %v3018 = vsub.f32 %v3002, %v3010
  %v3019 = vmul.f32 %v2110, %v1353
  %v3020 = vmul.f32 %v2114, %v1353
  %v3021 = vmul.f32 %v2118, %v1353
  %v3022 = vmul.f32 %v2122, %v1353
  %v3023 = vmul.f32 %v2126, %v1353
  %v3024 = vmul.f32 %v2130, %v1353
  %v3025 = vmul.f32 %v2134, %v1353
  %v3026 = vmul.f32 %v2138, %v1353
  %v3027 = vmul.f32 %v2150, %v1345
  %v3028 = vmul.f32 %v2154, %v1345
  %v3029 = vmul.f32 %v2158, %v1345
  %v3030 = vmul.f32 %v2162, %v1345
  %v3031 = vmul.f32 %v2166, %v1345
  %v3032 = vmul.f32 %v2170, %v1345
  %v3033 = vmul.f32 %v2174, %v1345
  %v3034 = vmul.f32 %v2178, %v1345
  %v3035 = vadd.f32 %v3019, %v3027
  %v3036 = vadd.f32 %v3020, %v3028
  %v3037 = vadd.f32 %v3021, %v3029
  %v3038 = vadd.f32 %v3022, %v3030
  %v3039 = vadd.f32 %v3023, %v3031
  %v3040 = vadd.f32 %v3024, %v3032
  %v3041 = vadd.f32 %v3025, %v3033
  %v3042 = vadd.f32 %v3026, %v3034
  %v3043 = vadd.f32 %v2979, %v3011
  %v3044 = vadd.f32 %v2980, %v3012
  %v3045 = vadd.f32 %v2981, %v3013
  %v3046 = vadd.f32 %v2982, %v3014
  %v3047 = vadd.f32 %v2983, %v3015
  %v3048 = vadd.f32 %v2984, %v3016
  %v3049 = vadd.f32 %v2985, %v3017
  %v3050 = vadd.f32 %v2986, %v3018
  %v3051 = vadd.f32 %v2987, %v3035
  %v3052 = vadd.f32 %v2988, %v3036
  %v3053 = vadd.f32 %v2989, %v3037
  %v3054 = vadd.f32 %v2990, %v3038
  %v3055 = vadd.f32 %v2991, %v3039
  %v3056 = vadd.f32 %v2992, %v3040
  %v3057 = vadd.f32 %v2993, %v3041
  %v3058 = vadd.f32 %v2994, %v3042
  %v3059 = vmul.f32 %v2238, %v1346
  %v3060 = vmul.f32 %v2242, %v1346
  %v3061 = vmul.f32 %v2246, %v1346
  %v3062 = vmul.f32 %v2250, %v1346
  %v3063 = vmul.f32 %v2254, %v1346
  %v3064 = vmul.f32 %v2258, %v1346
  %v3065 = vmul.f32 %v2262, %v1346
  %v3066 = vmul.f32 %v2266, %v1346
  %v3067 = vmul.f32 %v2278, %v1354
  %v3068 = vmul.f32 %v2282, %v1354
  %v3069 = vmul.f32 %v2286, %v1354
  %v3070 = vmul.f32 %v2290, %v1354
  %v3071 = vmul.f32 %v2294, %v1354
  %v3072 = vmul.f32 %v2298, %v1354
  %v3073 = vmul.f32 %v2302, %v1354
  %v3074 = vmul.f32 %v2306, %v1354
  %v3075 = vsub.f32 %v3059, %v3067
  %v3076 = vsub.f32 %v3060, %v3068
  %v3077 = vsub.f32 %v3061, %v3069
  %v3078 = vsub.f32 %v3062, %v3070
  %v3079 = vsub.f32 %v3063, %v3071
  %v3080 = vsub.f32 %v3064, %v3072
  %v3081 = vsub.f32 %v3065, %v3073
  %v3082 = vsub.f32 %v3066, %v3074
  %v3083 = vmul.f32 %v2238, %v1354
  %v3084 = vmul.f32 %v2242, %v1354
  %v3085 = vmul.f32 %v2246, %v1354
  %v3086 = vmul.f32 %v2250, %v1354
  %v3087 = vmul.f32 %v2254, %v1354
  %v3088 = vmul.f32 %v2258, %v1354
  %v3089 = vmul.f32 %v2262, %v1354
  %v3090 = vmul.f32 %v2266, %v1354
  %v3091 = vmul.f32 %v2278, %v1346
  %v3092 = vmul.f32 %v2282, %v1346
  %v3093 = vmul.f32 %v2286, %v1346
  %v3094 = vmul.f32 %v2290, %v1346
  %v3095 = vmul.f32 %v2294, %v1346
  %v3096 = vmul.f32 %v2298, %v1346
  %v3097 = vmul.f32 %v2302, %v1346
  %v3098 = vmul.f32 %v2306, %v1346
  %v3099 = vadd.f32 %v3083, %v3091
  %v3100 = vadd.f32 %v3084, %v3092
  %v3101 = vadd.f32 %v3085, %v3093
  %v3102 = vadd.f32 %v3086, %v3094
  %v3103 = vadd.f32 %v3087, %v3095
  %v3104 = vadd.f32 %v3088, %v3096
  %v3105 = vadd.f32 %v3089, %v3097
  %v3106 = vadd.f32 %v3090, %v3098
  %v3107 = vadd.f32 %v3043, %v3075
  %v3108 = vadd.f32 %v3044, %v3076
  %v3109 = vadd.f32 %v3045, %v3077
  %v3110 = vadd.f32 %v3046, %v3078
  %v3111 = vadd.f32 %v3047, %v3079
  %v3112 = vadd.f32 %v3048, %v3080
  %v3113 = vadd.f32 %v3049, %v3081
  %v3114 = vadd.f32 %v3050, %v3082
  %v3115 = vadd.f32 %v3051, %v3099
  %v3116 = vadd.f32 %v3052, %v3100
  %v3117 = vadd.f32 %v3053, %v3101
  %v3118 = vadd.f32 %v3054, %v3102
  %v3119 = vadd.f32 %v3055, %v3103
  %v3120 = vadd.f32 %v3056, %v3104
  %v3121 = vadd.f32 %v3057, %v3105
  %v3122 = vadd.f32 %v3058, %v3106
  %v3123 = vmul.f32 %v3107, 2.0876756e-09
  %v3124 = vmul.f32 %v3108, 2.0876756e-09
  %v3125 = vmul.f32 %v3109, 2.0876756e-09
  %v3126 = vmul.f32 %v3110, 2.0876756e-09
  %v3127 = vmul.f32 %v3111, 2.0876756e-09
  %v3128 = vmul.f32 %v3112, 2.0876756e-09
  %v3129 = vmul.f32 %v3113, 2.0876756e-09
  %v3130 = vmul.f32 %v3114, 2.0876756e-09
  %v3131 = vadd.f32 %v2579, %v3123
  %v3132 = vadd.f32 %v2580, %v3124
  %v3133 = vadd.f32 %v2581, %v3125
  %v3134 = vadd.f32 %v2582, %v3126
  %v3135 = vadd.f32 %v2583, %v3127
  %v3136 = vadd.f32 %v2584, %v3128
  %v3137 = vadd.f32 %v2585, %v3129
  %v3138 = vadd.f32 %v2586, %v3130
  %v3139 = vmul.f32 %v3115, 2.0876756e-09
  %v3140 = vmul.f32 %v3116, 2.0876756e-09
  %v3141 = vmul.f32 %v3117, 2.0876756e-09
  %v3142 = vmul.f32 %v3118, 2.0876756e-09
  %v3143 = vmul.f32 %v3119, 2.0876756e-09
  %v3144 = vmul.f32 %v3120, 2.0876756e-09
  %v3145 = vmul.f32 %v3121, 2.0876756e-09
  %v3146 = vmul.f32 %v3122, 2.0876756e-09
  %v3147 = vadd.f32 %v2619, %v3139
  %v3148 = vadd.f32 %v2620, %v3140
  %v3149 = vadd.f32 %v2621, %v3141
  %v3150 = vadd.f32 %v2622, %v3142
  %v3151 = vadd.f32 %v2623, %v3143
  %v3152 = vadd.f32 %v2624, %v3144
  %v3153 = vadd.f32 %v2625, %v3145
  %v3154 = vadd.f32 %v2626, %v3146
  %v3155 = vlaneseq
  %v3156 = vshrl.u32 %v3155, 7
  %v3157 = vsub.s32 0, %v3156
  %v3158 = vrot.slane %v3107, %v3157
  %v3159 = vlaneseq
  %v3160 = vshrl.u32 %v3159, 7
  %v3161 = vsub.s32 0, %v3160
  %v3162 = vrot.slane %v3108, %v3161
  %v3163 = vlaneseq
  %v3164 = vshrl.u32 %v3163, 7
  %v3165 = vsub.s32 0, %v3164
  %v3166 = vrot.slane %v3109, %v3165
  %v3167 = vlaneseq
  %v3168 = vshrl.u32 %v3167, 7
  %v3169 = vsub.s32 0, %v3168
  %v3170 = vrot.slane %v3110, %v3169
  %v3171 = vlaneseq
  %v3172 = vshrl.u32 %v3171, 7
  %v3173 = vsub.s32 0, %v3172
  %v3174 = vrot.slane %v3111, %v3173
  %v3175 = vlaneseq
  %v3176 = vshrl.u32 %v3175, 7
  %v3177 = vsub.s32 0, %v3176
  %v3178 = vrot.slane %v3112, %v3177
  %v3179 = vlaneseq
  %v3180 = vshrl.u32 %v3179, 7
  %v3181 = vsub.s32 0, %v3180
  %v3182 = vrot.slane %v3113, %v3181
  %v3183 = vlaneseq
  %v3184 = vshrl.u32 %v3183, 7
  %v3185 = vsub.s32 0, %v3184
  %v3186 = vrot.slane %v3114, %v3185
  %v3187 = vmul.f32 %v3158, %v3131
  %v3188 = vmul.f32 %v3162, %v3131
  %v3189 = vmul.f32 %v3166, %v3131
  %v3190 = vmul.f32 %v3170, %v3131
  %v3191 = vmul.f32 %v3174, %v3131
  %v3192 = vmul.f32 %v3178, %v3131
  %v3193 = vmul.f32 %v3182, %v3131
  %v3194 = vmul.f32 %v3186, %v3131
  %v3195 = vlaneseq
  %v3196 = vshrl.u32 %v3195, 7
  %v3197 = vsub.s32 0, %v3196
  %v3198 = vrot.slane %v3115, %v3197
  %v3199 = vlaneseq
  %v3200 = vshrl.u32 %v3199, 7
  %v3201 = vsub.s32 0, %v3200
  %v3202 = vrot.slane %v3116, %v3201
  %v3203 = vlaneseq
  %v3204 = vshrl.u32 %v3203, 7
  %v3205 = vsub.s32 0, %v3204
  %v3206 = vrot.slane %v3117, %v3205
  %v3207 = vlaneseq
  %v3208 = vshrl.u32 %v3207, 7
  %v3209 = vsub.s32 0, %v3208
  %v3210 = vrot.slane %v3118, %v3209
  %v3211 = vlaneseq
  %v3212 = vshrl.u32 %v3211, 7
  %v3213 = vsub.s32 0, %v3212
  %v3214 = vrot.slane %v3119, %v3213
  %v3215 = vlaneseq
  %v3216 = vshrl.u32 %v3215, 7
  %v3217 = vsub.s32 0, %v3216
  %v3218 = vrot.slane %v3120, %v3217
  %v3219 = vlaneseq
  %v3220 = vshrl.u32 %v3219, 7
  %v3221 = vsub.s32 0, %v3220
  %v3222 = vrot.slane %v3121, %v3221
  %v3223 = vlaneseq
  %v3224 = vshrl.u32 %v3223, 7
  %v3225 = vsub.s32 0, %v3224
  %v3226 = vrot.slane %v3122, %v3225
  %v3227 = vmul.f32 %v3198, %v3147
  %v3228 = vmul.f32 %v3202, %v3147
  %v3229 = vmul.f32 %v3206, %v3147
  %v3230 = vmul.f32 %v3210, %v3147
  %v3231 = vmul.f32 %v3214, %v3147
  %v3232 = vmul.f32 %v3218, %v3147
  %v3233 = vmul.f32 %v3222, %v3147
  %v3234 = vmul.f32 %v3226, %v3147
  %v3235 = vsub.f32 %v3187, %v3227
  %v3236 = vsub.f32 %v3188, %v3228
  %v3237 = vsub.f32 %v3189, %v3229
  %v3238 = vsub.f32 %v3190, %v3230
  %v3239 = vsub.f32 %v3191, %v3231
  %v3240 = vsub.f32 %v3192, %v3232
  %v3241 = vsub.f32 %v3193, %v3233
  %v3242 = vsub.f32 %v3194, %v3234
  %v3243 = vmul.f32 %v3158, %v3147
  %v3244 = vmul.f32 %v3162, %v3147
  %v3245 = vmul.f32 %v3166, %v3147
  %v3246 = vmul.f32 %v3170, %v3147
  %v3247 = vmul.f32 %v3174, %v3147
  %v3248 = vmul.f32 %v3178, %v3147
  %v3249 = vmul.f32 %v3182, %v3147
  %v3250 = vmul.f32 %v3186, %v3147
  %v3251 = vmul.f32 %v3198, %v3131
  %v3252 = vmul.f32 %v3202, %v3131
  %v3253 = vmul.f32 %v3206, %v3131
  %v3254 = vmul.f32 %v3210, %v3131
  %v3255 = vmul.f32 %v3214, %v3131
  %v3256 = vmul.f32 %v3218, %v3131
  %v3257 = vmul.f32 %v3222, %v3131
  %v3258 = vmul.f32 %v3226, %v3131
  %v3259 = vadd.f32 %v3243, %v3251
  %v3260 = vadd.f32 %v3244, %v3252
  %v3261 = vadd.f32 %v3245, %v3253
  %v3262 = vadd.f32 %v3246, %v3254
  %v3263 = vadd.f32 %v3247, %v3255
  %v3264 = vadd.f32 %v3248, %v3256
  %v3265 = vadd.f32 %v3249, %v3257
  %v3266 = vadd.f32 %v3250, %v3258
  %v3267 = vlaneseq
  %v3268 = vshrl.u32 %v3267, 7
  %v3269 = vsub.s32 1, %v3268
  %v3270 = vrot.slane %v3107, %v3269
  %v3271 = vlaneseq
  %v3272 = vshrl.u32 %v3271, 7
  %v3273 = vsub.s32 1, %v3272
  %v3274 = vrot.slane %v3108, %v3273
  %v3275 = vlaneseq
  %v3276 = vshrl.u32 %v3275, 7
  %v3277 = vsub.s32 1, %v3276
  %v3278 = vrot.slane %v3109, %v3277
  %v3279 = vlaneseq
  %v3280 = vshrl.u32 %v3279, 7
  %v3281 = vsub.s32 1, %v3280
  %v3282 = vrot.slane %v3110, %v3281
  %v3283 = vlaneseq
  %v3284 = vshrl.u32 %v3283, 7
  %v3285 = vsub.s32 1, %v3284
  %v3286 = vrot.slane %v3111, %v3285
  %v3287 = vlaneseq
  %v3288 = vshrl.u32 %v3287, 7
  %v3289 = vsub.s32 1, %v3288
  %v3290 = vrot.slane %v3112, %v3289
  %v3291 = vlaneseq
  %v3292 = vshrl.u32 %v3291, 7
  %v3293 = vsub.s32 1, %v3292
  %v3294 = vrot.slane %v3113, %v3293
  %v3295 = vlaneseq
  %v3296 = vshrl.u32 %v3295, 7
  %v3297 = vsub.s32 1, %v3296
  %v3298 = vrot.slane %v3114, %v3297
  %v3299 = vmul.f32 %v3270, %v3132
  %v3300 = vmul.f32 %v3274, %v3132
  %v3301 = vmul.f32 %v3278, %v3132
  %v3302 = vmul.f32 %v3282, %v3132
  %v3303 = vmul.f32 %v3286, %v3132
  %v3304 = vmul.f32 %v3290, %v3132
  %v3305 = vmul.f32 %v3294, %v3132
  %v3306 = vmul.f32 %v3298, %v3132
  %v3307 = vlaneseq
  %v3308 = vshrl.u32 %v3307, 7
  %v3309 = vsub.s32 1, %v3308
  %v3310 = vrot.slane %v3115, %v3309
  %v3311 = vlaneseq
  %v3312 = vshrl.u32 %v3311, 7
  %v3313 = vsub.s32 1, %v3312
  %v3314 = vrot.slane %v3116, %v3313
  %v3315 = vlaneseq
  %v3316 = vshrl.u32 %v3315, 7
  %v3317 = vsub.s32 1, %v3316
  %v3318 = vrot.slane %v3117, %v3317
  %v3319 = vlaneseq
  %v3320 = vshrl.u32 %v3319, 7
  %v3321 = vsub.s32 1, %v3320
  %v3322 = vrot.slane %v3118, %v3321
  %v3323 = vlaneseq
  %v3324 = vshrl.u32 %v3323, 7
  %v3325 = vsub.s32 1, %v3324
  %v3326 = vrot.slane %v3119, %v3325
  %v3327 = vlaneseq
  %v3328 = vshrl.u32 %v3327, 7
  %v3329 = vsub.s32 1, %v3328
  %v3330 = vrot.slane %v3120, %v3329
  %v3331 = vlaneseq
  %v3332 = vshrl.u32 %v3331, 7
  %v3333 = vsub.s32 1, %v3332
  %v3334 = vrot.slane %v3121, %v3333
  %v3335 = vlaneseq
  %v3336 = vshrl.u32 %v3335, 7
  %v3337 = vsub.s32 1, %v3336
  %v3338 = vrot.slane %v3122, %v3337
  %v3339 = vmul.f32 %v3310, %v3148
  %v3340 = vmul.f32 %v3314, %v3148
  %v3341 = vmul.f32 %v3318, %v3148
  %v3342 = vmul.f32 %v3322, %v3148
  %v3343 = vmul.f32 %v3326, %v3148
  %v3344 = vmul.f32 %v3330, %v3148
  %v3345 = vmul.f32 %v3334, %v3148
  %v3346 = vmul.f32 %v3338, %v3148
  %v3347 = vsub.f32 %v3299, %v3339
  %v3348 = vsub.f32 %v3300, %v3340
  %v3349 = vsub.f32 %v3301, %v3341
  %v3350 = vsub.f32 %v3302, %v3342
  %v3351 = vsub.f32 %v3303, %v3343
  %v3352 = vsub.f32 %v3304, %v3344
  %v3353 = vsub.f32 %v3305, %v3345
  %v3354 = vsub.f32 %v3306, %v3346
  %v3355 = vmul.f32 %v3270, %v3148
  %v3356 = vmul.f32 %v3274, %v3148
  %v3357 = vmul.f32 %v3278, %v3148
  %v3358 = vmul.f32 %v3282, %v3148
  %v3359 = vmul.f32 %v3286, %v3148
  %v3360 = vmul.f32 %v3290, %v3148
  %v3361 = vmul.f32 %v3294, %v3148
  %v3362 = vmul.f32 %v3298, %v3148
  %v3363 = vmul.f32 %v3310, %v3132
  %v3364 = vmul.f32 %v3314, %v3132
  %v3365 = vmul.f32 %v3318, %v3132
  %v3366 = vmul.f32 %v3322, %v3132
  %v3367 = vmul.f32 %v3326, %v3132
  %v3368 = vmul.f32 %v3330, %v3132
  %v3369 = vmul.f32 %v3334, %v3132
  %v3370 = vmul.f32 %v3338, %v3132
  %v3371 = vadd.f32 %v3355, %v3363
  %v3372 = vadd.f32 %v3356, %v3364
  %v3373 = vadd.f32 %v3357, %v3365
  %v3374 = vadd.f32 %v3358, %v3366
  %v3375 = vadd.f32 %v3359, %v3367
  %v3376 = vadd.f32 %v3360, %v3368
  %v3377 = vadd.f32 %v3361, %v3369
  %v3378 = vadd.f32 %v3362, %v3370
  %v3379 = vadd.f32 %v3235, %v3347
  %v3380 = vadd.f32 %v3236, %v3348
  %v3381 = vadd.f32 %v3237, %v3349
  %v3382 = vadd.f32 %v3238, %v3350
  %v3383 = vadd.f32 %v3239, %v3351
  %v3384 = vadd.f32 %v3240, %v3352
  %v3385 = vadd.f32 %v3241, %v3353
  %v3386 = vadd.f32 %v3242, %v3354
  %v3387 = vadd.f32 %v3259, %v3371
  %v3388 = vadd.f32 %v3260, %v3372
  %v3389 = vadd.f32 %v3261, %v3373
  %v3390 = vadd.f32 %v3262, %v3374
  %v3391 = vadd.f32 %v3263, %v3375
  %v3392 = vadd.f32 %v3264, %v3376
  %v3393 = vadd.f32 %v3265, %v3377
  %v3394 = vadd.f32 %v3266, %v3378
  %v3395 = vlaneseq
  %v3396 = vshrl.u32 %v3395, 7
  %v3397 = vsub.s32 2, %v3396
  %v3398 = vrot.slane %v3107, %v3397
  %v3399 = vlaneseq
  %v3400 = vshrl.u32 %v3399, 7
  %v3401 = vsub.s32 2, %v3400
  %v3402 = vrot.slane %v3108, %v3401
  %v3403 = vlaneseq
  %v3404 = vshrl.u32 %v3403, 7
  %v3405 = vsub.s32 2, %v3404
  %v3406 = vrot.slane %v3109, %v3405
  %v3407 = vlaneseq
  %v3408 = vshrl.u32 %v3407, 7
  %v3409 = vsub.s32 2, %v3408
  %v3410 = vrot.slane %v3110, %v3409
  %v3411 = vlaneseq
  %v3412 = vshrl.u32 %v3411, 7
  %v3413 = vsub.s32 2, %v3412
  %v3414 = vrot.slane %v3111, %v3413
  %v3415 = vlaneseq
  %v3416 = vshrl.u32 %v3415, 7
  %v3417 = vsub.s32 2, %v3416
  %v3418 = vrot.slane %v3112, %v3417
  %v3419 = vlaneseq
  %v3420 = vshrl.u32 %v3419, 7
  %v3421 = vsub.s32 2, %v3420
  %v3422 = vrot.slane %v3113, %v3421
  %v3423 = vlaneseq
  %v3424 = vshrl.u32 %v3423, 7
  %v3425 = vsub.s32 2, %v3424
  %v3426 = vrot.slane %v3114, %v3425
  %v3427 = vmul.f32 %v3398, %v3133
  %v3428 = vmul.f32 %v3402, %v3133
  %v3429 = vmul.f32 %v3406, %v3133
  %v3430 = vmul.f32 %v3410, %v3133
  %v3431 = vmul.f32 %v3414, %v3133
  %v3432 = vmul.f32 %v3418, %v3133
  %v3433 = vmul.f32 %v3422, %v3133
  %v3434 = vmul.f32 %v3426, %v3133
  %v3435 = vlaneseq
  %v3436 = vshrl.u32 %v3435, 7
  %v3437 = vsub.s32 2, %v3436
  %v3438 = vrot.slane %v3115, %v3437
  %v3439 = vlaneseq
  %v3440 = vshrl.u32 %v3439, 7
  %v3441 = vsub.s32 2, %v3440
  %v3442 = vrot.slane %v3116, %v3441
  %v3443 = vlaneseq
  %v3444 = vshrl.u32 %v3443, 7
  %v3445 = vsub.s32 2, %v3444
  %v3446 = vrot.slane %v3117, %v3445
  %v3447 = vlaneseq
  %v3448 = vshrl.u32 %v3447, 7
  %v3449 = vsub.s32 2, %v3448
  %v3450 = vrot.slane %v3118, %v3449
  %v3451 = vlaneseq
  %v3452 = vshrl.u32 %v3451, 7
  %v3453 = vsub.s32 2, %v3452
  %v3454 = vrot.slane %v3119, %v3453
  %v3455 = vlaneseq
  %v3456 = vshrl.u32 %v3455, 7
  %v3457 = vsub.s32 2, %v3456
  %v3458 = vrot.slane %v3120, %v3457
  %v3459 = vlaneseq
  %v3460 = vshrl.u32 %v3459, 7
  %v3461 = vsub.s32 2, %v3460
  %v3462 = vrot.slane %v3121, %v3461
  %v3463 = vlaneseq
  %v3464 = vshrl.u32 %v3463, 7
  %v3465 = vsub.s32 2, %v3464
  %v3466 = vrot.slane %v3122, %v3465
  %v3467 = vmul.f32 %v3438, %v3149
  %v3468 = vmul.f32 %v3442, %v3149
  %v3469 = vmul.f32 %v3446, %v3149
  %v3470 = vmul.f32 %v3450, %v3149
  %v3471 = vmul.f32 %v3454, %v3149
  %v3472 = vmul.f32 %v3458, %v3149
  %v3473 = vmul.f32 %v3462, %v3149
  %v3474 = vmul.f32 %v3466, %v3149
  %v3475 = vsub.f32 %v3427, %v3467
  %v3476 = vsub.f32 %v3428, %v3468
  %v3477 = vsub.f32 %v3429, %v3469
  %v3478 = vsub.f32 %v3430, %v3470
  %v3479 = vsub.f32 %v3431, %v3471
  %v3480 = vsub.f32 %v3432, %v3472
  %v3481 = vsub.f32 %v3433, %v3473
  %v3482 = vsub.f32 %v3434, %v3474
  %v3483 = vmul.f32 %v3398, %v3149
  %v3484 = vmul.f32 %v3402, %v3149
  %v3485 = vmul.f32 %v3406, %v3149
  %v3486 = vmul.f32 %v3410, %v3149
  %v3487 = vmul.f32 %v3414, %v3149
  %v3488 = vmul.f32 %v3418, %v3149
  %v3489 = vmul.f32 %v3422, %v3149
  %v3490 = vmul.f32 %v3426, %v3149
  %v3491 = vmul.f32 %v3438, %v3133
  %v3492 = vmul.f32 %v3442, %v3133
  %v3493 = vmul.f32 %v3446, %v3133
  %v3494 = vmul.f32 %v3450, %v3133
  %v3495 = vmul.f32 %v3454, %v3133
  %v3496 = vmul.f32 %v3458, %v3133
  %v3497 = vmul.f32 %v3462, %v3133
  %v3498 = vmul.f32 %v3466, %v3133
  %v3499 = vadd.f32 %v3483, %v3491
  %v3500 = vadd.f32 %v3484, %v3492
  %v3501 = vadd.f32 %v3485, %v3493
  %v3502 = vadd.f32 %v3486, %v3494
  %v3503 = vadd.f32 %v3487, %v3495
  %v3504 = vadd.f32 %v3488, %v3496
  %v3505 = vadd.f32 %v3489, %v3497
  %v3506 = vadd.f32 %v3490, %v3498
  %v3507 = vadd.f32 %v3379, %v3475
  %v3508 = vadd.f32 %v3380, %v3476
  %v3509 = vadd.f32 %v3381, %v3477
  %v3510 = vadd.f32 %v3382, %v3478
  %v3511 = vadd.f32 %v3383, %v3479
  %v3512 = vadd.f32 %v3384, %v3480
  %v3513 = vadd.f32 %v3385, %v3481
  %v3514 = vadd.f32 %v3386, %v3482
  %v3515 = vadd.f32 %v3387, %v3499
  %v3516 = vadd.f32 %v3388, %v3500
  %v3517 = vadd.f32 %v3389, %v3501
  %v3518 = vadd.f32 %v3390, %v3502
  %v3519 = vadd.f32 %v3391, %v3503
  %v3520 = vadd.f32 %v3392, %v3504
  %v3521 = vadd.f32 %v3393, %v3505
  %v3522 = vadd.f32 %v3394, %v3506
  %v3523 = vlaneseq
  %v3524 = vshrl.u32 %v3523, 7
  %v3525 = vsub.s32 3, %v3524
  %v3526 = vrot.slane %v3107, %v3525
  %v3527 = vlaneseq
  %v3528 = vshrl.u32 %v3527, 7
  %v3529 = vsub.s32 3, %v3528
  %v3530 = vrot.slane %v3108, %v3529
  %v3531 = vlaneseq
  %v3532 = vshrl.u32 %v3531, 7
  %v3533 = vsub.s32 3, %v3532
  %v3534 = vrot.slane %v3109, %v3533
  %v3535 = vlaneseq
  %v3536 = vshrl.u32 %v3535, 7
  %v3537 = vsub.s32 3, %v3536
  %v3538 = vrot.slane %v3110, %v3537
  %v3539 = vlaneseq
  %v3540 = vshrl.u32 %v3539, 7
  %v3541 = vsub.s32 3, %v3540
  %v3542 = vrot.slane %v3111, %v3541
  %v3543 = vlaneseq
  %v3544 = vshrl.u32 %v3543, 7
  %v3545 = vsub.s32 3, %v3544
  %v3546 = vrot.slane %v3112, %v3545
  %v3547 = vlaneseq
  %v3548 = vshrl.u32 %v3547, 7
  %v3549 = vsub.s32 3, %v3548
  %v3550 = vrot.slane %v3113, %v3549
  %v3551 = vlaneseq
  %v3552 = vshrl.u32 %v3551, 7
  %v3553 = vsub.s32 3, %v3552
  %v3554 = vrot.slane %v3114, %v3553
  %v3555 = vmul.f32 %v3526, %v3134
  %v3556 = vmul.f32 %v3530, %v3134
  %v3557 = vmul.f32 %v3534, %v3134
  %v3558 = vmul.f32 %v3538, %v3134
  %v3559 = vmul.f32 %v3542, %v3134
  %v3560 = vmul.f32 %v3546, %v3134
  %v3561 = vmul.f32 %v3550, %v3134
  %v3562 = vmul.f32 %v3554, %v3134
  %v3563 = vlaneseq
  %v3564 = vshrl.u32 %v3563, 7
  %v3565 = vsub.s32 3, %v3564
  %v3566 = vrot.slane %v3115, %v3565
  %v3567 = vlaneseq
  %v3568 = vshrl.u32 %v3567, 7
  %v3569 = vsub.s32 3, %v3568
  %v3570 = vrot.slane %v3116, %v3569
  %v3571 = vlaneseq
  %v3572 = vshrl.u32 %v3571, 7
  %v3573 = vsub.s32 3, %v3572
  %v3574 = vrot.slane %v3117, %v3573
  %v3575 = vlaneseq
  %v3576 = vshrl.u32 %v3575, 7
  %v3577 = vsub.s32 3, %v3576
  %v3578 = vrot.slane %v3118, %v3577
  %v3579 = vlaneseq
  %v3580 = vshrl.u32 %v3579, 7
  %v3581 = vsub.s32 3, %v3580
  %v3582 = vrot.slane %v3119, %v3581
  %v3583 = vlaneseq
  %v3584 = vshrl.u32 %v3583, 7
  %v3585 = vsub.s32 3, %v3584
  %v3586 = vrot.slane %v3120, %v3585
  %v3587 = vlaneseq
  %v3588 = vshrl.u32 %v3587, 7
  %v3589 = vsub.s32 3, %v3588
  %v3590 = vrot.slane %v3121, %v3589
  %v3591 = vlaneseq
  %v3592 = vshrl.u32 %v3591, 7
  %v3593 = vsub.s32 3, %v3592
  %v3594 = vrot.slane %v3122, %v3593
  %v3595 = vmul.f32 %v3566, %v3150
  %v3596 = vmul.f32 %v3570, %v3150
  %v3597 = vmul.f32 %v3574, %v3150
  %v3598 = vmul.f32 %v3578, %v3150
  %v3599 = vmul.f32 %v3582, %v3150
  %v3600 = vmul.f32 %v3586, %v3150
  %v3601 = vmul.f32 %v3590, %v3150
  %v3602 = vmul.f32 %v3594, %v3150
  %v3603 = vsub.f32 %v3555, %v3595
  %v3604 = vsub.f32 %v3556, %v3596
  %v3605 = vsub.f32 %v3557, %v3597
  %v3606 = vsub.f32 %v3558, %v3598
  %v3607 = vsub.f32 %v3559, %v3599
  %v3608 = vsub.f32 %v3560, %v3600
  %v3609 = vsub.f32 %v3561, %v3601
  %v3610 = vsub.f32 %v3562, %v3602
  %v3611 = vmul.f32 %v3526, %v3150
  %v3612 = vmul.f32 %v3530, %v3150
  %v3613 = vmul.f32 %v3534, %v3150
  %v3614 = vmul.f32 %v3538, %v3150
  %v3615 = vmul.f32 %v3542, %v3150
  %v3616 = vmul.f32 %v3546, %v3150
  %v3617 = vmul.f32 %v3550, %v3150
  %v3618 = vmul.f32 %v3554, %v3150
  %v3619 = vmul.f32 %v3566, %v3134
  %v3620 = vmul.f32 %v3570, %v3134
  %v3621 = vmul.f32 %v3574, %v3134
  %v3622 = vmul.f32 %v3578, %v3134
  %v3623 = vmul.f32 %v3582, %v3134
  %v3624 = vmul.f32 %v3586, %v3134
  %v3625 = vmul.f32 %v3590, %v3134
  %v3626 = vmul.f32 %v3594, %v3134
  %v3627 = vadd.f32 %v3611, %v3619
  %v3628 = vadd.f32 %v3612, %v3620
  %v3629 = vadd.f32 %v3613, %v3621
  %v3630 = vadd.f32 %v3614, %v3622
  %v3631 = vadd.f32 %v3615, %v3623
  %v3632 = vadd.f32 %v3616, %v3624
  %v3633 = vadd.f32 %v3617, %v3625
  %v3634 = vadd.f32 %v3618, %v3626
  %v3635 = vadd.f32 %v3507, %v3603
  %v3636 = vadd.f32 %v3508, %v3604
  %v3637 = vadd.f32 %v3509, %v3605
  %v3638 = vadd.f32 %v3510, %v3606
  %v3639 = vadd.f32 %v3511, %v3607
  %v3640 = vadd.f32 %v3512, %v3608
  %v3641 = vadd.f32 %v3513, %v3609
  %v3642 = vadd.f32 %v3514, %v3610
  %v3643 = vadd.f32 %v3515, %v3627
  %v3644 = vadd.f32 %v3516, %v3628
  %v3645 = vadd.f32 %v3517, %v3629
  %v3646 = vadd.f32 %v3518, %v3630
  %v3647 = vadd.f32 %v3519, %v3631
  %v3648 = vadd.f32 %v3520, %v3632
  %v3649 = vadd.f32 %v3521, %v3633
  %v3650 = vadd.f32 %v3522, %v3634
  %v3651 = vlaneseq
  %v3652 = vshrl.u32 %v3651, 7
  %v3653 = vsub.s32 4, %v3652
  %v3654 = vrot.slane %v3107, %v3653
  %v3655 = vlaneseq
  %v3656 = vshrl.u32 %v3655, 7
  %v3657 = vsub.s32 4, %v3656
  %v3658 = vrot.slane %v3108, %v3657
  %v3659 = vlaneseq
  %v3660 = vshrl.u32 %v3659, 7
  %v3661 = vsub.s32 4, %v3660
  %v3662 = vrot.slane %v3109, %v3661
  %v3663 = vlaneseq
  %v3664 = vshrl.u32 %v3663, 7
  %v3665 = vsub.s32 4, %v3664
  %v3666 = vrot.slane %v3110, %v3665
  %v3667 = vlaneseq
  %v3668 = vshrl.u32 %v3667, 7
  %v3669 = vsub.s32 4, %v3668
  %v3670 = vrot.slane %v3111, %v3669
  %v3671 = vlaneseq
  %v3672 = vshrl.u32 %v3671, 7
  %v3673 = vsub.s32 4, %v3672
  %v3674 = vrot.slane %v3112, %v3673
  %v3675 = vlaneseq
  %v3676 = vshrl.u32 %v3675, 7
  %v3677 = vsub.s32 4, %v3676
  %v3678 = vrot.slane %v3113, %v3677
  %v3679 = vlaneseq
  %v3680 = vshrl.u32 %v3679, 7
  %v3681 = vsub.s32 4, %v3680
  %v3682 = vrot.slane %v3114, %v3681
  %v3683 = vmul.f32 %v3654, %v3135
  %v3684 = vmul.f32 %v3658, %v3135
  %v3685 = vmul.f32 %v3662, %v3135
  %v3686 = vmul.f32 %v3666, %v3135
  %v3687 = vmul.f32 %v3670, %v3135
  %v3688 = vmul.f32 %v3674, %v3135
  %v3689 = vmul.f32 %v3678, %v3135
  %v3690 = vmul.f32 %v3682, %v3135
  %v3691 = vlaneseq
  %v3692 = vshrl.u32 %v3691, 7
  %v3693 = vsub.s32 4, %v3692
  %v3694 = vrot.slane %v3115, %v3693
  %v3695 = vlaneseq
  %v3696 = vshrl.u32 %v3695, 7
  %v3697 = vsub.s32 4, %v3696
  %v3698 = vrot.slane %v3116, %v3697
  %v3699 = vlaneseq
  %v3700 = vshrl.u32 %v3699, 7
  %v3701 = vsub.s32 4, %v3700
  %v3702 = vrot.slane %v3117, %v3701
  %v3703 = vlaneseq
  %v3704 = vshrl.u32 %v3703, 7
  %v3705 = vsub.s32 4, %v3704
  %v3706 = vrot.slane %v3118, %v3705
  %v3707 = vlaneseq
  %v3708 = vshrl.u32 %v3707, 7
  %v3709 = vsub.s32 4, %v3708
  %v3710 = vrot.slane %v3119, %v3709
  %v3711 = vlaneseq
  %v3712 = vshrl.u32 %v3711, 7
  %v3713 = vsub.s32 4, %v3712
  %v3714 = vrot.slane %v3120, %v3713
  %v3715 = vlaneseq
  %v3716 = vshrl.u32 %v3715, 7
  %v3717 = vsub.s32 4, %v3716
  %v3718 = vrot.slane %v3121, %v3717
  %v3719 = vlaneseq
  %v3720 = vshrl.u32 %v3719, 7
  %v3721 = vsub.s32 4, %v3720
  %v3722 = vrot.slane %v3122, %v3721
  %v3723 = vmul.f32 %v3694, %v3151
  %v3724 = vmul.f32 %v3698, %v3151
  %v3725 = vmul.f32 %v3702, %v3151
  %v3726 = vmul.f32 %v3706, %v3151
  %v3727 = vmul.f32 %v3710, %v3151
  %v3728 = vmul.f32 %v3714, %v3151
  %v3729 = vmul.f32 %v3718, %v3151
  %v3730 = vmul.f32 %v3722, %v3151
  %v3731 = vsub.f32 %v3683, %v3723
  %v3732 = vsub.f32 %v3684, %v3724
  %v3733 = vsub.f32 %v3685, %v3725
  %v3734 = vsub.f32 %v3686, %v3726
  %v3735 = vsub.f32 %v3687, %v3727
  %v3736 = vsub.f32 %v3688, %v3728
  %v3737 = vsub.f32 %v3689, %v3729
  %v3738 = vsub.f32 %v3690, %v3730
  %v3739 = vmul.f32 %v3654, %v3151
  %v3740 = vmul.f32 %v3658, %v3151
  %v3741 = vmul.f32 %v3662, %v3151
  %v3742 = vmul.f32 %v3666, %v3151
  %v3743 = vmul.f32 %v3670, %v3151
  %v3744 = vmul.f32 %v3674, %v3151
  %v3745 = vmul.f32 %v3678, %v3151
  %v3746 = vmul.f32 %v3682, %v3151
  %v3747 = vmul.f32 %v3694, %v3135
  %v3748 = vmul.f32 %v3698, %v3135
  %v3749 = vmul.f32 %v3702, %v3135
  %v3750 = vmul.f32 %v3706, %v3135
  %v3751 = vmul.f32 %v3710, %v3135
  %v3752 = vmul.f32 %v3714, %v3135
  %v3753 = vmul.f32 %v3718, %v3135
  %v3754 = vmul.f32 %v3722, %v3135
  %v3755 = vadd.f32 %v3739, %v3747
  %v3756 = vadd.f32 %v3740, %v3748
  %v3757 = vadd.f32 %v3741, %v3749
  %v3758 = vadd.f32 %v3742, %v3750
  %v3759 = vadd.f32 %v3743, %v3751
  %v3760 = vadd.f32 %v3744, %v3752
  %v3761 = vadd.f32 %v3745, %v3753
  %v3762 = vadd.f32 %v3746, %v3754
  %v3763 = vadd.f32 %v3635, %v3731
  %v3764 = vadd.f32 %v3636, %v3732
  %v3765 = vadd.f32 %v3637, %v3733
  %v3766 = vadd.f32 %v3638, %v3734
  %v3767 = vadd.f32 %v3639, %v3735
  %v3768 = vadd.f32 %v3640, %v3736
  %v3769 = vadd.f32 %v3641, %v3737
  %v3770 = vadd.f32 %v3642, %v3738
  %v3771 = vadd.f32 %v3643, %v3755
  %v3772 = vadd.f32 %v3644, %v3756
  %v3773 = vadd.f32 %v3645, %v3757
  %v3774 = vadd.f32 %v3646, %v3758
  %v3775 = vadd.f32 %v3647, %v3759
  %v3776 = vadd.f32 %v3648, %v3760
  %v3777 = vadd.f32 %v3649, %v3761
  %v3778 = vadd.f32 %v3650, %v3762
  %v3779 = vlaneseq
  %v3780 = vshrl.u32 %v3779, 7
  %v3781 = vsub.s32 5, %v3780
  %v3782 = vrot.slane %v3107, %v3781
  %v3783 = vlaneseq
  %v3784 = vshrl.u32 %v3783, 7
  %v3785 = vsub.s32 5, %v3784
  %v3786 = vrot.slane %v3108, %v3785
  %v3787 = vlaneseq
  %v3788 = vshrl.u32 %v3787, 7
  %v3789 = vsub.s32 5, %v3788
  %v3790 = vrot.slane %v3109, %v3789
  %v3791 = vlaneseq
  %v3792 = vshrl.u32 %v3791, 7
  %v3793 = vsub.s32 5, %v3792
  %v3794 = vrot.slane %v3110, %v3793
  %v3795 = vlaneseq
  %v3796 = vshrl.u32 %v3795, 7
  %v3797 = vsub.s32 5, %v3796
  %v3798 = vrot.slane %v3111, %v3797
  %v3799 = vlaneseq
  %v3800 = vshrl.u32 %v3799, 7
  %v3801 = vsub.s32 5, %v3800
  %v3802 = vrot.slane %v3112, %v3801
  %v3803 = vlaneseq
  %v3804 = vshrl.u32 %v3803, 7
  %v3805 = vsub.s32 5, %v3804
  %v3806 = vrot.slane %v3113, %v3805
  %v3807 = vlaneseq
  %v3808 = vshrl.u32 %v3807, 7
  %v3809 = vsub.s32 5, %v3808
  %v3810 = vrot.slane %v3114, %v3809
  %v3811 = vmul.f32 %v3782, %v3136
  %v3812 = vmul.f32 %v3786, %v3136
  %v3813 = vmul.f32 %v3790, %v3136
  %v3814 = vmul.f32 %v3794, %v3136
  %v3815 = vmul.f32 %v3798, %v3136
  %v3816 = vmul.f32 %v3802, %v3136
  %v3817 = vmul.f32 %v3806, %v3136
  %v3818 = vmul.f32 %v3810, %v3136
  %v3819 = vlaneseq
  %v3820 = vshrl.u32 %v3819, 7
  %v3821 = vsub.s32 5, %v3820
  %v3822 = vrot.slane %v3115, %v3821
  %v3823 = vlaneseq
  %v3824 = vshrl.u32 %v3823, 7
  %v3825 = vsub.s32 5, %v3824
  %v3826 = vrot.slane %v3116, %v3825
  %v3827 = vlaneseq
  %v3828 = vshrl.u32 %v3827, 7
  %v3829 = vsub.s32 5, %v3828
  %v3830 = vrot.slane %v3117, %v3829
  %v3831 = vlaneseq
  %v3832 = vshrl.u32 %v3831, 7
  %v3833 = vsub.s32 5, %v3832
  %v3834 = vrot.slane %v3118, %v3833
  %v3835 = vlaneseq
  %v3836 = vshrl.u32 %v3835, 7
  %v3837 = vsub.s32 5, %v3836
  %v3838 = vrot.slane %v3119, %v3837
  %v3839 = vlaneseq
  %v3840 = vshrl.u32 %v3839, 7
  %v3841 = vsub.s32 5, %v3840
  %v3842 = vrot.slane %v3120, %v3841
  %v3843 = vlaneseq
  %v3844 = vshrl.u32 %v3843, 7
  %v3845 = vsub.s32 5, %v3844
  %v3846 = vrot.slane %v3121, %v3845
  %v3847 = vlaneseq
  %v3848 = vshrl.u32 %v3847, 7
  %v3849 = vsub.s32 5, %v3848
  %v3850 = vrot.slane %v3122, %v3849
  %v3851 = vmul.f32 %v3822, %v3152
  %v3852 = vmul.f32 %v3826, %v3152
  %v3853 = vmul.f32 %v3830, %v3152
  %v3854 = vmul.f32 %v3834, %v3152
  %v3855 = vmul.f32 %v3838, %v3152
  %v3856 = vmul.f32 %v3842, %v3152
  %v3857 = vmul.f32 %v3846, %v3152
  %v3858 = vmul.f32 %v3850, %v3152
  %v3859 = vsub.f32 %v3811, %v3851
  %v3860 = vsub.f32 %v3812, %v3852
  %v3861 = vsub.f32 %v3813, %v3853
  %v3862 = vsub.f32 %v3814, %v3854
  %v3863 = vsub.f32 %v3815, %v3855
  %v3864 = vsub.f32 %v3816, %v3856
  %v3865 = vsub.f32 %v3817, %v3857
  %v3866 = vsub.f32 %v3818, %v3858
  %v3867 = vmul.f32 %v3782, %v3152
  %v3868 = vmul.f32 %v3786, %v3152
  %v3869 = vmul.f32 %v3790, %v3152
  %v3870 = vmul.f32 %v3794, %v3152
  %v3871 = vmul.f32 %v3798, %v3152
  %v3872 = vmul.f32 %v3802, %v3152
  %v3873 = vmul.f32 %v3806, %v3152
  %v3874 = vmul.f32 %v3810, %v3152
  %v3875 = vmul.f32 %v3822, %v3136
  %v3876 = vmul.f32 %v3826, %v3136
  %v3877 = vmul.f32 %v3830, %v3136
  %v3878 = vmul.f32 %v3834, %v3136
  %v3879 = vmul.f32 %v3838, %v3136
  %v3880 = vmul.f32 %v3842, %v3136
  %v3881 = vmul.f32 %v3846, %v3136
  %v3882 = vmul.f32 %v3850, %v3136
  %v3883 = vadd.f32 %v3867, %v3875
  %v3884 = vadd.f32 %v3868, %v3876
  %v3885 = vadd.f32 %v3869, %v3877
  %v3886 = vadd.f32 %v3870, %v3878
  %v3887 = vadd.f32 %v3871, %v3879
  %v3888 = vadd.f32 %v3872, %v3880
  %v3889 = vadd.f32 %v3873, %v3881
  %v3890 = vadd.f32 %v3874, %v3882
  %v3891 = vadd.f32 %v3763, %v3859
  %v3892 = vadd.f32 %v3764, %v3860
  %v3893 = vadd.f32 %v3765, %v3861
  %v3894 = vadd.f32 %v3766, %v3862
  %v3895 = vadd.f32 %v3767, %v3863
  %v3896 = vadd.f32 %v3768, %v3864
  %v3897 = vadd.f32 %v3769, %v3865
  %v3898 = vadd.f32 %v3770, %v3866
  %v3899 = vadd.f32 %v3771, %v3883
  %v3900 = vadd.f32 %v3772, %v3884
  %v3901 = vadd.f32 %v3773, %v3885
  %v3902 = vadd.f32 %v3774, %v3886
  %v3903 = vadd.f32 %v3775, %v3887
  %v3904 = vadd.f32 %v3776, %v3888
  %v3905 = vadd.f32 %v3777, %v3889
  %v3906 = vadd.f32 %v3778, %v3890
  %v3907 = vlaneseq
  %v3908 = vshrl.u32 %v3907, 7
  %v3909 = vsub.s32 6, %v3908
  %v3910 = vrot.slane %v3107, %v3909
  %v3911 = vlaneseq
  %v3912 = vshrl.u32 %v3911, 7
  %v3913 = vsub.s32 6, %v3912
  %v3914 = vrot.slane %v3108, %v3913
  %v3915 = vlaneseq
  %v3916 = vshrl.u32 %v3915, 7
  %v3917 = vsub.s32 6, %v3916
  %v3918 = vrot.slane %v3109, %v3917
  %v3919 = vlaneseq
  %v3920 = vshrl.u32 %v3919, 7
  %v3921 = vsub.s32 6, %v3920
  %v3922 = vrot.slane %v3110, %v3921
  %v3923 = vlaneseq
  %v3924 = vshrl.u32 %v3923, 7
  %v3925 = vsub.s32 6, %v3924
  %v3926 = vrot.slane %v3111, %v3925
  %v3927 = vlaneseq
  %v3928 = vshrl.u32 %v3927, 7
  %v3929 = vsub.s32 6, %v3928
  %v3930 = vrot.slane %v3112, %v3929
  %v3931 = vlaneseq
  %v3932 = vshrl.u32 %v3931, 7
  %v3933 = vsub.s32 6, %v3932
  %v3934 = vrot.slane %v3113, %v3933
  %v3935 = vlaneseq
  %v3936 = vshrl.u32 %v3935, 7
  %v3937 = vsub.s32 6, %v3936
  %v3938 = vrot.slane %v3114, %v3937
  %v3939 = vmul.f32 %v3910, %v3137
  %v3940 = vmul.f32 %v3914, %v3137
  %v3941 = vmul.f32 %v3918, %v3137
  %v3942 = vmul.f32 %v3922, %v3137
  %v3943 = vmul.f32 %v3926, %v3137
  %v3944 = vmul.f32 %v3930, %v3137
  %v3945 = vmul.f32 %v3934, %v3137
  %v3946 = vmul.f32 %v3938, %v3137
  %v3947 = vlaneseq
  %v3948 = vshrl.u32 %v3947, 7
  %v3949 = vsub.s32 6, %v3948
  %v3950 = vrot.slane %v3115, %v3949
  %v3951 = vlaneseq
  %v3952 = vshrl.u32 %v3951, 7
  %v3953 = vsub.s32 6, %v3952
  %v3954 = vrot.slane %v3116, %v3953
  %v3955 = vlaneseq
  %v3956 = vshrl.u32 %v3955, 7
  %v3957 = vsub.s32 6, %v3956
  %v3958 = vrot.slane %v3117, %v3957
  %v3959 = vlaneseq
  %v3960 = vshrl.u32 %v3959, 7
  %v3961 = vsub.s32 6, %v3960
  %v3962 = vrot.slane %v3118, %v3961
  %v3963 = vlaneseq
  %v3964 = vshrl.u32 %v3963, 7
  %v3965 = vsub.s32 6, %v3964
  %v3966 = vrot.slane %v3119, %v3965
  %v3967 = vlaneseq
  %v3968 = vshrl.u32 %v3967, 7
  %v3969 = vsub.s32 6, %v3968
  %v3970 = vrot.slane %v3120, %v3969
  %v3971 = vlaneseq
  %v3972 = vshrl.u32 %v3971, 7
  %v3973 = vsub.s32 6, %v3972
  %v3974 = vrot.slane %v3121, %v3973
  %v3975 = vlaneseq
  %v3976 = vshrl.u32 %v3975, 7
  %v3977 = vsub.s32 6, %v3976
  %v3978 = vrot.slane %v3122, %v3977
  %v3979 = vmul.f32 %v3950, %v3153
  %v3980 = vmul.f32 %v3954, %v3153
  %v3981 = vmul.f32 %v3958, %v3153
  %v3982 = vmul.f32 %v3962, %v3153
  %v3983 = vmul.f32 %v3966, %v3153
  %v3984 = vmul.f32 %v3970, %v3153
  %v3985 = vmul.f32 %v3974, %v3153
  %v3986 = vmul.f32 %v3978, %v3153
  %v3987 = vsub.f32 %v3939, %v3979
  %v3988 = vsub.f32 %v3940, %v3980
  %v3989 = vsub.f32 %v3941, %v3981
  %v3990 = vsub.f32 %v3942, %v3982
  %v3991 = vsub.f32 %v3943, %v3983
  %v3992 = vsub.f32 %v3944, %v3984
  %v3993 = vsub.f32 %v3945, %v3985
  %v3994 = vsub.f32 %v3946, %v3986
  %v3995 = vmul.f32 %v3910, %v3153
  %v3996 = vmul.f32 %v3914, %v3153
  %v3997 = vmul.f32 %v3918, %v3153
  %v3998 = vmul.f32 %v3922, %v3153
  %v3999 = vmul.f32 %v3926, %v3153
  %v4000 = vmul.f32 %v3930, %v3153
  %v4001 = vmul.f32 %v3934, %v3153
  %v4002 = vmul.f32 %v3938, %v3153
  %v4003 = vmul.f32 %v3950, %v3137
  %v4004 = vmul.f32 %v3954, %v3137
  %v4005 = vmul.f32 %v3958, %v3137
  %v4006 = vmul.f32 %v3962, %v3137
  %v4007 = vmul.f32 %v3966, %v3137
  %v4008 = vmul.f32 %v3970, %v3137
  %v4009 = vmul.f32 %v3974, %v3137
  %v4010 = vmul.f32 %v3978, %v3137
  %v4011 = vadd.f32 %v3995, %v4003
  %v4012 = vadd.f32 %v3996, %v4004
  %v4013 = vadd.f32 %v3997, %v4005
  %v4014 = vadd.f32 %v3998, %v4006
  %v4015 = vadd.f32 %v3999, %v4007
  %v4016 = vadd.f32 %v4000, %v4008
  %v4017 = vadd.f32 %v4001, %v4009
  %v4018 = vadd.f32 %v4002, %v4010
  %v4019 = vadd.f32 %v3891, %v3987
  %v4020 = vadd.f32 %v3892, %v3988
  %v4021 = vadd.f32 %v3893, %v3989
  %v4022 = vadd.f32 %v3894, %v3990
  %v4023 = vadd.f32 %v3895, %v3991
  %v4024 = vadd.f32 %v3896, %v3992
  %v4025 = vadd.f32 %v3897, %v3993
  %v4026 = vadd.f32 %v3898, %v3994
  %v4027 = vadd.f32 %v3899, %v4011
  %v4028 = vadd.f32 %v3900, %v4012
  %v4029 = vadd.f32 %v3901, %v4013
  %v4030 = vadd.f32 %v3902, %v4014
  %v4031 = vadd.f32 %v3903, %v4015
  %v4032 = vadd.f32 %v3904, %v4016
  %v4033 = vadd.f32 %v3905, %v4017
  %v4034 = vadd.f32 %v3906, %v4018
  %v4035 = vlaneseq
  %v4036 = vshrl.u32 %v4035, 7
  %v4037 = vsub.s32 7, %v4036
  %v4038 = vrot.slane %v3107, %v4037
  %v4039 = vlaneseq
  %v4040 = vshrl.u32 %v4039, 7
  %v4041 = vsub.s32 7, %v4040
  %v4042 = vrot.slane %v3108, %v4041
  %v4043 = vlaneseq
  %v4044 = vshrl.u32 %v4043, 7
  %v4045 = vsub.s32 7, %v4044
  %v4046 = vrot.slane %v3109, %v4045
  %v4047 = vlaneseq
  %v4048 = vshrl.u32 %v4047, 7
  %v4049 = vsub.s32 7, %v4048
  %v4050 = vrot.slane %v3110, %v4049
  %v4051 = vlaneseq
  %v4052 = vshrl.u32 %v4051, 7
  %v4053 = vsub.s32 7, %v4052
  %v4054 = vrot.slane %v3111, %v4053
  %v4055 = vlaneseq
  %v4056 = vshrl.u32 %v4055, 7
  %v4057 = vsub.s32 7, %v4056
  %v4058 = vrot.slane %v3112, %v4057
  %v4059 = vlaneseq
  %v4060 = vshrl.u32 %v4059, 7
  %v4061 = vsub.s32 7, %v4060
  %v4062 = vrot.slane %v3113, %v4061
  %v4063 = vlaneseq
  %v4064 = vshrl.u32 %v4063, 7
  %v4065 = vsub.s32 7, %v4064
  %v4066 = vrot.slane %v3114, %v4065
  %v4067 = vmul.f32 %v4038, %v3138
  %v4068 = vmul.f32 %v4042, %v3138
  %v4069 = vmul.f32 %v4046, %v3138
  %v4070 = vmul.f32 %v4050, %v3138
  %v4071 = vmul.f32 %v4054, %v3138
  %v4072 = vmul.f32 %v4058, %v3138
  %v4073 = vmul.f32 %v4062, %v3138
  %v4074 = vmul.f32 %v4066, %v3138
  %v4075 = vlaneseq
  %v4076 = vshrl.u32 %v4075, 7
  %v4077 = vsub.s32 7, %v4076
  %v4078 = vrot.slane %v3115, %v4077
  %v4079 = vlaneseq
  %v4080 = vshrl.u32 %v4079, 7
  %v4081 = vsub.s32 7, %v4080
  %v4082 = vrot.slane %v3116, %v4081
  %v4083 = vlaneseq
  %v4084 = vshrl.u32 %v4083, 7
  %v4085 = vsub.s32 7, %v4084
  %v4086 = vrot.slane %v3117, %v4085
  %v4087 = vlaneseq
  %v4088 = vshrl.u32 %v4087, 7
  %v4089 = vsub.s32 7, %v4088
  %v4090 = vrot.slane %v3118, %v4089
  %v4091 = vlaneseq
  %v4092 = vshrl.u32 %v4091, 7
  %v4093 = vsub.s32 7, %v4092
  %v4094 = vrot.slane %v3119, %v4093
  %v4095 = vlaneseq
  %v4096 = vshrl.u32 %v4095, 7
  %v4097 = vsub.s32 7, %v4096
  %v4098 = vrot.slane %v3120, %v4097
  %v4099 = vlaneseq
  %v4100 = vshrl.u32 %v4099, 7
  %v4101 = vsub.s32 7, %v4100
  %v4102 = vrot.slane %v3121, %v4101
  %v4103 = vlaneseq
  %v4104 = vshrl.u32 %v4103, 7
  %v4105 = vsub.s32 7, %v4104
  %v4106 = vrot.slane %v3122, %v4105
  %v4107 = vmul.f32 %v4078, %v3154
  %v4108 = vmul.f32 %v4082, %v3154
  %v4109 = vmul.f32 %v4086, %v3154
  %v4110 = vmul.f32 %v4090, %v3154
  %v4111 = vmul.f32 %v4094, %v3154
  %v4112 = vmul.f32 %v4098, %v3154
  %v4113 = vmul.f32 %v4102, %v3154
  %v4114 = vmul.f32 %v4106, %v3154
  %v4115 = vsub.f32 %v4067, %v4107
  %v4116 = vsub.f32 %v4068, %v4108
  %v4117 = vsub.f32 %v4069, %v4109
  %v4118 = vsub.f32 %v4070, %v4110
  %v4119 = vsub.f32 %v4071, %v4111
  %v4120 = vsub.f32 %v4072, %v4112
  %v4121 = vsub.f32 %v4073, %v4113
  %v4122 = vsub.f32 %v4074, %v4114
  %v4123 = vmul.f32 %v4038, %v3154
  %v4124 = vmul.f32 %v4042, %v3154
  %v4125 = vmul.f32 %v4046, %v3154
  %v4126 = vmul.f32 %v4050, %v3154
  %v4127 = vmul.f32 %v4054, %v3154
  %v4128 = vmul.f32 %v4058, %v3154
  %v4129 = vmul.f32 %v4062, %v3154
  %v4130 = vmul.f32 %v4066, %v3154
  %v4131 = vmul.f32 %v4078, %v3138
  %v4132 = vmul.f32 %v4082, %v3138
  %v4133 = vmul.f32 %v4086, %v3138
  %v4134 = vmul.f32 %v4090, %v3138
  %v4135 = vmul.f32 %v4094, %v3138
  %v4136 = vmul.f32 %v4098, %v3138
  %v4137 = vmul.f32 %v4102, %v3138
  %v4138 = vmul.f32 %v4106, %v3138
  %v4139 = vadd.f32 %v4123, %v4131
  %v4140 = vadd.f32 %v4124, %v4132
  %v4141 = vadd.f32 %v4125, %v4133
  %v4142 = vadd.f32 %v4126, %v4134
  %v4143 = vadd.f32 %v4127, %v4135
  %v4144 = vadd.f32 %v4128, %v4136
  %v4145 = vadd.f32 %v4129, %v4137
  %v4146 = vadd.f32 %v4130, %v4138
  %v4147 = vadd.f32 %v4019, %v4115
  %v4148 = vadd.f32 %v4020, %v4116
  %v4149 = vadd.f32 %v4021, %v4117
  %v4150 = vadd.f32 %v4022, %v4118
  %v4151 = vadd.f32 %v4023, %v4119
  %v4152 = vadd.f32 %v4024, %v4120
  %v4153 = vadd.f32 %v4025, %v4121
  %v4154 = vadd.f32 %v4026, %v4122
  %v4155 = vadd.f32 %v4027, %v4139
  %v4156 = vadd.f32 %v4028, %v4140
  %v4157 = vadd.f32 %v4029, %v4141
  %v4158 = vadd.f32 %v4030, %v4142
  %v4159 = vadd.f32 %v4031, %v4143
  %v4160 = vadd.f32 %v4032, %v4144
  %v4161 = vadd.f32 %v4033, %v4145
  %v4162 = vadd.f32 %v4034, %v4146
  %v4163 = vadd.f32 %v2483, %v4147
  %v4164 = vadd.f32 %v2484, %v4148
  %v4165 = vadd.f32 %v2485, %v4149
  %v4166 = vadd.f32 %v2486, %v4150
  %v4167 = vadd.f32 %v2487, %v4151
  %v4168 = vadd.f32 %v2488, %v4152
  %v4169 = vadd.f32 %v2489, %v4153
  %v4170 = vadd.f32 %v2490, %v4154
  %v4171 = vadd.f32 %v2523, %v4155
  %v4172 = vadd.f32 %v2524, %v4156
  %v4173 = vadd.f32 %v2525, %v4157
  %v4174 = vadd.f32 %v2526, %v4158
  %v4175 = vadd.f32 %v2527, %v4159
  %v4176 = vadd.f32 %v2528, %v4160
  %v4177 = vadd.f32 %v2529, %v4161
  %v4178 = vadd.f32 %v2530, %v4162
  %v4179 = vmul.f32 %v3158, %v4163
  %v4180 = vmul.f32 %v3162, %v4163
  %v4181 = vmul.f32 %v3166, %v4163
  %v4182 = vmul.f32 %v3170, %v4163
  %v4183 = vmul.f32 %v3174, %v4163
  %v4184 = vmul.f32 %v3178, %v4163
  %v4185 = vmul.f32 %v3182, %v4163
  %v4186 = vmul.f32 %v3186, %v4163
  %v4187 = vmul.f32 %v3198, %v4171
  %v4188 = vmul.f32 %v3202, %v4171
  %v4189 = vmul.f32 %v3206, %v4171
  %v4190 = vmul.f32 %v3210, %v4171
  %v4191 = vmul.f32 %v3214, %v4171
  %v4192 = vmul.f32 %v3218, %v4171
  %v4193 = vmul.f32 %v3222, %v4171
  %v4194 = vmul.f32 %v3226, %v4171
  %v4195 = vsub.f32 %v4179, %v4187
  %v4196 = vsub.f32 %v4180, %v4188
  %v4197 = vsub.f32 %v4181, %v4189
  %v4198 = vsub.f32 %v4182, %v4190
  %v4199 = vsub.f32 %v4183, %v4191
  %v4200 = vsub.f32 %v4184, %v4192
  %v4201 = vsub.f32 %v4185, %v4193
  %v4202 = vsub.f32 %v4186, %v4194
  %v4203 = vmul.f32 %v3158, %v4171
  %v4204 = vmul.f32 %v3162, %v4171
  %v4205 = vmul.f32 %v3166, %v4171
  %v4206 = vmul.f32 %v3170, %v4171
  %v4207 = vmul.f32 %v3174, %v4171
  %v4208 = vmul.f32 %v3178, %v4171
  %v4209 = vmul.f32 %v3182, %v4171
  %v4210 = vmul.f32 %v3186, %v4171
  %v4211 = vmul.f32 %v3198, %v4163
  %v4212 = vmul.f32 %v3202, %v4163
  %v4213 = vmul.f32 %v3206, %v4163
  %v4214 = vmul.f32 %v3210, %v4163
  %v4215 = vmul.f32 %v3214, %v4163
  %v4216 = vmul.f32 %v3218, %v4163
  %v4217 = vmul.f32 %v3222, %v4163
  %v4218 = vmul.f32 %v3226, %v4163
  %v4219 = vadd.f32 %v4203, %v4211
  %v4220 = vadd.f32 %v4204, %v4212
  %v4221 = vadd.f32 %v4205, %v4213
  %v4222 = vadd.f32 %v4206, %v4214
  %v4223 = vadd.f32 %v4207, %v4215
  %v4224 = vadd.f32 %v4208, %v4216
  %v4225 = vadd.f32 %v4209, %v4217
  %v4226 = vadd.f32 %v4210, %v4218
  %v4227 = vmul.f32 %v3270, %v4164
  %v4228 = vmul.f32 %v3274, %v4164
  %v4229 = vmul.f32 %v3278, %v4164
  %v4230 = vmul.f32 %v3282, %v4164
  %v4231 = vmul.f32 %v3286, %v4164
  %v4232 = vmul.f32 %v3290, %v4164
  %v4233 = vmul.f32 %v3294, %v4164
  %v4234 = vmul.f32 %v3298, %v4164
  %v4235 = vmul.f32 %v3310, %v4172
  %v4236 = vmul.f32 %v3314, %v4172
  %v4237 = vmul.f32 %v3318, %v4172
  %v4238 = vmul.f32 %v3322, %v4172
  %v4239 = vmul.f32 %v3326, %v4172
  %v4240 = vmul.f32 %v3330, %v4172
  %v4241 = vmul.f32 %v3334, %v4172
  %v4242 = vmul.f32 %v3338, %v4172
  %v4243 = vsub.f32 %v4227, %v4235
  %v4244 = vsub.f32 %v4228, %v4236
  %v4245 = vsub.f32 %v4229, %v4237
  %v4246 = vsub.f32 %v4230, %v4238
  %v4247 = vsub.f32 %v4231, %v4239
  %v4248 = vsub.f32 %v4232, %v4240
  %v4249 = vsub.f32 %v4233, %v4241
  %v4250 = vsub.f32 %v4234, %v4242
  %v4251 = vmul.f32 %v3270, %v4172
  %v4252 = vmul.f32 %v3274, %v4172
  %v4253 = vmul.f32 %v3278, %v4172
  %v4254 = vmul.f32 %v3282, %v4172
  %v4255 = vmul.f32 %v3286, %v4172
  %v4256 = vmul.f32 %v3290, %v4172
  %v4257 = vmul.f32 %v3294, %v4172
  %v4258 = vmul.f32 %v3298, %v4172
  %v4259 = vmul.f32 %v3310, %v4164
  %v4260 = vmul.f32 %v3314, %v4164
  %v4261 = vmul.f32 %v3318, %v4164
  %v4262 = vmul.f32 %v3322, %v4164
  %v4263 = vmul.f32 %v3326, %v4164
  %v4264 = vmul.f32 %v3330, %v4164
  %v4265 = vmul.f32 %v3334, %v4164
  %v4266 = vmul.f32 %v3338, %v4164
  %v4267 = vadd.f32 %v4251, %v4259
  %v4268 = vadd.f32 %v4252, %v4260
  %v4269 = vadd.f32 %v4253, %v4261
  %v4270 = vadd.f32 %v4254, %v4262
  %v4271 = vadd.f32 %v4255, %v4263
  %v4272 = vadd.f32 %v4256, %v4264
  %v4273 = vadd.f32 %v4257, %v4265
  %v4274 = vadd.f32 %v4258, %v4266
  %v4275 = vadd.f32 %v4195, %v4243
  %v4276 = vadd.f32 %v4196, %v4244
  %v4277 = vadd.f32 %v4197, %v4245
  %v4278 = vadd.f32 %v4198, %v4246
  %v4279 = vadd.f32 %v4199, %v4247
  %v4280 = vadd.f32 %v4200, %v4248
  %v4281 = vadd.f32 %v4201, %v4249
  %v4282 = vadd.f32 %v4202, %v4250
  %v4283 = vadd.f32 %v4219, %v4267
  %v4284 = vadd.f32 %v4220, %v4268
  %v4285 = vadd.f32 %v4221, %v4269
  %v4286 = vadd.f32 %v4222, %v4270
  %v4287 = vadd.f32 %v4223, %v4271
  %v4288 = vadd.f32 %v4224, %v4272
  %v4289 = vadd.f32 %v4225, %v4273
  %v4290 = vadd.f32 %v4226, %v4274
  %v4291 = vmul.f32 %v3398, %v4165
  %v4292 = vmul.f32 %v3402, %v4165
  %v4293 = vmul.f32 %v3406, %v4165
  %v4294 = vmul.f32 %v3410, %v4165
  %v4295 = vmul.f32 %v3414, %v4165
  %v4296 = vmul.f32 %v3418, %v4165
  %v4297 = vmul.f32 %v3422, %v4165
  %v4298 = vmul.f32 %v3426, %v4165
  %v4299 = vmul.f32 %v3438, %v4173
  %v4300 = vmul.f32 %v3442, %v4173
  %v4301 = vmul.f32 %v3446, %v4173
  %v4302 = vmul.f32 %v3450, %v4173
  %v4303 = vmul.f32 %v3454, %v4173
  %v4304 = vmul.f32 %v3458, %v4173
  %v4305 = vmul.f32 %v3462, %v4173
  %v4306 = vmul.f32 %v3466, %v4173
  %v4307 = vsub.f32 %v4291, %v4299
  %v4308 = vsub.f32 %v4292, %v4300
  %v4309 = vsub.f32 %v4293, %v4301
  %v4310 = vsub.f32 %v4294, %v4302
  %v4311 = vsub.f32 %v4295, %v4303
  %v4312 = vsub.f32 %v4296, %v4304
  %v4313 = vsub.f32 %v4297, %v4305
  %v4314 = vsub.f32 %v4298, %v4306
  %v4315 = vmul.f32 %v3398, %v4173
  %v4316 = vmul.f32 %v3402, %v4173
  %v4317 = vmul.f32 %v3406, %v4173
  %v4318 = vmul.f32 %v3410, %v4173
  %v4319 = vmul.f32 %v3414, %v4173
  %v4320 = vmul.f32 %v3418, %v4173
  %v4321 = vmul.f32 %v3422, %v4173
  %v4322 = vmul.f32 %v3426, %v4173
  %v4323 = vmul.f32 %v3438, %v4165
  %v4324 = vmul.f32 %v3442, %v4165
  %v4325 = vmul.f32 %v3446, %v4165
  %v4326 = vmul.f32 %v3450, %v4165
  %v4327 = vmul.f32 %v3454, %v4165
  %v4328 = vmul.f32 %v3458, %v4165
  %v4329 = vmul.f32 %v3462, %v4165
  %v4330 = vmul.f32 %v3466, %v4165
  %v4331 = vadd.f32 %v4315, %v4323
  %v4332 = vadd.f32 %v4316, %v4324
  %v4333 = vadd.f32 %v4317, %v4325
  %v4334 = vadd.f32 %v4318, %v4326
  %v4335 = vadd.f32 %v4319, %v4327
  %v4336 = vadd.f32 %v4320, %v4328
  %v4337 = vadd.f32 %v4321, %v4329
  %v4338 = vadd.f32 %v4322, %v4330
  %v4339 = vadd.f32 %v4275, %v4307
  %v4340 = vadd.f32 %v4276, %v4308
  %v4341 = vadd.f32 %v4277, %v4309
  %v4342 = vadd.f32 %v4278, %v4310
  %v4343 = vadd.f32 %v4279, %v4311
  %v4344 = vadd.f32 %v4280, %v4312
  %v4345 = vadd.f32 %v4281, %v4313
  %v4346 = vadd.f32 %v4282, %v4314
  %v4347 = vadd.f32 %v4283, %v4331
  %v4348 = vadd.f32 %v4284, %v4332
  %v4349 = vadd.f32 %v4285, %v4333
  %v4350 = vadd.f32 %v4286, %v4334
  %v4351 = vadd.f32 %v4287, %v4335
  %v4352 = vadd.f32 %v4288, %v4336
  %v4353 = vadd.f32 %v4289, %v4337
  %v4354 = vadd.f32 %v4290, %v4338
  %v4355 = vmul.f32 %v3526, %v4166
  %v4356 = vmul.f32 %v3530, %v4166
  %v4357 = vmul.f32 %v3534, %v4166
  %v4358 = vmul.f32 %v3538, %v4166
  %v4359 = vmul.f32 %v3542, %v4166
  %v4360 = vmul.f32 %v3546, %v4166
  %v4361 = vmul.f32 %v3550, %v4166
  %v4362 = vmul.f32 %v3554, %v4166
  %v4363 = vmul.f32 %v3566, %v4174
  %v4364 = vmul.f32 %v3570, %v4174
  %v4365 = vmul.f32 %v3574, %v4174
  %v4366 = vmul.f32 %v3578, %v4174
  %v4367 = vmul.f32 %v3582, %v4174
  %v4368 = vmul.f32 %v3586, %v4174
  %v4369 = vmul.f32 %v3590, %v4174
  %v4370 = vmul.f32 %v3594, %v4174
  %v4371 = vsub.f32 %v4355, %v4363
  %v4372 = vsub.f32 %v4356, %v4364
  %v4373 = vsub.f32 %v4357, %v4365
  %v4374 = vsub.f32 %v4358, %v4366
  %v4375 = vsub.f32 %v4359, %v4367
  %v4376 = vsub.f32 %v4360, %v4368
  %v4377 = vsub.f32 %v4361, %v4369
  %v4378 = vsub.f32 %v4362, %v4370
  %v4379 = vmul.f32 %v3526, %v4174
  %v4380 = vmul.f32 %v3530, %v4174
  %v4381 = vmul.f32 %v3534, %v4174
  %v4382 = vmul.f32 %v3538, %v4174
  %v4383 = vmul.f32 %v3542, %v4174
  %v4384 = vmul.f32 %v3546, %v4174
  %v4385 = vmul.f32 %v3550, %v4174
  %v4386 = vmul.f32 %v3554, %v4174
  %v4387 = vmul.f32 %v3566, %v4166
  %v4388 = vmul.f32 %v3570, %v4166
  %v4389 = vmul.f32 %v3574, %v4166
  %v4390 = vmul.f32 %v3578, %v4166
  %v4391 = vmul.f32 %v3582, %v4166
  %v4392 = vmul.f32 %v3586, %v4166
  %v4393 = vmul.f32 %v3590, %v4166
  %v4394 = vmul.f32 %v3594, %v4166
  %v4395 = vadd.f32 %v4379, %v4387
  %v4396 = vadd.f32 %v4380, %v4388
  %v4397 = vadd.f32 %v4381, %v4389
  %v4398 = vadd.f32 %v4382, %v4390
  %v4399 = vadd.f32 %v4383, %v4391
  %v4400 = vadd.f32 %v4384, %v4392
  %v4401 = vadd.f32 %v4385, %v4393
  %v4402 = vadd.f32 %v4386, %v4394
  %v4403 = vadd.f32 %v4339, %v4371
  %v4404 = vadd.f32 %v4340, %v4372
  %v4405 = vadd.f32 %v4341, %v4373
  %v4406 = vadd.f32 %v4342, %v4374
  %v4407 = vadd.f32 %v4343, %v4375
  %v4408 = vadd.f32 %v4344, %v4376
  %v4409 = vadd.f32 %v4345, %v4377
  %v4410 = vadd.f32 %v4346, %v4378
  %v4411 = vadd.f32 %v4347, %v4395
  %v4412 = vadd.f32 %v4348, %v4396
  %v4413 = vadd.f32 %v4349, %v4397
  %v4414 = vadd.f32 %v4350, %v4398
  %v4415 = vadd.f32 %v4351, %v4399
  %v4416 = vadd.f32 %v4352, %v4400
  %v4417 = vadd.f32 %v4353, %v4401
  %v4418 = vadd.f32 %v4354, %v4402
  %v4419 = vmul.f32 %v3654, %v4167
  %v4420 = vmul.f32 %v3658, %v4167
  %v4421 = vmul.f32 %v3662, %v4167
  %v4422 = vmul.f32 %v3666, %v4167
  %v4423 = vmul.f32 %v3670, %v4167
  %v4424 = vmul.f32 %v3674, %v4167
  %v4425 = vmul.f32 %v3678, %v4167
  %v4426 = vmul.f32 %v3682, %v4167
  %v4427 = vmul.f32 %v3694, %v4175
  %v4428 = vmul.f32 %v3698, %v4175
  %v4429 = vmul.f32 %v3702, %v4175
  %v4430 = vmul.f32 %v3706, %v4175
  %v4431 = vmul.f32 %v3710, %v4175
  %v4432 = vmul.f32 %v3714, %v4175
  %v4433 = vmul.f32 %v3718, %v4175
  %v4434 = vmul.f32 %v3722, %v4175
  %v4435 = vsub.f32 %v4419, %v4427
  %v4436 = vsub.f32 %v4420, %v4428
  %v4437 = vsub.f32 %v4421, %v4429
  %v4438 = vsub.f32 %v4422, %v4430
  %v4439 = vsub.f32 %v4423, %v4431
  %v4440 = vsub.f32 %v4424, %v4432
  %v4441 = vsub.f32 %v4425, %v4433
  %v4442 = vsub.f32 %v4426, %v4434
  %v4443 = vmul.f32 %v3654, %v4175
  %v4444 = vmul.f32 %v3658, %v4175
  %v4445 = vmul.f32 %v3662, %v4175
  %v4446 = vmul.f32 %v3666, %v4175
  %v4447 = vmul.f32 %v3670, %v4175
  %v4448 = vmul.f32 %v3674, %v4175
  %v4449 = vmul.f32 %v3678, %v4175
  %v4450 = vmul.f32 %v3682, %v4175
  %v4451 = vmul.f32 %v3694, %v4167
  %v4452 = vmul.f32 %v3698, %v4167
  %v4453 = vmul.f32 %v3702, %v4167
  %v4454 = vmul.f32 %v3706, %v4167
  %v4455 = vmul.f32 %v3710, %v4167
  %v4456 = vmul.f32 %v3714, %v4167
  %v4457 = vmul.f32 %v3718, %v4167
  %v4458 = vmul.f32 %v3722, %v4167
  %v4459 = vadd.f32 %v4443, %v4451
  %v4460 = vadd.f32 %v4444, %v4452
  %v4461 = vadd.f32 %v4445, %v4453
  %v4462 = vadd.f32 %v4446, %v4454
  %v4463 = vadd.f32 %v4447, %v4455
  %v4464 = vadd.f32 %v4448, %v4456
  %v4465 = vadd.f32 %v4449, %v4457
  %v4466 = vadd.f32 %v4450, %v4458
  %v4467 = vadd.f32 %v4403, %v4435
  %v4468 = vadd.f32 %v4404, %v4436
  %v4469 = vadd.f32 %v4405, %v4437
  %v4470 = vadd.f32 %v4406, %v4438
  %v4471 = vadd.f32 %v4407, %v4439
  %v4472 = vadd.f32 %v4408, %v4440
  %v4473 = vadd.f32 %v4409, %v4441
  %v4474 = vadd.f32 %v4410, %v4442
  %v4475 = vadd.f32 %v4411, %v4459
  %v4476 = vadd.f32 %v4412, %v4460
  %v4477 = vadd.f32 %v4413, %v4461
  %v4478 = vadd.f32 %v4414, %v4462
  %v4479 = vadd.f32 %v4415, %v4463
  %v4480 = vadd.f32 %v4416, %v4464
  %v4481 = vadd.f32 %v4417, %v4465
  %v4482 = vadd.f32 %v4418, %v4466
  %v4483 = vmul.f32 %v3782, %v4168
  %v4484 = vmul.f32 %v3786, %v4168
  %v4485 = vmul.f32 %v3790, %v4168
  %v4486 = vmul.f32 %v3794, %v4168
  %v4487 = vmul.f32 %v3798, %v4168
  %v4488 = vmul.f32 %v3802, %v4168
  %v4489 = vmul.f32 %v3806, %v4168
  %v4490 = vmul.f32 %v3810, %v4168
  %v4491 = vmul.f32 %v3822, %v4176
  %v4492 = vmul.f32 %v3826, %v4176
  %v4493 = vmul.f32 %v3830, %v4176
  %v4494 = vmul.f32 %v3834, %v4176
  %v4495 = vmul.f32 %v3838, %v4176
  %v4496 = vmul.f32 %v3842, %v4176
  %v4497 = vmul.f32 %v3846, %v4176
  %v4498 = vmul.f32 %v3850, %v4176
  %v4499 = vsub.f32 %v4483, %v4491
  %v4500 = vsub.f32 %v4484, %v4492
  %v4501 = vsub.f32 %v4485, %v4493
  %v4502 = vsub.f32 %v4486, %v4494
  %v4503 = vsub.f32 %v4487, %v4495
  %v4504 = vsub.f32 %v4488, %v4496
  %v4505 = vsub.f32 %v4489, %v4497
  %v4506 = vsub.f32 %v4490, %v4498
  %v4507 = vmul.f32 %v3782, %v4176
  %v4508 = vmul.f32 %v3786, %v4176
  %v4509 = vmul.f32 %v3790, %v4176
  %v4510 = vmul.f32 %v3794, %v4176
  %v4511 = vmul.f32 %v3798, %v4176
  %v4512 = vmul.f32 %v3802, %v4176
  %v4513 = vmul.f32 %v3806, %v4176
  %v4514 = vmul.f32 %v3810, %v4176
  %v4515 = vmul.f32 %v3822, %v4168
  %v4516 = vmul.f32 %v3826, %v4168
  %v4517 = vmul.f32 %v3830, %v4168
  %v4518 = vmul.f32 %v3834, %v4168
  %v4519 = vmul.f32 %v3838, %v4168
  %v4520 = vmul.f32 %v3842, %v4168
  %v4521 = vmul.f32 %v3846, %v4168
  %v4522 = vmul.f32 %v3850, %v4168
  %v4523 = vadd.f32 %v4507, %v4515
  %v4524 = vadd.f32 %v4508, %v4516
  %v4525 = vadd.f32 %v4509, %v4517
  %v4526 = vadd.f32 %v4510, %v4518
  %v4527 = vadd.f32 %v4511, %v4519
  %v4528 = vadd.f32 %v4512, %v4520
  %v4529 = vadd.f32 %v4513, %v4521
  %v4530 = vadd.f32 %v4514, %v4522
  %v4531 = vadd.f32 %v4467, %v4499
  %v4532 = vadd.f32 %v4468, %v4500
  %v4533 = vadd.f32 %v4469, %v4501
  %v4534 = vadd.f32 %v4470, %v4502
  %v4535 = vadd.f32 %v4471, %v4503
  %v4536 = vadd.f32 %v4472, %v4504
  %v4537 = vadd.f32 %v4473, %v4505
  %v4538 = vadd.f32 %v4474, %v4506
  %v4539 = vadd.f32 %v4475, %v4523
  %v4540 = vadd.f32 %v4476, %v4524
  %v4541 = vadd.f32 %v4477, %v4525
  %v4542 = vadd.f32 %v4478, %v4526
  %v4543 = vadd.f32 %v4479, %v4527
  %v4544 = vadd.f32 %v4480, %v4528
  %v4545 = vadd.f32 %v4481, %v4529
  %v4546 = vadd.f32 %v4482, %v4530
  %v4547 = vmul.f32 %v3910, %v4169
  %v4548 = vmul.f32 %v3914, %v4169
  %v4549 = vmul.f32 %v3918, %v4169
  %v4550 = vmul.f32 %v3922, %v4169
  %v4551 = vmul.f32 %v3926, %v4169
  %v4552 = vmul.f32 %v3930, %v4169
  %v4553 = vmul.f32 %v3934, %v4169
  %v4554 = vmul.f32 %v3938, %v4169
  %v4555 = vmul.f32 %v3950, %v4177
  %v4556 = vmul.f32 %v3954, %v4177
  %v4557 = vmul.f32 %v3958, %v4177
  %v4558 = vmul.f32 %v3962, %v4177
  %v4559 = vmul.f32 %v3966, %v4177
  %v4560 = vmul.f32 %v3970, %v4177
  %v4561 = vmul.f32 %v3974, %v4177
  %v4562 = vmul.f32 %v3978, %v4177
  %v4563 = vsub.f32 %v4547, %v4555
  %v4564 = vsub.f32 %v4548, %v4556
  %v4565 = vsub.f32 %v4549, %v4557
  %v4566 = vsub.f32 %v4550, %v4558
  %v4567 = vsub.f32 %v4551, %v4559
  %v4568 = vsub.f32 %v4552, %v4560
  %v4569 = vsub.f32 %v4553, %v4561
  %v4570 = vsub.f32 %v4554, %v4562
  %v4571 = vmul.f32 %v3910, %v4177
  %v4572 = vmul.f32 %v3914, %v4177
  %v4573 = vmul.f32 %v3918, %v4177
  %v4574 = vmul.f32 %v3922, %v4177
  %v4575 = vmul.f32 %v3926, %v4177
  %v4576 = vmul.f32 %v3930, %v4177
  %v4577 = vmul.f32 %v3934, %v4177
  %v4578 = vmul.f32 %v3938, %v4177
  %v4579 = vmul.f32 %v3950, %v4169
  %v4580 = vmul.f32 %v3954, %v4169
  %v4581 = vmul.f32 %v3958, %v4169
  %v4582 = vmul.f32 %v3962, %v4169
  %v4583 = vmul.f32 %v3966, %v4169
  %v4584 = vmul.f32 %v3970, %v4169
  %v4585 = vmul.f32 %v3974, %v4169
  %v4586 = vmul.f32 %v3978, %v4169
  %v4587 = vadd.f32 %v4571, %v4579
  %v4588 = vadd.f32 %v4572, %v4580
  %v4589 = vadd.f32 %v4573, %v4581
  %v4590 = vadd.f32 %v4574, %v4582
  %v4591 = vadd.f32 %v4575, %v4583
  %v4592 = vadd.f32 %v4576, %v4584
  %v4593 = vadd.f32 %v4577, %v4585
  %v4594 = vadd.f32 %v4578, %v4586
  %v4595 = vadd.f32 %v4531, %v4563
  %v4596 = vadd.f32 %v4532, %v4564
  %v4597 = vadd.f32 %v4533, %v4565
  %v4598 = vadd.f32 %v4534, %v4566
  %v4599 = vadd.f32 %v4535, %v4567
  %v4600 = vadd.f32 %v4536, %v4568
  %v4601 = vadd.f32 %v4537, %v4569
  %v4602 = vadd.f32 %v4538, %v4570
  %v4603 = vadd.f32 %v4539, %v4587
  %v4604 = vadd.f32 %v4540, %v4588
  %v4605 = vadd.f32 %v4541, %v4589
  %v4606 = vadd.f32 %v4542, %v4590
  %v4607 = vadd.f32 %v4543, %v4591
  %v4608 = vadd.f32 %v4544, %v4592
  %v4609 = vadd.f32 %v4545, %v4593
  %v4610 = vadd.f32 %v4546, %v4594
  %v4611 = vmul.f32 %v4038, %v4170
  %v4612 = vmul.f32 %v4042, %v4170
  %v4613 = vmul.f32 %v4046, %v4170
  %v4614 = vmul.f32 %v4050, %v4170
  %v4615 = vmul.f32 %v4054, %v4170
  %v4616 = vmul.f32 %v4058, %v4170
  %v4617 = vmul.f32 %v4062, %v4170
  %v4618 = vmul.f32 %v4066, %v4170
  %v4619 = vmul.f32 %v4078, %v4178
  %v4620 = vmul.f32 %v4082, %v4178
  %v4621 = vmul.f32 %v4086, %v4178
  %v4622 = vmul.f32 %v4090, %v4178
  %v4623 = vmul.f32 %v4094, %v4178
  %v4624 = vmul.f32 %v4098, %v4178
  %v4625 = vmul.f32 %v4102, %v4178
  %v4626 = vmul.f32 %v4106, %v4178
  %v4627 = vsub.f32 %v4611, %v4619
  %v4628 = vsub.f32 %v4612, %v4620
  %v4629 = vsub.f32 %v4613, %v4621
  %v4630 = vsub.f32 %v4614, %v4622
  %v4631 = vsub.f32 %v4615, %v4623
  %v4632 = vsub.f32 %v4616, %v4624
  %v4633 = vsub.f32 %v4617, %v4625
  %v4634 = vsub.f32 %v4618, %v4626
  %v4635 = vmul.f32 %v4038, %v4178
  %v4636 = vmul.f32 %v4042, %v4178
  %v4637 = vmul.f32 %v4046, %v4178
  %v4638 = vmul.f32 %v4050, %v4178
  %v4639 = vmul.f32 %v4054, %v4178
  %v4640 = vmul.f32 %v4058, %v4178
  %v4641 = vmul.f32 %v4062, %v4178
  %v4642 = vmul.f32 %v4066, %v4178
  %v4643 = vmul.f32 %v4078, %v4170
  %v4644 = vmul.f32 %v4082, %v4170
  %v4645 = vmul.f32 %v4086, %v4170
  %v4646 = vmul.f32 %v4090, %v4170
  %v4647 = vmul.f32 %v4094, %v4170
  %v4648 = vmul.f32 %v4098, %v4170
  %v4649 = vmul.f32 %v4102, %v4170
  %v4650 = vmul.f32 %v4106, %v4170
  %v4651 = vadd.f32 %v4635, %v4643
  %v4652 = vadd.f32 %v4636, %v4644
  %v4653 = vadd.f32 %v4637, %v4645
  %v4654 = vadd.f32 %v4638, %v4646
  %v4655 = vadd.f32 %v4639, %v4647
  %v4656 = vadd.f32 %v4640, %v4648
  %v4657 = vadd.f32 %v4641, %v4649
  %v4658 = vadd.f32 %v4642, %v4650
  %v4659 = vadd.f32 %v4595, %v4627
  %v4660 = vadd.f32 %v4596, %v4628
  %v4661 = vadd.f32 %v4597, %v4629
  %v4662 = vadd.f32 %v4598, %v4630
  %v4663 = vadd.f32 %v4599, %v4631
  %v4664 = vadd.f32 %v4600, %v4632
  %v4665 = vadd.f32 %v4601, %v4633
  %v4666 = vadd.f32 %v4602, %v4634
  %v4667 = vadd.f32 %v4603, %v4651
  %v4668 = vadd.f32 %v4604, %v4652
  %v4669 = vadd.f32 %v4605, %v4653
  %v4670 = vadd.f32 %v4606, %v4654
  %v4671 = vadd.f32 %v4607, %v4655
  %v4672 = vadd.f32 %v4608, %v4656
  %v4673 = vadd.f32 %v4609, %v4657
  %v4674 = vadd.f32 %v4610, %v4658
  %v4675 = vadd.f32 %v2395, %v4659
  %v4676 = vadd.f32 %v2396, %v4660
  %v4677 = vadd.f32 %v2397, %v4661
  %v4678 = vadd.f32 %v2398, %v4662
  %v4679 = vadd.f32 %v2399, %v4663
  %v4680 = vadd.f32 %v2400, %v4664
  %v4681 = vadd.f32 %v2401, %v4665
  %v4682 = vadd.f32 %v2402, %v4666
  %v4683 = vadd.f32 %v2427, %v4667
  %v4684 = vadd.f32 %v2428, %v4668
  %v4685 = vadd.f32 %v2429, %v4669
  %v4686 = vadd.f32 %v2430, %v4670
  %v4687 = vadd.f32 %v2431, %v4671
  %v4688 = vadd.f32 %v2432, %v4672
  %v4689 = vadd.f32 %v2433, %v4673
  %v4690 = vadd.f32 %v2434, %v4674
  // While loop
  $region14: #{projection_forward.1} parent=0 // loop_pre_header
    _
  $region15: #{projection_forward.1} parent=0 // loop_header
    %s4692 = sphi 0, %s4694
    %p4693 = scmp.ge.s32.totalorder %s4692, %s309
    %v4697 = vphi %v4675, %v5726
    %v4698 = vphi %v4676, %v5727
    %v4699 = vphi %v4677, %v5728
    %v4700 = vphi %v4678, %v5729
    %v4701 = vphi %v4679, %v5730
    %v4702 = vphi %v4680, %v5731
    %v4703 = vphi %v4681, %v5732
    %v4704 = vphi %v4682, %v5733
    %v4705 = vphi %v4683, %v5734
    %v4706 = vphi %v4684, %v5735
    %v4707 = vphi %v4685, %v5736
    %v4708 = vphi %v4686, %v5737
    %v4709 = vphi %v4687, %v5738
    %v4710 = vphi %v4688, %v5739
    %v4711 = vphi %v4689, %v5740
    %v4712 = vphi %v4690, %v5741
  $region16: #{projection_forward.1} parent=0 // loop_header_branch
    %4696 = sbr.rel (%p4693) target = $region20
  $region17: #{projection_forward.1} parent=0 // loop_body
    %v4713 = vlaneseq
    %v4714 = vshrl.u32 %v4713, 7
    %v4715 = vsub.s32 0, %v4714
    %v4716 = vrot.slane %v4697, %v4715
    %v4717 = vlaneseq
    %v4718 = vshrl.u32 %v4717, 7
    %v4719 = vsub.s32 0, %v4718
    %v4720 = vrot.slane %v4698, %v4719
    %v4721 = vlaneseq
    %v4722 = vshrl.u32 %v4721, 7
    %v4723 = vsub.s32 0, %v4722
    %v4724 = vrot.slane %v4699, %v4723
    %v4725 = vlaneseq
    %v4726 = vshrl.u32 %v4725, 7
    %v4727 = vsub.s32 0, %v4726
    %v4728 = vrot.slane %v4700, %v4727
    %v4729 = vlaneseq
    %v4730 = vshrl.u32 %v4729, 7
    %v4731 = vsub.s32 0, %v4730
    %v4732 = vrot.slane %v4701, %v4731
    %v4733 = vlaneseq
    %v4734 = vshrl.u32 %v4733, 7
    %v4735 = vsub.s32 0, %v4734
    %v4736 = vrot.slane %v4702, %v4735
    %v4737 = vlaneseq
    %v4738 = vshrl.u32 %v4737, 7
    %v4739 = vsub.s32 0, %v4738
    %v4740 = vrot.slane %v4703, %v4739
    %v4741 = vlaneseq
    %v4742 = vshrl.u32 %v4741, 7
    %v4743 = vsub.s32 0, %v4742
    %v4744 = vrot.slane %v4704, %v4743
    %v4745 = vmul.f32 %v4716, %v4697
    %v4746 = vmul.f32 %v4720, %v4697
    %v4747 = vmul.f32 %v4724, %v4697
    %v4748 = vmul.f32 %v4728, %v4697
    %v4749 = vmul.f32 %v4732, %v4697
    %v4750 = vmul.f32 %v4736, %v4697
    %v4751 = vmul.f32 %v4740, %v4697
    %v4752 = vmul.f32 %v4744, %v4697
    %v4753 = vlaneseq
    %v4754 = vshrl.u32 %v4753, 7
    %v4755 = vsub.s32 0, %v4754
    %v4756 = vrot.slane %v4705, %v4755
    %v4757 = vlaneseq
    %v4758 = vshrl.u32 %v4757, 7
    %v4759 = vsub.s32 0, %v4758
    %v4760 = vrot.slane %v4706, %v4759
    %v4761 = vlaneseq
    %v4762 = vshrl.u32 %v4761, 7
    %v4763 = vsub.s32 0, %v4762
    %v4764 = vrot.slane %v4707, %v4763
    %v4765 = vlaneseq
    %v4766 = vshrl.u32 %v4765, 7
    %v4767 = vsub.s32 0, %v4766
    %v4768 = vrot.slane %v4708, %v4767
    %v4769 = vlaneseq
    %v4770 = vshrl.u32 %v4769, 7
    %v4771 = vsub.s32 0, %v4770
    %v4772 = vrot.slane %v4709, %v4771
    %v4773 = vlaneseq
    %v4774 = vshrl.u32 %v4773, 7
    %v4775 = vsub.s32 0, %v4774
    %v4776 = vrot.slane %v4710, %v4775
    %v4777 = vlaneseq
    %v4778 = vshrl.u32 %v4777, 7
    %v4779 = vsub.s32 0, %v4778
    %v4780 = vrot.slane %v4711, %v4779
    %v4781 = vlaneseq
    %v4782 = vshrl.u32 %v4781, 7
    %v4783 = vsub.s32 0, %v4782
    %v4784 = vrot.slane %v4712, %v4783
    %v4785 = vmul.f32 %v4756, %v4705
    %v4786 = vmul.f32 %v4760, %v4705
    %v4787 = vmul.f32 %v4764, %v4705
    %v4788 = vmul.f32 %v4768, %v4705
    %v4789 = vmul.f32 %v4772, %v4705
    %v4790 = vmul.f32 %v4776, %v4705
    %v4791 = vmul.f32 %v4780, %v4705
    %v4792 = vmul.f32 %v4784, %v4705
    %v4793 = vsub.f32 %v4745, %v4785
    %v4794 = vsub.f32 %v4746, %v4786
    %v4795 = vsub.f32 %v4747, %v4787
    %v4796 = vsub.f32 %v4748, %v4788
    %v4797 = vsub.f32 %v4749, %v4789
    %v4798 = vsub.f32 %v4750, %v4790
    %v4799 = vsub.f32 %v4751, %v4791
    %v4800 = vsub.f32 %v4752, %v4792
    %v4801 = vmul.f32 %v4716, %v4705
    %v4802 = vmul.f32 %v4720, %v4705
    %v4803 = vmul.f32 %v4724, %v4705
    %v4804 = vmul.f32 %v4728, %v4705
    %v4805 = vmul.f32 %v4732, %v4705
    %v4806 = vmul.f32 %v4736, %v4705
    %v4807 = vmul.f32 %v4740, %v4705
    %v4808 = vmul.f32 %v4744, %v4705
    %v4809 = vmul.f32 %v4756, %v4697
    %v4810 = vmul.f32 %v4760, %v4697
    %v4811 = vmul.f32 %v4764, %v4697
    %v4812 = vmul.f32 %v4768, %v4697
    %v4813 = vmul.f32 %v4772, %v4697
    %v4814 = vmul.f32 %v4776, %v4697
    %v4815 = vmul.f32 %v4780, %v4697
    %v4816 = vmul.f32 %v4784, %v4697
    %v4817 = vadd.f32 %v4801, %v4809
    %v4818 = vadd.f32 %v4802, %v4810
    %v4819 = vadd.f32 %v4803, %v4811
    %v4820 = vadd.f32 %v4804, %v4812
    %v4821 = vadd.f32 %v4805, %v4813
    %v4822 = vadd.f32 %v4806, %v4814
    %v4823 = vadd.f32 %v4807, %v4815
    %v4824 = vadd.f32 %v4808, %v4816
    %v4825 = vlaneseq
    %v4826 = vshrl.u32 %v4825, 7
    %v4827 = vsub.s32 1, %v4826
    %v4828 = vrot.slane %v4697, %v4827
    %v4829 = vlaneseq
    %v4830 = vshrl.u32 %v4829, 7
    %v4831 = vsub.s32 1, %v4830
    %v4832 = vrot.slane %v4698, %v4831
    %v4833 = vlaneseq
    %v4834 = vshrl.u32 %v4833, 7
    %v4835 = vsub.s32 1, %v4834
    %v4836 = vrot.slane %v4699, %v4835
    %v4837 = vlaneseq
    %v4838 = vshrl.u32 %v4837, 7
    %v4839 = vsub.s32 1, %v4838
    %v4840 = vrot.slane %v4700, %v4839
    %v4841 = vlaneseq
    %v4842 = vshrl.u32 %v4841, 7
    %v4843 = vsub.s32 1, %v4842
    %v4844 = vrot.slane %v4701, %v4843
    %v4845 = vlaneseq
    %v4846 = vshrl.u32 %v4845, 7
    %v4847 = vsub.s32 1, %v4846
    %v4848 = vrot.slane %v4702, %v4847
    %v4849 = vlaneseq
    %v4850 = vshrl.u32 %v4849, 7
    %v4851 = vsub.s32 1, %v4850
    %v4852 = vrot.slane %v4703, %v4851
    %v4853 = vlaneseq
    %v4854 = vshrl.u32 %v4853, 7
    %v4855 = vsub.s32 1, %v4854
    %v4856 = vrot.slane %v4704, %v4855
    %v4857 = vmul.f32 %v4828, %v4698
    %v4858 = vmul.f32 %v4832, %v4698
    %v4859 = vmul.f32 %v4836, %v4698
    %v4860 = vmul.f32 %v4840, %v4698
    %v4861 = vmul.f32 %v4844, %v4698
    %v4862 = vmul.f32 %v4848, %v4698
    %v4863 = vmul.f32 %v4852, %v4698
    %v4864 = vmul.f32 %v4856, %v4698
    %v4865 = vlaneseq
    %v4866 = vshrl.u32 %v4865, 7
    %v4867 = vsub.s32 1, %v4866
    %v4868 = vrot.slane %v4705, %v4867
    %v4869 = vlaneseq
    %v4870 = vshrl.u32 %v4869, 7
    %v4871 = vsub.s32 1, %v4870
    %v4872 = vrot.slane %v4706, %v4871
    %v4873 = vlaneseq
    %v4874 = vshrl.u32 %v4873, 7
    %v4875 = vsub.s32 1, %v4874
    %v4876 = vrot.slane %v4707, %v4875
    %v4877 = vlaneseq
    %v4878 = vshrl.u32 %v4877, 7
    %v4879 = vsub.s32 1, %v4878
    %v4880 = vrot.slane %v4708, %v4879
    %v4881 = vlaneseq
    %v4882 = vshrl.u32 %v4881, 7
    %v4883 = vsub.s32 1, %v4882
    %v4884 = vrot.slane %v4709, %v4883
    %v4885 = vlaneseq
    %v4886 = vshrl.u32 %v4885, 7
    %v4887 = vsub.s32 1, %v4886
    %v4888 = vrot.slane %v4710, %v4887
    %v4889 = vlaneseq
    %v4890 = vshrl.u32 %v4889, 7
    %v4891 = vsub.s32 1, %v4890
    %v4892 = vrot.slane %v4711, %v4891
    %v4893 = vlaneseq
    %v4894 = vshrl.u32 %v4893, 7
    %v4895 = vsub.s32 1, %v4894
    %v4896 = vrot.slane %v4712, %v4895
    %v4897 = vmul.f32 %v4868, %v4706
    %v4898 = vmul.f32 %v4872, %v4706
    %v4899 = vmul.f32 %v4876, %v4706
    %v4900 = vmul.f32 %v4880, %v4706
    %v4901 = vmul.f32 %v4884, %v4706
    %v4902 = vmul.f32 %v4888, %v4706
    %v4903 = vmul.f32 %v4892, %v4706
    %v4904 = vmul.f32 %v4896, %v4706
    %v4905 = vsub.f32 %v4857, %v4897
    %v4906 = vsub.f32 %v4858, %v4898
    %v4907 = vsub.f32 %v4859, %v4899
    %v4908 = vsub.f32 %v4860, %v4900
    %v4909 = vsub.f32 %v4861, %v4901
    %v4910 = vsub.f32 %v4862, %v4902
    %v4911 = vsub.f32 %v4863, %v4903
    %v4912 = vsub.f32 %v4864, %v4904
    %v4913 = vmul.f32 %v4828, %v4706
    %v4914 = vmul.f32 %v4832, %v4706
    %v4915 = vmul.f32 %v4836, %v4706
    %v4916 = vmul.f32 %v4840, %v4706
    %v4917 = vmul.f32 %v4844, %v4706
    %v4918 = vmul.f32 %v4848, %v4706
    %v4919 = vmul.f32 %v4852, %v4706
    %v4920 = vmul.f32 %v4856, %v4706
    %v4921 = vmul.f32 %v4868, %v4698
    %v4922 = vmul.f32 %v4872, %v4698
    %v4923 = vmul.f32 %v4876, %v4698
    %v4924 = vmul.f32 %v4880, %v4698
    %v4925 = vmul.f32 %v4884, %v4698
    %v4926 = vmul.f32 %v4888, %v4698
    %v4927 = vmul.f32 %v4892, %v4698
    %v4928 = vmul.f32 %v4896, %v4698
    %v4929 = vadd.f32 %v4913, %v4921
    %v4930 = vadd.f32 %v4914, %v4922
    %v4931 = vadd.f32 %v4915, %v4923
    %v4932 = vadd.f32 %v4916, %v4924
    %v4933 = vadd.f32 %v4917, %v4925
    %v4934 = vadd.f32 %v4918, %v4926
    %v4935 = vadd.f32 %v4919, %v4927
    %v4936 = vadd.f32 %v4920, %v4928
    %v4937 = vadd.f32 %v4793, %v4905
    %v4938 = vadd.f32 %v4794, %v4906
    %v4939 = vadd.f32 %v4795, %v4907
    %v4940 = vadd.f32 %v4796, %v4908
    %v4941 = vadd.f32 %v4797, %v4909
    %v4942 = vadd.f32 %v4798, %v4910
    %v4943 = vadd.f32 %v4799, %v4911
    %v4944 = vadd.f32 %v4800, %v4912
    %v4945 = vadd.f32 %v4817, %v4929
    %v4946 = vadd.f32 %v4818, %v4930
    %v4947 = vadd.f32 %v4819, %v4931
    %v4948 = vadd.f32 %v4820, %v4932
    %v4949 = vadd.f32 %v4821, %v4933
    %v4950 = vadd.f32 %v4822, %v4934
    %v4951 = vadd.f32 %v4823, %v4935
    %v4952 = vadd.f32 %v4824, %v4936
    %v4953 = vlaneseq
    %v4954 = vshrl.u32 %v4953, 7
    %v4955 = vsub.s32 2, %v4954
    %v4956 = vrot.slane %v4697, %v4955
    %v4957 = vlaneseq
    %v4958 = vshrl.u32 %v4957, 7
    %v4959 = vsub.s32 2, %v4958
    %v4960 = vrot.slane %v4698, %v4959
    %v4961 = vlaneseq
    %v4962 = vshrl.u32 %v4961, 7
    %v4963 = vsub.s32 2, %v4962
    %v4964 = vrot.slane %v4699, %v4963
    %v4965 = vlaneseq
    %v4966 = vshrl.u32 %v4965, 7
    %v4967 = vsub.s32 2, %v4966
    %v4968 = vrot.slane %v4700, %v4967
    %v4969 = vlaneseq
    %v4970 = vshrl.u32 %v4969, 7
    %v4971 = vsub.s32 2, %v4970
    %v4972 = vrot.slane %v4701, %v4971
    %v4973 = vlaneseq
    %v4974 = vshrl.u32 %v4973, 7
    %v4975 = vsub.s32 2, %v4974
    %v4976 = vrot.slane %v4702, %v4975
    %v4977 = vlaneseq
    %v4978 = vshrl.u32 %v4977, 7
    %v4979 = vsub.s32 2, %v4978
    %v4980 = vrot.slane %v4703, %v4979
    %v4981 = vlaneseq
    %v4982 = vshrl.u32 %v4981, 7
    %v4983 = vsub.s32 2, %v4982
    %v4984 = vrot.slane %v4704, %v4983
    %v4985 = vmul.f32 %v4956, %v4699
    %v4986 = vmul.f32 %v4960, %v4699
    %v4987 = vmul.f32 %v4964, %v4699
    %v4988 = vmul.f32 %v4968, %v4699
    %v4989 = vmul.f32 %v4972, %v4699
    %v4990 = vmul.f32 %v4976, %v4699
    %v4991 = vmul.f32 %v4980, %v4699
    %v4992 = vmul.f32 %v4984, %v4699
    %v4993 = vlaneseq
    %v4994 = vshrl.u32 %v4993, 7
    %v4995 = vsub.s32 2, %v4994
    %v4996 = vrot.slane %v4705, %v4995
    %v4997 = vlaneseq
    %v4998 = vshrl.u32 %v4997, 7
    %v4999 = vsub.s32 2, %v4998
    %v5000 = vrot.slane %v4706, %v4999
    %v5001 = vlaneseq
    %v5002 = vshrl.u32 %v5001, 7
    %v5003 = vsub.s32 2, %v5002
    %v5004 = vrot.slane %v4707, %v5003
    %v5005 = vlaneseq
    %v5006 = vshrl.u32 %v5005, 7
    %v5007 = vsub.s32 2, %v5006
    %v5008 = vrot.slane %v4708, %v5007
    %v5009 = vlaneseq
    %v5010 = vshrl.u32 %v5009, 7
    %v5011 = vsub.s32 2, %v5010
    %v5012 = vrot.slane %v4709, %v5011
    %v5013 = vlaneseq
    %v5014 = vshrl.u32 %v5013, 7
    %v5015 = vsub.s32 2, %v5014
    %v5016 = vrot.slane %v4710, %v5015
    %v5017 = vlaneseq
    %v5018 = vshrl.u32 %v5017, 7
    %v5019 = vsub.s32 2, %v5018
    %v5020 = vrot.slane %v4711, %v5019
    %v5021 = vlaneseq
    %v5022 = vshrl.u32 %v5021, 7
    %v5023 = vsub.s32 2, %v5022
    %v5024 = vrot.slane %v4712, %v5023
    %v5025 = vmul.f32 %v4996, %v4707
    %v5026 = vmul.f32 %v5000, %v4707
    %v5027 = vmul.f32 %v5004, %v4707
    %v5028 = vmul.f32 %v5008, %v4707
    %v5029 = vmul.f32 %v5012, %v4707
    %v5030 = vmul.f32 %v5016, %v4707
    %v5031 = vmul.f32 %v5020, %v4707
    %v5032 = vmul.f32 %v5024, %v4707
    %v5033 = vsub.f32 %v4985, %v5025
    %v5034 = vsub.f32 %v4986, %v5026
    %v5035 = vsub.f32 %v4987, %v5027
    %v5036 = vsub.f32 %v4988, %v5028
    %v5037 = vsub.f32 %v4989, %v5029
    %v5038 = vsub.f32 %v4990, %v5030
    %v5039 = vsub.f32 %v4991, %v5031
    %v5040 = vsub.f32 %v4992, %v5032
    %v5041 = vmul.f32 %v4956, %v4707
    %v5042 = vmul.f32 %v4960, %v4707
    %v5043 = vmul.f32 %v4964, %v4707
    %v5044 = vmul.f32 %v4968, %v4707
    %v5045 = vmul.f32 %v4972, %v4707
    %v5046 = vmul.f32 %v4976, %v4707
    %v5047 = vmul.f32 %v4980, %v4707
    %v5048 = vmul.f32 %v4984, %v4707
    %v5049 = vmul.f32 %v4996, %v4699
    %v5050 = vmul.f32 %v5000, %v4699
    %v5051 = vmul.f32 %v5004, %v4699
    %v5052 = vmul.f32 %v5008, %v4699
    %v5053 = vmul.f32 %v5012, %v4699
    %v5054 = vmul.f32 %v5016, %v4699
    %v5055 = vmul.f32 %v5020, %v4699
    %v5056 = vmul.f32 %v5024, %v4699
    %v5057 = vadd.f32 %v5041, %v5049
    %v5058 = vadd.f32 %v5042, %v5050
    %v5059 = vadd.f32 %v5043, %v5051
    %v5060 = vadd.f32 %v5044, %v5052
    %v5061 = vadd.f32 %v5045, %v5053
    %v5062 = vadd.f32 %v5046, %v5054
    %v5063 = vadd.f32 %v5047, %v5055
    %v5064 = vadd.f32 %v5048, %v5056
    %v5065 = vadd.f32 %v4937, %v5033
    %v5066 = vadd.f32 %v4938, %v5034
    %v5067 = vadd.f32 %v4939, %v5035
    %v5068 = vadd.f32 %v4940, %v5036
    %v5069 = vadd.f32 %v4941, %v5037
    %v5070 = vadd.f32 %v4942, %v5038
    %v5071 = vadd.f32 %v4943, %v5039
    %v5072 = vadd.f32 %v4944, %v5040
    %v5073 = vadd.f32 %v4945, %v5057
    %v5074 = vadd.f32 %v4946, %v5058
    %v5075 = vadd.f32 %v4947, %v5059
    %v5076 = vadd.f32 %v4948, %v5060
    %v5077 = vadd.f32 %v4949, %v5061
    %v5078 = vadd.f32 %v4950, %v5062
    %v5079 = vadd.f32 %v4951, %v5063
    %v5080 = vadd.f32 %v4952, %v5064
    %v5081 = vlaneseq
    %v5082 = vshrl.u32 %v5081, 7
    %v5083 = vsub.s32 3, %v5082
    %v5084 = vrot.slane %v4697, %v5083
    %v5085 = vlaneseq
    %v5086 = vshrl.u32 %v5085, 7
    %v5087 = vsub.s32 3, %v5086
    %v5088 = vrot.slane %v4698, %v5087
    %v5089 = vlaneseq
    %v5090 = vshrl.u32 %v5089, 7
    %v5091 = vsub.s32 3, %v5090
    %v5092 = vrot.slane %v4699, %v5091
    %v5093 = vlaneseq
    %v5094 = vshrl.u32 %v5093, 7
    %v5095 = vsub.s32 3, %v5094
    %v5096 = vrot.slane %v4700, %v5095
    %v5097 = vlaneseq
    %v5098 = vshrl.u32 %v5097, 7
    %v5099 = vsub.s32 3, %v5098
    %v5100 = vrot.slane %v4701, %v5099
    %v5101 = vlaneseq
    %v5102 = vshrl.u32 %v5101, 7
    %v5103 = vsub.s32 3, %v5102
    %v5104 = vrot.slane %v4702, %v5103
    %v5105 = vlaneseq
    %v5106 = vshrl.u32 %v5105, 7
    %v5107 = vsub.s32 3, %v5106
    %v5108 = vrot.slane %v4703, %v5107
    %v5109 = vlaneseq
    %v5110 = vshrl.u32 %v5109, 7
    %v5111 = vsub.s32 3, %v5110
    %v5112 = vrot.slane %v4704, %v5111
    %v5113 = vmul.f32 %v5084, %v4700
    %v5114 = vmul.f32 %v5088, %v4700
    %v5115 = vmul.f32 %v5092, %v4700
    %v5116 = vmul.f32 %v5096, %v4700
    %v5117 = vmul.f32 %v5100, %v4700
    %v5118 = vmul.f32 %v5104, %v4700
    %v5119 = vmul.f32 %v5108, %v4700
    %v5120 = vmul.f32 %v5112, %v4700
    %v5121 = vlaneseq
    %v5122 = vshrl.u32 %v5121, 7
    %v5123 = vsub.s32 3, %v5122
    %v5124 = vrot.slane %v4705, %v5123
    %v5125 = vlaneseq
    %v5126 = vshrl.u32 %v5125, 7
    %v5127 = vsub.s32 3, %v5126
    %v5128 = vrot.slane %v4706, %v5127
    %v5129 = vlaneseq
    %v5130 = vshrl.u32 %v5129, 7
    %v5131 = vsub.s32 3, %v5130
    %v5132 = vrot.slane %v4707, %v5131
    %v5133 = vlaneseq
    %v5134 = vshrl.u32 %v5133, 7
    %v5135 = vsub.s32 3, %v5134
    %v5136 = vrot.slane %v4708, %v5135
    %v5137 = vlaneseq
    %v5138 = vshrl.u32 %v5137, 7
    %v5139 = vsub.s32 3, %v5138
    %v5140 = vrot.slane %v4709, %v5139
    %v5141 = vlaneseq
    %v5142 = vshrl.u32 %v5141, 7
    %v5143 = vsub.s32 3, %v5142
    %v5144 = vrot.slane %v4710, %v5143
    %v5145 = vlaneseq
    %v5146 = vshrl.u32 %v5145, 7
    %v5147 = vsub.s32 3, %v5146
    %v5148 = vrot.slane %v4711, %v5147
    %v5149 = vlaneseq
    %v5150 = vshrl.u32 %v5149, 7
    %v5151 = vsub.s32 3, %v5150
    %v5152 = vrot.slane %v4712, %v5151
    %v5153 = vmul.f32 %v5124, %v4708
    %v5154 = vmul.f32 %v5128, %v4708
    %v5155 = vmul.f32 %v5132, %v4708
    %v5156 = vmul.f32 %v5136, %v4708
    %v5157 = vmul.f32 %v5140, %v4708
    %v5158 = vmul.f32 %v5144, %v4708
    %v5159 = vmul.f32 %v5148, %v4708
    %v5160 = vmul.f32 %v5152, %v4708
    %v5161 = vsub.f32 %v5113, %v5153
    %v5162 = vsub.f32 %v5114, %v5154
    %v5163 = vsub.f32 %v5115, %v5155
    %v5164 = vsub.f32 %v5116, %v5156
    %v5165 = vsub.f32 %v5117, %v5157
    %v5166 = vsub.f32 %v5118, %v5158
    %v5167 = vsub.f32 %v5119, %v5159
    %v5168 = vsub.f32 %v5120, %v5160
    %v5169 = vmul.f32 %v5084, %v4708
    %v5170 = vmul.f32 %v5088, %v4708
    %v5171 = vmul.f32 %v5092, %v4708
    %v5172 = vmul.f32 %v5096, %v4708
    %v5173 = vmul.f32 %v5100, %v4708
    %v5174 = vmul.f32 %v5104, %v4708
    %v5175 = vmul.f32 %v5108, %v4708
    %v5176 = vmul.f32 %v5112, %v4708
    %v5177 = vmul.f32 %v5124, %v4700
    %v5178 = vmul.f32 %v5128, %v4700
    %v5179 = vmul.f32 %v5132, %v4700
    %v5180 = vmul.f32 %v5136, %v4700
    %v5181 = vmul.f32 %v5140, %v4700
    %v5182 = vmul.f32 %v5144, %v4700
    %v5183 = vmul.f32 %v5148, %v4700
    %v5184 = vmul.f32 %v5152, %v4700
    %v5185 = vadd.f32 %v5169, %v5177
    %v5186 = vadd.f32 %v5170, %v5178
    %v5187 = vadd.f32 %v5171, %v5179
    %v5188 = vadd.f32 %v5172, %v5180
    %v5189 = vadd.f32 %v5173, %v5181
    %v5190 = vadd.f32 %v5174, %v5182
    %v5191 = vadd.f32 %v5175, %v5183
    %v5192 = vadd.f32 %v5176, %v5184
    %v5193 = vadd.f32 %v5065, %v5161
    %v5194 = vadd.f32 %v5066, %v5162
    %v5195 = vadd.f32 %v5067, %v5163
    %v5196 = vadd.f32 %v5068, %v5164
    %v5197 = vadd.f32 %v5069, %v5165
    %v5198 = vadd.f32 %v5070, %v5166
    %v5199 = vadd.f32 %v5071, %v5167
    %v5200 = vadd.f32 %v5072, %v5168
    %v5201 = vadd.f32 %v5073, %v5185
    %v5202 = vadd.f32 %v5074, %v5186
    %v5203 = vadd.f32 %v5075, %v5187
    %v5204 = vadd.f32 %v5076, %v5188
    %v5205 = vadd.f32 %v5077, %v5189
    %v5206 = vadd.f32 %v5078, %v5190
    %v5207 = vadd.f32 %v5079, %v5191
    %v5208 = vadd.f32 %v5080, %v5192
    %v5209 = vlaneseq
    %v5210 = vshrl.u32 %v5209, 7
    %v5211 = vsub.s32 4, %v5210
    %v5212 = vrot.slane %v4697, %v5211
    %v5213 = vlaneseq
    %v5214 = vshrl.u32 %v5213, 7
    %v5215 = vsub.s32 4, %v5214
    %v5216 = vrot.slane %v4698, %v5215
    %v5217 = vlaneseq
    %v5218 = vshrl.u32 %v5217, 7
    %v5219 = vsub.s32 4, %v5218
    %v5220 = vrot.slane %v4699, %v5219
    %v5221 = vlaneseq
    %v5222 = vshrl.u32 %v5221, 7
    %v5223 = vsub.s32 4, %v5222
    %v5224 = vrot.slane %v4700, %v5223
    %v5225 = vlaneseq
    %v5226 = vshrl.u32 %v5225, 7
    %v5227 = vsub.s32 4, %v5226
    %v5228 = vrot.slane %v4701, %v5227
    %v5229 = vlaneseq
    %v5230 = vshrl.u32 %v5229, 7
    %v5231 = vsub.s32 4, %v5230
    %v5232 = vrot.slane %v4702, %v5231
    %v5233 = vlaneseq
    %v5234 = vshrl.u32 %v5233, 7
    %v5235 = vsub.s32 4, %v5234
    %v5236 = vrot.slane %v4703, %v5235
    %v5237 = vlaneseq
    %v5238 = vshrl.u32 %v5237, 7
    %v5239 = vsub.s32 4, %v5238
    %v5240 = vrot.slane %v4704, %v5239
    %v5241 = vmul.f32 %v5212, %v4701
    %v5242 = vmul.f32 %v5216, %v4701
    %v5243 = vmul.f32 %v5220, %v4701
    %v5244 = vmul.f32 %v5224, %v4701
    %v5245 = vmul.f32 %v5228, %v4701
    %v5246 = vmul.f32 %v5232, %v4701
    %v5247 = vmul.f32 %v5236, %v4701
    %v5248 = vmul.f32 %v5240, %v4701
    %v5249 = vlaneseq
    %v5250 = vshrl.u32 %v5249, 7
    %v5251 = vsub.s32 4, %v5250
    %v5252 = vrot.slane %v4705, %v5251
    %v5253 = vlaneseq
    %v5254 = vshrl.u32 %v5253, 7
    %v5255 = vsub.s32 4, %v5254
    %v5256 = vrot.slane %v4706, %v5255
    %v5257 = vlaneseq
    %v5258 = vshrl.u32 %v5257, 7
    %v5259 = vsub.s32 4, %v5258
    %v5260 = vrot.slane %v4707, %v5259
    %v5261 = vlaneseq
    %v5262 = vshrl.u32 %v5261, 7
    %v5263 = vsub.s32 4, %v5262
    %v5264 = vrot.slane %v4708, %v5263
    %v5265 = vlaneseq
    %v5266 = vshrl.u32 %v5265, 7
    %v5267 = vsub.s32 4, %v5266
    %v5268 = vrot.slane %v4709, %v5267
    %v5269 = vlaneseq
    %v5270 = vshrl.u32 %v5269, 7
    %v5271 = vsub.s32 4, %v5270
    %v5272 = vrot.slane %v4710, %v5271
    %v5273 = vlaneseq
    %v5274 = vshrl.u32 %v5273, 7
    %v5275 = vsub.s32 4, %v5274
    %v5276 = vrot.slane %v4711, %v5275
    %v5277 = vlaneseq
    %v5278 = vshrl.u32 %v5277, 7
    %v5279 = vsub.s32 4, %v5278
    %v5280 = vrot.slane %v4712, %v5279
    %v5281 = vmul.f32 %v5252, %v4709
    %v5282 = vmul.f32 %v5256, %v4709
    %v5283 = vmul.f32 %v5260, %v4709
    %v5284 = vmul.f32 %v5264, %v4709
    %v5285 = vmul.f32 %v5268, %v4709
    %v5286 = vmul.f32 %v5272, %v4709
    %v5287 = vmul.f32 %v5276, %v4709
    %v5288 = vmul.f32 %v5280, %v4709
    %v5289 = vsub.f32 %v5241, %v5281
    %v5290 = vsub.f32 %v5242, %v5282
    %v5291 = vsub.f32 %v5243, %v5283
    %v5292 = vsub.f32 %v5244, %v5284
    %v5293 = vsub.f32 %v5245, %v5285
    %v5294 = vsub.f32 %v5246, %v5286
    %v5295 = vsub.f32 %v5247, %v5287
    %v5296 = vsub.f32 %v5248, %v5288
    %v5297 = vmul.f32 %v5212, %v4709
    %v5298 = vmul.f32 %v5216, %v4709
    %v5299 = vmul.f32 %v5220, %v4709
    %v5300 = vmul.f32 %v5224, %v4709
    %v5301 = vmul.f32 %v5228, %v4709
    %v5302 = vmul.f32 %v5232, %v4709
    %v5303 = vmul.f32 %v5236, %v4709
    %v5304 = vmul.f32 %v5240, %v4709
    %v5305 = vmul.f32 %v5252, %v4701
    %v5306 = vmul.f32 %v5256, %v4701
    %v5307 = vmul.f32 %v5260, %v4701
    %v5308 = vmul.f32 %v5264, %v4701
    %v5309 = vmul.f32 %v5268, %v4701
    %v5310 = vmul.f32 %v5272, %v4701
    %v5311 = vmul.f32 %v5276, %v4701
    %v5312 = vmul.f32 %v5280, %v4701
    %v5313 = vadd.f32 %v5297, %v5305
    %v5314 = vadd.f32 %v5298, %v5306
    %v5315 = vadd.f32 %v5299, %v5307
    %v5316 = vadd.f32 %v5300, %v5308
    %v5317 = vadd.f32 %v5301, %v5309
    %v5318 = vadd.f32 %v5302, %v5310
    %v5319 = vadd.f32 %v5303, %v5311
    %v5320 = vadd.f32 %v5304, %v5312
    %v5321 = vadd.f32 %v5193, %v5289
    %v5322 = vadd.f32 %v5194, %v5290
    %v5323 = vadd.f32 %v5195, %v5291
    %v5324 = vadd.f32 %v5196, %v5292
    %v5325 = vadd.f32 %v5197, %v5293
    %v5326 = vadd.f32 %v5198, %v5294
    %v5327 = vadd.f32 %v5199, %v5295
    %v5328 = vadd.f32 %v5200, %v5296
    %v5329 = vadd.f32 %v5201, %v5313
    %v5330 = vadd.f32 %v5202, %v5314
    %v5331 = vadd.f32 %v5203, %v5315
    %v5332 = vadd.f32 %v5204, %v5316
    %v5333 = vadd.f32 %v5205, %v5317
    %v5334 = vadd.f32 %v5206, %v5318
    %v5335 = vadd.f32 %v5207, %v5319
    %v5336 = vadd.f32 %v5208, %v5320
    %v5337 = vlaneseq
    %v5338 = vshrl.u32 %v5337, 7
    %v5339 = vsub.s32 5, %v5338
    %v5340 = vrot.slane %v4697, %v5339
    %v5341 = vlaneseq
    %v5342 = vshrl.u32 %v5341, 7
    %v5343 = vsub.s32 5, %v5342
    %v5344 = vrot.slane %v4698, %v5343
    %v5345 = vlaneseq
    %v5346 = vshrl.u32 %v5345, 7
    %v5347 = vsub.s32 5, %v5346
    %v5348 = vrot.slane %v4699, %v5347
    %v5349 = vlaneseq
    %v5350 = vshrl.u32 %v5349, 7
    %v5351 = vsub.s32 5, %v5350
    %v5352 = vrot.slane %v4700, %v5351
    %v5353 = vlaneseq
    %v5354 = vshrl.u32 %v5353, 7
    %v5355 = vsub.s32 5, %v5354
    %v5356 = vrot.slane %v4701, %v5355
    %v5357 = vlaneseq
    %v5358 = vshrl.u32 %v5357, 7
    %v5359 = vsub.s32 5, %v5358
    %v5360 = vrot.slane %v4702, %v5359
    %v5361 = vlaneseq
    %v5362 = vshrl.u32 %v5361, 7
    %v5363 = vsub.s32 5, %v5362
    %v5364 = vrot.slane %v4703, %v5363
    %v5365 = vlaneseq
    %v5366 = vshrl.u32 %v5365, 7
    %v5367 = vsub.s32 5, %v5366
    %v5368 = vrot.slane %v4704, %v5367
    %v5369 = vmul.f32 %v5340, %v4702
    %v5370 = vmul.f32 %v5344, %v4702
    %v5371 = vmul.f32 %v5348, %v4702
    %v5372 = vmul.f32 %v5352, %v4702
    %v5373 = vmul.f32 %v5356, %v4702
    %v5374 = vmul.f32 %v5360, %v4702
    %v5375 = vmul.f32 %v5364, %v4702
    %v5376 = vmul.f32 %v5368, %v4702
    %v5377 = vlaneseq
    %v5378 = vshrl.u32 %v5377, 7
    %v5379 = vsub.s32 5, %v5378
    %v5380 = vrot.slane %v4705, %v5379
    %v5381 = vlaneseq
    %v5382 = vshrl.u32 %v5381, 7
    %v5383 = vsub.s32 5, %v5382
    %v5384 = vrot.slane %v4706, %v5383
    %v5385 = vlaneseq
    %v5386 = vshrl.u32 %v5385, 7
    %v5387 = vsub.s32 5, %v5386
    %v5388 = vrot.slane %v4707, %v5387
    %v5389 = vlaneseq
    %v5390 = vshrl.u32 %v5389, 7
    %v5391 = vsub.s32 5, %v5390
    %v5392 = vrot.slane %v4708, %v5391
    %v5393 = vlaneseq
    %v5394 = vshrl.u32 %v5393, 7
    %v5395 = vsub.s32 5, %v5394
    %v5396 = vrot.slane %v4709, %v5395
    %v5397 = vlaneseq
    %v5398 = vshrl.u32 %v5397, 7
    %v5399 = vsub.s32 5, %v5398
    %v5400 = vrot.slane %v4710, %v5399
    %v5401 = vlaneseq
    %v5402 = vshrl.u32 %v5401, 7
    %v5403 = vsub.s32 5, %v5402
    %v5404 = vrot.slane %v4711, %v5403
    %v5405 = vlaneseq
    %v5406 = vshrl.u32 %v5405, 7
    %v5407 = vsub.s32 5, %v5406
    %v5408 = vrot.slane %v4712, %v5407
    %v5409 = vmul.f32 %v5380, %v4710
    %v5410 = vmul.f32 %v5384, %v4710
    %v5411 = vmul.f32 %v5388, %v4710
    %v5412 = vmul.f32 %v5392, %v4710
    %v5413 = vmul.f32 %v5396, %v4710
    %v5414 = vmul.f32 %v5400, %v4710
    %v5415 = vmul.f32 %v5404, %v4710
    %v5416 = vmul.f32 %v5408, %v4710
    %v5417 = vsub.f32 %v5369, %v5409
    %v5418 = vsub.f32 %v5370, %v5410
    %v5419 = vsub.f32 %v5371, %v5411
    %v5420 = vsub.f32 %v5372, %v5412
    %v5421 = vsub.f32 %v5373, %v5413
    %v5422 = vsub.f32 %v5374, %v5414
    %v5423 = vsub.f32 %v5375, %v5415
    %v5424 = vsub.f32 %v5376, %v5416
    %v5425 = vmul.f32 %v5340, %v4710
    %v5426 = vmul.f32 %v5344, %v4710
    %v5427 = vmul.f32 %v5348, %v4710
    %v5428 = vmul.f32 %v5352, %v4710
    %v5429 = vmul.f32 %v5356, %v4710
    %v5430 = vmul.f32 %v5360, %v4710
    %v5431 = vmul.f32 %v5364, %v4710
    %v5432 = vmul.f32 %v5368, %v4710
    %v5433 = vmul.f32 %v5380, %v4702
    %v5434 = vmul.f32 %v5384, %v4702
    %v5435 = vmul.f32 %v5388, %v4702
    %v5436 = vmul.f32 %v5392, %v4702
    %v5437 = vmul.f32 %v5396, %v4702
    %v5438 = vmul.f32 %v5400, %v4702
    %v5439 = vmul.f32 %v5404, %v4702
    %v5440 = vmul.f32 %v5408, %v4702
    %v5441 = vadd.f32 %v5425, %v5433
    %v5442 = vadd.f32 %v5426, %v5434
    %v5443 = vadd.f32 %v5427, %v5435
    %v5444 = vadd.f32 %v5428, %v5436
    %v5445 = vadd.f32 %v5429, %v5437
    %v5446 = vadd.f32 %v5430, %v5438
    %v5447 = vadd.f32 %v5431, %v5439
    %v5448 = vadd.f32 %v5432, %v5440
    %v5449 = vadd.f32 %v5321, %v5417
    %v5450 = vadd.f32 %v5322, %v5418
    %v5451 = vadd.f32 %v5323, %v5419
    %v5452 = vadd.f32 %v5324, %v5420
    %v5453 = vadd.f32 %v5325, %v5421
    %v5454 = vadd.f32 %v5326, %v5422
    %v5455 = vadd.f32 %v5327, %v5423
    %v5456 = vadd.f32 %v5328, %v5424
    %v5457 = vadd.f32 %v5329, %v5441
    %v5458 = vadd.f32 %v5330, %v5442
    %v5459 = vadd.f32 %v5331, %v5443
    %v5460 = vadd.f32 %v5332, %v5444
    %v5461 = vadd.f32 %v5333, %v5445
    %v5462 = vadd.f32 %v5334, %v5446
    %v5463 = vadd.f32 %v5335, %v5447
    %v5464 = vadd.f32 %v5336, %v5448
    %v5465 = vlaneseq
    %v5466 = vshrl.u32 %v5465, 7
    %v5467 = vsub.s32 6, %v5466
    %v5468 = vrot.slane %v4697, %v5467
    %v5469 = vlaneseq
    %v5470 = vshrl.u32 %v5469, 7
    %v5471 = vsub.s32 6, %v5470
    %v5472 = vrot.slane %v4698, %v5471
    %v5473 = vlaneseq
    %v5474 = vshrl.u32 %v5473, 7
    %v5475 = vsub.s32 6, %v5474
    %v5476 = vrot.slane %v4699, %v5475
    %v5477 = vlaneseq
    %v5478 = vshrl.u32 %v5477, 7
    %v5479 = vsub.s32 6, %v5478
    %v5480 = vrot.slane %v4700, %v5479
    %v5481 = vlaneseq
    %v5482 = vshrl.u32 %v5481, 7
    %v5483 = vsub.s32 6, %v5482
    %v5484 = vrot.slane %v4701, %v5483
    %v5485 = vlaneseq
    %v5486 = vshrl.u32 %v5485, 7
    %v5487 = vsub.s32 6, %v5486
    %v5488 = vrot.slane %v4702, %v5487
    %v5489 = vlaneseq
    %v5490 = vshrl.u32 %v5489, 7
    %v5491 = vsub.s32 6, %v5490
    %v5492 = vrot.slane %v4703, %v5491
    %v5493 = vlaneseq
    %v5494 = vshrl.u32 %v5493, 7
    %v5495 = vsub.s32 6, %v5494
    %v5496 = vrot.slane %v4704, %v5495
    %v5497 = vmul.f32 %v5468, %v4703
    %v5498 = vmul.f32 %v5472, %v4703
    %v5499 = vmul.f32 %v5476, %v4703
    %v5500 = vmul.f32 %v5480, %v4703
    %v5501 = vmul.f32 %v5484, %v4703
    %v5502 = vmul.f32 %v5488, %v4703
    %v5503 = vmul.f32 %v5492, %v4703
    %v5504 = vmul.f32 %v5496, %v4703
    %v5505 = vlaneseq
    %v5506 = vshrl.u32 %v5505, 7
    %v5507 = vsub.s32 6, %v5506
    %v5508 = vrot.slane %v4705, %v5507
    %v5509 = vlaneseq
    %v5510 = vshrl.u32 %v5509, 7
    %v5511 = vsub.s32 6, %v5510
    %v5512 = vrot.slane %v4706, %v5511
    %v5513 = vlaneseq
    %v5514 = vshrl.u32 %v5513, 7
    %v5515 = vsub.s32 6, %v5514
    %v5516 = vrot.slane %v4707, %v5515
    %v5517 = vlaneseq
    %v5518 = vshrl.u32 %v5517, 7
    %v5519 = vsub.s32 6, %v5518
    %v5520 = vrot.slane %v4708, %v5519
    %v5521 = vlaneseq
    %v5522 = vshrl.u32 %v5521, 7
    %v5523 = vsub.s32 6, %v5522
    %v5524 = vrot.slane %v4709, %v5523
    %v5525 = vlaneseq
    %v5526 = vshrl.u32 %v5525, 7
    %v5527 = vsub.s32 6, %v5526
    %v5528 = vrot.slane %v4710, %v5527
    %v5529 = vlaneseq
    %v5530 = vshrl.u32 %v5529, 7
    %v5531 = vsub.s32 6, %v5530
    %v5532 = vrot.slane %v4711, %v5531
    %v5533 = vlaneseq
    %v5534 = vshrl.u32 %v5533, 7
    %v5535 = vsub.s32 6, %v5534
    %v5536 = vrot.slane %v4712, %v5535
    %v5537 = vmul.f32 %v5508, %v4711
    %v5538 = vmul.f32 %v5512, %v4711
    %v5539 = vmul.f32 %v5516, %v4711
    %v5540 = vmul.f32 %v5520, %v4711
    %v5541 = vmul.f32 %v5524, %v4711
    %v5542 = vmul.f32 %v5528, %v4711
    %v5543 = vmul.f32 %v5532, %v4711
    %v5544 = vmul.f32 %v5536, %v4711
    %v5545 = vsub.f32 %v5497, %v5537
    %v5546 = vsub.f32 %v5498, %v5538
    %v5547 = vsub.f32 %v5499, %v5539
    %v5548 = vsub.f32 %v5500, %v5540
    %v5549 = vsub.f32 %v5501, %v5541
    %v5550 = vsub.f32 %v5502, %v5542
    %v5551 = vsub.f32 %v5503, %v5543
    %v5552 = vsub.f32 %v5504, %v5544
    %v5553 = vmul.f32 %v5468, %v4711
    %v5554 = vmul.f32 %v5472, %v4711
    %v5555 = vmul.f32 %v5476, %v4711
    %v5556 = vmul.f32 %v5480, %v4711
    %v5557 = vmul.f32 %v5484, %v4711
    %v5558 = vmul.f32 %v5488, %v4711
    %v5559 = vmul.f32 %v5492, %v4711
    %v5560 = vmul.f32 %v5496, %v4711
    %v5561 = vmul.f32 %v5508, %v4703
    %v5562 = vmul.f32 %v5512, %v4703
    %v5563 = vmul.f32 %v5516, %v4703
    %v5564 = vmul.f32 %v5520, %v4703
    %v5565 = vmul.f32 %v5524, %v4703
    %v5566 = vmul.f32 %v5528, %v4703
    %v5567 = vmul.f32 %v5532, %v4703
    %v5568 = vmul.f32 %v5536, %v4703
    %v5569 = vadd.f32 %v5553, %v5561
    %v5570 = vadd.f32 %v5554, %v5562
    %v5571 = vadd.f32 %v5555, %v5563
    %v5572 = vadd.f32 %v5556, %v5564
    %v5573 = vadd.f32 %v5557, %v5565
    %v5574 = vadd.f32 %v5558, %v5566
    %v5575 = vadd.f32 %v5559, %v5567
    %v5576 = vadd.f32 %v5560, %v5568
    %v5577 = vadd.f32 %v5449, %v5545
    %v5578 = vadd.f32 %v5450, %v5546
    %v5579 = vadd.f32 %v5451, %v5547
    %v5580 = vadd.f32 %v5452, %v5548
    %v5581 = vadd.f32 %v5453, %v5549
    %v5582 = vadd.f32 %v5454, %v5550
    %v5583 = vadd.f32 %v5455, %v5551
    %v5584 = vadd.f32 %v5456, %v5552
    %v5585 = vadd.f32 %v5457, %v5569
    %v5586 = vadd.f32 %v5458, %v5570
    %v5587 = vadd.f32 %v5459, %v5571
    %v5588 = vadd.f32 %v5460, %v5572
    %v5589 = vadd.f32 %v5461, %v5573
    %v5590 = vadd.f32 %v5462, %v5574
    %v5591 = vadd.f32 %v5463, %v5575
    %v5592 = vadd.f32 %v5464, %v5576
    %v5593 = vlaneseq
    %v5594 = vshrl.u32 %v5593, 7
    %v5595 = vsub.s32 7, %v5594
    %v5596 = vrot.slane %v4697, %v5595
    %v5597 = vlaneseq
    %v5598 = vshrl.u32 %v5597, 7
    %v5599 = vsub.s32 7, %v5598
    %v5600 = vrot.slane %v4698, %v5599
    %v5601 = vlaneseq
    %v5602 = vshrl.u32 %v5601, 7
    %v5603 = vsub.s32 7, %v5602
    %v5604 = vrot.slane %v4699, %v5603
    %v5605 = vlaneseq
    %v5606 = vshrl.u32 %v5605, 7
    %v5607 = vsub.s32 7, %v5606
    %v5608 = vrot.slane %v4700, %v5607
    %v5609 = vlaneseq
    %v5610 = vshrl.u32 %v5609, 7
    %v5611 = vsub.s32 7, %v5610
    %v5612 = vrot.slane %v4701, %v5611
    %v5613 = vlaneseq
    %v5614 = vshrl.u32 %v5613, 7
    %v5615 = vsub.s32 7, %v5614
    %v5616 = vrot.slane %v4702, %v5615
    %v5617 = vlaneseq
    %v5618 = vshrl.u32 %v5617, 7
    %v5619 = vsub.s32 7, %v5618
    %v5620 = vrot.slane %v4703, %v5619
    %v5621 = vlaneseq
    %v5622 = vshrl.u32 %v5621, 7
    %v5623 = vsub.s32 7, %v5622
    %v5624 = vrot.slane %v4704, %v5623
    %v5625 = vmul.f32 %v5596, %v4704
    %v5626 = vmul.f32 %v5600, %v4704
    %v5627 = vmul.f32 %v5604, %v4704
    %v5628 = vmul.f32 %v5608, %v4704
    %v5629 = vmul.f32 %v5612, %v4704
    %v5630 = vmul.f32 %v5616, %v4704
    %v5631 = vmul.f32 %v5620, %v4704
    %v5632 = vmul.f32 %v5624, %v4704
    %v5633 = vlaneseq
    %v5634 = vshrl.u32 %v5633, 7
    %v5635 = vsub.s32 7, %v5634
    %v5636 = vrot.slane %v4705, %v5635
    %v5637 = vlaneseq
    %v5638 = vshrl.u32 %v5637, 7
    %v5639 = vsub.s32 7, %v5638
    %v5640 = vrot.slane %v4706, %v5639
    %v5641 = vlaneseq
    %v5642 = vshrl.u32 %v5641, 7
    %v5643 = vsub.s32 7, %v5642
    %v5644 = vrot.slane %v4707, %v5643
    %v5645 = vlaneseq
    %v5646 = vshrl.u32 %v5645, 7
    %v5647 = vsub.s32 7, %v5646
    %v5648 = vrot.slane %v4708, %v5647
    %v5649 = vlaneseq
    %v5650 = vshrl.u32 %v5649, 7
    %v5651 = vsub.s32 7, %v5650
    %v5652 = vrot.slane %v4709, %v5651
    %v5653 = vlaneseq
    %v5654 = vshrl.u32 %v5653, 7
    %v5655 = vsub.s32 7, %v5654
    %v5656 = vrot.slane %v4710, %v5655
    %v5657 = vlaneseq
    %v5658 = vshrl.u32 %v5657, 7
    %v5659 = vsub.s32 7, %v5658
    %v5660 = vrot.slane %v4711, %v5659
    %v5661 = vlaneseq
    %v5662 = vshrl.u32 %v5661, 7
    %v5663 = vsub.s32 7, %v5662
    %v5664 = vrot.slane %v4712, %v5663
    %v5665 = vmul.f32 %v5636, %v4712
    %v5666 = vmul.f32 %v5640, %v4712
    %v5667 = vmul.f32 %v5644, %v4712
    %v5668 = vmul.f32 %v5648, %v4712
    %v5669 = vmul.f32 %v5652, %v4712
    %v5670 = vmul.f32 %v5656, %v4712
    %v5671 = vmul.f32 %v5660, %v4712
    %v5672 = vmul.f32 %v5664, %v4712
    %v5673 = vsub.f32 %v5625, %v5665
    %v5674 = vsub.f32 %v5626, %v5666
    %v5675 = vsub.f32 %v5627, %v5667
    %v5676 = vsub.f32 %v5628, %v5668
    %v5677 = vsub.f32 %v5629, %v5669
    %v5678 = vsub.f32 %v5630, %v5670
    %v5679 = vsub.f32 %v5631, %v5671
    %v5680 = vsub.f32 %v5632, %v5672
    %v5681 = vmul.f32 %v5596, %v4712
    %v5682 = vmul.f32 %v5600, %v4712
    %v5683 = vmul.f32 %v5604, %v4712
    %v5684 = vmul.f32 %v5608, %v4712
    %v5685 = vmul.f32 %v5612, %v4712
    %v5686 = vmul.f32 %v5616, %v4712
    %v5687 = vmul.f32 %v5620, %v4712
    %v5688 = vmul.f32 %v5624, %v4712
    %v5689 = vmul.f32 %v5636, %v4704
    %v5690 = vmul.f32 %v5640, %v4704
    %v5691 = vmul.f32 %v5644, %v4704
    %v5692 = vmul.f32 %v5648, %v4704
    %v5693 = vmul.f32 %v5652, %v4704
    %v5694 = vmul.f32 %v5656, %v4704
    %v5695 = vmul.f32 %v5660, %v4704
    %v5696 = vmul.f32 %v5664, %v4704
    %v5697 = vadd.f32 %v5681, %v5689
    %v5698 = vadd.f32 %v5682, %v5690
    %v5699 = vadd.f32 %v5683, %v5691
    %v5700 = vadd.f32 %v5684, %v5692
    %v5701 = vadd.f32 %v5685, %v5693
    %v5702 = vadd.f32 %v5686, %v5694
    %v5703 = vadd.f32 %v5687, %v5695
    %v5704 = vadd.f32 %v5688, %v5696
    %v5705 = vadd.f32 %v5577, %v5673
    %v5706 = vadd.f32 %v5578, %v5674
    %v5707 = vadd.f32 %v5579, %v5675
    %v5708 = vadd.f32 %v5580, %v5676
    %v5709 = vadd.f32 %v5581, %v5677
    %v5710 = vadd.f32 %v5582, %v5678
    %v5711 = vadd.f32 %v5583, %v5679
    %v5712 = vadd.f32 %v5584, %v5680
    %v5713 = vadd.f32 %v5585, %v5697
    %v5714 = vadd.f32 %v5586, %v5698
    %v5715 = vadd.f32 %v5587, %v5699
    %v5716 = vadd.f32 %v5588, %v5700
    %v5717 = vadd.f32 %v5589, %v5701
    %v5718 = vadd.f32 %v5590, %v5702
    %v5719 = vadd.f32 %v5591, %v5703
    %v5720 = vadd.f32 %v5592, %v5704
    %s5721 = scvt.s32.f32 %s4692
    %v5722 = vstv %s5721
    %vm5723 = vcmp.lt.f32.partialorder %v5722, %v320
    %v5724 = vsel %vm5723, 1, 0
    %vm5725 = vcmp.eq.s32.totalorder %v5724, 1
    %v5726 = vsel %vm5725, %v5705, %v4697
    %v5727 = vsel %vm5725, %v5706, %v4698
    %v5728 = vsel %vm5725, %v5707, %v4699
    %v5729 = vsel %vm5725, %v5708, %v4700
    %v5730 = vsel %vm5725, %v5709, %v4701
    %v5731 = vsel %vm5725, %v5710, %v4702
    %v5732 = vsel %vm5725, %v5711, %v4703
    %v5733 = vsel %vm5725, %v5712, %v4704
    %v5734 = vsel %vm5725, %v5713, %v4705
    %v5735 = vsel %vm5725, %v5714, %v4706
    %v5736 = vsel %vm5725, %v5715, %v4707
    %v5737 = vsel %vm5725, %v5716, %v4708
    %v5738 = vsel %vm5725, %v5717, %v4709
    %v5739 = vsel %vm5725, %v5718, %v4710
    %v5740 = vsel %vm5725, %v5719, %v4711
    %v5741 = vsel %vm5725, %v5720, %v4712
  $region18: #{projection_forward.1} parent=0 // loop_footer
    %s4694 = sadd.s32 %s4692, 1
  $region19: #{projection_forward.1} parent=0 // loop_footer_branch
    %4691 = sbr.rel target = $region15
  $region20: #{projection_forward.1} parent=0 // loop_exit
    _
  %5742 = vst [vmem:[%s4] sm:$0xff] %v4697
  %5743 = vst [vmem:[%s4 + $0x8] sm:$0xff] %v4698
  %5744 = vst [vmem:[%s4 + $0x10] sm:$0xff] %v4699
  %5745 = vst [vmem:[%s4 + $0x18] sm:$0xff] %v4700
  %5746 = vst [vmem:[%s4 + $0x20] sm:$0xff] %v4701
  %5747 = vst [vmem:[%s4 + $0x28] sm:$0xff] %v4702
  %5748 = vst [vmem:[%s4 + $0x30] sm:$0xff] %v4703
  %5749 = vst [vmem:[%s4 + $0x38] sm:$0xff] %v4704
  %s5750 = scalar_lea.vmem %s4, 64
  %5751 = vst [vmem:[%s5750] sm:$0xff] %v4705
  %5752 = vst [vmem:[%s5750 + $0x8] sm:$0xff] %v4706
  %5753 = vst [vmem:[%s5750 + $0x10] sm:$0xff] %v4707
  %5754 = vst [vmem:[%s5750 + $0x18] sm:$0xff] %v4708
  %5755 = vst [vmem:[%s5750 + $0x20] sm:$0xff] %v4709
  %5756 = vst [vmem:[%s5750 + $0x28] sm:$0xff] %v4710
  %5757 = vst [vmem:[%s5750 + $0x30] sm:$0xff] %v4711
  %5758 = vst [vmem:[%s5750 + $0x38] sm:$0xff] %v4712
  // Predicated region
  $region21: #{projection_forward.1} parent=0 // pred_check
    _
  $region22: #{projection_forward.1} parent=0 // pred_check_branch
    %5760 = sbr.rel (0) target = $region24
  $region23: #{projection_forward.1} parent=0 // pred_region
    _
  $region24: #{projection_forward.1} parent=0 // pred_fallthru
    _
  // Predicated region
  $region25: #{projection_forward.1} parent=0 // pred_check
    _
  $region26: #{projection_forward.1} parent=0 // pred_check_branch
    %5762 = sbr.rel (0) target = $region28
  $region27: #{projection_forward.1} parent=0 // pred_region
    _
  $region28: #{projection_forward.1} parent=0 // pred_fallthru
    _

</llo_original>
